<compile_context>
chip_gen: v6e
topology: v6e:2x2x1
jax: 0.10.0
libtpu: 0.0.40
codegen_flags: <defaults>
</compile_context>

<pallas_src>
import math

import jax
import jax.numpy as jnp
from jax.experimental import pallas as pl
from jax.experimental.pallas import tpu as pltpu

# ----------------------- config (mirrors the module defaults) -----------------------
OUTPUT_FEATURE_DIM = 256
N_PARAMETER = 2
N_FLOW = 5
COUNT_BINS = 500
KPAD = 512                        # count_bins padded to a lane multiple
BOUND = 100.0                     # bound_change for n_parameter == 2
HIDDEN = 256                      # hidden_dims = [256, 256]
HALF = HIDDEN // 2                # MADE degree split (deg-0 half / deg-1 half)
PAD_P = 3 * KPAD                  # padded per-dim spline parameter width (1536)
MIN_BIN = 1e-3
MIN_DERIV = 1e-3
LOG_001 = math.log(0.01)
HALF_LOG_2PI = 0.5 * math.log(2.0 * math.pi)
MEAN_MULT = (30.0, 30.0)
STD_MULT = (5.0, 5.0)


# ------------------------------ spline inverse (one dim) -----------------------------
def _spline_inverse(yd, raw_d, tri_bf, lane):
    """Invert a monotone RQ spline for one dim. yd (B,1), raw_d (B, 3*KPAD)."""
    wl = raw_d[:, 0:KPAD]
    hl = raw_d[:, KPAD:2 * KPAD]
    dl = raw_d[:, 2 * KPAD:3 * KPAD]

    binmask = lane < COUNT_BINS
    neg_big = jnp.float32(-1e9)
    wl = jnp.where(binmask, wl, neg_big)
    hl = jnp.where(binmask, hl, neg_big)

    def _softmax(v):
        m = jnp.max(v, axis=-1, keepdims=True)
        e = jnp.exp(v - m)
        return e / jnp.sum(e, axis=-1, keepdims=True)

    scale = 2.0 * BOUND
    widths = (MIN_BIN + (1.0 - MIN_BIN * COUNT_BINS) * _softmax(wl)) * scale
    heights = (MIN_BIN + (1.0 - MIN_BIN * COUNT_BINS) * _softmax(hl)) * scale
    widths = jnp.where(binmask, widths, 0.0)
    heights = jnp.where(binmask, heights, 0.0)
    # stable softplus (avoids log1p lowering)
    derivs = MIN_DERIV + jnp.maximum(dl, 0.0) + jnp.log(1.0 + jnp.exp(-jnp.abs(dl)))

    # inclusive cumsum of heights, used ONLY for the bin search; bf16 MXU matmul
    # against a constant triangular matrix (f32 accumulate).
    csum_h = jnp.dot(heights.astype(jnp.bfloat16), tri_bf,
                     preferred_element_type=jnp.float32)

    inside = (yd > -BOUND) & (yd < BOUND)
    yc = jnp.clip(yd, -BOUND + 1e-6, BOUND - 1e-6)

    # bin index via VPU compares (only the K-1 interior knots count)
    interior = lane <= (COUNT_BINS - 2)
    hit = jnp.logical_and(interior, (csum_h - BOUND) <= yc)
    idx = jnp.sum(hit.astype(jnp.int32), axis=-1, keepdims=True)       # (B,1)
    onehot = lane == idx
    before = lane < idx

    def _sel(a, m):
        return jnp.sum(jnp.where(m, a, 0.0), axis=-1, keepdims=True)

    w_sel = _sel(widths, onehot)
    h_sel = _sel(heights, onehot)
    xk = -BOUND + _sel(widths, before)      # exact f32 left-knot positions
    yk = -BOUND + _sel(heights, before)
    dk1 = jnp.where(idx == (COUNT_BINS - 1), 1.0, _sel(derivs, onehot))
    dk = jnp.where(idx == 0, 1.0, _sel(derivs, lane == (idx - 1)))

    s = h_sel / w_sel
    dy = yc - yk
    t = dk1 + dk - 2.0 * s
    a = h_sel * (s - dk) + dy * t
    b = h_sel * dk - dy * t
    c = -s * dy
    disc = jnp.maximum(b * b - 4.0 * a * c, 0.0)
    xi = (2.0 * c) / (-b - jnp.sqrt(disc))
    x_in = xk + xi * w_sel
    denom = s + t * xi * (1.0 - xi)
    dydx = (s * s) * (dk1 * xi * xi + 2.0 * s * xi * (1.0 - xi)
                      + dk * (1.0 - xi) * (1.0 - xi)) / (denom * denom)
    x_d = jnp.where(inside, x_in, yd)
    ld_d = jnp.where(inside, jnp.log(dydx), 0.0)
    return x_d, ld_d


# ------------------------------- fused forward kernel --------------------------------
def _fused_kernel(label_ref, sig_ref, wf_ref, bf_ref, clr_ref, tri_ref, ms_ref,
                  w1x_ref, w1c_ref, b1_ref,
                  w2ll_ref, w2lh_ref, w2hh_ref, b2_ref,
                  w30_ref, w31l_ref, w31h_ref, b3_ref,
                  loss_ref, feat_ref, clr_out_ref,
                  ctx_sc, y_sc, ld_sc):
    i = pl.program_id(0)
    B = label_ref.shape[0]

    # step 0: feature extraction (flow context) + invert the trailing
    # LeakyReLUTransform + init the logdet carry.
    @pl.when(i == 0)
    def _():
        feats = jnp.dot(sig_ref[...].astype(jnp.bfloat16), wf_ref[...],
                        preferred_element_type=jnp.float32) + bf_ref[...]
        ctx_sc[...] = feats
        yl = label_ref[...]
        x = jnp.where(yl >= 0.0, yl, yl * 100.0)
        y_sc[...] = x
        ld_sc[...] = jnp.sum(jnp.where(x >= 0.0, 0.0, LOG_001),
                             axis=-1, keepdims=True)

    ctx = ctx_sc[...]
    tri = tri_ref[...]
    lane = jax.lax.broadcasted_iota(jnp.int32, (B, KPAD), 1)

    # conditioner layer 1, context part (shared across both output dims)
    pre1_ctx = jnp.dot(ctx.astype(jnp.bfloat16), w1c_ref[...],
                       preferred_element_type=jnp.float32) + b1_ref[...]

    y = y_sc[...]                                         # (B, 2)
    ld = ld_sc[...]                                       # (B, 1)

    # ---- dim 0: depends on context only (MADE degree-0 half) ----
    h1_lo = jnp.maximum(pre1_ctx[:, :HALF], 0.0)
    h1_lo_b = h1_lo.astype(jnp.bfloat16)
    h2_lo = jnp.maximum(
        jnp.dot(h1_lo_b, w2ll_ref[...], preferred_element_type=jnp.float32)
        + b2_ref[:, :HALF], 0.0)
    h2_lo_b = h2_lo.astype(jnp.bfloat16)
    raw0 = (jnp.dot(h2_lo_b, w30_ref[...], preferred_element_type=jnp.float32)
            + b3_ref[:, 0:PAD_P])
    x0, ld0 = _spline_inverse(y[:, 0:1], raw0, tri, lane)

    # ---- dim 1: context + x0 (full width) ----
    h1_hi = jnp.maximum(pre1_ctx[:, HALF:] + x0 * w1x_ref[...], 0.0)
    h2_hi = jnp.maximum(
        jnp.dot(h1_lo_b, w2lh_ref[...], preferred_element_type=jnp.float32)
        + jnp.dot(h1_hi.astype(jnp.bfloat16), w2hh_ref[...],
                  preferred_element_type=jnp.float32)
        + b2_ref[:, HALF:], 0.0)
    raw1 = (jnp.dot(h2_lo_b, w31l_ref[...], preferred_element_type=jnp.float32)
            + jnp.dot(h2_hi.astype(jnp.bfloat16), w31h_ref[...],
                      preferred_element_type=jnp.float32)
            + b3_ref[:, PAD_P:2 * PAD_P])
    x1, ld1 = _spline_inverse(y[:, 1:2], raw1, tri, lane)

    ci = jax.lax.broadcasted_iota(jnp.int32, (B, N_PARAMETER), 1)
    x_new = jnp.where(ci == 0, x0, x1)
    ld = ld + ld0 + ld1
    y_sc[...] = x_new
    ld_sc[...] = ld

    # last step: base Normal log-prob + final scalar loss + CLR head, fused.
    @pl.when(i == pl.num_programs(0) - 1)
    def _():
        mean = ms_ref[0:1, :]
        std = ms_ref[1:2, :]
        z = (x_new - mean) / std
        base_lp = jnp.sum(-0.5 * z * z - jnp.log(std) - HALF_LOG_2PI,
                          axis=-1, keepdims=True)          # (B, 1)
        lp = base_lp - ld
        loss_ref[...] = -jnp.mean(lp) * jnp.ones((1, 1), jnp.float32)

        feats = ctx_sc[...]
        feat_ref[...] = feats
        # fc3(relu(fc2(x))) with fc2/fc3 = Conv1d(1,1,1) == scalar affine
        h = jnp.maximum(feats * clr_ref[0:1, :] + clr_ref[1:2, :], 0.0)
        clr_out_ref[...] = h * clr_ref[2:3, :] + clr_ref[3:4, :]


def fused_forward(label, signal, params):
    B = label.shape[0]
    L = signal.shape[1]
    fw = params["flows"]
    c2 = lambda i: (0, 0)
    pf = lambda i: (N_FLOW - 1 - i, 0, 0)     # invert flows in reverse order
    return pl.pallas_call(
        _fused_kernel,
        out_shape=(jax.ShapeDtypeStruct((1, 1), jnp.float32),
                   jax.ShapeDtypeStruct((B, OUTPUT_FEATURE_DIM), jnp.float32),
                   jax.ShapeDtypeStruct((B, OUTPUT_FEATURE_DIM), jnp.float32)),
        grid_spec=pltpu.PrefetchScalarGridSpec(
            num_scalar_prefetch=0,
            grid=(N_FLOW,),
            in_specs=[
                pl.BlockSpec((B, N_PARAMETER), c2),                    # label
                pl.BlockSpec((B, L), c2),                              # signal
                pl.BlockSpec((L, OUTPUT_FEATURE_DIM), c2),             # wf (bf16)
                pl.BlockSpec((1, OUTPUT_FEATURE_DIM), c2),             # bf
                pl.BlockSpec((4, OUTPUT_FEATURE_DIM), c2),             # clr affines
                pl.BlockSpec((KPAD, KPAD), c2),                        # tri (bf16)
                pl.BlockSpec((2, N_PARAMETER), c2),                    # mean/std
                pl.BlockSpec((None, 1, HALF), pf),                     # w1 x0->hi
                pl.BlockSpec((None, OUTPUT_FEATURE_DIM, HIDDEN), pf),  # w1 ctx
                pl.BlockSpec((None, 1, HIDDEN), pf),                   # b1
                pl.BlockSpec((None, HALF, HALF), pf),                  # w2 lo->lo
                pl.BlockSpec((None, HALF, HALF), pf),                  # w2 lo->hi
                pl.BlockSpec((None, HALF, HALF), pf),                  # w2 hi->hi
                pl.BlockSpec((None, 1, HIDDEN), pf),                   # b2
                pl.BlockSpec((None, HALF, PAD_P), pf),                 # w3 dim0 (lo)
                pl.BlockSpec((None, HALF, PAD_P), pf),                 # w3 dim1 lo
                pl.BlockSpec((None, HALF, PAD_P), pf),                 # w3 dim1 hi
                pl.BlockSpec((None, 1, N_PARAMETER * PAD_P), pf),      # b3
            ],
            out_specs=(pl.BlockSpec((1, 1), c2),
                       pl.BlockSpec((B, OUTPUT_FEATURE_DIM), c2),
                       pl.BlockSpec((B, OUTPUT_FEATURE_DIM), c2)),
            scratch_shapes=[pltpu.VMEM((B, OUTPUT_FEATURE_DIM), jnp.float32),  # ctx
                            pltpu.VMEM((B, N_PARAMETER), jnp.float32),         # x/y
                            pltpu.VMEM((B, 1), jnp.float32)],                  # logdet
        ),
        compiler_params=pltpu.CompilerParams(
            dimension_semantics=("arbitrary",),
            vmem_limit_bytes=32 * 1024 * 1024),
    )(label, signal, params["wf"], params["bf"], params["clr"],
      params["tri"], params["meanstd"],
      fw["w1x"], fw["w1c"], fw["b1"],
      fw["w2ll"], fw["w2lh"], fw["w2hh"], fw["b2"],
      fw["w30"], fw["w31l"], fw["w31h"], fw["b3"])


# --------------------------------- forward + params ---------------------------------
@jax.jit
def forward(inputs_signal, inputs_label, params):
    # check_dim: (B, L) -> (B, 1, L); singleton channel kept implicit as (B, L).
    # fc1 is identity for model_base == 'wavenet1'
    clr_loss = jnp.float32(0.0)          # eval mode: torch.Tensor([0.0]).mean()
    # features.shape[1] == 256 != 2*n_param(+1) -> base Normal([30,30],[5,5])
    loss, features, clr_encoded = fused_forward(inputs_label, inputs_signal, params)
    return (loss[0, 0], clr_loss), features, clr_encoded


def _pad_last(a, width):
    return jnp.pad(a, [(0, 0)] * (a.ndim - 1) + [(0, width - a.shape[-1])])


def _spline_head(key, rows):
    """Random [w | h | d] spline-parameter head, lane-padded to 3*KPAD."""
    kw, kh, kd = jax.random.split(key, 3)
    wlog = 0.01 * jax.random.normal(kw, (rows, COUNT_BINS), jnp.float32)
    hlog = 0.01 * jax.random.normal(kh, (rows, COUNT_BINS), jnp.float32)
    dlog = 0.01 * jax.random.normal(kd, (rows, COUNT_BINS - 1), jnp.float32)
    return jnp.concatenate([_pad_last(wlog, KPAD), _pad_last(hlog, KPAD),
                            _pad_last(dlog, KPAD)], axis=-1)


def init_params(key, L):
    k_wf, k_bf, k_flow = jax.random.split(key, 3)

    params = {
        "wf": (jax.random.normal(k_wf, (L, OUTPUT_FEATURE_DIM), jnp.float32)
               / math.sqrt(L)).astype(jnp.bfloat16),
        "bf": 0.01 * jax.random.normal(k_bf, (1, OUTPUT_FEATURE_DIM), jnp.float32),
        # [w2, b2, w3, b3] scalars of the two Conv1d(1,1,1) layers, lane-broadcast
        "clr": jnp.stack([jnp.full((OUTPUT_FEATURE_DIM,), v, jnp.float32)
                          for v in (0.8, 0.1, 1.2, -0.05)]),
        # inclusive-cumsum upper-triangular matrix (bf16 0/1 exact)
        "tri": (jnp.arange(KPAD)[:, None] <= jnp.arange(KPAD)[None, :]
                ).astype(jnp.bfloat16),
        "meanstd": jnp.array([MEAN_MULT, STD_MULT], jnp.float32),
    }

    # MADE degrees: x0->1, x1->2 (x1 never feeds anything), ctx->0;
    # hidden split deg {0 (lo half), 1 (hi half)}; output for dim d has degree d+1.
    kk = jax.random.split(k_flow, N_FLOW * 8)
    lists = {n: [] for n in ("w1x", "w1c", "b1", "w2ll", "w2lh", "w2hh", "b2",
                             "w30", "w31l", "w31h", "b3")}
    for f in range(N_FLOW):
        k0, k1, k2, k3, k4, k5, k6, k7 = kk[8 * f:8 * f + 8]
        lists["w1x"].append(0.05 * jax.random.normal(k0, (1, HALF), jnp.float32))
        lists["w1c"].append(0.05 * jax.random.normal(
            k1, (OUTPUT_FEATURE_DIM, HIDDEN), jnp.float32))
        lists["b1"].append(jnp.zeros((1, HIDDEN), jnp.float32))
        lists["w2ll"].append(0.05 * jax.random.normal(k2, (HALF, HALF), jnp.float32))
        lists["w2lh"].append(0.05 * jax.random.normal(k3, (HALF, HALF), jnp.float32))
        lists["w2hh"].append(0.05 * jax.random.normal(k4, (HALF, HALF), jnp.float32))
        lists["b2"].append(jnp.zeros((1, HIDDEN), jnp.float32))
        # dim-0 head sees only the degree-0 (lo) hidden half; dim-1 head sees all.
        lists["w30"].append(_spline_head(k5, HALF))
        k6a, k6b = jax.random.split(k6, 2)
        lists["w31l"].append(_spline_head(k6a, HALF))
        lists["w31h"].append(_spline_head(k6b, HALF))
        kb0, kb1 = jax.random.split(k7, 2)
        lists["b3"].append(jnp.concatenate(
            [_spline_head(kb0, 1), _spline_head(kb1, 1)], axis=-1))

    params["flows"] = dict(
        w1x=jnp.stack(lists["w1x"]),                               # (5, 1, 128)   f32
        w1c=jnp.stack(lists["w1c"]).astype(jnp.bfloat16),          # (5, 256, 256) bf16
        b1=jnp.stack(lists["b1"]),                                 # (5, 1, 256)   f32
        w2ll=jnp.stack(lists["w2ll"]).astype(jnp.bfloat16),        # (5, 128, 128) bf16
        w2lh=jnp.stack(lists["w2lh"]).astype(jnp.bfloat16),        # (5, 128, 128) bf16
        w2hh=jnp.stack(lists["w2hh"]).astype(jnp.bfloat16),        # (5, 128, 128) bf16
        b2=jnp.stack(lists["b2"]),                                 # (5, 1, 256)   f32
        w30=jnp.stack(lists["w30"]).astype(jnp.bfloat16),          # (5, 128, 1536) bf16
        w31l=jnp.stack(lists["w31l"]).astype(jnp.bfloat16),        # (5, 128, 1536) bf16
        w31h=jnp.stack(lists["w31h"]).astype(jnp.bfloat16),        # (5, 128, 1536) bf16
        b3=jnp.stack(lists["b3"]),                                 # (5, 1, 3072)  f32
    )
    return params


if __name__ == "__main__":
    B, L = 8, 1024
    key = jax.random.PRNGKey(0)
    k_sig, k_lab, k_par = jax.random.split(key, 3)
    inputs_signal = jax.random.normal(k_sig, (B, L), jnp.float32)
    inputs_label = (jnp.array(MEAN_MULT, jnp.float32)[None, :]
                    + 2.0 * jax.random.normal(k_lab, (B, N_PARAMETER), jnp.float32))
    params = init_params(k_par, L)

    (logprob, clr_loss), features, clr_encoded = forward(inputs_signal, inputs_label, params)
    jax.block_until_ready((logprob, clr_loss, features, clr_encoded))
    _ = float(logprob)   # force materialization of the scalar loss
    print("KERNEL_OK")
</pallas_src>

<mosaic_0001>
module attributes {stable_mosaic.version = 11 : i64} {
  func.func @_fused_kernel(%arg0: i32, %arg1: memref<8x2xf32, #tpu.memory_space<vmem>>, %arg2: memref<8x1024xf32, #tpu.memory_space<vmem>>, %arg3: memref<1024x256xbf16, #tpu.memory_space<vmem>>, %arg4: memref<1x256xf32, #tpu.memory_space<vmem>>, %arg5: memref<4x256xf32, #tpu.memory_space<vmem>>, %arg6: memref<512x512xbf16, #tpu.memory_space<vmem>>, %arg7: memref<2x2xf32, #tpu.memory_space<vmem>>, %arg8: memref<1x1x128xf32, #tpu.memory_space<vmem>>, %arg9: memref<1x256x256xbf16, #tpu.memory_space<vmem>>, %arg10: memref<1x1x256xf32, #tpu.memory_space<vmem>>, %arg11: memref<1x128x128xbf16, #tpu.memory_space<vmem>>, %arg12: memref<1x128x128xbf16, #tpu.memory_space<vmem>>, %arg13: memref<1x128x128xbf16, #tpu.memory_space<vmem>>, %arg14: memref<1x1x256xf32, #tpu.memory_space<vmem>>, %arg15: memref<1x128x1536xbf16, #tpu.memory_space<vmem>>, %arg16: memref<1x128x1536xbf16, #tpu.memory_space<vmem>>, %arg17: memref<1x128x1536xbf16, #tpu.memory_space<vmem>>, %arg18: memref<1x1x3072xf32, #tpu.memory_space<vmem>>, %arg19: memref<1x1xf32, #tpu.memory_space<vmem>>, %arg20: memref<8x256xf32, #tpu.memory_space<vmem>>, %arg21: memref<8x256xf32, #tpu.memory_space<vmem>>, %arg22: memref<8x256xf32, #tpu.memory_space<vmem>>, %arg23: memref<8x2xf32, #tpu.memory_space<vmem>>, %arg24: memref<8x1xf32, #tpu.memory_space<vmem>>) attributes {dimension_semantics = [#tpu.dimension_semantics<arbitrary>], iteration_bounds = array<i64: 5>, scalar_prefetch = 0 : i64, scratch_operands = 3 : i64, tpu.core_type = #tpu.core_type<tc>, window_params = [{pipeline_mode = #tpu.pipeline_mode<synchronous>, transform_indices = @transform_0, window_bounds = array<i64: 8, 2>}, {pipeline_mode = #tpu.pipeline_mode<synchronous>, transform_indices = @transform_1, window_bounds = array<i64: 8, 1024>}, {pipeline_mode = #tpu.pipeline_mode<synchronous>, transform_indices = @transform_2, window_bounds = array<i64: 1024, 256>}, {pipeline_mode = #tpu.pipeline_mode<synchronous>, transform_indices = @transform_3, window_bounds = array<i64: 1, 256>}, {pipeline_mode = #tpu.pipeline_mode<synchronous>, transform_indices = @transform_4, window_bounds = array<i64: 4, 256>}, {pipeline_mode = #tpu.pipeline_mode<synchronous>, transform_indices = @transform_5, window_bounds = array<i64: 512, 512>}, {pipeline_mode = #tpu.pipeline_mode<synchronous>, transform_indices = @transform_6, window_bounds = array<i64: 2, 2>}, {transform_indices = @transform_7, window_bounds = array<i64: 1, 1, 128>}, {transform_indices = @transform_8, window_bounds = array<i64: 1, 256, 256>}, {transform_indices = @transform_9, window_bounds = array<i64: 1, 1, 256>}, {transform_indices = @transform_10, window_bounds = array<i64: 1, 128, 128>}, {transform_indices = @transform_11, window_bounds = array<i64: 1, 128, 128>}, {transform_indices = @transform_12, window_bounds = array<i64: 1, 128, 128>}, {transform_indices = @transform_13, window_bounds = array<i64: 1, 1, 256>}, {transform_indices = @transform_14, window_bounds = array<i64: 1, 128, 1536>}, {transform_indices = @transform_15, window_bounds = array<i64: 1, 128, 1536>}, {transform_indices = @transform_16, window_bounds = array<i64: 1, 128, 1536>}, {transform_indices = @transform_17, window_bounds = array<i64: 1, 1, 3072>}, {pipeline_mode = #tpu.pipeline_mode<synchronous>, transform_indices = @transform_18, window_bounds = array<i64: 1, 1>}, {pipeline_mode = #tpu.pipeline_mode<synchronous>, transform_indices = @transform_19, window_bounds = array<i64: 8, 256>}, {pipeline_mode = #tpu.pipeline_mode<synchronous>, transform_indices = @transform_20, window_bounds = array<i64: 8, 256>}]} {
    %c0_i32 = arith.constant 0 : i32
    %0 = arith.cmpi eq, %arg0, %c0_i32 : i32
    %1 = arith.extui %0 : i1 to i32
    %c0_i32_0 = arith.constant 0 : i32
    %2 = arith.cmpi ne, %1, %c0_i32_0 : i32
    scf.if %2 {
      %c0_173 = arith.constant 0 : index
      %c0_174 = arith.constant 0 : index
      %451 = vector.load %arg2[%c0_173, %c0_174] : memref<8x1024xf32, #tpu.memory_space<vmem>>, vector<8x1024xf32>
      %452 = arith.truncf %451 : vector<8x1024xf32> to vector<8x1024xbf16>
      %c0_175 = arith.constant 0 : index
      %c0_176 = arith.constant 0 : index
      %453 = vector.load %arg3[%c0_175, %c0_176] : memref<1024x256xbf16, #tpu.memory_space<vmem>>, vector<1024x256xbf16>
      %cst_177 = arith.constant dense<0.000000e+00> : vector<8x256xf32>
      %454 = tpu.matmul %452, %453, %cst_177 {dimension_numbers = #tpu.dot_dimension_numbers<[1], [0], [0], [1], [0, 0, 1, 1], [], []>} : vector<8x1024xbf16>, vector<1024x256xbf16>, vector<8x256xf32> -> vector<8x256xf32>
      %c0_178 = arith.constant 0 : index
      %c0_179 = arith.constant 0 : index
      %455 = vector.load %arg4[%c0_178, %c0_179] : memref<1x256xf32, #tpu.memory_space<vmem>>, vector<1x256xf32>
      %456 = vector.broadcast %455 : vector<1x256xf32> to vector<8x256xf32>
      %457 = arith.addf %454, %456 : vector<8x256xf32>
      %c0_180 = arith.constant 0 : index
      %c0_181 = arith.constant 0 : index
      %458 = vector.load %arg22[%c0_180, %c0_181] : memref<8x256xf32, #tpu.memory_space<vmem>>, vector<8x256xf32>
      tpu.vector_store %arg22[%c0_180, %c0_181], %457 {strides = array<i32>} : memref<8x256xf32, #tpu.memory_space<vmem>>, vector<8x256xf32>,
      %c0_182 = arith.constant 0 : index
      %c0_183 = arith.constant 0 : index
      %459 = vector.load %arg1[%c0_182, %c0_183] : memref<8x2xf32, #tpu.memory_space<vmem>>, vector<8x2xf32>
      %cst_184 = arith.constant 0.000000e+00 : f32
      %460 = vector.broadcast %cst_184 : f32 to vector<8x2xf32>
      %461 = arith.cmpf oge, %459, %460 : vector<8x2xf32>
      %cst_185 = arith.constant 1.000000e+02 : f32
      %462 = vector.broadcast %cst_185 : f32 to vector<8x2xf32>
      %463 = arith.mulf %459, %462 : vector<8x2xf32>
      %464 = arith.select %461, %459, %463 : vector<8x2xi1>, vector<8x2xf32>
      %c0_186 = arith.constant 0 : index
      %c0_187 = arith.constant 0 : index
      %465 = vector.load %arg23[%c0_186, %c0_187] : memref<8x2xf32, #tpu.memory_space<vmem>>, vector<8x2xf32>
      tpu.vector_store %arg23[%c0_186, %c0_187], %464 {strides = array<i32>} : memref<8x2xf32, #tpu.memory_space<vmem>>, vector<8x2xf32>,
      %cst_188 = arith.constant 0.000000e+00 : f32
      %466 = vector.broadcast %cst_188 : f32 to vector<8x2xf32>
      %467 = arith.cmpf oge, %464, %466 : vector<8x2xf32>
      %cst_189 = arith.constant 0.000000e+00 : f32
      %cst_190 = arith.constant -4.60517025 : f32
      %468 = vector.broadcast %cst_189 : f32 to vector<8x2xf32>
      %469 = vector.broadcast %cst_190 : f32 to vector<8x2xf32>
      %470 = arith.select %467, %468, %469 : vector<8x2xi1>, vector<8x2xf32>
      %cst_191 = arith.constant dense<0.000000e+00> : vector<8xf32>
      %471 = vector.multi_reduction <add>, %470, %cst_191 [1] : vector<8x2xf32> to vector<8xf32>
      %472 = vector.shape_cast %471 : vector<8xf32> to vector<8x1xf32>
      %c0_192 = arith.constant 0 : index
      %c0_193 = arith.constant 0 : index
      %473 = vector.load %arg24[%c0_192, %c0_193] : memref<8x1xf32, #tpu.memory_space<vmem>>, vector<8x1xf32>
      tpu.vector_store %arg24[%c0_192, %c0_193], %472 {strides = array<i32>} : memref<8x1xf32, #tpu.memory_space<vmem>>, vector<8x1xf32>,
    } else {
    }
    %c0 = arith.constant 0 : index
    %c0_1 = arith.constant 0 : index
    %3 = vector.load %arg22[%c0, %c0_1] : memref<8x256xf32, #tpu.memory_space<vmem>>, vector<8x256xf32>
    %c0_2 = arith.constant 0 : index
    %c0_3 = arith.constant 0 : index
    %4 = vector.load %arg6[%c0_2, %c0_3] : memref<512x512xbf16, #tpu.memory_space<vmem>>, vector<512x512xbf16>
    %5 = tpu.iota {dimensions = array<i32: 1>} : vector<8x512xi32>
    %6 = arith.truncf %3 : vector<8x256xf32> to vector<8x256xbf16>
    %c0_4 = arith.constant 0 : index
    %c0_5 = arith.constant 0 : index
    %c0_6 = arith.constant 0 : index
    %7 = vector.load %arg9[%c0_4, %c0_5, %c0_6] : memref<1x256x256xbf16, #tpu.memory_space<vmem>>, vector<1x256x256xbf16>
    %8 = vector.shape_cast %7 : vector<1x256x256xbf16> to vector<256x256xbf16>
    %cst = arith.constant dense<0.000000e+00> : vector<8x256xf32>
    %9 = tpu.matmul %6, %8, %cst {dimension_numbers = #tpu.dot_dimension_numbers<[1], [0], [0], [1], [0, 0, 1, 1], [], []>} : vector<8x256xbf16>, vector<256x256xbf16>, vector<8x256xf32> -> vector<8x256xf32>
    %c0_7 = arith.constant 0 : index
    %c0_8 = arith.constant 0 : index
    %c0_9 = arith.constant 0 : index
    %10 = vector.load %arg10[%c0_7, %c0_8, %c0_9] : memref<1x1x256xf32, #tpu.memory_space<vmem>>, vector<1x1x256xf32>
    %11 = vector.shape_cast %10 : vector<1x1x256xf32> to vector<1x256xf32>
    %12 = vector.broadcast %11 : vector<1x256xf32> to vector<8x256xf32>
    %13 = arith.addf %9, %12 : vector<8x256xf32>
    %c0_10 = arith.constant 0 : index
    %c0_11 = arith.constant 0 : index
    %14 = vector.load %arg23[%c0_10, %c0_11] : memref<8x2xf32, #tpu.memory_space<vmem>>, vector<8x2xf32>
    %c0_12 = arith.constant 0 : index
    %c0_13 = arith.constant 0 : index
    %15 = vector.load %arg24[%c0_12, %c0_13] : memref<8x1xf32, #tpu.memory_space<vmem>>, vector<8x1xf32>
    %16 = vector.extract_strided_slice %13 {offsets = [0, 0], sizes = [8, 128], strides = [1, 1]} : vector<8x256xf32> to vector<8x128xf32>
    %cst_14 = arith.constant 0.000000e+00 : f32
    %17 = vector.broadcast %cst_14 : f32 to vector<8x128xf32>
    %18 = arith.maximumf %16, %17 : vector<8x128xf32>
    %19 = arith.truncf %18 : vector<8x128xf32> to vector<8x128xbf16>
    %c0_15 = arith.constant 0 : index
    %c0_16 = arith.constant 0 : index
    %c0_17 = arith.constant 0 : index
    %20 = vector.load %arg11[%c0_15, %c0_16, %c0_17] : memref<1x128x128xbf16, #tpu.memory_space<vmem>>, vector<1x128x128xbf16>
    %21 = vector.shape_cast %20 : vector<1x128x128xbf16> to vector<128x128xbf16>
    %cst_18 = arith.constant dense<0.000000e+00> : vector<8x128xf32>
    %22 = tpu.matmul %19, %21, %cst_18 {dimension_numbers = #tpu.dot_dimension_numbers<[1], [0], [0], [1], [0, 0, 1, 1], [], []>} : vector<8x128xbf16>, vector<128x128xbf16>, vector<8x128xf32> -> vector<8x128xf32>
    %c0_19 = arith.constant 0 : index
    %c0_20 = arith.constant 0 : index
    %c0_21 = arith.constant 0 : index
    %23 = vector.load %arg14[%c0_19, %c0_20, %c0_21] : memref<1x1x256xf32, #tpu.memory_space<vmem>>, vector<1x1x128xf32>
    %24 = vector.shape_cast %23 : vector<1x1x128xf32> to vector<1x128xf32>
    %25 = vector.broadcast %24 : vector<1x128xf32> to vector<8x128xf32>
    %26 = arith.addf %22, %25 : vector<8x128xf32>
    %cst_22 = arith.constant 0.000000e+00 : f32
    %27 = vector.broadcast %cst_22 : f32 to vector<8x128xf32>
    %28 = arith.maximumf %26, %27 : vector<8x128xf32>
    %29 = arith.truncf %28 : vector<8x128xf32> to vector<8x128xbf16>
    %c0_23 = arith.constant 0 : index
    %c0_24 = arith.constant 0 : index
    %c0_25 = arith.constant 0 : index
    %30 = vector.load %arg15[%c0_23, %c0_24, %c0_25] : memref<1x128x1536xbf16, #tpu.memory_space<vmem>>, vector<1x128x1536xbf16>
    %31 = vector.shape_cast %30 : vector<1x128x1536xbf16> to vector<128x1536xbf16>
    %cst_26 = arith.constant dense<0.000000e+00> : vector<8x1536xf32>
    %32 = tpu.matmul %29, %31, %cst_26 {dimension_numbers = #tpu.dot_dimension_numbers<[1], [0], [0], [1], [0, 0, 1, 1], [], []>} : vector<8x128xbf16>, vector<128x1536xbf16>, vector<8x1536xf32> -> vector<8x1536xf32>
    %c0_27 = arith.constant 0 : index
    %c0_28 = arith.constant 0 : index
    %c0_29 = arith.constant 0 : index
    %33 = vector.load %arg18[%c0_27, %c0_28, %c0_29] : memref<1x1x3072xf32, #tpu.memory_space<vmem>>, vector<1x1x1536xf32>
    %34 = vector.shape_cast %33 : vector<1x1x1536xf32> to vector<1x1536xf32>
    %35 = vector.broadcast %34 : vector<1x1536xf32> to vector<8x1536xf32>
    %36 = arith.addf %32, %35 : vector<8x1536xf32>
    %37 = vector.extract_strided_slice %14 {offsets = [0, 0], sizes = [8, 1], strides = [1, 1]} : vector<8x2xf32> to vector<8x1xf32>
    %38 = vector.extract_strided_slice %36 {offsets = [0, 0], sizes = [8, 512], strides = [1, 1]} : vector<8x1536xf32> to vector<8x512xf32>
    %39 = vector.extract_strided_slice %36 {offsets = [0, 512], sizes = [8, 512], strides = [1, 1]} : vector<8x1536xf32> to vector<8x512xf32>
    %40 = vector.extract_strided_slice %36 {offsets = [0, 1024], sizes = [8, 512], strides = [1, 1]} : vector<8x1536xf32> to vector<8x512xf32>
    %c500_i32 = arith.constant 500 : i32
    %41 = vector.broadcast %c500_i32 : i32 to vector<8x512xi32>
    %42 = arith.cmpi slt, %5, %41 : vector<8x512xi32>
    %cst_30 = arith.constant -1.000000e+09 : f32
    %43 = vector.broadcast %cst_30 : f32 to vector<8x512xf32>
    %44 = arith.select %42, %38, %43 : vector<8x512xi1>, vector<8x512xf32>
    %cst_31 = arith.constant -1.000000e+09 : f32
    %45 = vector.broadcast %cst_31 : f32 to vector<8x512xf32>
    %46 = arith.select %42, %39, %45 : vector<8x512xi1>, vector<8x512xf32>
    %cst_32 = arith.constant dense<0xFF800000> : vector<8xf32>
    %47 = vector.multi_reduction <maximumf>, %44, %cst_32 [1] : vector<8x512xf32> to vector<8xf32>
    %48 = vector.shape_cast %47 : vector<8xf32> to vector<8x1xf32>
    %49 = vector.broadcast %48 : vector<8x1xf32> to vector<8x512xf32>
    %50 = arith.subf %44, %49 : vector<8x512xf32>
    %51 = math.exp %50 : vector<8x512xf32>
    %cst_33 = arith.constant dense<0.000000e+00> : vector<8xf32>
    %52 = vector.multi_reduction <add>, %51, %cst_33 [1] : vector<8x512xf32> to vector<8xf32>
    %53 = vector.shape_cast %52 : vector<8xf32> to vector<8x1xf32>
    %54 = vector.broadcast %53 : vector<8x1xf32> to vector<8x512xf32>
    %55 = arith.divf %51, %54 : vector<8x512xf32>
    %cst_34 = arith.constant 5.000000e-01 : f32
    %56 = vector.broadcast %cst_34 : f32 to vector<8x512xf32>
    %57 = arith.mulf %56, %55 : vector<8x512xf32>
    %cst_35 = arith.constant 1.000000e-03 : f32
    %58 = vector.broadcast %cst_35 : f32 to vector<8x512xf32>
    %59 = arith.addf %58, %57 : vector<8x512xf32>
    %cst_36 = arith.constant 2.000000e+02 : f32
    %60 = vector.broadcast %cst_36 : f32 to vector<8x512xf32>
    %61 = arith.mulf %59, %60 : vector<8x512xf32>
    %cst_37 = arith.constant dense<0xFF800000> : vector<8xf32>
    %62 = vector.multi_reduction <maximumf>, %46, %cst_37 [1] : vector<8x512xf32> to vector<8xf32>
    %63 = vector.shape_cast %62 : vector<8xf32> to vector<8x1xf32>
    %64 = vector.broadcast %63 : vector<8x1xf32> to vector<8x512xf32>
    %65 = arith.subf %46, %64 : vector<8x512xf32>
    %66 = math.exp %65 : vector<8x512xf32>
    %cst_38 = arith.constant dense<0.000000e+00> : vector<8xf32>
    %67 = vector.multi_reduction <add>, %66, %cst_38 [1] : vector<8x512xf32> to vector<8xf32>
    %68 = vector.shape_cast %67 : vector<8xf32> to vector<8x1xf32>
    %69 = vector.broadcast %68 : vector<8x1xf32> to vector<8x512xf32>
    %70 = arith.divf %66, %69 : vector<8x512xf32>
    %cst_39 = arith.constant 5.000000e-01 : f32
    %71 = vector.broadcast %cst_39 : f32 to vector<8x512xf32>
    %72 = arith.mulf %71, %70 : vector<8x512xf32>
    %cst_40 = arith.constant 1.000000e-03 : f32
    %73 = vector.broadcast %cst_40 : f32 to vector<8x512xf32>
    %74 = arith.addf %73, %72 : vector<8x512xf32>
    %cst_41 = arith.constant 2.000000e+02 : f32
    %75 = vector.broadcast %cst_41 : f32 to vector<8x512xf32>
    %76 = arith.mulf %74, %75 : vector<8x512xf32>
    %cst_42 = arith.constant 0.000000e+00 : f32
    %77 = vector.broadcast %cst_42 : f32 to vector<8x512xf32>
    %78 = arith.select %42, %61, %77 : vector<8x512xi1>, vector<8x512xf32>
    %cst_43 = arith.constant 0.000000e+00 : f32
    %79 = vector.broadcast %cst_43 : f32 to vector<8x512xf32>
    %80 = arith.select %42, %76, %79 : vector<8x512xi1>, vector<8x512xf32>
    %cst_44 = arith.constant 0.000000e+00 : f32
    %81 = vector.broadcast %cst_44 : f32 to vector<8x512xf32>
    %82 = arith.maximumf %40, %81 : vector<8x512xf32>
    %cst_45 = arith.constant 1.000000e-03 : f32
    %83 = vector.broadcast %cst_45 : f32 to vector<8x512xf32>
    %84 = arith.addf %83, %82 : vector<8x512xf32>
    %85 = math.absf %40 : vector<8x512xf32>
    %cst_46 = arith.constant 0.000000e+00 : f32
    %86 = vector.broadcast %cst_46 : f32 to vector<8x512xf32>
    %87 = arith.subf %86, %85 : vector<8x512xf32>
    %88 = math.exp %87 : vector<8x512xf32>
    %cst_47 = arith.constant 1.000000e+00 : f32
    %89 = vector.broadcast %cst_47 : f32 to vector<8x512xf32>
    %90 = arith.addf %89, %88 : vector<8x512xf32>
    %91 = math.log %90 : vector<8x512xf32>
    %92 = arith.addf %84, %91 : vector<8x512xf32>
    %93 = arith.truncf %80 : vector<8x512xf32> to vector<8x512xbf16>
    %cst_48 = arith.constant dense<0.000000e+00> : vector<8x512xf32>
    %94 = tpu.matmul %93, %4, %cst_48 {dimension_numbers = #tpu.dot_dimension_numbers<[1], [0], [0], [1], [0, 0, 1, 1], [], []>} : vector<8x512xbf16>, vector<512x512xbf16>, vector<8x512xf32> -> vector<8x512xf32>
    %cst_49 = arith.constant -1.000000e+02 : f32
    %95 = vector.broadcast %cst_49 : f32 to vector<8x1xf32>
    %96 = arith.cmpf ogt, %37, %95 : vector<8x1xf32>
    %cst_50 = arith.constant 1.000000e+02 : f32
    %97 = vector.broadcast %cst_50 : f32 to vector<8x1xf32>
    %98 = arith.cmpf olt, %37, %97 : vector<8x1xf32>
    %99 = arith.andi %96, %98 : vector<8x1xi1>
    %cst_51 = arith.constant -1.000000e+02 : f32
    %cst_52 = arith.constant 1.000000e+02 : f32
    %100 = vector.broadcast %cst_51 : f32 to vector<8x1xf32>
    %101 = arith.maximumf %100, %37 : vector<8x1xf32>
    %102 = vector.broadcast %cst_52 : f32 to vector<8x1xf32>
    %103 = arith.minimumf %102, %101 : vector<8x1xf32>
    %c498_i32 = arith.constant 498 : i32
    %104 = vector.broadcast %c498_i32 : i32 to vector<8x512xi32>
    %105 = arith.cmpi sle, %5, %104 : vector<8x512xi32>
    %cst_53 = arith.constant 1.000000e+02 : f32
    %106 = vector.broadcast %cst_53 : f32 to vector<8x512xf32>
    %107 = arith.subf %94, %106 : vector<8x512xf32>
    %108 = vector.broadcast %103 : vector<8x1xf32> to vector<8x512xf32>
    %109 = arith.cmpf ole, %107, %108 : vector<8x512xf32>
    %110 = arith.andi %105, %109 : vector<8x512xi1>
    %111 = arith.extui %110 : vector<8x512xi1> to vector<8x512xi32>
    %cst_54 = arith.constant dense<0> : vector<8xi32>
    %112 = vector.multi_reduction <add>, %111, %cst_54 [1] : vector<8x512xi32> to vector<8xi32>
    %113 = vector.shape_cast %112 : vector<8xi32> to vector<8x1xi32>
    %114 = vector.broadcast %113 : vector<8x1xi32> to vector<8x512xi32>
    %115 = arith.cmpi eq, %5, %114 : vector<8x512xi32>
    %116 = vector.broadcast %113 : vector<8x1xi32> to vector<8x512xi32>
    %117 = arith.cmpi slt, %5, %116 : vector<8x512xi32>
    %cst_55 = arith.constant 0.000000e+00 : f32
    %118 = vector.broadcast %cst_55 : f32 to vector<8x512xf32>
    %119 = arith.select %115, %78, %118 : vector<8x512xi1>, vector<8x512xf32>
    %cst_56 = arith.constant dense<0.000000e+00> : vector<8xf32>
    %120 = vector.multi_reduction <add>, %119, %cst_56 [1] : vector<8x512xf32> to vector<8xf32>
    %121 = vector.shape_cast %120 : vector<8xf32> to vector<8x1xf32>
    %cst_57 = arith.constant 0.000000e+00 : f32
    %122 = vector.broadcast %cst_57 : f32 to vector<8x512xf32>
    %123 = arith.select %115, %80, %122 : vector<8x512xi1>, vector<8x512xf32>
    %cst_58 = arith.constant dense<0.000000e+00> : vector<8xf32>
    %124 = vector.multi_reduction <add>, %123, %cst_58 [1] : vector<8x512xf32> to vector<8xf32>
    %125 = vector.shape_cast %124 : vector<8xf32> to vector<8x1xf32>
    %cst_59 = arith.constant 0.000000e+00 : f32
    %126 = vector.broadcast %cst_59 : f32 to vector<8x512xf32>
    %127 = arith.select %117, %78, %126 : vector<8x512xi1>, vector<8x512xf32>
    %cst_60 = arith.constant dense<0.000000e+00> : vector<8xf32>
    %128 = vector.multi_reduction <add>, %127, %cst_60 [1] : vector<8x512xf32> to vector<8xf32>
    %129 = vector.shape_cast %128 : vector<8xf32> to vector<8x1xf32>
    %cst_61 = arith.constant -1.000000e+02 : f32
    %130 = vector.broadcast %cst_61 : f32 to vector<8x1xf32>
    %131 = arith.addf %130, %129 : vector<8x1xf32>
    %cst_62 = arith.constant 0.000000e+00 : f32
    %132 = vector.broadcast %cst_62 : f32 to vector<8x512xf32>
    %133 = arith.select %117, %80, %132 : vector<8x512xi1>, vector<8x512xf32>
    %cst_63 = arith.constant dense<0.000000e+00> : vector<8xf32>
    %134 = vector.multi_reduction <add>, %133, %cst_63 [1] : vector<8x512xf32> to vector<8xf32>
    %135 = vector.shape_cast %134 : vector<8xf32> to vector<8x1xf32>
    %cst_64 = arith.constant -1.000000e+02 : f32
    %136 = vector.broadcast %cst_64 : f32 to vector<8x1xf32>
    %137 = arith.addf %136, %135 : vector<8x1xf32>
    %c499_i32 = arith.constant 499 : i32
    %138 = vector.broadcast %c499_i32 : i32 to vector<8x1xi32>
    %139 = arith.cmpi eq, %113, %138 : vector<8x1xi32>
    %cst_65 = arith.constant 0.000000e+00 : f32
    %140 = vector.broadcast %cst_65 : f32 to vector<8x512xf32>
    %141 = arith.select %115, %92, %140 : vector<8x512xi1>, vector<8x512xf32>
    %cst_66 = arith.constant dense<0.000000e+00> : vector<8xf32>
    %142 = vector.multi_reduction <add>, %141, %cst_66 [1] : vector<8x512xf32> to vector<8xf32>
    %143 = vector.shape_cast %142 : vector<8xf32> to vector<8x1xf32>
    %cst_67 = arith.constant 1.000000e+00 : f32
    %144 = vector.broadcast %cst_67 : f32 to vector<8x1xf32>
    %145 = arith.select %139, %144, %143 : vector<8x1xi1>, vector<8x1xf32>
    %c0_i32_68 = arith.constant 0 : i32
    %146 = vector.broadcast %c0_i32_68 : i32 to vector<8x1xi32>
    %147 = arith.cmpi eq, %113, %146 : vector<8x1xi32>
    %c1_i32 = arith.constant 1 : i32
    %148 = vector.broadcast %c1_i32 : i32 to vector<8x1xi32>
    %149 = arith.subi %113, %148 : vector<8x1xi32>
    %150 = vector.broadcast %149 : vector<8x1xi32> to vector<8x512xi32>
    %151 = arith.cmpi eq, %5, %150 : vector<8x512xi32>
    %cst_69 = arith.constant 0.000000e+00 : f32
    %152 = vector.broadcast %cst_69 : f32 to vector<8x512xf32>
    %153 = arith.select %151, %92, %152 : vector<8x512xi1>, vector<8x512xf32>
    %cst_70 = arith.constant dense<0.000000e+00> : vector<8xf32>
    %154 = vector.multi_reduction <add>, %153, %cst_70 [1] : vector<8x512xf32> to vector<8xf32>
    %155 = vector.shape_cast %154 : vector<8xf32> to vector<8x1xf32>
    %cst_71 = arith.constant 1.000000e+00 : f32
    %156 = vector.broadcast %cst_71 : f32 to vector<8x1xf32>
    %157 = arith.select %147, %156, %155 : vector<8x1xi1>, vector<8x1xf32>
    %158 = arith.divf %125, %121 : vector<8x1xf32>
    %159 = arith.subf %103, %137 : vector<8x1xf32>
    %160 = arith.addf %145, %157 : vector<8x1xf32>
    %cst_72 = arith.constant 2.000000e+00 : f32
    %161 = vector.broadcast %cst_72 : f32 to vector<8x1xf32>
    %162 = arith.mulf %161, %158 : vector<8x1xf32>
    %163 = arith.subf %160, %162 : vector<8x1xf32>
    %164 = arith.subf %158, %157 : vector<8x1xf32>
    %165 = arith.mulf %125, %164 : vector<8x1xf32>
    %166 = arith.mulf %159, %163 : vector<8x1xf32>
    %167 = arith.addf %165, %166 : vector<8x1xf32>
    %168 = arith.mulf %125, %157 : vector<8x1xf32>
    %169 = arith.mulf %159, %163 : vector<8x1xf32>
    %170 = arith.subf %168, %169 : vector<8x1xf32>
    %cst_73 = arith.constant 0.000000e+00 : f32
    %171 = vector.broadcast %cst_73 : f32 to vector<8x1xf32>
    %172 = arith.subf %171, %158 : vector<8x1xf32>
    %173 = arith.mulf %172, %159 : vector<8x1xf32>
    %174 = arith.mulf %170, %170 : vector<8x1xf32>
    %cst_74 = arith.constant 4.000000e+00 : f32
    %175 = vector.broadcast %cst_74 : f32 to vector<8x1xf32>
    %176 = arith.mulf %175, %167 : vector<8x1xf32>
    %177 = arith.mulf %176, %173 : vector<8x1xf32>
    %178 = arith.subf %174, %177 : vector<8x1xf32>
    %cst_75 = arith.constant 0.000000e+00 : f32
    %179 = vector.broadcast %cst_75 : f32 to vector<8x1xf32>
    %180 = arith.maximumf %178, %179 : vector<8x1xf32>
    %cst_76 = arith.constant 2.000000e+00 : f32
    %181 = vector.broadcast %cst_76 : f32 to vector<8x1xf32>
    %182 = arith.mulf %181, %173 : vector<8x1xf32>
    %cst_77 = arith.constant 0.000000e+00 : f32
    %183 = vector.broadcast %cst_77 : f32 to vector<8x1xf32>
    %184 = arith.subf %183, %170 : vector<8x1xf32>
    %185 = math.sqrt %180 : vector<8x1xf32>
    %186 = arith.subf %184, %185 : vector<8x1xf32>
    %187 = arith.divf %182, %186 : vector<8x1xf32>
    %188 = arith.mulf %187, %121 : vector<8x1xf32>
    %189 = arith.addf %131, %188 : vector<8x1xf32>
    %190 = arith.mulf %163, %187 : vector<8x1xf32>
    %cst_78 = arith.constant 1.000000e+00 : f32
    %191 = vector.broadcast %cst_78 : f32 to vector<8x1xf32>
    %192 = arith.subf %191, %187 : vector<8x1xf32>
    %193 = arith.mulf %190, %192 : vector<8x1xf32>
    %194 = arith.addf %158, %193 : vector<8x1xf32>
    %195 = arith.mulf %158, %158 : vector<8x1xf32>
    %196 = arith.mulf %145, %187 : vector<8x1xf32>
    %197 = arith.mulf %196, %187 : vector<8x1xf32>
    %cst_79 = arith.constant 2.000000e+00 : f32
    %198 = vector.broadcast %cst_79 : f32 to vector<8x1xf32>
    %199 = arith.mulf %198, %158 : vector<8x1xf32>
    %200 = arith.mulf %199, %187 : vector<8x1xf32>
    %cst_80 = arith.constant 1.000000e+00 : f32
    %201 = vector.broadcast %cst_80 : f32 to vector<8x1xf32>
    %202 = arith.subf %201, %187 : vector<8x1xf32>
    %203 = arith.mulf %200, %202 : vector<8x1xf32>
    %204 = arith.addf %197, %203 : vector<8x1xf32>
    %cst_81 = arith.constant 1.000000e+00 : f32
    %205 = vector.broadcast %cst_81 : f32 to vector<8x1xf32>
    %206 = arith.subf %205, %187 : vector<8x1xf32>
    %207 = arith.mulf %157, %206 : vector<8x1xf32>
    %cst_82 = arith.constant 1.000000e+00 : f32
    %208 = vector.broadcast %cst_82 : f32 to vector<8x1xf32>
    %209 = arith.subf %208, %187 : vector<8x1xf32>
    %210 = arith.mulf %207, %209 : vector<8x1xf32>
    %211 = arith.addf %204, %210 : vector<8x1xf32>
    %212 = arith.mulf %195, %211 : vector<8x1xf32>
    %213 = arith.mulf %194, %194 : vector<8x1xf32>
    %214 = arith.divf %212, %213 : vector<8x1xf32>
    %215 = arith.select %99, %189, %37 : vector<8x1xi1>, vector<8x1xf32>
    %216 = math.log %214 : vector<8x1xf32>
    %cst_83 = arith.constant 0.000000e+00 : f32
    %217 = vector.broadcast %cst_83 : f32 to vector<8x1xf32>
    %218 = arith.select %99, %216, %217 : vector<8x1xi1>, vector<8x1xf32>
    %219 = vector.extract_strided_slice %13 {offsets = [0, 128], sizes = [8, 128], strides = [1, 1]} : vector<8x256xf32> to vector<8x128xf32>
    %c0_84 = arith.constant 0 : index
    %c0_85 = arith.constant 0 : index
    %c0_86 = arith.constant 0 : index
    %220 = vector.load %arg8[%c0_84, %c0_85, %c0_86] : memref<1x1x128xf32, #tpu.memory_space<vmem>>, vector<1x1x128xf32>
    %221 = vector.shape_cast %220 : vector<1x1x128xf32> to vector<1x128xf32>
    %222 = vector.broadcast %215 : vector<8x1xf32> to vector<8x128xf32>
    %223 = vector.broadcast %221 : vector<1x128xf32> to vector<8x128xf32>
    %224 = arith.mulf %222, %223 : vector<8x128xf32>
    %225 = arith.addf %219, %224 : vector<8x128xf32>
    %cst_87 = arith.constant 0.000000e+00 : f32
    %226 = vector.broadcast %cst_87 : f32 to vector<8x128xf32>
    %227 = arith.maximumf %225, %226 : vector<8x128xf32>
    %c0_88 = arith.constant 0 : index
    %c0_89 = arith.constant 0 : index
    %c0_90 = arith.constant 0 : index
    %228 = vector.load %arg12[%c0_88, %c0_89, %c0_90] : memref<1x128x128xbf16, #tpu.memory_space<vmem>>, vector<1x128x128xbf16>
    %229 = vector.shape_cast %228 : vector<1x128x128xbf16> to vector<128x128xbf16>
    %cst_91 = arith.constant dense<0.000000e+00> : vector<8x128xf32>
    %230 = tpu.matmul %19, %229, %cst_91 {dimension_numbers = #tpu.dot_dimension_numbers<[1], [0], [0], [1], [0, 0, 1, 1], [], []>} : vector<8x128xbf16>, vector<128x128xbf16>, vector<8x128xf32> -> vector<8x128xf32>
    %231 = arith.truncf %227 : vector<8x128xf32> to vector<8x128xbf16>
    %c0_92 = arith.constant 0 : index
    %c0_93 = arith.constant 0 : index
    %c0_94 = arith.constant 0 : index
    %232 = vector.load %arg13[%c0_92, %c0_93, %c0_94] : memref<1x128x128xbf16, #tpu.memory_space<vmem>>, vector<1x128x128xbf16>
    %233 = vector.shape_cast %232 : vector<1x128x128xbf16> to vector<128x128xbf16>
    %cst_95 = arith.constant dense<0.000000e+00> : vector<8x128xf32>
    %234 = tpu.matmul %231, %233, %cst_95 {dimension_numbers = #tpu.dot_dimension_numbers<[1], [0], [0], [1], [0, 0, 1, 1], [], []>} : vector<8x128xbf16>, vector<128x128xbf16>, vector<8x128xf32> -> vector<8x128xf32>
    %235 = arith.addf %230, %234 : vector<8x128xf32>
    %c0_96 = arith.constant 0 : index
    %c0_97 = arith.constant 0 : index
    %c128 = arith.constant 128 : index
    %236 = vector.load %arg14[%c0_96, %c0_97, %c128] : memref<1x1x256xf32, #tpu.memory_space<vmem>>, vector<1x1x128xf32>
    %237 = vector.shape_cast %236 : vector<1x1x128xf32> to vector<1x128xf32>
    %238 = vector.broadcast %237 : vector<1x128xf32> to vector<8x128xf32>
    %239 = arith.addf %235, %238 : vector<8x128xf32>
    %cst_98 = arith.constant 0.000000e+00 : f32
    %240 = vector.broadcast %cst_98 : f32 to vector<8x128xf32>
    %241 = arith.maximumf %239, %240 : vector<8x128xf32>
    %c0_99 = arith.constant 0 : index
    %c0_100 = arith.constant 0 : index
    %c0_101 = arith.constant 0 : index
    %242 = vector.load %arg16[%c0_99, %c0_100, %c0_101] : memref<1x128x1536xbf16, #tpu.memory_space<vmem>>, vector<1x128x1536xbf16>
    %243 = vector.shape_cast %242 : vector<1x128x1536xbf16> to vector<128x1536xbf16>
    %cst_102 = arith.constant dense<0.000000e+00> : vector<8x1536xf32>
    %244 = tpu.matmul %29, %243, %cst_102 {dimension_numbers = #tpu.dot_dimension_numbers<[1], [0], [0], [1], [0, 0, 1, 1], [], []>} : vector<8x128xbf16>, vector<128x1536xbf16>, vector<8x1536xf32> -> vector<8x1536xf32>
    %245 = arith.truncf %241 : vector<8x128xf32> to vector<8x128xbf16>
    %c0_103 = arith.constant 0 : index
    %c0_104 = arith.constant 0 : index
    %c0_105 = arith.constant 0 : index
    %246 = vector.load %arg17[%c0_103, %c0_104, %c0_105] : memref<1x128x1536xbf16, #tpu.memory_space<vmem>>, vector<1x128x1536xbf16>
    %247 = vector.shape_cast %246 : vector<1x128x1536xbf16> to vector<128x1536xbf16>
    %cst_106 = arith.constant dense<0.000000e+00> : vector<8x1536xf32>
    %248 = tpu.matmul %245, %247, %cst_106 {dimension_numbers = #tpu.dot_dimension_numbers<[1], [0], [0], [1], [0, 0, 1, 1], [], []>} : vector<8x128xbf16>, vector<128x1536xbf16>, vector<8x1536xf32> -> vector<8x1536xf32>
    %249 = arith.addf %244, %248 : vector<8x1536xf32>
    %c0_107 = arith.constant 0 : index
    %c0_108 = arith.constant 0 : index
    %c1536 = arith.constant 1536 : index
    %250 = vector.load %arg18[%c0_107, %c0_108, %c1536] : memref<1x1x3072xf32, #tpu.memory_space<vmem>>, vector<1x1x1536xf32>
    %251 = vector.shape_cast %250 : vector<1x1x1536xf32> to vector<1x1536xf32>
    %252 = vector.broadcast %251 : vector<1x1536xf32> to vector<8x1536xf32>
    %253 = arith.addf %249, %252 : vector<8x1536xf32>
    %254 = vector.extract_strided_slice %14 {offsets = [0, 1], sizes = [8, 1], strides = [1, 1]} : vector<8x2xf32> to vector<8x1xf32>
    %255 = vector.extract_strided_slice %253 {offsets = [0, 0], sizes = [8, 512], strides = [1, 1]} : vector<8x1536xf32> to vector<8x512xf32>
    %256 = vector.extract_strided_slice %253 {offsets = [0, 512], sizes = [8, 512], strides = [1, 1]} : vector<8x1536xf32> to vector<8x512xf32>
    %257 = vector.extract_strided_slice %253 {offsets = [0, 1024], sizes = [8, 512], strides = [1, 1]} : vector<8x1536xf32> to vector<8x512xf32>
    %c500_i32_109 = arith.constant 500 : i32
    %258 = vector.broadcast %c500_i32_109 : i32 to vector<8x512xi32>
    %259 = arith.cmpi slt, %5, %258 : vector<8x512xi32>
    %cst_110 = arith.constant -1.000000e+09 : f32
    %260 = vector.broadcast %cst_110 : f32 to vector<8x512xf32>
    %261 = arith.select %259, %255, %260 : vector<8x512xi1>, vector<8x512xf32>
    %cst_111 = arith.constant -1.000000e+09 : f32
    %262 = vector.broadcast %cst_111 : f32 to vector<8x512xf32>
    %263 = arith.select %259, %256, %262 : vector<8x512xi1>, vector<8x512xf32>
    %cst_112 = arith.constant dense<0xFF800000> : vector<8xf32>
    %264 = vector.multi_reduction <maximumf>, %261, %cst_112 [1] : vector<8x512xf32> to vector<8xf32>
    %265 = vector.shape_cast %264 : vector<8xf32> to vector<8x1xf32>
    %266 = vector.broadcast %265 : vector<8x1xf32> to vector<8x512xf32>
    %267 = arith.subf %261, %266 : vector<8x512xf32>
    %268 = math.exp %267 : vector<8x512xf32>
    %cst_113 = arith.constant dense<0.000000e+00> : vector<8xf32>
    %269 = vector.multi_reduction <add>, %268, %cst_113 [1] : vector<8x512xf32> to vector<8xf32>
    %270 = vector.shape_cast %269 : vector<8xf32> to vector<8x1xf32>
    %271 = vector.broadcast %270 : vector<8x1xf32> to vector<8x512xf32>
    %272 = arith.divf %268, %271 : vector<8x512xf32>
    %cst_114 = arith.constant 5.000000e-01 : f32
    %273 = vector.broadcast %cst_114 : f32 to vector<8x512xf32>
    %274 = arith.mulf %273, %272 : vector<8x512xf32>
    %cst_115 = arith.constant 1.000000e-03 : f32
    %275 = vector.broadcast %cst_115 : f32 to vector<8x512xf32>
    %276 = arith.addf %275, %274 : vector<8x512xf32>
    %cst_116 = arith.constant 2.000000e+02 : f32
    %277 = vector.broadcast %cst_116 : f32 to vector<8x512xf32>
    %278 = arith.mulf %276, %277 : vector<8x512xf32>
    %cst_117 = arith.constant dense<0xFF800000> : vector<8xf32>
    %279 = vector.multi_reduction <maximumf>, %263, %cst_117 [1] : vector<8x512xf32> to vector<8xf32>
    %280 = vector.shape_cast %279 : vector<8xf32> to vector<8x1xf32>
    %281 = vector.broadcast %280 : vector<8x1xf32> to vector<8x512xf32>
    %282 = arith.subf %263, %281 : vector<8x512xf32>
    %283 = math.exp %282 : vector<8x512xf32>
    %cst_118 = arith.constant dense<0.000000e+00> : vector<8xf32>
    %284 = vector.multi_reduction <add>, %283, %cst_118 [1] : vector<8x512xf32> to vector<8xf32>
    %285 = vector.shape_cast %284 : vector<8xf32> to vector<8x1xf32>
    %286 = vector.broadcast %285 : vector<8x1xf32> to vector<8x512xf32>
    %287 = arith.divf %283, %286 : vector<8x512xf32>
    %cst_119 = arith.constant 5.000000e-01 : f32
    %288 = vector.broadcast %cst_119 : f32 to vector<8x512xf32>
    %289 = arith.mulf %288, %287 : vector<8x512xf32>
    %cst_120 = arith.constant 1.000000e-03 : f32
    %290 = vector.broadcast %cst_120 : f32 to vector<8x512xf32>
    %291 = arith.addf %290, %289 : vector<8x512xf32>
    %cst_121 = arith.constant 2.000000e+02 : f32
    %292 = vector.broadcast %cst_121 : f32 to vector<8x512xf32>
    %293 = arith.mulf %291, %292 : vector<8x512xf32>
    %cst_122 = arith.constant 0.000000e+00 : f32
    %294 = vector.broadcast %cst_122 : f32 to vector<8x512xf32>
    %295 = arith.select %259, %278, %294 : vector<8x512xi1>, vector<8x512xf32>
    %cst_123 = arith.constant 0.000000e+00 : f32
    %296 = vector.broadcast %cst_123 : f32 to vector<8x512xf32>
    %297 = arith.select %259, %293, %296 : vector<8x512xi1>, vector<8x512xf32>
    %cst_124 = arith.constant 0.000000e+00 : f32
    %298 = vector.broadcast %cst_124 : f32 to vector<8x512xf32>
    %299 = arith.maximumf %257, %298 : vector<8x512xf32>
    %cst_125 = arith.constant 1.000000e-03 : f32
    %300 = vector.broadcast %cst_125 : f32 to vector<8x512xf32>
    %301 = arith.addf %300, %299 : vector<8x512xf32>
    %302 = math.absf %257 : vector<8x512xf32>
    %cst_126 = arith.constant 0.000000e+00 : f32
    %303 = vector.broadcast %cst_126 : f32 to vector<8x512xf32>
    %304 = arith.subf %303, %302 : vector<8x512xf32>
    %305 = math.exp %304 : vector<8x512xf32>
    %cst_127 = arith.constant 1.000000e+00 : f32
    %306 = vector.broadcast %cst_127 : f32 to vector<8x512xf32>
    %307 = arith.addf %306, %305 : vector<8x512xf32>
    %308 = math.log %307 : vector<8x512xf32>
    %309 = arith.addf %301, %308 : vector<8x512xf32>
    %310 = arith.truncf %297 : vector<8x512xf32> to vector<8x512xbf16>
    %cst_128 = arith.constant dense<0.000000e+00> : vector<8x512xf32>
    %311 = tpu.matmul %310, %4, %cst_128 {dimension_numbers = #tpu.dot_dimension_numbers<[1], [0], [0], [1], [0, 0, 1, 1], [], []>} : vector<8x512xbf16>, vector<512x512xbf16>, vector<8x512xf32> -> vector<8x512xf32>
    %cst_129 = arith.constant -1.000000e+02 : f32
    %312 = vector.broadcast %cst_129 : f32 to vector<8x1xf32>
    %313 = arith.cmpf ogt, %254, %312 : vector<8x1xf32>
    %cst_130 = arith.constant 1.000000e+02 : f32
    %314 = vector.broadcast %cst_130 : f32 to vector<8x1xf32>
    %315 = arith.cmpf olt, %254, %314 : vector<8x1xf32>
    %316 = arith.andi %313, %315 : vector<8x1xi1>
    %cst_131 = arith.constant -1.000000e+02 : f32
    %cst_132 = arith.constant 1.000000e+02 : f32
    %317 = vector.broadcast %cst_131 : f32 to vector<8x1xf32>
    %318 = arith.maximumf %317, %254 : vector<8x1xf32>
    %319 = vector.broadcast %cst_132 : f32 to vector<8x1xf32>
    %320 = arith.minimumf %319, %318 : vector<8x1xf32>
    %c498_i32_133 = arith.constant 498 : i32
    %321 = vector.broadcast %c498_i32_133 : i32 to vector<8x512xi32>
    %322 = arith.cmpi sle, %5, %321 : vector<8x512xi32>
    %cst_134 = arith.constant 1.000000e+02 : f32
    %323 = vector.broadcast %cst_134 : f32 to vector<8x512xf32>
    %324 = arith.subf %311, %323 : vector<8x512xf32>
    %325 = vector.broadcast %320 : vector<8x1xf32> to vector<8x512xf32>
    %326 = arith.cmpf ole, %324, %325 : vector<8x512xf32>
    %327 = arith.andi %322, %326 : vector<8x512xi1>
    %328 = arith.extui %327 : vector<8x512xi1> to vector<8x512xi32>
    %cst_135 = arith.constant dense<0> : vector<8xi32>
    %329 = vector.multi_reduction <add>, %328, %cst_135 [1] : vector<8x512xi32> to vector<8xi32>
    %330 = vector.shape_cast %329 : vector<8xi32> to vector<8x1xi32>
    %331 = vector.broadcast %330 : vector<8x1xi32> to vector<8x512xi32>
    %332 = arith.cmpi eq, %5, %331 : vector<8x512xi32>
    %333 = vector.broadcast %330 : vector<8x1xi32> to vector<8x512xi32>
    %334 = arith.cmpi slt, %5, %333 : vector<8x512xi32>
    %cst_136 = arith.constant 0.000000e+00 : f32
    %335 = vector.broadcast %cst_136 : f32 to vector<8x512xf32>
    %336 = arith.select %332, %295, %335 : vector<8x512xi1>, vector<8x512xf32>
    %cst_137 = arith.constant dense<0.000000e+00> : vector<8xf32>
    %337 = vector.multi_reduction <add>, %336, %cst_137 [1] : vector<8x512xf32> to vector<8xf32>
    %338 = vector.shape_cast %337 : vector<8xf32> to vector<8x1xf32>
    %cst_138 = arith.constant 0.000000e+00 : f32
    %339 = vector.broadcast %cst_138 : f32 to vector<8x512xf32>
    %340 = arith.select %332, %297, %339 : vector<8x512xi1>, vector<8x512xf32>
    %cst_139 = arith.constant dense<0.000000e+00> : vector<8xf32>
    %341 = vector.multi_reduction <add>, %340, %cst_139 [1] : vector<8x512xf32> to vector<8xf32>
    %342 = vector.shape_cast %341 : vector<8xf32> to vector<8x1xf32>
    %cst_140 = arith.constant 0.000000e+00 : f32
    %343 = vector.broadcast %cst_140 : f32 to vector<8x512xf32>
    %344 = arith.select %334, %295, %343 : vector<8x512xi1>, vector<8x512xf32>
    %cst_141 = arith.constant dense<0.000000e+00> : vector<8xf32>
    %345 = vector.multi_reduction <add>, %344, %cst_141 [1] : vector<8x512xf32> to vector<8xf32>
    %346 = vector.shape_cast %345 : vector<8xf32> to vector<8x1xf32>
    %cst_142 = arith.constant -1.000000e+02 : f32
    %347 = vector.broadcast %cst_142 : f32 to vector<8x1xf32>
    %348 = arith.addf %347, %346 : vector<8x1xf32>
    %cst_143 = arith.constant 0.000000e+00 : f32
    %349 = vector.broadcast %cst_143 : f32 to vector<8x512xf32>
    %350 = arith.select %334, %297, %349 : vector<8x512xi1>, vector<8x512xf32>
    %cst_144 = arith.constant dense<0.000000e+00> : vector<8xf32>
    %351 = vector.multi_reduction <add>, %350, %cst_144 [1] : vector<8x512xf32> to vector<8xf32>
    %352 = vector.shape_cast %351 : vector<8xf32> to vector<8x1xf32>
    %cst_145 = arith.constant -1.000000e+02 : f32
    %353 = vector.broadcast %cst_145 : f32 to vector<8x1xf32>
    %354 = arith.addf %353, %352 : vector<8x1xf32>
    %c499_i32_146 = arith.constant 499 : i32
    %355 = vector.broadcast %c499_i32_146 : i32 to vector<8x1xi32>
    %356 = arith.cmpi eq, %330, %355 : vector<8x1xi32>
    %cst_147 = arith.constant 0.000000e+00 : f32
    %357 = vector.broadcast %cst_147 : f32 to vector<8x512xf32>
    %358 = arith.select %332, %309, %357 : vector<8x512xi1>, vector<8x512xf32>
    %cst_148 = arith.constant dense<0.000000e+00> : vector<8xf32>
    %359 = vector.multi_reduction <add>, %358, %cst_148 [1] : vector<8x512xf32> to vector<8xf32>
    %360 = vector.shape_cast %359 : vector<8xf32> to vector<8x1xf32>
    %cst_149 = arith.constant 1.000000e+00 : f32
    %361 = vector.broadcast %cst_149 : f32 to vector<8x1xf32>
    %362 = arith.select %356, %361, %360 : vector<8x1xi1>, vector<8x1xf32>
    %c0_i32_150 = arith.constant 0 : i32
    %363 = vector.broadcast %c0_i32_150 : i32 to vector<8x1xi32>
    %364 = arith.cmpi eq, %330, %363 : vector<8x1xi32>
    %c1_i32_151 = arith.constant 1 : i32
    %365 = vector.broadcast %c1_i32_151 : i32 to vector<8x1xi32>
    %366 = arith.subi %330, %365 : vector<8x1xi32>
    %367 = vector.broadcast %366 : vector<8x1xi32> to vector<8x512xi32>
    %368 = arith.cmpi eq, %5, %367 : vector<8x512xi32>
    %cst_152 = arith.constant 0.000000e+00 : f32
    %369 = vector.broadcast %cst_152 : f32 to vector<8x512xf32>
    %370 = arith.select %368, %309, %369 : vector<8x512xi1>, vector<8x512xf32>
    %cst_153 = arith.constant dense<0.000000e+00> : vector<8xf32>
    %371 = vector.multi_reduction <add>, %370, %cst_153 [1] : vector<8x512xf32> to vector<8xf32>
    %372 = vector.shape_cast %371 : vector<8xf32> to vector<8x1xf32>
    %cst_154 = arith.constant 1.000000e+00 : f32
    %373 = vector.broadcast %cst_154 : f32 to vector<8x1xf32>
    %374 = arith.select %364, %373, %372 : vector<8x1xi1>, vector<8x1xf32>
    %375 = arith.divf %342, %338 : vector<8x1xf32>
    %376 = arith.subf %320, %354 : vector<8x1xf32>
    %377 = arith.addf %362, %374 : vector<8x1xf32>
    %cst_155 = arith.constant 2.000000e+00 : f32
    %378 = vector.broadcast %cst_155 : f32 to vector<8x1xf32>
    %379 = arith.mulf %378, %375 : vector<8x1xf32>
    %380 = arith.subf %377, %379 : vector<8x1xf32>
    %381 = arith.subf %375, %374 : vector<8x1xf32>
    %382 = arith.mulf %342, %381 : vector<8x1xf32>
    %383 = arith.mulf %376, %380 : vector<8x1xf32>
    %384 = arith.addf %382, %383 : vector<8x1xf32>
    %385 = arith.mulf %342, %374 : vector<8x1xf32>
    %386 = arith.mulf %376, %380 : vector<8x1xf32>
    %387 = arith.subf %385, %386 : vector<8x1xf32>
    %cst_156 = arith.constant 0.000000e+00 : f32
    %388 = vector.broadcast %cst_156 : f32 to vector<8x1xf32>
    %389 = arith.subf %388, %375 : vector<8x1xf32>
    %390 = arith.mulf %389, %376 : vector<8x1xf32>
    %391 = arith.mulf %387, %387 : vector<8x1xf32>
    %cst_157 = arith.constant 4.000000e+00 : f32
    %392 = vector.broadcast %cst_157 : f32 to vector<8x1xf32>
    %393 = arith.mulf %392, %384 : vector<8x1xf32>
    %394 = arith.mulf %393, %390 : vector<8x1xf32>
    %395 = arith.subf %391, %394 : vector<8x1xf32>
    %cst_158 = arith.constant 0.000000e+00 : f32
    %396 = vector.broadcast %cst_158 : f32 to vector<8x1xf32>
    %397 = arith.maximumf %395, %396 : vector<8x1xf32>
    %cst_159 = arith.constant 2.000000e+00 : f32
    %398 = vector.broadcast %cst_159 : f32 to vector<8x1xf32>
    %399 = arith.mulf %398, %390 : vector<8x1xf32>
    %cst_160 = arith.constant 0.000000e+00 : f32
    %400 = vector.broadcast %cst_160 : f32 to vector<8x1xf32>
    %401 = arith.subf %400, %387 : vector<8x1xf32>
    %402 = math.sqrt %397 : vector<8x1xf32>
    %403 = arith.subf %401, %402 : vector<8x1xf32>
    %404 = arith.divf %399, %403 : vector<8x1xf32>
    %405 = arith.mulf %404, %338 : vector<8x1xf32>
    %406 = arith.addf %348, %405 : vector<8x1xf32>
    %407 = arith.mulf %380, %404 : vector<8x1xf32>
    %cst_161 = arith.constant 1.000000e+00 : f32
    %408 = vector.broadcast %cst_161 : f32 to vector<8x1xf32>
    %409 = arith.subf %408, %404 : vector<8x1xf32>
    %410 = arith.mulf %407, %409 : vector<8x1xf32>
    %411 = arith.addf %375, %410 : vector<8x1xf32>
    %412 = arith.mulf %375, %375 : vector<8x1xf32>
    %413 = arith.mulf %362, %404 : vector<8x1xf32>
    %414 = arith.mulf %413, %404 : vector<8x1xf32>
    %cst_162 = arith.constant 2.000000e+00 : f32
    %415 = vector.broadcast %cst_162 : f32 to vector<8x1xf32>
    %416 = arith.mulf %415, %375 : vector<8x1xf32>
    %417 = arith.mulf %416, %404 : vector<8x1xf32>
    %cst_163 = arith.constant 1.000000e+00 : f32
    %418 = vector.broadcast %cst_163 : f32 to vector<8x1xf32>
    %419 = arith.subf %418, %404 : vector<8x1xf32>
    %420 = arith.mulf %417, %419 : vector<8x1xf32>
    %421 = arith.addf %414, %420 : vector<8x1xf32>
    %cst_164 = arith.constant 1.000000e+00 : f32
    %422 = vector.broadcast %cst_164 : f32 to vector<8x1xf32>
    %423 = arith.subf %422, %404 : vector<8x1xf32>
    %424 = arith.mulf %374, %423 : vector<8x1xf32>
    %cst_165 = arith.constant 1.000000e+00 : f32
    %425 = vector.broadcast %cst_165 : f32 to vector<8x1xf32>
    %426 = arith.subf %425, %404 : vector<8x1xf32>
    %427 = arith.mulf %424, %426 : vector<8x1xf32>
    %428 = arith.addf %421, %427 : vector<8x1xf32>
    %429 = arith.mulf %412, %428 : vector<8x1xf32>
    %430 = arith.mulf %411, %411 : vector<8x1xf32>
    %431 = arith.divf %429, %430 : vector<8x1xf32>
    %432 = arith.select %316, %406, %254 : vector<8x1xi1>, vector<8x1xf32>
    %433 = math.log %431 : vector<8x1xf32>
    %cst_166 = arith.constant 0.000000e+00 : f32
    %434 = vector.broadcast %cst_166 : f32 to vector<8x1xf32>
    %435 = arith.select %316, %433, %434 : vector<8x1xi1>, vector<8x1xf32>
    %436 = tpu.iota {dimensions = array<i32: 1>} : vector<8x2xi32>
    %c0_i32_167 = arith.constant 0 : i32
    %437 = vector.broadcast %c0_i32_167 : i32 to vector<8x2xi32>
    %438 = arith.cmpi eq, %436, %437 : vector<8x2xi32>
    %439 = vector.shape_cast %215 : vector<8x1xf32> to vector<8x1xf32>
    %440 = vector.broadcast %439 : vector<8x1xf32> to vector<8x2xf32>
    %441 = vector.shape_cast %432 : vector<8x1xf32> to vector<8x1xf32>
    %442 = vector.broadcast %441 : vector<8x1xf32> to vector<8x2xf32>
    %443 = arith.select %438, %440, %442 : vector<8x2xi1>, vector<8x2xf32>
    %444 = arith.addf %15, %218 : vector<8x1xf32>
    %445 = arith.addf %444, %435 : vector<8x1xf32>
    %c0_168 = arith.constant 0 : index
    %c0_169 = arith.constant 0 : index
    %446 = vector.load %arg23[%c0_168, %c0_169] : memref<8x2xf32, #tpu.memory_space<vmem>>, vector<8x2xf32>
    tpu.vector_store %arg23[%c0_168, %c0_169], %443 {strides = array<i32>} : memref<8x2xf32, #tpu.memory_space<vmem>>, vector<8x2xf32>,
    %c0_170 = arith.constant 0 : index
    %c0_171 = arith.constant 0 : index
    %447 = vector.load %arg24[%c0_170, %c0_171] : memref<8x1xf32, #tpu.memory_space<vmem>>, vector<8x1xf32>
    tpu.vector_store %arg24[%c0_170, %c0_171], %445 {strides = array<i32>} : memref<8x1xf32, #tpu.memory_space<vmem>>, vector<8x1xf32>,
    %c4_i32 = arith.constant 4 : i32
    %448 = arith.cmpi eq, %arg0, %c4_i32 : i32
    %449 = arith.extui %448 : i1 to i32
    %c0_i32_172 = arith.constant 0 : i32
    %450 = arith.cmpi ne, %449, %c0_i32_172 : i32
    scf.if %450 {
      %c0_173 = arith.constant 0 : index
      %c0_174 = arith.constant 0 : index
      %451 = vector.load %arg7[%c0_173, %c0_174] : memref<2x2xf32, #tpu.memory_space<vmem>>, vector<1x2xf32>
      %c1 = arith.constant 1 : index
      %c0_175 = arith.constant 0 : index
      %452 = vector.load %arg7[%c1, %c0_175] : memref<2x2xf32, #tpu.memory_space<vmem>>, vector<1x2xf32>
      %453 = vector.broadcast %451 : vector<1x2xf32> to vector<8x2xf32>
      %454 = arith.subf %443, %453 : vector<8x2xf32>
      %455 = vector.broadcast %452 : vector<1x2xf32> to vector<8x2xf32>
      %456 = arith.divf %454, %455 : vector<8x2xf32>
      %cst_176 = arith.constant -5.000000e-01 : f32
      %457 = vector.broadcast %cst_176 : f32 to vector<8x2xf32>
      %458 = arith.mulf %457, %456 : vector<8x2xf32>
      %459 = arith.mulf %458, %456 : vector<8x2xf32>
      %460 = math.log %452 : vector<1x2xf32>
      %461 = vector.broadcast %460 : vector<1x2xf32> to vector<8x2xf32>
      %462 = arith.subf %459, %461 : vector<8x2xf32>
      %cst_177 = arith.constant 0.918938517 : f32
      %463 = vector.broadcast %cst_177 : f32 to vector<8x2xf32>
      %464 = arith.subf %462, %463 : vector<8x2xf32>
      %cst_178 = arith.constant dense<0.000000e+00> : vector<8xf32>
      %465 = vector.multi_reduction <add>, %464, %cst_178 [1] : vector<8x2xf32> to vector<8xf32>
      %466 = vector.shape_cast %465 : vector<8xf32> to vector<8x1xf32>
      %467 = arith.subf %466, %445 : vector<8x1xf32>
      %468 = vector.shape_cast %467 : vector<8x1xf32> to vector<1x8x1xf32>
      %cst_179 = arith.constant dense<0.000000e+00> : vector<1xf32>
      %469 = vector.multi_reduction <add>, %468, %cst_179 [1, 2] : vector<1x8x1xf32> to vector<1xf32>
      %470 = vector.shape_cast %469 : vector<1xf32> to vector<1x1x1xf32>
      %471 = vector.extract %470[0, 0, 0] : f32 from vector<1x1x1xf32>
      %cst_180 = arith.constant 8.000000e+00 : f32
      %472 = arith.divf %471, %cst_180 : f32
      %cst_181 = arith.constant 0.000000e+00 : f32
      %473 = arith.subf %cst_181, %472 : f32
      %cst_182 = arith.constant 1.000000e+00 : f32
      %474 = vector.broadcast %cst_182 : f32 to vector<1x1xf32>
      %475 = vector.broadcast %473 : f32 to vector<1x1xf32>
      %476 = arith.mulf %475, %474 : vector<1x1xf32>
      %c0_183 = arith.constant 0 : index
      %c0_184 = arith.constant 0 : index
      %477 = vector.load %arg19[%c0_183, %c0_184] : memref<1x1xf32, #tpu.memory_space<vmem>>, vector<1x1xf32>
      tpu.vector_store %arg19[%c0_183, %c0_184], %476 {strides = array<i32>} : memref<1x1xf32, #tpu.memory_space<vmem>>, vector<1x1xf32>,
      %c0_185 = arith.constant 0 : index
      %c0_186 = arith.constant 0 : index
      %478 = vector.load %arg22[%c0_185, %c0_186] : memref<8x256xf32, #tpu.memory_space<vmem>>, vector<8x256xf32>
      %c0_187 = arith.constant 0 : index
      %c0_188 = arith.constant 0 : index
      %479 = vector.load %arg20[%c0_187, %c0_188] : memref<8x256xf32, #tpu.memory_space<vmem>>, vector<8x256xf32>
      tpu.vector_store %arg20[%c0_187, %c0_188], %478 {strides = array<i32>} : memref<8x256xf32, #tpu.memory_space<vmem>>, vector<8x256xf32>,
      %c0_189 = arith.constant 0 : index
      %c0_190 = arith.constant 0 : index
      %480 = vector.load %arg5[%c0_189, %c0_190] : memref<4x256xf32, #tpu.memory_space<vmem>>, vector<1x256xf32>
      %481 = vector.broadcast %480 : vector<1x256xf32> to vector<8x256xf32>
      %482 = arith.mulf %478, %481 : vector<8x256xf32>
      %c1_191 = arith.constant 1 : index
      %c0_192 = arith.constant 0 : index
      %483 = vector.load %arg5[%c1_191, %c0_192] : memref<4x256xf32, #tpu.memory_space<vmem>>, vector<1x256xf32>
      %484 = vector.broadcast %483 : vector<1x256xf32> to vector<8x256xf32>
      %485 = arith.addf %482, %484 : vector<8x256xf32>
      %cst_193 = arith.constant 0.000000e+00 : f32
      %486 = vector.broadcast %cst_193 : f32 to vector<8x256xf32>
      %487 = arith.maximumf %485, %486 : vector<8x256xf32>
      %c2 = arith.constant 2 : index
      %c0_194 = arith.constant 0 : index
      %488 = vector.load %arg5[%c2, %c0_194] : memref<4x256xf32, #tpu.memory_space<vmem>>, vector<1x256xf32>
      %489 = vector.broadcast %488 : vector<1x256xf32> to vector<8x256xf32>
      %490 = arith.mulf %487, %489 : vector<8x256xf32>
      %c3 = arith.constant 3 : index
      %c0_195 = arith.constant 0 : index
      %491 = vector.load %arg5[%c3, %c0_195] : memref<4x256xf32, #tpu.memory_space<vmem>>, vector<1x256xf32>
      %492 = vector.broadcast %491 : vector<1x256xf32> to vector<8x256xf32>
      %493 = arith.addf %490, %492 : vector<8x256xf32>
      %c0_196 = arith.constant 0 : index
      %c0_197 = arith.constant 0 : index
      %494 = vector.load %arg21[%c0_196, %c0_197] : memref<8x256xf32, #tpu.memory_space<vmem>>, vector<8x256xf32>
      tpu.vector_store %arg21[%c0_196, %c0_197], %493 {strides = array<i32>} : memref<8x256xf32, #tpu.memory_space<vmem>>, vector<8x256xf32>,
    } else {
    }
    return
  }
  func.func @transform_0(%arg0: i32) -> (i32, i32) {
    %c0_i32 = arith.constant 0 : i32
    %c0_i32_0 = arith.constant 0 : i32
    %c0_i32_1 = arith.constant 0 : i32
    return %c0_i32, %c0_i32_0 : i32, i32
  }
  func.func @transform_1(%arg0: i32) -> (i32, i32) {
    %c0_i32 = arith.constant 0 : i32
    %c0_i32_0 = arith.constant 0 : i32
    %c0_i32_1 = arith.constant 0 : i32
    return %c0_i32, %c0_i32_0 : i32, i32
  }
  func.func @transform_2(%arg0: i32) -> (i32, i32) {
    %c0_i32 = arith.constant 0 : i32
    %c0_i32_0 = arith.constant 0 : i32
    %c0_i32_1 = arith.constant 0 : i32
    return %c0_i32, %c0_i32_0 : i32, i32
  }
  func.func @transform_3(%arg0: i32) -> (i32, i32) {
    %c0_i32 = arith.constant 0 : i32
    %c0_i32_0 = arith.constant 0 : i32
    %c0_i32_1 = arith.constant 0 : i32
    return %c0_i32, %c0_i32_0 : i32, i32
  }
  func.func @transform_4(%arg0: i32) -> (i32, i32) {
    %c0_i32 = arith.constant 0 : i32
    %c0_i32_0 = arith.constant 0 : i32
    %c0_i32_1 = arith.constant 0 : i32
    return %c0_i32, %c0_i32_0 : i32, i32
  }
  func.func @transform_5(%arg0: i32) -> (i32, i32) {
    %c0_i32 = arith.constant 0 : i32
    %c0_i32_0 = arith.constant 0 : i32
    %c0_i32_1 = arith.constant 0 : i32
    return %c0_i32, %c0_i32_0 : i32, i32
  }
  func.func @transform_6(%arg0: i32) -> (i32, i32) {
    %c0_i32 = arith.constant 0 : i32
    %c0_i32_0 = arith.constant 0 : i32
    %c0_i32_1 = arith.constant 0 : i32
    return %c0_i32, %c0_i32_0 : i32, i32
  }
  func.func @transform_7(%arg0: i32) -> (i32, i32, i32) {
    %c4_i32 = arith.constant 4 : i32
    %0 = arith.subi %c4_i32, %arg0 : i32
    %c0_i32 = arith.constant 0 : i32
    %c0_i32_0 = arith.constant 0 : i32
    %c0_i32_1 = arith.constant 0 : i32
    return %0, %c0_i32, %c0_i32_0 : i32, i32, i32
  }
  func.func @transform_8(%arg0: i32) -> (i32, i32, i32) {
    %c4_i32 = arith.constant 4 : i32
    %0 = arith.subi %c4_i32, %arg0 : i32
    %c0_i32 = arith.constant 0 : i32
    %c0_i32_0 = arith.constant 0 : i32
    %c0_i32_1 = arith.constant 0 : i32
    return %0, %c0_i32, %c0_i32_0 : i32, i32, i32
  }
  func.func @transform_9(%arg0: i32) -> (i32, i32, i32) {
    %c4_i32 = arith.constant 4 : i32
    %0 = arith.subi %c4_i32, %arg0 : i32
    %c0_i32 = arith.constant 0 : i32
    %c0_i32_0 = arith.constant 0 : i32
    %c0_i32_1 = arith.constant 0 : i32
    return %0, %c0_i32, %c0_i32_0 : i32, i32, i32
  }
  func.func @transform_10(%arg0: i32) -> (i32, i32, i32) {
    %c4_i32 = arith.constant 4 : i32
    %0 = arith.subi %c4_i32, %arg0 : i32
    %c0_i32 = arith.constant 0 : i32
    %c0_i32_0 = arith.constant 0 : i32
    %c0_i32_1 = arith.constant 0 : i32
    return %0, %c0_i32, %c0_i32_0 : i32, i32, i32
  }
  func.func @transform_11(%arg0: i32) -> (i32, i32, i32) {
    %c4_i32 = arith.constant 4 : i32
    %0 = arith.subi %c4_i32, %arg0 : i32
    %c0_i32 = arith.constant 0 : i32
    %c0_i32_0 = arith.constant 0 : i32
    %c0_i32_1 = arith.constant 0 : i32
    return %0, %c0_i32, %c0_i32_0 : i32, i32, i32
  }
  func.func @transform_12(%arg0: i32) -> (i32, i32, i32) {
    %c4_i32 = arith.constant 4 : i32
    %0 = arith.subi %c4_i32, %arg0 : i32
    %c0_i32 = arith.constant 0 : i32
    %c0_i32_0 = arith.constant 0 : i32
    %c0_i32_1 = arith.constant 0 : i32
    return %0, %c0_i32, %c0_i32_0 : i32, i32, i32
  }
  func.func @transform_13(%arg0: i32) -> (i32, i32, i32) {
    %c4_i32 = arith.constant 4 : i32
    %0 = arith.subi %c4_i32, %arg0 : i32
    %c0_i32 = arith.constant 0 : i32
    %c0_i32_0 = arith.constant 0 : i32
    %c0_i32_1 = arith.constant 0 : i32
    return %0, %c0_i32, %c0_i32_0 : i32, i32, i32
  }
  func.func @transform_14(%arg0: i32) -> (i32, i32, i32) {
    %c4_i32 = arith.constant 4 : i32
    %0 = arith.subi %c4_i32, %arg0 : i32
    %c0_i32 = arith.constant 0 : i32
    %c0_i32_0 = arith.constant 0 : i32
    %c0_i32_1 = arith.constant 0 : i32
    return %0, %c0_i32, %c0_i32_0 : i32, i32, i32
  }
  func.func @transform_15(%arg0: i32) -> (i32, i32, i32) {
    %c4_i32 = arith.constant 4 : i32
    %0 = arith.subi %c4_i32, %arg0 : i32
    %c0_i32 = arith.constant 0 : i32
    %c0_i32_0 = arith.constant 0 : i32
    %c0_i32_1 = arith.constant 0 : i32
    return %0, %c0_i32, %c0_i32_0 : i32, i32, i32
  }
  func.func @transform_16(%arg0: i32) -> (i32, i32, i32) {
    %c4_i32 = arith.constant 4 : i32
    %0 = arith.subi %c4_i32, %arg0 : i32
    %c0_i32 = arith.constant 0 : i32
    %c0_i32_0 = arith.constant 0 : i32
    %c0_i32_1 = arith.constant 0 : i32
    return %0, %c0_i32, %c0_i32_0 : i32, i32, i32
  }
  func.func @transform_17(%arg0: i32) -> (i32, i32, i32) {
    %c4_i32 = arith.constant 4 : i32
    %0 = arith.subi %c4_i32, %arg0 : i32
    %c0_i32 = arith.constant 0 : i32
    %c0_i32_0 = arith.constant 0 : i32
    %c0_i32_1 = arith.constant 0 : i32
    return %0, %c0_i32, %c0_i32_0 : i32, i32, i32
  }
  func.func @transform_18(%arg0: i32) -> (i32, i32) {
    %c0_i32 = arith.constant 0 : i32
    %c0_i32_0 = arith.constant 0 : i32
    %c0_i32_1 = arith.constant 0 : i32
    return %c0_i32, %c0_i32_0 : i32, i32
  }
  func.func @transform_19(%arg0: i32) -> (i32, i32) {
    %c0_i32 = arith.constant 0 : i32
    %c0_i32_0 = arith.constant 0 : i32
    %c0_i32_1 = arith.constant 0 : i32
    return %c0_i32, %c0_i32_0 : i32, i32
  }
  func.func @transform_20(%arg0: i32) -> (i32, i32) {
    %c0_i32 = arith.constant 0 : i32
    %c0_i32_0 = arith.constant 0 : i32
    %c0_i32_1 = arith.constant 0 : i32
    return %c0_i32, %c0_i32_0 : i32, i32
  }
}

</mosaic_0001>

<llo_original>
// kernel: forward.1
$region0: #{forward.1}
  #allocation0 [shape = 'u32[]', space=smem, size = 0x4, offset = 0x4, fixed_abs, tag = 'smem constant byte address 0x4 - core index']
  #allocation1 [shape = 'u32[144,128]{1,0:T(1,128)}', space=vmem, size = 0x12000, scoped, tag = 'internal scratch']
  #allocation2 [shape = 'f32[8,256]{1,0:T(8,128)}', space=vmem, size = 0x2000, scoped, tag = 'scratch operand']
  #allocation3 [shape = 'f32[8,2]{1,0:T(8,128)}', space=vmem, size = 0x1000, scoped, tag = 'scratch operand']
  #allocation4 [shape = 'f32[8,1]{1,0:T(8,128)}', space=vmem, size = 0x1000, scoped, tag = 'scratch operand']
  %s0 = inlined_call_operand.vmem [shape: f32[8,2], index: 0, kind: input, shape index: {}]
  %s1 = inlined_call_operand.hbm [shape: f32[8,1024], index: 1, kind: input, shape index: {}]
  %s2 = inlined_call_operand.hbm [shape: bf16[1024,256], index: 2, kind: input, shape index: {}]
  %s3 = inlined_call_operand.hbm [shape: f32[1,256], index: 3, kind: input, shape index: {}]
  %s4 = inlined_call_operand.hbm [shape: f32[4,256], index: 4, kind: input, shape index: {}]
  %s5 = inlined_call_operand.hbm [shape: bf16[512,512], index: 5, kind: input, shape index: {}]
  %s6 = inlined_call_operand.hbm [shape: f32[2,2], index: 6, kind: input, shape index: {}]
  %s7 = inlined_call_operand.hbm [shape: f32[5,1,128], index: 7, kind: input, shape index: {}]
  %s8 = inlined_call_operand.hbm [shape: bf16[5,256,256], index: 8, kind: input, shape index: {}]
  %s9 = inlined_call_operand.hbm [shape: f32[5,1,256], index: 9, kind: input, shape index: {}]
  %s10 = inlined_call_operand.hbm [shape: bf16[5,128,128], index: 10, kind: input, shape index: {}]
  %s11 = inlined_call_operand.hbm [shape: bf16[5,128,128], index: 11, kind: input, shape index: {}]
  %s12 = inlined_call_operand.hbm [shape: bf16[5,128,128], index: 12, kind: input, shape index: {}]
  %s13 = inlined_call_operand.hbm [shape: f32[5,1,256], index: 13, kind: input, shape index: {}]
  %s14 = inlined_call_operand.hbm [shape: bf16[5,128,1536], index: 14, kind: input, shape index: {}]
  %s15 = inlined_call_operand.hbm [shape: bf16[5,128,1536], index: 15, kind: input, shape index: {}]
  %s16 = inlined_call_operand.hbm [shape: bf16[5,128,1536], index: 16, kind: input, shape index: {}]
  %s17 = inlined_call_operand.hbm [shape: f32[5,1,3072], index: 17, kind: input, shape index: {}]
  %s18 = inlined_call_operand.hbm [shape: f32[1,1], index: 18, kind: output, shape index: {0}]
  %s19 = inlined_call_operand.hbm [shape: f32[8,256], index: 19, kind: output, shape index: {1}]
  %s20 = inlined_call_operand.hbm [shape: f32[8,256], index: 20, kind: output, shape index: {2}]
  %21 = xla_tuple %s18, %s19, %s20
  %s22 = sld [smem:[#allocation0]]
  $region197: #{forward.1} parent=0
    _
  %s24 = ssub.s32 1, %s22
  %s25 = scalar_select 0, %s24, %s22
  $region1: #{forward.1} parent=0
    #allocation5 [shape = 'u8[32768]{0}', space=vmem, size = 0x8000, scoped, tag = 'input window, operand 1, single buffered']
    #allocation6 [shape = 's32[2]{0}', space=sflag, size = 0x8, scoped, tag = 'scoped memory for forward.1']
    #allocation7 [shape = 's32[2]{0}', space=sflag, size = 0x8, scoped, tag = 'scoped memory for forward.1']
    #allocation8 [shape = 'u8[524288]{0}', space=vmem, size = 0x80000, scoped, tag = 'input window, operand 2, single buffered']
    #allocation9 [shape = 's32[1]{0}', space=sflag, size = 0x4, scoped, tag = 'scoped memory for forward.1']
    #allocation10 [shape = 'u8[1024]{0}', space=vmem, size = 0x400, scoped, tag = 'input window, operand 3, single buffered']
    #allocation11 [shape = 'u8[4096]{0}', space=vmem, size = 0x1000, scoped, tag = 'input window, operand 4, single buffered']
    #allocation12 [shape = 's32[1]{0}', space=sflag, size = 0x4, scoped, tag = 'scoped memory for forward.1']
    #allocation13 [shape = 'u8[524288]{0}', space=vmem, size = 0x80000, scoped, tag = 'input window, operand 5, single buffered']
    #allocation14 [shape = 'u8[1024]{0}', space=vmem, size = 0x400, scoped, tag = 'input window, operand 6, single buffered']
    #allocation15 [shape = 's32[1]{0}', space=sflag, size = 0x4, scoped, tag = 'scoped memory for forward.1']
    #allocation16 [shape = 'u8[1024]{0}', space=vmem, size = 0x400, scoped, tag = 'input window, operand 7']
    #allocation17 [shape = 'u8[262144]{0}', space=vmem, size = 0x40000, scoped, tag = 'input window, operand 8']
    #allocation18 [shape = 'u8[2048]{0}', space=vmem, size = 0x800, scoped, tag = 'input window, operand 9']
    #allocation19 [shape = 'u8[65536]{0}', space=vmem, size = 0x10000, scoped, tag = 'input window, operand 10']
    #allocation20 [shape = 'u8[65536]{0}', space=vmem, size = 0x10000, scoped, tag = 'input window, operand 11']
    #allocation21 [shape = 'u8[65536]{0}', space=vmem, size = 0x10000, scoped, tag = 'input window, operand 12']
    #allocation22 [shape = 'u8[2048]{0}', space=vmem, size = 0x800, scoped, tag = 'input window, operand 13']
    #allocation23 [shape = 'u8[786432]{0}', space=vmem, size = 0xc0000, scoped, tag = 'input window, operand 14']
    #allocation24 [shape = 'u8[786432]{0}', space=vmem, size = 0xc0000, scoped, tag = 'input window, operand 15']
    #allocation25 [shape = 'u8[786432]{0}', space=vmem, size = 0xc0000, scoped, tag = 'input window, operand 16']
    #allocation26 [shape = 'u8[24576]{0}', space=vmem, size = 0x6000, scoped, tag = 'input window, operand 17']
    #allocation27 [shape = 'u8[512]{0}', space=vmem, size = 0x400, scoped, tag = 'output window, operand 0, single buffered']
    #allocation28 [shape = 'u8[8192]{0}', space=vmem, size = 0x2000, scoped, tag = 'output window, operand 1, single buffered']
    #allocation29 [shape = 's32[1]{0}', space=sflag, size = 0x4, scoped, tag = 'scoped memory for forward.1']
    #allocation30 [shape = 'u8[8192]{0}', space=vmem, size = 0x2000, scoped, tag = 'output window, operand 2, single buffered']
    %26 = vsyncpa [#allocation6], 0
    %27 = vsyncpa [#allocation9], 0
    %28 = vsyncpa [#allocation12], 0
    %29 = vsyncpa [#allocation15], 0
    %30 = vsyncpa [#allocation7], 0
    %31 = vsyncpa [#allocation29], 0
    loop: start=0, step=1, limit=7
    $region2: #{forward.1} parent=1 // loop_pre_header
      _
    $region3: #{forward.1} parent=1 // loop_header
      %s33 = sphi 0, %s37
      %p34 = scmp.ge.s32.totalorder %s33, 7
      %s41 = sphi 0, %s41
      %s43 = sphi 0, %s41
      %s44 = sphi 0, %s43
      %s58 = sphi 0, %s44
      %s62 = sphi 0, %s62
      %s64 = sphi 0, %s62
      %s65 = sphi 0, %s64
      %s79 = sphi 0, %s65
      %s83 = sphi 0, %s83
      %s85 = sphi 0, %s83
      %s86 = sphi 0, %s85
      %s100 = sphi 0, %s86
      %s104 = sphi 0, %s104
      %s106 = sphi 0, %s104
      %s107 = sphi 0, %s106
      %s121 = sphi 0, %s107
      %s125 = sphi 0, %s125
      %s127 = sphi 0, %s125
      %s128 = sphi 0, %s127
      %s142 = sphi 0, %s128
      %s146 = sphi 0, %s146
      %s148 = sphi 0, %s146
      %s149 = sphi 0, %s148
      %s163 = sphi 0, %s149
      %s167 = sphi 0, %s167
      %s169 = sphi 0, %s167
      %s170 = sphi 0, %s169
      %s184 = sphi 0, %s170
      %s192 = sphi 0, %s194
      %s195 = sphi 0, %s192
      %s196 = sphi 0, %s195
      %s212 = sphi 0, %s196
      %s220 = sphi 0, %s222
      %s223 = sphi 0, %s220
      %s224 = sphi 0, %s223
      %s240 = sphi 0, %s224
      %s248 = sphi 0, %s250
      %s251 = sphi 0, %s248
      %s252 = sphi 0, %s251
      %s268 = sphi 0, %s252
      %s276 = sphi 0, %s278
      %s279 = sphi 0, %s276
      %s280 = sphi 0, %s279
      %s296 = sphi 0, %s280
      %s304 = sphi 0, %s306
      %s307 = sphi 0, %s304
      %s308 = sphi 0, %s307
      %s324 = sphi 0, %s308
      %s332 = sphi 0, %s334
      %s335 = sphi 0, %s332
      %s336 = sphi 0, %s335
      %s352 = sphi 0, %s336
      %s360 = sphi 0, %s362
      %s363 = sphi 0, %s360
      %s364 = sphi 0, %s363
      %s380 = sphi 0, %s364
      %s388 = sphi 0, %s390
      %s391 = sphi 0, %s388
      %s392 = sphi 0, %s391
      %s408 = sphi 0, %s392
      %s416 = sphi 0, %s418
      %s419 = sphi 0, %s416
      %s420 = sphi 0, %s419
      %s436 = sphi 0, %s420
      %s444 = sphi 0, %s446
      %s447 = sphi 0, %s444
      %s448 = sphi 0, %s447
      %s464 = sphi 0, %s448
      %s472 = sphi 0, %s474
      %s475 = sphi 0, %s472
      %s476 = sphi 0, %s475
      %s492 = sphi 0, %s476
      %s496 = sphi 0, %s496
      %s498 = sphi 0, %s496
      %s499 = sphi 0, %s498
      %s513 = sphi 0, %s499
      %s517 = sphi 0, %s517
      %s519 = sphi 0, %s517
      %s520 = sphi 0, %s519
      %s534 = sphi 0, %s520
      %s538 = sphi 0, %s538
      %s540 = sphi 0, %s538
      %s541 = sphi 0, %s540
      %s555 = sphi 0, %s541
    $region4: #{forward.1} parent=1 // loop_header_branch
      %36 = sbr.rel (%p34) target = $region8
    $region5: #{forward.1} parent=1 // loop_body
      %s38 = ssub.s32 %s33, 1
      %s39 = ssub.s32 %s33, 2
      %s40 = sadd.s32 %s33, 1
      %s42 = sadd.s32 %s41, 1
      %p45 = scmp.eq.s32.totalorder %s33, 4
      %p46 = scmp.ne.s32.totalorder %s41, %s43
      %p47 = scmp.eq.s32.totalorder %s33, 0
      %p48 = por %p46, %p47
      %p49 = scmp.ne.s32.totalorder %s41, %s43
      %p50 = scmp.eq.s32.totalorder %s38, 4
      %p51 = por %p49, %p50
      %p52 = scmp.ne.s32.totalorder %s43, %s44
      %p53 = scmp.eq.s32.totalorder %s38, 0
      %p54 = por %p52, %p53
      %p55 = scmp.ne.s32.totalorder %s43, %s44
      %p56 = scmp.eq.s32.totalorder %s39, 4
      %p57 = por %p55, %p56
      %p59 = scmp.ne.s32.totalorder %s44, %s58
      %p60 = scmp.eq.s32.totalorder %s39, 0
      %p61 = por %p59, %p60
      %s63 = sadd.s32 %s62, 1
      %p66 = scmp.eq.s32.totalorder %s33, 4
      %p67 = scmp.ne.s32.totalorder %s62, %s64
      %p68 = scmp.eq.s32.totalorder %s33, 0
      %p69 = por %p67, %p68
      %p70 = scmp.ne.s32.totalorder %s62, %s64
      %p71 = scmp.eq.s32.totalorder %s38, 4
      %p72 = por %p70, %p71
      %p73 = scmp.ne.s32.totalorder %s64, %s65
      %p74 = scmp.eq.s32.totalorder %s38, 0
      %p75 = por %p73, %p74
      %p76 = scmp.ne.s32.totalorder %s64, %s65
      %p77 = scmp.eq.s32.totalorder %s39, 4
      %p78 = por %p76, %p77
      %p80 = scmp.ne.s32.totalorder %s65, %s79
      %p81 = scmp.eq.s32.totalorder %s39, 0
      %p82 = por %p80, %p81
      %s84 = sadd.s32 %s83, 1
      %p87 = scmp.eq.s32.totalorder %s33, 4
      %p88 = scmp.ne.s32.totalorder %s83, %s85
      %p89 = scmp.eq.s32.totalorder %s33, 0
      %p90 = por %p88, %p89
      %p91 = scmp.ne.s32.totalorder %s83, %s85
      %p92 = scmp.eq.s32.totalorder %s38, 4
      %p93 = por %p91, %p92
      %p94 = scmp.ne.s32.totalorder %s85, %s86
      %p95 = scmp.eq.s32.totalorder %s38, 0
      %p96 = por %p94, %p95
      %p97 = scmp.ne.s32.totalorder %s85, %s86
      %p98 = scmp.eq.s32.totalorder %s39, 4
      %p99 = por %p97, %p98
      %p101 = scmp.ne.s32.totalorder %s86, %s100
      %p102 = scmp.eq.s32.totalorder %s39, 0
      %p103 = por %p101, %p102
      %s105 = sadd.s32 %s104, 1
      %p108 = scmp.eq.s32.totalorder %s33, 4
      %p109 = scmp.ne.s32.totalorder %s104, %s106
      %p110 = scmp.eq.s32.totalorder %s33, 0
      %p111 = por %p109, %p110
      %p112 = scmp.ne.s32.totalorder %s104, %s106
      %p113 = scmp.eq.s32.totalorder %s38, 4
      %p114 = por %p112, %p113
      %p115 = scmp.ne.s32.totalorder %s106, %s107
      %p116 = scmp.eq.s32.totalorder %s38, 0
      %p117 = por %p115, %p116
      %p118 = scmp.ne.s32.totalorder %s106, %s107
      %p119 = scmp.eq.s32.totalorder %s39, 4
      %p120 = por %p118, %p119
      %p122 = scmp.ne.s32.totalorder %s107, %s121
      %p123 = scmp.eq.s32.totalorder %s39, 0
      %p124 = por %p122, %p123
      %s126 = sadd.s32 %s125, 1
      %p129 = scmp.eq.s32.totalorder %s33, 4
      %p130 = scmp.ne.s32.totalorder %s125, %s127
      %p131 = scmp.eq.s32.totalorder %s33, 0
      %p132 = por %p130, %p131
      %p133 = scmp.ne.s32.totalorder %s125, %s127
      %p134 = scmp.eq.s32.totalorder %s38, 4
      %p135 = por %p133, %p134
      %p136 = scmp.ne.s32.totalorder %s127, %s128
      %p137 = scmp.eq.s32.totalorder %s38, 0
      %p138 = por %p136, %p137
      %p139 = scmp.ne.s32.totalorder %s127, %s128
      %p140 = scmp.eq.s32.totalorder %s39, 4
      %p141 = por %p139, %p140
      %p143 = scmp.ne.s32.totalorder %s128, %s142
      %p144 = scmp.eq.s32.totalorder %s39, 0
      %p145 = por %p143, %p144
      %s147 = sadd.s32 %s146, 1
      %p150 = scmp.eq.s32.totalorder %s33, 4
      %p151 = scmp.ne.s32.totalorder %s146, %s148
      %p152 = scmp.eq.s32.totalorder %s33, 0
      %p153 = por %p151, %p152
      %p154 = scmp.ne.s32.totalorder %s146, %s148
      %p155 = scmp.eq.s32.totalorder %s38, 4
      %p156 = por %p154, %p155
      %p157 = scmp.ne.s32.totalorder %s148, %s149
      %p158 = scmp.eq.s32.totalorder %s38, 0
      %p159 = por %p157, %p158
      %p160 = scmp.ne.s32.totalorder %s148, %s149
      %p161 = scmp.eq.s32.totalorder %s39, 4
      %p162 = por %p160, %p161
      %p164 = scmp.ne.s32.totalorder %s149, %s163
      %p165 = scmp.eq.s32.totalorder %s39, 0
      %p166 = por %p164, %p165
      %s168 = sadd.s32 %s167, 1
      %p171 = scmp.eq.s32.totalorder %s33, 4
      %p172 = scmp.ne.s32.totalorder %s167, %s169
      %p173 = scmp.eq.s32.totalorder %s33, 0
      %p174 = por %p172, %p173
      %p175 = scmp.ne.s32.totalorder %s167, %s169
      %p176 = scmp.eq.s32.totalorder %s38, 4
      %p177 = por %p175, %p176
      %p178 = scmp.ne.s32.totalorder %s169, %s170
      %p179 = scmp.eq.s32.totalorder %s38, 0
      %p180 = por %p178, %p179
      %p181 = scmp.ne.s32.totalorder %s169, %s170
      %p182 = scmp.eq.s32.totalorder %s39, 4
      %p183 = por %p181, %p182
      %p185 = scmp.ne.s32.totalorder %s170, %s184
      %p186 = scmp.eq.s32.totalorder %s39, 0
      %p187 = por %p185, %p186
      %s188 = ssub.s32 4, %s33
      %s189 = ssub.s32 4, %s40
      %s190 = ssub.s32 %s188, %s189
      %p191 = scmp.eq.s32.totalorder %s190, 0
      %s193 = sadd.s32 %s192, 1
      %s194 = scalar_select %p191, %s192, %s193
      %p197 = pneg %p191
      %p198 = scmp.eq.s32.totalorder %s33, 4
      %p199 = por %p197, %p198
      %p200 = scmp.ne.s32.totalorder %s192, %s195
      %p201 = scmp.eq.s32.totalorder %s33, 0
      %p202 = por %p200, %p201
      %p203 = scmp.ne.s32.totalorder %s192, %s195
      %p204 = scmp.eq.s32.totalorder %s38, 4
      %p205 = por %p203, %p204
      %p206 = scmp.ne.s32.totalorder %s195, %s196
      %p207 = scmp.eq.s32.totalorder %s38, 0
      %p208 = por %p206, %p207
      %p209 = scmp.ne.s32.totalorder %s195, %s196
      %p210 = scmp.eq.s32.totalorder %s39, 4
      %p211 = por %p209, %p210
      %p213 = scmp.ne.s32.totalorder %s196, %s212
      %p214 = scmp.eq.s32.totalorder %s39, 0
      %p215 = por %p213, %p214
      %s216 = ssub.s32 4, %s33
      %s217 = ssub.s32 4, %s40
      %s218 = ssub.s32 %s216, %s217
      %p219 = scmp.eq.s32.totalorder %s218, 0
      %s221 = sadd.s32 %s220, 1
      %s222 = scalar_select %p219, %s220, %s221
      %p225 = pneg %p219
      %p226 = scmp.eq.s32.totalorder %s33, 4
      %p227 = por %p225, %p226
      %p228 = scmp.ne.s32.totalorder %s220, %s223
      %p229 = scmp.eq.s32.totalorder %s33, 0
      %p230 = por %p228, %p229
      %p231 = scmp.ne.s32.totalorder %s220, %s223
      %p232 = scmp.eq.s32.totalorder %s38, 4
      %p233 = por %p231, %p232
      %p234 = scmp.ne.s32.totalorder %s223, %s224
      %p235 = scmp.eq.s32.totalorder %s38, 0
      %p236 = por %p234, %p235
      %p237 = scmp.ne.s32.totalorder %s223, %s224
      %p238 = scmp.eq.s32.totalorder %s39, 4
      %p239 = por %p237, %p238
      %p241 = scmp.ne.s32.totalorder %s224, %s240
      %p242 = scmp.eq.s32.totalorder %s39, 0
      %p243 = por %p241, %p242
      %s244 = ssub.s32 4, %s33
      %s245 = ssub.s32 4, %s40
      %s246 = ssub.s32 %s244, %s245
      %p247 = scmp.eq.s32.totalorder %s246, 0
      %s249 = sadd.s32 %s248, 1
      %s250 = scalar_select %p247, %s248, %s249
      %p253 = pneg %p247
      %p254 = scmp.eq.s32.totalorder %s33, 4
      %p255 = por %p253, %p254
      %p256 = scmp.ne.s32.totalorder %s248, %s251
      %p257 = scmp.eq.s32.totalorder %s33, 0
      %p258 = por %p256, %p257
      %p259 = scmp.ne.s32.totalorder %s248, %s251
      %p260 = scmp.eq.s32.totalorder %s38, 4
      %p261 = por %p259, %p260
      %p262 = scmp.ne.s32.totalorder %s251, %s252
      %p263 = scmp.eq.s32.totalorder %s38, 0
      %p264 = por %p262, %p263
      %p265 = scmp.ne.s32.totalorder %s251, %s252
      %p266 = scmp.eq.s32.totalorder %s39, 4
      %p267 = por %p265, %p266
      %p269 = scmp.ne.s32.totalorder %s252, %s268
      %p270 = scmp.eq.s32.totalorder %s39, 0
      %p271 = por %p269, %p270
      %s272 = ssub.s32 4, %s33
      %s273 = ssub.s32 4, %s40
      %s274 = ssub.s32 %s272, %s273
      %p275 = scmp.eq.s32.totalorder %s274, 0
      %s277 = sadd.s32 %s276, 1
      %s278 = scalar_select %p275, %s276, %s277
      %p281 = pneg %p275
      %p282 = scmp.eq.s32.totalorder %s33, 4
      %p283 = por %p281, %p282
      %p284 = scmp.ne.s32.totalorder %s276, %s279
      %p285 = scmp.eq.s32.totalorder %s33, 0
      %p286 = por %p284, %p285
      %p287 = scmp.ne.s32.totalorder %s276, %s279
      %p288 = scmp.eq.s32.totalorder %s38, 4
      %p289 = por %p287, %p288
      %p290 = scmp.ne.s32.totalorder %s279, %s280
      %p291 = scmp.eq.s32.totalorder %s38, 0
      %p292 = por %p290, %p291
      %p293 = scmp.ne.s32.totalorder %s279, %s280
      %p294 = scmp.eq.s32.totalorder %s39, 4
      %p295 = por %p293, %p294
      %p297 = scmp.ne.s32.totalorder %s280, %s296
      %p298 = scmp.eq.s32.totalorder %s39, 0
      %p299 = por %p297, %p298
      %s300 = ssub.s32 4, %s33
      %s301 = ssub.s32 4, %s40
      %s302 = ssub.s32 %s300, %s301
      %p303 = scmp.eq.s32.totalorder %s302, 0
      %s305 = sadd.s32 %s304, 1
      %s306 = scalar_select %p303, %s304, %s305
      %p309 = pneg %p303
      %p310 = scmp.eq.s32.totalorder %s33, 4
      %p311 = por %p309, %p310
      %p312 = scmp.ne.s32.totalorder %s304, %s307
      %p313 = scmp.eq.s32.totalorder %s33, 0
      %p314 = por %p312, %p313
      %p315 = scmp.ne.s32.totalorder %s304, %s307
      %p316 = scmp.eq.s32.totalorder %s38, 4
      %p317 = por %p315, %p316
      %p318 = scmp.ne.s32.totalorder %s307, %s308
      %p319 = scmp.eq.s32.totalorder %s38, 0
      %p320 = por %p318, %p319
      %p321 = scmp.ne.s32.totalorder %s307, %s308
      %p322 = scmp.eq.s32.totalorder %s39, 4
      %p323 = por %p321, %p322
      %p325 = scmp.ne.s32.totalorder %s308, %s324
      %p326 = scmp.eq.s32.totalorder %s39, 0
      %p327 = por %p325, %p326
      %s328 = ssub.s32 4, %s33
      %s329 = ssub.s32 4, %s40
      %s330 = ssub.s32 %s328, %s329
      %p331 = scmp.eq.s32.totalorder %s330, 0
      %s333 = sadd.s32 %s332, 1
      %s334 = scalar_select %p331, %s332, %s333
      %p337 = pneg %p331
      %p338 = scmp.eq.s32.totalorder %s33, 4
      %p339 = por %p337, %p338
      %p340 = scmp.ne.s32.totalorder %s332, %s335
      %p341 = scmp.eq.s32.totalorder %s33, 0
      %p342 = por %p340, %p341
      %p343 = scmp.ne.s32.totalorder %s332, %s335
      %p344 = scmp.eq.s32.totalorder %s38, 4
      %p345 = por %p343, %p344
      %p346 = scmp.ne.s32.totalorder %s335, %s336
      %p347 = scmp.eq.s32.totalorder %s38, 0
      %p348 = por %p346, %p347
      %p349 = scmp.ne.s32.totalorder %s335, %s336
      %p350 = scmp.eq.s32.totalorder %s39, 4
      %p351 = por %p349, %p350
      %p353 = scmp.ne.s32.totalorder %s336, %s352
      %p354 = scmp.eq.s32.totalorder %s39, 0
      %p355 = por %p353, %p354
      %s356 = ssub.s32 4, %s33
      %s357 = ssub.s32 4, %s40
      %s358 = ssub.s32 %s356, %s357
      %p359 = scmp.eq.s32.totalorder %s358, 0
      %s361 = sadd.s32 %s360, 1
      %s362 = scalar_select %p359, %s360, %s361
      %p365 = pneg %p359
      %p366 = scmp.eq.s32.totalorder %s33, 4
      %p367 = por %p365, %p366
      %p368 = scmp.ne.s32.totalorder %s360, %s363
      %p369 = scmp.eq.s32.totalorder %s33, 0
      %p370 = por %p368, %p369
      %p371 = scmp.ne.s32.totalorder %s360, %s363
      %p372 = scmp.eq.s32.totalorder %s38, 4
      %p373 = por %p371, %p372
      %p374 = scmp.ne.s32.totalorder %s363, %s364
      %p375 = scmp.eq.s32.totalorder %s38, 0
      %p376 = por %p374, %p375
      %p377 = scmp.ne.s32.totalorder %s363, %s364
      %p378 = scmp.eq.s32.totalorder %s39, 4
      %p379 = por %p377, %p378
      %p381 = scmp.ne.s32.totalorder %s364, %s380
      %p382 = scmp.eq.s32.totalorder %s39, 0
      %p383 = por %p381, %p382
      %s384 = ssub.s32 4, %s33
      %s385 = ssub.s32 4, %s40
      %s386 = ssub.s32 %s384, %s385
      %p387 = scmp.eq.s32.totalorder %s386, 0
      %s389 = sadd.s32 %s388, 1
      %s390 = scalar_select %p387, %s388, %s389
      %p393 = pneg %p387
      %p394 = scmp.eq.s32.totalorder %s33, 4
      %p395 = por %p393, %p394
      %p396 = scmp.ne.s32.totalorder %s388, %s391
      %p397 = scmp.eq.s32.totalorder %s33, 0
      %p398 = por %p396, %p397
      %p399 = scmp.ne.s32.totalorder %s388, %s391
      %p400 = scmp.eq.s32.totalorder %s38, 4
      %p401 = por %p399, %p400
      %p402 = scmp.ne.s32.totalorder %s391, %s392
      %p403 = scmp.eq.s32.totalorder %s38, 0
      %p404 = por %p402, %p403
      %p405 = scmp.ne.s32.totalorder %s391, %s392
      %p406 = scmp.eq.s32.totalorder %s39, 4
      %p407 = por %p405, %p406
      %p409 = scmp.ne.s32.totalorder %s392, %s408
      %p410 = scmp.eq.s32.totalorder %s39, 0
      %p411 = por %p409, %p410
      %s412 = ssub.s32 4, %s33
      %s413 = ssub.s32 4, %s40
      %s414 = ssub.s32 %s412, %s413
      %p415 = scmp.eq.s32.totalorder %s414, 0
      %s417 = sadd.s32 %s416, 1
      %s418 = scalar_select %p415, %s416, %s417
      %p421 = pneg %p415
      %p422 = scmp.eq.s32.totalorder %s33, 4
      %p423 = por %p421, %p422
      %p424 = scmp.ne.s32.totalorder %s416, %s419
      %p425 = scmp.eq.s32.totalorder %s33, 0
      %p426 = por %p424, %p425
      %p427 = scmp.ne.s32.totalorder %s416, %s419
      %p428 = scmp.eq.s32.totalorder %s38, 4
      %p429 = por %p427, %p428
      %p430 = scmp.ne.s32.totalorder %s419, %s420
      %p431 = scmp.eq.s32.totalorder %s38, 0
      %p432 = por %p430, %p431
      %p433 = scmp.ne.s32.totalorder %s419, %s420
      %p434 = scmp.eq.s32.totalorder %s39, 4
      %p435 = por %p433, %p434
      %p437 = scmp.ne.s32.totalorder %s420, %s436
      %p438 = scmp.eq.s32.totalorder %s39, 0
      %p439 = por %p437, %p438
      %s440 = ssub.s32 4, %s33
      %s441 = ssub.s32 4, %s40
      %s442 = ssub.s32 %s440, %s441
      %p443 = scmp.eq.s32.totalorder %s442, 0
      %s445 = sadd.s32 %s444, 1
      %s446 = scalar_select %p443, %s444, %s445
      %p449 = pneg %p443
      %p450 = scmp.eq.s32.totalorder %s33, 4
      %p451 = por %p449, %p450
      %p452 = scmp.ne.s32.totalorder %s444, %s447
      %p453 = scmp.eq.s32.totalorder %s33, 0
      %p454 = por %p452, %p453
      %p455 = scmp.ne.s32.totalorder %s444, %s447
      %p456 = scmp.eq.s32.totalorder %s38, 4
      %p457 = por %p455, %p456
      %p458 = scmp.ne.s32.totalorder %s447, %s448
      %p459 = scmp.eq.s32.totalorder %s38, 0
      %p460 = por %p458, %p459
      %p461 = scmp.ne.s32.totalorder %s447, %s448
      %p462 = scmp.eq.s32.totalorder %s39, 4
      %p463 = por %p461, %p462
      %p465 = scmp.ne.s32.totalorder %s448, %s464
      %p466 = scmp.eq.s32.totalorder %s39, 0
      %p467 = por %p465, %p466
      %s468 = ssub.s32 4, %s33
      %s469 = ssub.s32 4, %s40
      %s470 = ssub.s32 %s468, %s469
      %p471 = scmp.eq.s32.totalorder %s470, 0
      %s473 = sadd.s32 %s472, 1
      %s474 = scalar_select %p471, %s472, %s473
      %p477 = pneg %p471
      %p478 = scmp.eq.s32.totalorder %s33, 4
      %p479 = por %p477, %p478
      %p480 = scmp.ne.s32.totalorder %s472, %s475
      %p481 = scmp.eq.s32.totalorder %s33, 0
      %p482 = por %p480, %p481
      %p483 = scmp.ne.s32.totalorder %s472, %s475
      %p484 = scmp.eq.s32.totalorder %s38, 4
      %p485 = por %p483, %p484
      %p486 = scmp.ne.s32.totalorder %s475, %s476
      %p487 = scmp.eq.s32.totalorder %s38, 0
      %p488 = por %p486, %p487
      %p489 = scmp.ne.s32.totalorder %s475, %s476
      %p490 = scmp.eq.s32.totalorder %s39, 4
      %p491 = por %p489, %p490
      %p493 = scmp.ne.s32.totalorder %s476, %s492
      %p494 = scmp.eq.s32.totalorder %s39, 0
      %p495 = por %p493, %p494
      %s497 = sadd.s32 %s496, 1
      %p500 = scmp.eq.s32.totalorder %s33, 4
      %p501 = scmp.ne.s32.totalorder %s496, %s498
      %p502 = scmp.eq.s32.totalorder %s33, 0
      %p503 = por %p501, %p502
      %p504 = scmp.ne.s32.totalorder %s496, %s498
      %p505 = scmp.eq.s32.totalorder %s38, 4
      %p506 = por %p504, %p505
      %p507 = scmp.ne.s32.totalorder %s498, %s499
      %p508 = scmp.eq.s32.totalorder %s38, 0
      %p509 = por %p507, %p508
      %p510 = scmp.ne.s32.totalorder %s498, %s499
      %p511 = scmp.eq.s32.totalorder %s39, 4
      %p512 = por %p510, %p511
      %p514 = scmp.ne.s32.totalorder %s499, %s513
      %p515 = scmp.eq.s32.totalorder %s39, 0
      %p516 = por %p514, %p515
      %s518 = sadd.s32 %s517, 1
      %p521 = scmp.eq.s32.totalorder %s33, 4
      %p522 = scmp.ne.s32.totalorder %s517, %s519
      %p523 = scmp.eq.s32.totalorder %s33, 0
      %p524 = por %p522, %p523
      %p525 = scmp.ne.s32.totalorder %s517, %s519
      %p526 = scmp.eq.s32.totalorder %s38, 4
      %p527 = por %p525, %p526
      %p528 = scmp.ne.s32.totalorder %s519, %s520
      %p529 = scmp.eq.s32.totalorder %s38, 0
      %p530 = por %p528, %p529
      %p531 = scmp.ne.s32.totalorder %s519, %s520
      %p532 = scmp.eq.s32.totalorder %s39, 4
      %p533 = por %p531, %p532
      %p535 = scmp.ne.s32.totalorder %s520, %s534
      %p536 = scmp.eq.s32.totalorder %s39, 0
      %p537 = por %p535, %p536
      %s539 = sadd.s32 %s538, 1
      %p542 = scmp.eq.s32.totalorder %s33, 4
      %p543 = scmp.ne.s32.totalorder %s538, %s540
      %p544 = scmp.eq.s32.totalorder %s33, 0
      %p545 = por %p543, %p544
      %p546 = scmp.ne.s32.totalorder %s538, %s540
      %p547 = scmp.eq.s32.totalorder %s38, 4
      %p548 = por %p546, %p547
      %p549 = scmp.ne.s32.totalorder %s540, %s541
      %p550 = scmp.eq.s32.totalorder %s38, 0
      %p551 = por %p549, %p550
      %p552 = scmp.ne.s32.totalorder %s540, %s541
      %p553 = scmp.eq.s32.totalorder %s39, 4
      %p554 = por %p552, %p553
      %p556 = scmp.ne.s32.totalorder %s541, %s555
      %p557 = scmp.eq.s32.totalorder %s39, 0
      %p558 = por %p556, %p557
      %p559 = scmp.le.s32.totalorder 1, %s33
      %p560 = scmp.lt.s32.totalorder %s33, 6
      %p561 = pnand %p559, %p560
      %p562 = pneg %p561
      // Predicated region
      $region9: #{forward.1} parent=5 // pred_check
        _
      $region10: #{forward.1} parent=5 // pred_check_branch
        %564 = sbr.rel (%p561) target = $region12
      $region11: #{forward.1} parent=5 // pred_region
        %s565 = ssub.s32 %s33, 1
        // Predicated region
        $region13: #{forward.1} parent=11 // pred_check
          %p566 = pneg %p54
        $region14: #{forward.1} parent=11 // pred_check_branch
          %568 = sbr.rel (%p566) target = $region16
        $region15: #{forward.1} parent=11 // pred_region
          _
        $region16: #{forward.1} parent=11 // pred_fallthru
          _
        // Predicated region
        $region17: #{forward.1} parent=11 // pred_check
          %p569 = pneg %p75
        $region18: #{forward.1} parent=11 // pred_check_branch
          %571 = sbr.rel (%p569) target = $region20
        $region19: #{forward.1} parent=11 // pred_region
          %s573 = ssub.s32 1024, 1024
          %574 = vsyncadd [#allocation6], %s573
          %s576 = sshll.u32 [#allocation5], 4
          %s577 = int_to_ptr.vmem [resolvable:$true] %s576
          %579 = dma.hbm_to_vmem [thread:$0]  %s1, 1024, %s577, [#allocation6]
        $region20: #{forward.1} parent=11 // pred_fallthru
          _
        // Predicated region
        $region21: #{forward.1} parent=11 // pred_check
          %p580 = pneg %p96
        $region22: #{forward.1} parent=11 // pred_check_branch
          %582 = sbr.rel (%p580) target = $region24
        $region23: #{forward.1} parent=11 // pred_region
          %s584 = ssub.s32 16384, 16384
          %585 = vsyncadd [#allocation9], %s584
          %s586 = sshll.u32 [#allocation8], 4
          %s587 = int_to_ptr.vmem [resolvable:$true] %s586
          %592 = dma.hbm_to_vmem [thread:$0]  %s2, 16384, %s587, [#allocation9], 128, 128, 8
        $region24: #{forward.1} parent=11 // pred_fallthru
          _
        // Predicated region
        $region25: #{forward.1} parent=11 // pred_check
          %p593 = pneg %p117
        $region26: #{forward.1} parent=11 // pred_check_branch
          %595 = sbr.rel (%p593) target = $region28
        $region27: #{forward.1} parent=11 // pred_region
          %s597 = ssub.s32 32, 32
          %598 = vsyncadd [#allocation9], %s597
          %s600 = sshll.u32 [#allocation10], 4
          %s601 = int_to_ptr.vmem [resolvable:$true] %s600
          %603 = dma.hbm_to_vmem [thread:$0]  %s3, 32, %s601, [#allocation9]
        $region28: #{forward.1} parent=11 // pred_fallthru
          _
        // Predicated region
        $region29: #{forward.1} parent=11 // pred_check
          %p604 = pneg %p138
        $region30: #{forward.1} parent=11 // pred_check_branch
          %606 = sbr.rel (%p604) target = $region32
        $region31: #{forward.1} parent=11 // pred_region
          %s608 = ssub.s32 128, 128
          %609 = vsyncadd [#allocation12], %s608
          %s611 = sshll.u32 [#allocation11], 4
          %s612 = int_to_ptr.vmem [resolvable:$true] %s611
          %614 = dma.hbm_to_vmem [thread:$0]  %s4, 128, %s612, [#allocation12]
        $region32: #{forward.1} parent=11 // pred_fallthru
          _
        // Predicated region
        $region33: #{forward.1} parent=11 // pred_check
          %p615 = pneg %p159
        $region34: #{forward.1} parent=11 // pred_check_branch
          %617 = sbr.rel (%p615) target = $region36
        $region35: #{forward.1} parent=11 // pred_region
          %s619 = ssub.s32 16384, 16384
          %620 = vsyncadd [#allocation12], %s619
          %s621 = sshll.u32 [#allocation13], 4
          %s622 = int_to_ptr.vmem [resolvable:$true] %s621
          %627 = dma.hbm_to_vmem [thread:$0]  %s5, 16384, %s622, [#allocation12], 256, 256, 16
        $region36: #{forward.1} parent=11 // pred_fallthru
          _
        // Predicated region
        $region37: #{forward.1} parent=11 // pred_check
          %p628 = pneg %p180
        $region38: #{forward.1} parent=11 // pred_check_branch
          %630 = sbr.rel (%p628) target = $region40
        $region39: #{forward.1} parent=11 // pred_region
          %s632 = ssub.s32 32, 32
          %633 = vsyncadd [#allocation15], %s632
          %s635 = sshll.u32 [#allocation14], 4
          %s636 = int_to_ptr.vmem [resolvable:$true] %s635
          %638 = dma.hbm_to_vmem [thread:$0]  %s6, 32, %s636, [#allocation15]
        $region40: #{forward.1} parent=11 // pred_fallthru
          _
      $region12: #{forward.1} parent=5 // pred_fallthru
        _
      %p639 = scmp.lt.s32.totalorder %s33, 5
      // Predicated region
      $region41: #{forward.1} parent=5 // pred_check
        %p640 = pneg %p639
      $region42: #{forward.1} parent=5 // pred_check_branch
        %642 = sbr.rel (%p640) target = $region44
      $region43: #{forward.1} parent=5 // pred_region
        // Predicated region
        $region45: #{forward.1} parent=43 // pred_check
          %p643 = pneg %p202
        $region46: #{forward.1} parent=43 // pred_check_branch
          %645 = sbr.rel (%p643) target = $region48
        $region47: #{forward.1} parent=43 // pred_region
          %s646 = sand.u32 %s33, 1
          %s647 = scalar_lea.sflag [#allocation6], %s646
          %s648 = sand.u32 %s192, 1
          %s649 = scalar_lea.vmem [#allocation16], %s648
          %s650 = ssub.s32 4, %s33
          %s652 = ssub.s32 16, 16
          %653 = vsyncadd %s647, %s652
          %s654 = smul.addr %s650, 16
          %s655 = scalar_lea.hbm %s7, %s654
          %s657 = sshll.u32 %s649, 4
          %s658 = int_to_ptr.vmem [resolvable:$true] %s657
          %660 = dma.hbm_to_vmem [thread:$0]  %s655, 16, %s658, %s647
        $region48: #{forward.1} parent=43 // pred_fallthru
          _
        // Predicated region
        $region49: #{forward.1} parent=43 // pred_check
          %p661 = pneg %p230
        $region50: #{forward.1} parent=43 // pred_check_branch
          %663 = sbr.rel (%p661) target = $region52
        $region51: #{forward.1} parent=43 // pred_region
          %s664 = sand.u32 %s33, 1
          %s665 = scalar_lea.sflag [#allocation6], %s664
          %s666 = sand.u32 %s220, 1
          %s667 = smul.addr %s666, 256
          %s668 = scalar_lea.vmem [#allocation17], %s667
          %s669 = ssub.s32 4, %s33
          %s671 = ssub.s32 4096, 4096
          %672 = vsyncadd %s665, %s671
          %s673 = smul.addr %s669, 64
          %s674 = smul.addr %s673, 64
          %s675 = scalar_lea.hbm %s8, %s674
          %s676 = sshll.u32 %s668, 4
          %s677 = int_to_ptr.vmem [resolvable:$true] %s676
          %682 = dma.hbm_to_vmem [thread:$0]  %s675, 4096, %s677, %s665, 128, 128, 8
        $region52: #{forward.1} parent=43 // pred_fallthru
          _
        // Predicated region
        $region53: #{forward.1} parent=43 // pred_check
          %p683 = pneg %p258
        $region54: #{forward.1} parent=43 // pred_check_branch
          %685 = sbr.rel (%p683) target = $region56
        $region55: #{forward.1} parent=43 // pred_region
          %s686 = sand.u32 %s33, 1
          %s687 = scalar_lea.sflag [#allocation6], %s686
          %s688 = sand.u32 %s248, 1
          %s689 = smul.addr %s688, 2
          %s690 = scalar_lea.vmem [#allocation18], %s689
          %s691 = ssub.s32 4, %s33
          %s693 = ssub.s32 32, 32
          %694 = vsyncadd %s687, %s693
          %s695 = smul.addr %s691, 2
          %s696 = smul.addr %s695, 16
          %s697 = scalar_lea.hbm %s9, %s696
          %s699 = sshll.u32 %s690, 4
          %s700 = int_to_ptr.vmem [resolvable:$true] %s699
          %702 = dma.hbm_to_vmem [thread:$0]  %s697, 32, %s700, %s687
        $region56: #{forward.1} parent=43 // pred_fallthru
          _
        // Predicated region
        $region57: #{forward.1} parent=43 // pred_check
          %p703 = pneg %p286
        $region58: #{forward.1} parent=43 // pred_check_branch
          %705 = sbr.rel (%p703) target = $region60
        $region59: #{forward.1} parent=43 // pred_region
          %s706 = sand.u32 %s33, 1
          %s707 = scalar_lea.sflag [#allocation6], %s706
          %s708 = sand.u32 %s276, 1
          %s709 = smul.addr %s708, 64
          %s710 = scalar_lea.vmem [#allocation19], %s709
          %s711 = ssub.s32 4, %s33
          %s713 = ssub.s32 1024, 1024
          %714 = vsyncadd %s707, %s713
          %s715 = smul.addr %s711, 16
          %s716 = smul.addr %s715, 64
          %s717 = scalar_lea.hbm %s10, %s716
          %s718 = sshll.u32 %s710, 4
          %s719 = int_to_ptr.vmem [resolvable:$true] %s718
          %724 = dma.hbm_to_vmem [thread:$0]  %s717, 1024, %s719, %s707, 64, 64, 4
        $region60: #{forward.1} parent=43 // pred_fallthru
          _
        // Predicated region
        $region61: #{forward.1} parent=43 // pred_check
          %p725 = pneg %p314
        $region62: #{forward.1} parent=43 // pred_check_branch
          %727 = sbr.rel (%p725) target = $region64
        $region63: #{forward.1} parent=43 // pred_region
          %s728 = sand.u32 %s33, 1
          %s729 = scalar_lea.sflag [#allocation6], %s728
          %s730 = sand.u32 %s304, 1
          %s731 = smul.addr %s730, 64
          %s732 = scalar_lea.vmem [#allocation20], %s731
          %s733 = ssub.s32 4, %s33
          %s735 = ssub.s32 1024, 1024
          %736 = vsyncadd %s729, %s735
          %s737 = smul.addr %s733, 16
          %s738 = smul.addr %s737, 64
          %s739 = scalar_lea.hbm %s11, %s738
          %s740 = sshll.u32 %s732, 4
          %s741 = int_to_ptr.vmem [resolvable:$true] %s740
          %746 = dma.hbm_to_vmem [thread:$0]  %s739, 1024, %s741, %s729, 64, 64, 4
        $region64: #{forward.1} parent=43 // pred_fallthru
          _
        // Predicated region
        $region65: #{forward.1} parent=43 // pred_check
          %p747 = pneg %p342
        $region66: #{forward.1} parent=43 // pred_check_branch
          %749 = sbr.rel (%p747) target = $region68
        $region67: #{forward.1} parent=43 // pred_region
          %s750 = sand.u32 %s33, 1
          %s751 = scalar_lea.sflag [#allocation6], %s750
          %s752 = sand.u32 %s332, 1
          %s753 = smul.addr %s752, 64
          %s754 = scalar_lea.vmem [#allocation21], %s753
          %s755 = ssub.s32 4, %s33
          %s757 = ssub.s32 1024, 1024
          %758 = vsyncadd %s751, %s757
          %s759 = smul.addr %s755, 16
          %s760 = smul.addr %s759, 64
          %s761 = scalar_lea.hbm %s12, %s760
          %s762 = sshll.u32 %s754, 4
          %s763 = int_to_ptr.vmem [resolvable:$true] %s762
          %768 = dma.hbm_to_vmem [thread:$0]  %s761, 1024, %s763, %s751, 64, 64, 4
        $region68: #{forward.1} parent=43 // pred_fallthru
          _
        // Predicated region
        $region69: #{forward.1} parent=43 // pred_check
          %p769 = pneg %p370
        $region70: #{forward.1} parent=43 // pred_check_branch
          %771 = sbr.rel (%p769) target = $region72
        $region71: #{forward.1} parent=43 // pred_region
          %s772 = sand.u32 %s33, 1
          %s773 = scalar_lea.sflag [#allocation6], %s772
          %s774 = sand.u32 %s360, 1
          %s775 = smul.addr %s774, 2
          %s776 = scalar_lea.vmem [#allocation22], %s775
          %s777 = ssub.s32 4, %s33
          %s779 = ssub.s32 32, 32
          %780 = vsyncadd %s773, %s779
          %s781 = smul.addr %s777, 2
          %s782 = smul.addr %s781, 16
          %s783 = scalar_lea.hbm %s13, %s782
          %s785 = sshll.u32 %s776, 4
          %s786 = int_to_ptr.vmem [resolvable:$true] %s785
          %788 = dma.hbm_to_vmem [thread:$0]  %s783, 32, %s786, %s773
        $region72: #{forward.1} parent=43 // pred_fallthru
          _
        // Predicated region
        $region73: #{forward.1} parent=43 // pred_check
          %p789 = pneg %p398
        $region74: #{forward.1} parent=43 // pred_check_branch
          %791 = sbr.rel (%p789) target = $region76
        $region75: #{forward.1} parent=43 // pred_region
          %s792 = sand.u32 %s33, 1
          %s793 = scalar_lea.sflag [#allocation6], %s792
          %s794 = sand.u32 %s388, 1
          %s795 = smul.addr %s794, 768
          %s796 = scalar_lea.vmem [#allocation23], %s795
          %s797 = ssub.s32 4, %s33
          %s799 = ssub.s32 12288, 12288
          %800 = vsyncadd %s793, %s799
          %s801 = smul.addr %s797, 192
          %s802 = smul.addr %s801, 64
          %s803 = scalar_lea.hbm %s14, %s802
          %s804 = sshll.u32 %s796, 4
          %s805 = int_to_ptr.vmem [resolvable:$true] %s804
          %810 = dma.hbm_to_vmem [thread:$0]  %s803, 12288, %s805, %s793, 768, 768, 48
        $region76: #{forward.1} parent=43 // pred_fallthru
          _
        // Predicated region
        $region77: #{forward.1} parent=43 // pred_check
          %p811 = pneg %p426
        $region78: #{forward.1} parent=43 // pred_check_branch
          %813 = sbr.rel (%p811) target = $region80
        $region79: #{forward.1} parent=43 // pred_region
          %s814 = sand.u32 %s33, 1
          %s815 = scalar_lea.sflag [#allocation6], %s814
          %s816 = sand.u32 %s416, 1
          %s817 = smul.addr %s816, 768
          %s818 = scalar_lea.vmem [#allocation24], %s817
          %s819 = ssub.s32 4, %s33
          %s821 = ssub.s32 12288, 12288
          %822 = vsyncadd %s815, %s821
          %s823 = smul.addr %s819, 192
          %s824 = smul.addr %s823, 64
          %s825 = scalar_lea.hbm %s15, %s824
          %s826 = sshll.u32 %s818, 4
          %s827 = int_to_ptr.vmem [resolvable:$true] %s826
          %832 = dma.hbm_to_vmem [thread:$0]  %s825, 12288, %s827, %s815, 768, 768, 48
        $region80: #{forward.1} parent=43 // pred_fallthru
          _
        // Predicated region
        $region81: #{forward.1} parent=43 // pred_check
          %p833 = pneg %p454
        $region82: #{forward.1} parent=43 // pred_check_branch
          %835 = sbr.rel (%p833) target = $region84
        $region83: #{forward.1} parent=43 // pred_region
          %s836 = sand.u32 %s33, 1
          %s837 = scalar_lea.sflag [#allocation6], %s836
          %s838 = sand.u32 %s444, 1
          %s839 = smul.addr %s838, 768
          %s840 = scalar_lea.vmem [#allocation25], %s839
          %s841 = ssub.s32 4, %s33
          %s843 = ssub.s32 12288, 12288
          %844 = vsyncadd %s837, %s843
          %s845 = smul.addr %s841, 192
          %s846 = smul.addr %s845, 64
          %s847 = scalar_lea.hbm %s16, %s846
          %s848 = sshll.u32 %s840, 4
          %s849 = int_to_ptr.vmem [resolvable:$true] %s848
          %854 = dma.hbm_to_vmem [thread:$0]  %s847, 12288, %s849, %s837, 768, 768, 48
        $region84: #{forward.1} parent=43 // pred_fallthru
          _
        // Predicated region
        $region85: #{forward.1} parent=43 // pred_check
          %p855 = pneg %p482
        $region86: #{forward.1} parent=43 // pred_check_branch
          %857 = sbr.rel (%p855) target = $region88
        $region87: #{forward.1} parent=43 // pred_region
          %s858 = sand.u32 %s33, 1
          %s859 = scalar_lea.sflag [#allocation6], %s858
          %s860 = sand.u32 %s472, 1
          %s861 = smul.addr %s860, 24
          %s862 = scalar_lea.vmem [#allocation26], %s861
          %s863 = ssub.s32 4, %s33
          %s865 = ssub.s32 384, 384
          %866 = vsyncadd %s859, %s865
          %s867 = smul.addr %s863, 24
          %s868 = smul.addr %s867, 16
          %s869 = scalar_lea.hbm %s17, %s868
          %s871 = sshll.u32 %s862, 4
          %s872 = int_to_ptr.vmem [resolvable:$true] %s871
          %874 = dma.hbm_to_vmem [thread:$0]  %s869, 384, %s872, %s859
        $region88: #{forward.1} parent=43 // pred_fallthru
          _
      $region44: #{forward.1} parent=5 // pred_fallthru
        _
      %p875 = scmp.le.s32.totalorder 1, %s33
      %p876 = scmp.lt.s32.totalorder %s33, 6
      %p877 = pnand %p875, %p876
      %p878 = pneg %p877
      // Predicated region
      $region89: #{forward.1} parent=5 // pred_check
        _
      $region90: #{forward.1} parent=5 // pred_check_branch
        %880 = sbr.rel (%p877) target = $region92
      $region91: #{forward.1} parent=5 // pred_region
        %s881 = ssub.s32 %s33, 1
        // Predicated region
        $region93: #{forward.1} parent=91 // pred_check
          %p882 = pneg %p75
        $region94: #{forward.1} parent=91 // pred_check_branch
          %884 = sbr.rel (%p882) target = $region96
        $region95: #{forward.1} parent=91 // pred_region
          %885 = dma.done [#allocation6], 1024
        $region96: #{forward.1} parent=91 // pred_fallthru
          _
        // Predicated region
        $region97: #{forward.1} parent=91 // pred_check
          %p886 = pneg %p96
        $region98: #{forward.1} parent=91 // pred_check_branch
          %888 = sbr.rel (%p886) target = $region100
        $region99: #{forward.1} parent=91 // pred_region
          %889 = dma.done [#allocation9], 16384
        $region100: #{forward.1} parent=91 // pred_fallthru
          _
        // Predicated region
        $region101: #{forward.1} parent=91 // pred_check
          %p890 = pneg %p117
        $region102: #{forward.1} parent=91 // pred_check_branch
          %892 = sbr.rel (%p890) target = $region104
        $region103: #{forward.1} parent=91 // pred_region
          %893 = dma.done [#allocation9], 32
        $region104: #{forward.1} parent=91 // pred_fallthru
          _
        // Predicated region
        $region105: #{forward.1} parent=91 // pred_check
          %p894 = pneg %p138
        $region106: #{forward.1} parent=91 // pred_check_branch
          %896 = sbr.rel (%p894) target = $region108
        $region107: #{forward.1} parent=91 // pred_region
          %897 = dma.done [#allocation12], 128
        $region108: #{forward.1} parent=91 // pred_fallthru
          _
        // Predicated region
        $region109: #{forward.1} parent=91 // pred_check
          %p898 = pneg %p159
        $region110: #{forward.1} parent=91 // pred_check_branch
          %900 = sbr.rel (%p898) target = $region112
        $region111: #{forward.1} parent=91 // pred_region
          %901 = dma.done [#allocation12], 16384
        $region112: #{forward.1} parent=91 // pred_fallthru
          _
        // Predicated region
        $region113: #{forward.1} parent=91 // pred_check
          %p902 = pneg %p180
        $region114: #{forward.1} parent=91 // pred_check_branch
          %904 = sbr.rel (%p902) target = $region116
        $region115: #{forward.1} parent=91 // pred_region
          %905 = dma.done [#allocation15], 32
        $region116: #{forward.1} parent=91 // pred_fallthru
          _
        %s906 = sand.u32 %s38, 1
        %s907 = scalar_lea.sflag [#allocation6], %s906
        %s908 = sand.u32 %s195, 1
        %s909 = scalar_lea.vmem [#allocation16], %s908
        // Predicated region
        $region117: #{forward.1} parent=91 // pred_check
          %p910 = pneg %p208
        $region118: #{forward.1} parent=91 // pred_check_branch
          %912 = sbr.rel (%p910) target = $region120
        $region119: #{forward.1} parent=91 // pred_region
          %913 = dma.done %s907, 16
        $region120: #{forward.1} parent=91 // pred_fallthru
          _
        %s914 = sand.u32 %s38, 1
        %s915 = scalar_lea.sflag [#allocation6], %s914
        %s916 = sand.u32 %s223, 1
        %s917 = smul.addr %s916, 256
        %s918 = scalar_lea.vmem [#allocation17], %s917
        // Predicated region
        $region121: #{forward.1} parent=91 // pred_check
          %p919 = pneg %p236
        $region122: #{forward.1} parent=91 // pred_check_branch
          %921 = sbr.rel (%p919) target = $region124
        $region123: #{forward.1} parent=91 // pred_region
          %922 = dma.done %s915, 4096
        $region124: #{forward.1} parent=91 // pred_fallthru
          _
        %s923 = sand.u32 %s38, 1
        %s924 = scalar_lea.sflag [#allocation6], %s923
        %s925 = sand.u32 %s251, 1
        %s926 = smul.addr %s925, 2
        %s927 = scalar_lea.vmem [#allocation18], %s926
        // Predicated region
        $region125: #{forward.1} parent=91 // pred_check
          %p928 = pneg %p264
        $region126: #{forward.1} parent=91 // pred_check_branch
          %930 = sbr.rel (%p928) target = $region128
        $region127: #{forward.1} parent=91 // pred_region
          %931 = dma.done %s924, 32
        $region128: #{forward.1} parent=91 // pred_fallthru
          _
        %s932 = sand.u32 %s38, 1
        %s933 = scalar_lea.sflag [#allocation6], %s932
        %s934 = sand.u32 %s279, 1
        %s935 = smul.addr %s934, 64
        %s936 = scalar_lea.vmem [#allocation19], %s935
        // Predicated region
        $region129: #{forward.1} parent=91 // pred_check
          %p937 = pneg %p292
        $region130: #{forward.1} parent=91 // pred_check_branch
          %939 = sbr.rel (%p937) target = $region132
        $region131: #{forward.1} parent=91 // pred_region
          %940 = dma.done %s933, 1024
        $region132: #{forward.1} parent=91 // pred_fallthru
          _
        %s941 = sand.u32 %s38, 1
        %s942 = scalar_lea.sflag [#allocation6], %s941
        %s943 = sand.u32 %s307, 1
        %s944 = smul.addr %s943, 64
        %s945 = scalar_lea.vmem [#allocation20], %s944
        // Predicated region
        $region133: #{forward.1} parent=91 // pred_check
          %p946 = pneg %p320
        $region134: #{forward.1} parent=91 // pred_check_branch
          %948 = sbr.rel (%p946) target = $region136
        $region135: #{forward.1} parent=91 // pred_region
          %949 = dma.done %s942, 1024
        $region136: #{forward.1} parent=91 // pred_fallthru
          _
        %s950 = sand.u32 %s38, 1
        %s951 = scalar_lea.sflag [#allocation6], %s950
        %s952 = sand.u32 %s335, 1
        %s953 = smul.addr %s952, 64
        %s954 = scalar_lea.vmem [#allocation21], %s953
        // Predicated region
        $region137: #{forward.1} parent=91 // pred_check
          %p955 = pneg %p348
        $region138: #{forward.1} parent=91 // pred_check_branch
          %957 = sbr.rel (%p955) target = $region140
        $region139: #{forward.1} parent=91 // pred_region
          %958 = dma.done %s951, 1024
        $region140: #{forward.1} parent=91 // pred_fallthru
          _
        %s959 = sand.u32 %s38, 1
        %s960 = scalar_lea.sflag [#allocation6], %s959
        %s961 = sand.u32 %s363, 1
        %s962 = smul.addr %s961, 2
        %s963 = scalar_lea.vmem [#allocation22], %s962
        // Predicated region
        $region141: #{forward.1} parent=91 // pred_check
          %p964 = pneg %p376
        $region142: #{forward.1} parent=91 // pred_check_branch
          %966 = sbr.rel (%p964) target = $region144
        $region143: #{forward.1} parent=91 // pred_region
          %967 = dma.done %s960, 32
        $region144: #{forward.1} parent=91 // pred_fallthru
          _
        %s968 = sand.u32 %s38, 1
        %s969 = scalar_lea.sflag [#allocation6], %s968
        %s970 = sand.u32 %s391, 1
        %s971 = smul.addr %s970, 768
        %s972 = scalar_lea.vmem [#allocation23], %s971
        // Predicated region
        $region145: #{forward.1} parent=91 // pred_check
          %p973 = pneg %p404
        $region146: #{forward.1} parent=91 // pred_check_branch
          %975 = sbr.rel (%p973) target = $region148
        $region147: #{forward.1} parent=91 // pred_region
          %976 = dma.done %s969, 12288
        $region148: #{forward.1} parent=91 // pred_fallthru
          _
        %s977 = sand.u32 %s38, 1
        %s978 = scalar_lea.sflag [#allocation6], %s977
        %s979 = sand.u32 %s419, 1
        %s980 = smul.addr %s979, 768
        %s981 = scalar_lea.vmem [#allocation24], %s980
        // Predicated region
        $region149: #{forward.1} parent=91 // pred_check
          %p982 = pneg %p432
        $region150: #{forward.1} parent=91 // pred_check_branch
          %984 = sbr.rel (%p982) target = $region152
        $region151: #{forward.1} parent=91 // pred_region
          %985 = dma.done %s978, 12288
        $region152: #{forward.1} parent=91 // pred_fallthru
          _
        %s986 = sand.u32 %s38, 1
        %s987 = scalar_lea.sflag [#allocation6], %s986
        %s988 = sand.u32 %s447, 1
        %s989 = smul.addr %s988, 768
        %s990 = scalar_lea.vmem [#allocation25], %s989
        // Predicated region
        $region153: #{forward.1} parent=91 // pred_check
          %p991 = pneg %p460
        $region154: #{forward.1} parent=91 // pred_check_branch
          %993 = sbr.rel (%p991) target = $region156
        $region155: #{forward.1} parent=91 // pred_region
          %994 = dma.done %s987, 12288
        $region156: #{forward.1} parent=91 // pred_fallthru
          _
        %s995 = sand.u32 %s38, 1
        %s996 = scalar_lea.sflag [#allocation6], %s995
        %s997 = sand.u32 %s475, 1
        %s998 = smul.addr %s997, 24
        %s999 = scalar_lea.vmem [#allocation26], %s998
        // Predicated region
        $region157: #{forward.1} parent=91 // pred_check
          %p1000 = pneg %p488
        $region158: #{forward.1} parent=91 // pred_check_branch
          %1002 = sbr.rel (%p1000) target = $region160
        $region159: #{forward.1} parent=91 // pred_region
          %1003 = dma.done %s996, 384
        $region160: #{forward.1} parent=91 // pred_fallthru
          _
        %p1004 = pneg %p54
        %p1005 = pneg %p51
        %p1006 = pneg %p75
        %p1007 = pneg %p72
        %p1008 = pneg %p96
        %p1009 = pneg %p93
        %p1010 = pneg %p117
        %p1011 = pneg %p114
        %p1012 = pneg %p138
        %p1013 = pneg %p135
        %p1014 = pneg %p159
        %p1015 = pneg %p156
        %p1016 = pneg %p180
        %p1017 = pneg %p177
        %s1018 = sand.u32 %s38, 1
        %s1019 = scalar_lea.sflag [#allocation6], %s1018
        %s1020 = sand.u32 %s195, 1
        %s1021 = scalar_lea.vmem [#allocation16], %s1020
        %p1022 = pneg %p208
        %p1023 = pneg %p205
        %s1024 = sand.u32 %s38, 1
        %s1025 = scalar_lea.sflag [#allocation6], %s1024
        %s1026 = sand.u32 %s223, 1
        %s1027 = smul.addr %s1026, 256
        %s1028 = scalar_lea.vmem [#allocation17], %s1027
        %p1029 = pneg %p236
        %p1030 = pneg %p233
        %s1031 = sand.u32 %s38, 1
        %s1032 = scalar_lea.sflag [#allocation6], %s1031
        %s1033 = sand.u32 %s251, 1
        %s1034 = smul.addr %s1033, 2
        %s1035 = scalar_lea.vmem [#allocation18], %s1034
        %p1036 = pneg %p264
        %p1037 = pneg %p261
        %s1038 = sand.u32 %s38, 1
        %s1039 = scalar_lea.sflag [#allocation6], %s1038
        %s1040 = sand.u32 %s279, 1
        %s1041 = smul.addr %s1040, 64
        %s1042 = scalar_lea.vmem [#allocation19], %s1041
        %p1043 = pneg %p292
        %p1044 = pneg %p289
        %s1045 = sand.u32 %s38, 1
        %s1046 = scalar_lea.sflag [#allocation6], %s1045
        %s1047 = sand.u32 %s307, 1
        %s1048 = smul.addr %s1047, 64
        %s1049 = scalar_lea.vmem [#allocation20], %s1048
        %p1050 = pneg %p320
        %p1051 = pneg %p317
        %s1052 = sand.u32 %s38, 1
        %s1053 = scalar_lea.sflag [#allocation6], %s1052
        %s1054 = sand.u32 %s335, 1
        %s1055 = smul.addr %s1054, 64
        %s1056 = scalar_lea.vmem [#allocation21], %s1055
        %p1057 = pneg %p348
        %p1058 = pneg %p345
        %s1059 = sand.u32 %s38, 1
        %s1060 = scalar_lea.sflag [#allocation6], %s1059
        %s1061 = sand.u32 %s363, 1
        %s1062 = smul.addr %s1061, 2
        %s1063 = scalar_lea.vmem [#allocation22], %s1062
        %p1064 = pneg %p376
        %p1065 = pneg %p373
        %s1066 = sand.u32 %s38, 1
        %s1067 = scalar_lea.sflag [#allocation6], %s1066
        %s1068 = sand.u32 %s391, 1
        %s1069 = smul.addr %s1068, 768
        %s1070 = scalar_lea.vmem [#allocation23], %s1069
        %p1071 = pneg %p404
        %p1072 = pneg %p401
        %s1073 = sand.u32 %s38, 1
        %s1074 = scalar_lea.sflag [#allocation6], %s1073
        %s1075 = sand.u32 %s419, 1
        %s1076 = smul.addr %s1075, 768
        %s1077 = scalar_lea.vmem [#allocation24], %s1076
        %p1078 = pneg %p432
        %p1079 = pneg %p429
        %s1080 = sand.u32 %s38, 1
        %s1081 = scalar_lea.sflag [#allocation6], %s1080
        %s1082 = sand.u32 %s447, 1
        %s1083 = smul.addr %s1082, 768
        %s1084 = scalar_lea.vmem [#allocation25], %s1083
        %p1085 = pneg %p460
        %p1086 = pneg %p457
        %s1087 = sand.u32 %s38, 1
        %s1088 = scalar_lea.sflag [#allocation6], %s1087
        %s1089 = sand.u32 %s475, 1
        %s1090 = smul.addr %s1089, 24
        %s1091 = scalar_lea.vmem [#allocation26], %s1090
        %p1092 = pneg %p488
        %p1093 = pneg %p485
        %p1094 = pneg %p509
        %p1095 = pneg %p506
        %p1096 = pneg %p530
        %p1097 = pneg %p527
        %p1098 = pneg %p551
        %p1099 = pneg %p548
        %s1100 = ssub.s32 4, %s38
        %s1101 = ssub.s32 4, %s38
        %s1102 = ssub.s32 4, %s38
        %s1103 = ssub.s32 4, %s38
        %s1104 = ssub.s32 4, %s38
        %s1105 = ssub.s32 4, %s38
        %s1106 = ssub.s32 4, %s38
        %s1107 = ssub.s32 4, %s38
        %s1108 = ssub.s32 4, %s38
        %s1109 = ssub.s32 4, %s38
        %s1110 = ssub.s32 4, %s38
        %p1112 = scmp.eq.s32.totalorder %s38, 0
        // Predicated region
        $region161: #{forward.1} parent=91 // pred_check
          %p1113 = pneg %p1112
        $region162: #{forward.1} parent=91 // pred_check_branch
          %1115 = sbr.rel (%p1113) target = $region164
        $region163: #{forward.1} parent=91 // pred_region
          %v1116 = vld [vmem:[#allocation5] sm:$0xff]
          %v1117 = vld [vmem:[#allocation5 + $0x8] sm:$0xff]
          %v1118 = vld [vmem:[#allocation5 + $0x10] sm:$0xff]
          %v1119 = vld [vmem:[#allocation5 + $0x18] sm:$0xff]
          %v1120 = vld [vmem:[#allocation5 + $0x20] sm:$0xff]
          %v1121 = vld [vmem:[#allocation5 + $0x28] sm:$0xff]
          %v1122 = vld [vmem:[#allocation5 + $0x30] sm:$0xff]
          %v1123 = vld [vmem:[#allocation5 + $0x38] sm:$0xff]
          %v1124 = vpack.c.bf16 %v1116, %v1116
          %v1125 = vpack.c.bf16 %v1117, %v1117
          %v1126 = vpack.c.bf16 %v1118, %v1118
          %v1127 = vpack.c.bf16 %v1119, %v1119
          %v1128 = vpack.c.bf16 %v1120, %v1120
          %v1129 = vpack.c.bf16 %v1121, %v1121
          %v1130 = vpack.c.bf16 %v1122, %v1122
          %v1131 = vpack.c.bf16 %v1123, %v1123
          %v1132 = vld [vmem:[#allocation8] sm:$0xff]
          %v1133 = vld [vmem:[#allocation8 + $0x8] sm:$0xff]
          %v1134 = vld [vmem:[#allocation8 + $0x10] sm:$0xff]
          %v1135 = vld [vmem:[#allocation8 + $0x18] sm:$0xff]
          %v1136 = vld [vmem:[#allocation8 + $0x20] sm:$0xff]
          %v1137 = vld [vmem:[#allocation8 + $0x28] sm:$0xff]
          %v1138 = vld [vmem:[#allocation8 + $0x30] sm:$0xff]
          %v1139 = vld [vmem:[#allocation8 + $0x38] sm:$0xff]
          %v1140 = vld [vmem:[#allocation8 + $0x40] sm:$0xff]
          %v1141 = vld [vmem:[#allocation8 + $0x48] sm:$0xff]
          %v1142 = vld [vmem:[#allocation8 + $0x50] sm:$0xff]
          %v1143 = vld [vmem:[#allocation8 + $0x58] sm:$0xff]
          %v1144 = vld [vmem:[#allocation8 + $0x60] sm:$0xff]
          %v1145 = vld [vmem:[#allocation8 + $0x68] sm:$0xff]
          %v1146 = vld [vmem:[#allocation8 + $0x70] sm:$0xff]
          %v1147 = vld [vmem:[#allocation8 + $0x78] sm:$0xff]
          %v1148 = vld [vmem:[#allocation8 + $0x80] sm:$0xff]
          %v1149 = vld [vmem:[#allocation8 + $0x88] sm:$0xff]
          %v1150 = vld [vmem:[#allocation8 + $0x90] sm:$0xff]
          %v1151 = vld [vmem:[#allocation8 + $0x98] sm:$0xff]
          %v1152 = vld [vmem:[#allocation8 + $0xa0] sm:$0xff]
          %v1153 = vld [vmem:[#allocation8 + $0xa8] sm:$0xff]
          %v1154 = vld [vmem:[#allocation8 + $0xb0] sm:$0xff]
          %v1155 = vld [vmem:[#allocation8 + $0xb8] sm:$0xff]
          %v1156 = vld [vmem:[#allocation8 + $0xc0] sm:$0xff]
          %v1157 = vld [vmem:[#allocation8 + $0xc8] sm:$0xff]
          %v1158 = vld [vmem:[#allocation8 + $0xd0] sm:$0xff]
          %v1159 = vld [vmem:[#allocation8 + $0xd8] sm:$0xff]
          %v1160 = vld [vmem:[#allocation8 + $0xe0] sm:$0xff]
          %v1161 = vld [vmem:[#allocation8 + $0xe8] sm:$0xff]
          %v1162 = vld [vmem:[#allocation8 + $0xf0] sm:$0xff]
          %v1163 = vld [vmem:[#allocation8 + $0xf8] sm:$0xff]
          %v1164 = vld [vmem:[#allocation8 + $0x100] sm:$0xff]
          %v1165 = vld [vmem:[#allocation8 + $0x108] sm:$0xff]
          %v1166 = vld [vmem:[#allocation8 + $0x110] sm:$0xff]
          %v1167 = vld [vmem:[#allocation8 + $0x118] sm:$0xff]
          %v1168 = vld [vmem:[#allocation8 + $0x120] sm:$0xff]
          %v1169 = vld [vmem:[#allocation8 + $0x128] sm:$0xff]
          %v1170 = vld [vmem:[#allocation8 + $0x130] sm:$0xff]
          %v1171 = vld [vmem:[#allocation8 + $0x138] sm:$0xff]
          %v1172 = vld [vmem:[#allocation8 + $0x140] sm:$0xff]
          %v1173 = vld [vmem:[#allocation8 + $0x148] sm:$0xff]
          %v1174 = vld [vmem:[#allocation8 + $0x150] sm:$0xff]
          %v1175 = vld [vmem:[#allocation8 + $0x158] sm:$0xff]
          %v1176 = vld [vmem:[#allocation8 + $0x160] sm:$0xff]
          %v1177 = vld [vmem:[#allocation8 + $0x168] sm:$0xff]
          %v1178 = vld [vmem:[#allocation8 + $0x170] sm:$0xff]
          %v1179 = vld [vmem:[#allocation8 + $0x178] sm:$0xff]
          %v1180 = vld [vmem:[#allocation8 + $0x180] sm:$0xff]
          %v1181 = vld [vmem:[#allocation8 + $0x188] sm:$0xff]
          %v1182 = vld [vmem:[#allocation8 + $0x190] sm:$0xff]
          %v1183 = vld [vmem:[#allocation8 + $0x198] sm:$0xff]
          %v1184 = vld [vmem:[#allocation8 + $0x1a0] sm:$0xff]
          %v1185 = vld [vmem:[#allocation8 + $0x1a8] sm:$0xff]
          %v1186 = vld [vmem:[#allocation8 + $0x1b0] sm:$0xff]
          %v1187 = vld [vmem:[#allocation8 + $0x1b8] sm:$0xff]
          %v1188 = vld [vmem:[#allocation8 + $0x1c0] sm:$0xff]
          %v1189 = vld [vmem:[#allocation8 + $0x1c8] sm:$0xff]
          %v1190 = vld [vmem:[#allocation8 + $0x1d0] sm:$0xff]
          %v1191 = vld [vmem:[#allocation8 + $0x1d8] sm:$0xff]
          %v1192 = vld [vmem:[#allocation8 + $0x1e0] sm:$0xff]
          %v1193 = vld [vmem:[#allocation8 + $0x1e8] sm:$0xff]
          %v1194 = vld [vmem:[#allocation8 + $0x1f0] sm:$0xff]
          %v1195 = vld [vmem:[#allocation8 + $0x1f8] sm:$0xff]
          %v1196 = vld [vmem:[#allocation8 + $0x200] sm:$0xff]
          %v1197 = vld [vmem:[#allocation8 + $0x208] sm:$0xff]
          %v1198 = vld [vmem:[#allocation8 + $0x210] sm:$0xff]
          %v1199 = vld [vmem:[#allocation8 + $0x218] sm:$0xff]
          %v1200 = vld [vmem:[#allocation8 + $0x220] sm:$0xff]
          %v1201 = vld [vmem:[#allocation8 + $0x228] sm:$0xff]
          %v1202 = vld [vmem:[#allocation8 + $0x230] sm:$0xff]
          %v1203 = vld [vmem:[#allocation8 + $0x238] sm:$0xff]
          %v1204 = vld [vmem:[#allocation8 + $0x240] sm:$0xff]
          %v1205 = vld [vmem:[#allocation8 + $0x248] sm:$0xff]
          %v1206 = vld [vmem:[#allocation8 + $0x250] sm:$0xff]
          %v1207 = vld [vmem:[#allocation8 + $0x258] sm:$0xff]
          %v1208 = vld [vmem:[#allocation8 + $0x260] sm:$0xff]
          %v1209 = vld [vmem:[#allocation8 + $0x268] sm:$0xff]
          %v1210 = vld [vmem:[#allocation8 + $0x270] sm:$0xff]
          %v1211 = vld [vmem:[#allocation8 + $0x278] sm:$0xff]
          %v1212 = vld [vmem:[#allocation8 + $0x280] sm:$0xff]
          %v1213 = vld [vmem:[#allocation8 + $0x288] sm:$0xff]
          %v1214 = vld [vmem:[#allocation8 + $0x290] sm:$0xff]
          %v1215 = vld [vmem:[#allocation8 + $0x298] sm:$0xff]
          %v1216 = vld [vmem:[#allocation8 + $0x2a0] sm:$0xff]
          %v1217 = vld [vmem:[#allocation8 + $0x2a8] sm:$0xff]
          %v1218 = vld [vmem:[#allocation8 + $0x2b0] sm:$0xff]
          %v1219 = vld [vmem:[#allocation8 + $0x2b8] sm:$0xff]
          %v1220 = vld [vmem:[#allocation8 + $0x2c0] sm:$0xff]
          %v1221 = vld [vmem:[#allocation8 + $0x2c8] sm:$0xff]
          %v1222 = vld [vmem:[#allocation8 + $0x2d0] sm:$0xff]
          %v1223 = vld [vmem:[#allocation8 + $0x2d8] sm:$0xff]
          %v1224 = vld [vmem:[#allocation8 + $0x2e0] sm:$0xff]
          %v1225 = vld [vmem:[#allocation8 + $0x2e8] sm:$0xff]
          %v1226 = vld [vmem:[#allocation8 + $0x2f0] sm:$0xff]
          %v1227 = vld [vmem:[#allocation8 + $0x2f8] sm:$0xff]
          %v1228 = vld [vmem:[#allocation8 + $0x300] sm:$0xff]
          %v1229 = vld [vmem:[#allocation8 + $0x308] sm:$0xff]
          %v1230 = vld [vmem:[#allocation8 + $0x310] sm:$0xff]
          %v1231 = vld [vmem:[#allocation8 + $0x318] sm:$0xff]
          %v1232 = vld [vmem:[#allocation8 + $0x320] sm:$0xff]
          %v1233 = vld [vmem:[#allocation8 + $0x328] sm:$0xff]
          %v1234 = vld [vmem:[#allocation8 + $0x330] sm:$0xff]
          %v1235 = vld [vmem:[#allocation8 + $0x338] sm:$0xff]
          %v1236 = vld [vmem:[#allocation8 + $0x340] sm:$0xff]
          %v1237 = vld [vmem:[#allocation8 + $0x348] sm:$0xff]
          %v1238 = vld [vmem:[#allocation8 + $0x350] sm:$0xff]
          %v1239 = vld [vmem:[#allocation8 + $0x358] sm:$0xff]
          %v1240 = vld [vmem:[#allocation8 + $0x360] sm:$0xff]
          %v1241 = vld [vmem:[#allocation8 + $0x368] sm:$0xff]
          %v1242 = vld [vmem:[#allocation8 + $0x370] sm:$0xff]
          %v1243 = vld [vmem:[#allocation8 + $0x378] sm:$0xff]
          %v1244 = vld [vmem:[#allocation8 + $0x380] sm:$0xff]
          %v1245 = vld [vmem:[#allocation8 + $0x388] sm:$0xff]
          %v1246 = vld [vmem:[#allocation8 + $0x390] sm:$0xff]
          %v1247 = vld [vmem:[#allocation8 + $0x398] sm:$0xff]
          %v1248 = vld [vmem:[#allocation8 + $0x3a0] sm:$0xff]
          %v1249 = vld [vmem:[#allocation8 + $0x3a8] sm:$0xff]
          %v1250 = vld [vmem:[#allocation8 + $0x3b0] sm:$0xff]
          %v1251 = vld [vmem:[#allocation8 + $0x3b8] sm:$0xff]
          %v1252 = vld [vmem:[#allocation8 + $0x3c0] sm:$0xff]
          %v1253 = vld [vmem:[#allocation8 + $0x3c8] sm:$0xff]
          %v1254 = vld [vmem:[#allocation8 + $0x3d0] sm:$0xff]
          %v1255 = vld [vmem:[#allocation8 + $0x3d8] sm:$0xff]
          %v1256 = vld [vmem:[#allocation8 + $0x3e0] sm:$0xff]
          %v1257 = vld [vmem:[#allocation8 + $0x3e8] sm:$0xff]
          %v1258 = vld [vmem:[#allocation8 + $0x3f0] sm:$0xff]
          %v1259 = vld [vmem:[#allocation8 + $0x3f8] sm:$0xff]
          %v1260 = vld [vmem:[#allocation10] sm:$0x3]
          %v1262 = vlaneseq
          %v1263 = vshrl.u32 %v1262, 7
          %v1264 = vsub.s32 0, %v1263
          %v1265 = vrot.slane %v1260, %v1264
          %v1266 = vlaneseq
          %v1267 = vshrl.u32 %v1266, 7
          %v1268 = vsub.s32 1, %v1267
          %v1269 = vrot.slane %v1260, %v1268
          %v1400 = vunpack.c.l.b16 %v1132
          %v1401 = vunpack.c.h.b16 %v1132
          %v1402 = vunpack.c.l.b16 %v1133
          %v1403 = vunpack.c.h.b16 %v1133
          %v1404 = vunpack.c.l.b16 %v1134
          %v1405 = vunpack.c.h.b16 %v1134
          %v1406 = vunpack.c.l.b16 %v1135
          %v1407 = vunpack.c.h.b16 %v1135
          %v1408 = vunpack.c.l.b16 %v1136
          %v1409 = vunpack.c.h.b16 %v1136
          %v1410 = vunpack.c.l.b16 %v1137
          %v1411 = vunpack.c.h.b16 %v1137
          %v1412 = vunpack.c.l.b16 %v1138
          %v1413 = vunpack.c.h.b16 %v1138
          %v1414 = vunpack.c.l.b16 %v1139
          %v1415 = vunpack.c.h.b16 %v1139
          %v1416 = vunpack.c.l.b16 %v1140
          %v1417 = vunpack.c.h.b16 %v1140
          %v1418 = vunpack.c.l.b16 %v1141
          %v1419 = vunpack.c.h.b16 %v1141
          %v1420 = vunpack.c.l.b16 %v1142
          %v1421 = vunpack.c.h.b16 %v1142
          %v1422 = vunpack.c.l.b16 %v1143
          %v1423 = vunpack.c.h.b16 %v1143
          %v1424 = vunpack.c.l.b16 %v1144
          %v1425 = vunpack.c.h.b16 %v1144
          %v1426 = vunpack.c.l.b16 %v1145
          %v1427 = vunpack.c.h.b16 %v1145
          %v1428 = vunpack.c.l.b16 %v1146
          %v1429 = vunpack.c.h.b16 %v1146
          %v1430 = vunpack.c.l.b16 %v1147
          %v1431 = vunpack.c.h.b16 %v1147
          %v1432 = vunpack.c.l.b16 %v1148
          %v1433 = vunpack.c.h.b16 %v1148
          %v1434 = vunpack.c.l.b16 %v1149
          %v1435 = vunpack.c.h.b16 %v1149
          %v1436 = vunpack.c.l.b16 %v1150
          %v1437 = vunpack.c.h.b16 %v1150
          %v1438 = vunpack.c.l.b16 %v1151
          %v1439 = vunpack.c.h.b16 %v1151
          %v1440 = vunpack.c.l.b16 %v1152
          %v1441 = vunpack.c.h.b16 %v1152
          %v1442 = vunpack.c.l.b16 %v1153
          %v1443 = vunpack.c.h.b16 %v1153
          %v1444 = vunpack.c.l.b16 %v1154
          %v1445 = vunpack.c.h.b16 %v1154
          %v1446 = vunpack.c.l.b16 %v1155
          %v1447 = vunpack.c.h.b16 %v1155
          %v1448 = vunpack.c.l.b16 %v1156
          %v1449 = vunpack.c.h.b16 %v1156
          %v1450 = vunpack.c.l.b16 %v1157
          %v1451 = vunpack.c.h.b16 %v1157
          %v1452 = vunpack.c.l.b16 %v1158
          %v1453 = vunpack.c.h.b16 %v1158
          %v1454 = vunpack.c.l.b16 %v1159
          %v1455 = vunpack.c.h.b16 %v1159
          %v1456 = vunpack.c.l.b16 %v1160
          %v1457 = vunpack.c.h.b16 %v1160
          %v1458 = vunpack.c.l.b16 %v1161
          %v1459 = vunpack.c.h.b16 %v1161
          %v1460 = vunpack.c.l.b16 %v1162
          %v1461 = vunpack.c.h.b16 %v1162
          %v1462 = vunpack.c.l.b16 %v1163
          %v1463 = vunpack.c.h.b16 %v1163
          %v1464 = vunpack.c.l.b16 %v1164
          %v1465 = vunpack.c.h.b16 %v1164
          %v1466 = vunpack.c.l.b16 %v1165
          %v1467 = vunpack.c.h.b16 %v1165
          %v1468 = vunpack.c.l.b16 %v1166
          %v1469 = vunpack.c.h.b16 %v1166
          %v1470 = vunpack.c.l.b16 %v1167
          %v1471 = vunpack.c.h.b16 %v1167
          %v1472 = vunpack.c.l.b16 %v1168
          %v1473 = vunpack.c.h.b16 %v1168
          %v1474 = vunpack.c.l.b16 %v1169
          %v1475 = vunpack.c.h.b16 %v1169
          %v1476 = vunpack.c.l.b16 %v1170
          %v1477 = vunpack.c.h.b16 %v1170
          %v1478 = vunpack.c.l.b16 %v1171
          %v1479 = vunpack.c.h.b16 %v1171
          %v1480 = vunpack.c.l.b16 %v1172
          %v1481 = vunpack.c.h.b16 %v1172
          %v1482 = vunpack.c.l.b16 %v1173
          %v1483 = vunpack.c.h.b16 %v1173
          %v1484 = vunpack.c.l.b16 %v1174
          %v1485 = vunpack.c.h.b16 %v1174
          %v1486 = vunpack.c.l.b16 %v1175
          %v1487 = vunpack.c.h.b16 %v1175
          %v1488 = vunpack.c.l.b16 %v1176
          %v1489 = vunpack.c.h.b16 %v1176
          %v1490 = vunpack.c.l.b16 %v1177
          %v1491 = vunpack.c.h.b16 %v1177
          %v1492 = vunpack.c.l.b16 %v1178
          %v1493 = vunpack.c.h.b16 %v1178
          %v1494 = vunpack.c.l.b16 %v1179
          %v1495 = vunpack.c.h.b16 %v1179
          %v1496 = vunpack.c.l.b16 %v1180
          %v1497 = vunpack.c.h.b16 %v1180
          %v1498 = vunpack.c.l.b16 %v1181
          %v1499 = vunpack.c.h.b16 %v1181
          %v1500 = vunpack.c.l.b16 %v1182
          %v1501 = vunpack.c.h.b16 %v1182
          %v1502 = vunpack.c.l.b16 %v1183
          %v1503 = vunpack.c.h.b16 %v1183
          %v1504 = vunpack.c.l.b16 %v1184
          %v1505 = vunpack.c.h.b16 %v1184
          %v1506 = vunpack.c.l.b16 %v1185
          %v1507 = vunpack.c.h.b16 %v1185
          %v1508 = vunpack.c.l.b16 %v1186
          %v1509 = vunpack.c.h.b16 %v1186
          %v1510 = vunpack.c.l.b16 %v1187
          %v1511 = vunpack.c.h.b16 %v1187
          %v1512 = vunpack.c.l.b16 %v1188
          %v1513 = vunpack.c.h.b16 %v1188
          %v1514 = vunpack.c.l.b16 %v1189
          %v1515 = vunpack.c.h.b16 %v1189
          %v1516 = vunpack.c.l.b16 %v1190
          %v1517 = vunpack.c.h.b16 %v1190
          %v1518 = vunpack.c.l.b16 %v1191
          %v1519 = vunpack.c.h.b16 %v1191
          %v1520 = vunpack.c.l.b16 %v1192
          %v1521 = vunpack.c.h.b16 %v1192
          %v1522 = vunpack.c.l.b16 %v1193
          %v1523 = vunpack.c.h.b16 %v1193
          %v1524 = vunpack.c.l.b16 %v1194
          %v1525 = vunpack.c.h.b16 %v1194
          %v1526 = vunpack.c.l.b16 %v1195
          %v1527 = vunpack.c.h.b16 %v1195
          %v1528 = vunpack.c.l.b16 %v1196
          %v1529 = vunpack.c.h.b16 %v1196
          %v1530 = vunpack.c.l.b16 %v1197
          %v1531 = vunpack.c.h.b16 %v1197
          %v1532 = vunpack.c.l.b16 %v1198
          %v1533 = vunpack.c.h.b16 %v1198
          %v1534 = vunpack.c.l.b16 %v1199
          %v1535 = vunpack.c.h.b16 %v1199
          %v1536 = vunpack.c.l.b16 %v1200
          %v1537 = vunpack.c.h.b16 %v1200
          %v1538 = vunpack.c.l.b16 %v1201
          %v1539 = vunpack.c.h.b16 %v1201
          %v1540 = vunpack.c.l.b16 %v1202
          %v1541 = vunpack.c.h.b16 %v1202
          %v1542 = vunpack.c.l.b16 %v1203
          %v1543 = vunpack.c.h.b16 %v1203
          %v1544 = vunpack.c.l.b16 %v1204
          %v1545 = vunpack.c.h.b16 %v1204
          %v1546 = vunpack.c.l.b16 %v1205
          %v1547 = vunpack.c.h.b16 %v1205
          %v1548 = vunpack.c.l.b16 %v1206
          %v1549 = vunpack.c.h.b16 %v1206
          %v1550 = vunpack.c.l.b16 %v1207
          %v1551 = vunpack.c.h.b16 %v1207
          %v1552 = vunpack.c.l.b16 %v1208
          %v1553 = vunpack.c.h.b16 %v1208
          %v1554 = vunpack.c.l.b16 %v1209
          %v1555 = vunpack.c.h.b16 %v1209
          %v1556 = vunpack.c.l.b16 %v1210
          %v1557 = vunpack.c.h.b16 %v1210
          %v1558 = vunpack.c.l.b16 %v1211
          %v1559 = vunpack.c.h.b16 %v1211
          %v1560 = vunpack.c.l.b16 %v1212
          %v1561 = vunpack.c.h.b16 %v1212
          %v1562 = vunpack.c.l.b16 %v1213
          %v1563 = vunpack.c.h.b16 %v1213
          %v1564 = vunpack.c.l.b16 %v1214
          %v1565 = vunpack.c.h.b16 %v1214
          %v1566 = vunpack.c.l.b16 %v1215
          %v1567 = vunpack.c.h.b16 %v1215
          %v1568 = vunpack.c.l.b16 %v1216
          %v1569 = vunpack.c.h.b16 %v1216
          %v1570 = vunpack.c.l.b16 %v1217
          %v1571 = vunpack.c.h.b16 %v1217
          %v1572 = vunpack.c.l.b16 %v1218
          %v1573 = vunpack.c.h.b16 %v1218
          %v1574 = vunpack.c.l.b16 %v1219
          %v1575 = vunpack.c.h.b16 %v1219
          %v1576 = vunpack.c.l.b16 %v1220
          %v1577 = vunpack.c.h.b16 %v1220
          %v1578 = vunpack.c.l.b16 %v1221
          %v1579 = vunpack.c.h.b16 %v1221
          %v1580 = vunpack.c.l.b16 %v1222
          %v1581 = vunpack.c.h.b16 %v1222
          %v1582 = vunpack.c.l.b16 %v1223
          %v1583 = vunpack.c.h.b16 %v1223
          %v1584 = vunpack.c.l.b16 %v1224
          %v1585 = vunpack.c.h.b16 %v1224
          %v1586 = vunpack.c.l.b16 %v1225
          %v1587 = vunpack.c.h.b16 %v1225
          %v1588 = vunpack.c.l.b16 %v1226
          %v1589 = vunpack.c.h.b16 %v1226
          %v1590 = vunpack.c.l.b16 %v1227
          %v1591 = vunpack.c.h.b16 %v1227
          %v1592 = vunpack.c.l.b16 %v1228
          %v1593 = vunpack.c.h.b16 %v1228
          %v1594 = vunpack.c.l.b16 %v1229
          %v1595 = vunpack.c.h.b16 %v1229
          %v1596 = vunpack.c.l.b16 %v1230
          %v1597 = vunpack.c.h.b16 %v1230
          %v1598 = vunpack.c.l.b16 %v1231
          %v1599 = vunpack.c.h.b16 %v1231
          %v1600 = vunpack.c.l.b16 %v1232
          %v1601 = vunpack.c.h.b16 %v1232
          %v1602 = vunpack.c.l.b16 %v1233
          %v1603 = vunpack.c.h.b16 %v1233
          %v1604 = vunpack.c.l.b16 %v1234
          %v1605 = vunpack.c.h.b16 %v1234
          %v1606 = vunpack.c.l.b16 %v1235
          %v1607 = vunpack.c.h.b16 %v1235
          %v1608 = vunpack.c.l.b16 %v1236
          %v1609 = vunpack.c.h.b16 %v1236
          %v1610 = vunpack.c.l.b16 %v1237
          %v1611 = vunpack.c.h.b16 %v1237
          %v1612 = vunpack.c.l.b16 %v1238
          %v1613 = vunpack.c.h.b16 %v1238
          %v1614 = vunpack.c.l.b16 %v1239
          %v1615 = vunpack.c.h.b16 %v1239
          %v1616 = vunpack.c.l.b16 %v1240
          %v1617 = vunpack.c.h.b16 %v1240
          %v1618 = vunpack.c.l.b16 %v1241
          %v1619 = vunpack.c.h.b16 %v1241
          %v1620 = vunpack.c.l.b16 %v1242
          %v1621 = vunpack.c.h.b16 %v1242
          %v1622 = vunpack.c.l.b16 %v1243
          %v1623 = vunpack.c.h.b16 %v1243
          %v1624 = vunpack.c.l.b16 %v1244
          %v1625 = vunpack.c.h.b16 %v1244
          %v1626 = vunpack.c.l.b16 %v1245
          %v1627 = vunpack.c.h.b16 %v1245
          %v1628 = vunpack.c.l.b16 %v1246
          %v1629 = vunpack.c.h.b16 %v1246
          %v1630 = vunpack.c.l.b16 %v1247
          %v1631 = vunpack.c.h.b16 %v1247
          %v1632 = vunpack.c.l.b16 %v1248
          %v1633 = vunpack.c.h.b16 %v1248
          %v1634 = vunpack.c.l.b16 %v1249
          %v1635 = vunpack.c.h.b16 %v1249
          %v1636 = vunpack.c.l.b16 %v1250
          %v1637 = vunpack.c.h.b16 %v1250
          %v1638 = vunpack.c.l.b16 %v1251
          %v1639 = vunpack.c.h.b16 %v1251
          %v1640 = vunpack.c.l.b16 %v1252
          %v1641 = vunpack.c.h.b16 %v1252
          %v1642 = vunpack.c.l.b16 %v1253
          %v1643 = vunpack.c.h.b16 %v1253
          %v1644 = vunpack.c.l.b16 %v1254
          %v1645 = vunpack.c.h.b16 %v1254
          %v1646 = vunpack.c.l.b16 %v1255
          %v1647 = vunpack.c.h.b16 %v1255
          %v1648 = vunpack.c.l.b16 %v1256
          %v1649 = vunpack.c.h.b16 %v1256
          %v1650 = vunpack.c.l.b16 %v1257
          %v1651 = vunpack.c.h.b16 %v1257
          %v1652 = vunpack.c.l.b16 %v1258
          %v1653 = vunpack.c.h.b16 %v1258
          %v1654 = vunpack.c.l.b16 %v1259
          %v1655 = vunpack.c.h.b16 %v1259
          %v1656 = vpack.c.b16 %v1402, %v1400
          %v1657 = vpack.c.b16 %v1403, %v1401
          %v1658 = vpack.c.b16 %v1406, %v1404
          %v1659 = vpack.c.b16 %v1407, %v1405
          %v1660 = vpack.c.b16 %v1410, %v1408
          %v1661 = vpack.c.b16 %v1411, %v1409
          %v1662 = vpack.c.b16 %v1414, %v1412
          %v1663 = vpack.c.b16 %v1415, %v1413
          %v1664 = vpack.c.b16 %v1418, %v1416
          %v1665 = vpack.c.b16 %v1419, %v1417
          %v1666 = vpack.c.b16 %v1422, %v1420
          %v1667 = vpack.c.b16 %v1423, %v1421
          %v1668 = vpack.c.b16 %v1426, %v1424
          %v1669 = vpack.c.b16 %v1427, %v1425
          %v1670 = vpack.c.b16 %v1430, %v1428
          %v1671 = vpack.c.b16 %v1431, %v1429
          %v1672 = vpack.c.b16 %v1434, %v1432
          %v1673 = vpack.c.b16 %v1435, %v1433
          %v1674 = vpack.c.b16 %v1438, %v1436
          %v1675 = vpack.c.b16 %v1439, %v1437
          %v1676 = vpack.c.b16 %v1442, %v1440
          %v1677 = vpack.c.b16 %v1443, %v1441
          %v1678 = vpack.c.b16 %v1446, %v1444
          %v1679 = vpack.c.b16 %v1447, %v1445
          %v1680 = vpack.c.b16 %v1450, %v1448
          %v1681 = vpack.c.b16 %v1451, %v1449
          %v1682 = vpack.c.b16 %v1454, %v1452
          %v1683 = vpack.c.b16 %v1455, %v1453
          %v1684 = vpack.c.b16 %v1458, %v1456
          %v1685 = vpack.c.b16 %v1459, %v1457
          %v1686 = vpack.c.b16 %v1462, %v1460
          %v1687 = vpack.c.b16 %v1463, %v1461
          %v1688 = vpack.c.b16 %v1466, %v1464
          %v1689 = vpack.c.b16 %v1467, %v1465
          %v1690 = vpack.c.b16 %v1470, %v1468
          %v1691 = vpack.c.b16 %v1471, %v1469
          %v1692 = vpack.c.b16 %v1474, %v1472
          %v1693 = vpack.c.b16 %v1475, %v1473
          %v1694 = vpack.c.b16 %v1478, %v1476
          %v1695 = vpack.c.b16 %v1479, %v1477
          %v1696 = vpack.c.b16 %v1482, %v1480
          %v1697 = vpack.c.b16 %v1483, %v1481
          %v1698 = vpack.c.b16 %v1486, %v1484
          %v1699 = vpack.c.b16 %v1487, %v1485
          %v1700 = vpack.c.b16 %v1490, %v1488
          %v1701 = vpack.c.b16 %v1491, %v1489
          %v1702 = vpack.c.b16 %v1494, %v1492
          %v1703 = vpack.c.b16 %v1495, %v1493
          %v1704 = vpack.c.b16 %v1498, %v1496
          %v1705 = vpack.c.b16 %v1499, %v1497
          %v1706 = vpack.c.b16 %v1502, %v1500
          %v1707 = vpack.c.b16 %v1503, %v1501
          %v1708 = vpack.c.b16 %v1506, %v1504
          %v1709 = vpack.c.b16 %v1507, %v1505
          %v1710 = vpack.c.b16 %v1510, %v1508
          %v1711 = vpack.c.b16 %v1511, %v1509
          %v1712 = vpack.c.b16 %v1514, %v1512
          %v1713 = vpack.c.b16 %v1515, %v1513
          %v1714 = vpack.c.b16 %v1518, %v1516
          %v1715 = vpack.c.b16 %v1519, %v1517
          %v1716 = vpack.c.b16 %v1522, %v1520
          %v1717 = vpack.c.b16 %v1523, %v1521
          %v1718 = vpack.c.b16 %v1526, %v1524
          %v1719 = vpack.c.b16 %v1527, %v1525
          %v1720 = vpack.c.b16 %v1530, %v1528
          %v1721 = vpack.c.b16 %v1531, %v1529
          %v1722 = vpack.c.b16 %v1534, %v1532
          %v1723 = vpack.c.b16 %v1535, %v1533
          %v1724 = vpack.c.b16 %v1538, %v1536
          %v1725 = vpack.c.b16 %v1539, %v1537
          %v1726 = vpack.c.b16 %v1542, %v1540
          %v1727 = vpack.c.b16 %v1543, %v1541
          %v1728 = vpack.c.b16 %v1546, %v1544
          %v1729 = vpack.c.b16 %v1547, %v1545
          %v1730 = vpack.c.b16 %v1550, %v1548
          %v1731 = vpack.c.b16 %v1551, %v1549
          %v1732 = vpack.c.b16 %v1554, %v1552
          %v1733 = vpack.c.b16 %v1555, %v1553
          %v1734 = vpack.c.b16 %v1558, %v1556
          %v1735 = vpack.c.b16 %v1559, %v1557
          %v1736 = vpack.c.b16 %v1562, %v1560
          %v1737 = vpack.c.b16 %v1563, %v1561
          %v1738 = vpack.c.b16 %v1566, %v1564
          %v1739 = vpack.c.b16 %v1567, %v1565
          %v1740 = vpack.c.b16 %v1570, %v1568
          %v1741 = vpack.c.b16 %v1571, %v1569
          %v1742 = vpack.c.b16 %v1574, %v1572
          %v1743 = vpack.c.b16 %v1575, %v1573
          %v1744 = vpack.c.b16 %v1578, %v1576
          %v1745 = vpack.c.b16 %v1579, %v1577
          %v1746 = vpack.c.b16 %v1582, %v1580
          %v1747 = vpack.c.b16 %v1583, %v1581
          %v1748 = vpack.c.b16 %v1586, %v1584
          %v1749 = vpack.c.b16 %v1587, %v1585
          %v1750 = vpack.c.b16 %v1590, %v1588
          %v1751 = vpack.c.b16 %v1591, %v1589
          %v1752 = vpack.c.b16 %v1594, %v1592
          %v1753 = vpack.c.b16 %v1595, %v1593
          %v1754 = vpack.c.b16 %v1598, %v1596
          %v1755 = vpack.c.b16 %v1599, %v1597
          %v1756 = vpack.c.b16 %v1602, %v1600
          %v1757 = vpack.c.b16 %v1603, %v1601
          %v1758 = vpack.c.b16 %v1606, %v1604
          %v1759 = vpack.c.b16 %v1607, %v1605
          %v1760 = vpack.c.b16 %v1610, %v1608
          %v1761 = vpack.c.b16 %v1611, %v1609
          %v1762 = vpack.c.b16 %v1614, %v1612
          %v1763 = vpack.c.b16 %v1615, %v1613
          %v1764 = vpack.c.b16 %v1618, %v1616
          %v1765 = vpack.c.b16 %v1619, %v1617
          %v1766 = vpack.c.b16 %v1622, %v1620
          %v1767 = vpack.c.b16 %v1623, %v1621
          %v1768 = vpack.c.b16 %v1626, %v1624
          %v1769 = vpack.c.b16 %v1627, %v1625
          %v1770 = vpack.c.b16 %v1630, %v1628
          %v1771 = vpack.c.b16 %v1631, %v1629
          %v1772 = vpack.c.b16 %v1634, %v1632
          %v1773 = vpack.c.b16 %v1635, %v1633
          %v1774 = vpack.c.b16 %v1638, %v1636
          %v1775 = vpack.c.b16 %v1639, %v1637
          %v1776 = vpack.c.b16 %v1642, %v1640
          %v1777 = vpack.c.b16 %v1643, %v1641
          %v1778 = vpack.c.b16 %v1646, %v1644
          %v1779 = vpack.c.b16 %v1647, %v1645
          %v1780 = vpack.c.b16 %v1650, %v1648
          %v1781 = vpack.c.b16 %v1651, %v1649
          %v1782 = vpack.c.b16 %v1654, %v1652
          %v1783 = vpack.c.b16 %v1655, %v1653
          %1912 = vmatprep.subr.bf16.mxu0 %v1671
          %1913 = vmatpush1.bf16.msra.mxu0 %v1670
          %1914 = vmatprep.subr.bf16.mxu0 %v1669
          %1915 = vmatpush1.bf16.msra.mxu0 %v1668
          %1916 = vmatprep.subr.bf16.mxu0 %v1667
          %1917 = vmatpush1.bf16.msra.mxu0 %v1666
          %1918 = vmatprep.subr.bf16.mxu0 %v1665
          %1919 = vmatpush1.bf16.msra.mxu0 %v1664
          %1920 = vmatprep.subr.bf16.mxu0 %v1663
          %1921 = vmatpush1.bf16.msra.mxu0 %v1662
          %1922 = vmatprep.subr.bf16.mxu0 %v1661
          %1923 = vmatpush1.bf16.msra.mxu0 %v1660
          %1924 = vmatprep.subr.bf16.mxu0 %v1659
          %1925 = vmatpush1.bf16.msra.mxu0 %v1658
          %1926 = vmatprep.subr.bf16.mxu0 %v1657
          %1927 = vmatpush1.bf16.msra.mxu0 %v1656
          %1928 = vmatprep.subr.bf16.mxu0 %v1687
          %1929 = vmatpush2.bf16.msra.mxu0 %v1686
          %1930 = vmatprep.subr.bf16.mxu0 %v1685
          %1931 = vmatpush2.bf16.msra.mxu0 %v1684
          %1932 = vmatprep.subr.bf16.mxu0 %v1683
          %1933 = vmatpush2.bf16.msra.mxu0 %v1682
          %1934 = vmatprep.subr.bf16.mxu0 %v1681
          %1935 = vmatpush2.bf16.msra.mxu0 %v1680
          %1936 = vmatprep.subr.bf16.mxu0 %v1679
          %1937 = vmatpush2.bf16.msra.mxu0 %v1678
          %1938 = vmatprep.subr.bf16.mxu0 %v1677
          %1939 = vmatpush2.bf16.msra.mxu0 %v1676
          %1940 = vmatprep.subr.bf16.mxu0 %v1675
          %1941 = vmatpush2.bf16.msra.mxu0 %v1674
          %1942 = vmatprep.subr.bf16.mxu0 %v1673
          %1943 = vmatpush2.bf16.msra.mxu0 %v1672
          %1944 = vmatprep.mubr.bf16.mxu0 %v1125
          %1945 = vmatmul.mubr.bf16.gmra.mxu0 %v1124
          %v1946 = vpop.f32.mrf.mxu0
          %v1947 = vadd.f32 %v1265, %v1946
          %v1948 = vpop.f32.mrf.mxu0
          %v1949 = vadd.f32 %v1269, %v1948
          %v1950 = vpop.f32.mrf.mxu0
          %v1951 = vpop.f32.mrf.mxu0
          %1952 = vdwg.mxu0
          %1953 = vmatprep.subr.bf16.mxu0 %v1703
          %1954 = vmatpush1.bf16.msra.mxu0 %v1702
          %1955 = vmatprep.subr.bf16.mxu0 %v1701
          %1956 = vmatpush1.bf16.msra.mxu0 %v1700
          %1957 = vmatprep.subr.bf16.mxu0 %v1699
          %1958 = vmatpush1.bf16.msra.mxu0 %v1698
          %1959 = vmatprep.subr.bf16.mxu0 %v1697
          %1960 = vmatpush1.bf16.msra.mxu0 %v1696
          %1961 = vmatprep.subr.bf16.mxu0 %v1695
          %1962 = vmatpush1.bf16.msra.mxu0 %v1694
          %1963 = vmatprep.subr.bf16.mxu0 %v1693
          %1964 = vmatpush1.bf16.msra.mxu0 %v1692
          %1965 = vmatprep.subr.bf16.mxu0 %v1691
          %1966 = vmatpush1.bf16.msra.mxu0 %v1690
          %1967 = vmatprep.subr.bf16.mxu0 %v1689
          %1968 = vmatpush1.bf16.msra.mxu0 %v1688
          %1969 = vmatprep.subr.bf16.mxu0 %v1719
          %1970 = vmatpush2.bf16.msra.mxu0 %v1718
          %1971 = vmatprep.subr.bf16.mxu0 %v1717
          %1972 = vmatpush2.bf16.msra.mxu0 %v1716
          %1973 = vmatprep.subr.bf16.mxu0 %v1715
          %1974 = vmatpush2.bf16.msra.mxu0 %v1714
          %1975 = vmatprep.subr.bf16.mxu0 %v1713
          %1976 = vmatpush2.bf16.msra.mxu0 %v1712
          %1977 = vmatprep.subr.bf16.mxu0 %v1711
          %1978 = vmatpush2.bf16.msra.mxu0 %v1710
          %1979 = vmatprep.subr.bf16.mxu0 %v1709
          %1980 = vmatpush2.bf16.msra.mxu0 %v1708
          %1981 = vmatprep.subr.bf16.mxu0 %v1707
          %1982 = vmatpush2.bf16.msra.mxu0 %v1706
          %1983 = vmatprep.subr.bf16.mxu0 %v1705
          %1984 = vmatpush2.bf16.msra.mxu0 %v1704
          %1985 = vmatprep.mubr.bf16.mxu0 %v1127
          %1986 = vmatmul.mubr.bf16.gmra.mxu0 %v1126
          %v1987 = vpop.f32.mrf.mxu0
          %v1988 = vadd.f32 %v1947, %v1987
          %v1989 = vpop.f32.mrf.mxu0
          %v1990 = vadd.f32 %v1949, %v1989
          %v1991 = vpop.f32.mrf.mxu0
          %v1992 = vpop.f32.mrf.mxu0
          %1993 = vdwg.mxu0
          %1994 = vmatprep.subr.bf16.mxu0 %v1735
          %1995 = vmatpush1.bf16.msra.mxu0 %v1734
          %1996 = vmatprep.subr.bf16.mxu0 %v1733
          %1997 = vmatpush1.bf16.msra.mxu0 %v1732
          %1998 = vmatprep.subr.bf16.mxu0 %v1731
          %1999 = vmatpush1.bf16.msra.mxu0 %v1730
          %2000 = vmatprep.subr.bf16.mxu0 %v1729
          %2001 = vmatpush1.bf16.msra.mxu0 %v1728
          %2002 = vmatprep.subr.bf16.mxu0 %v1727
          %2003 = vmatpush1.bf16.msra.mxu0 %v1726
          %2004 = vmatprep.subr.bf16.mxu0 %v1725
          %2005 = vmatpush1.bf16.msra.mxu0 %v1724
          %2006 = vmatprep.subr.bf16.mxu0 %v1723
          %2007 = vmatpush1.bf16.msra.mxu0 %v1722
          %2008 = vmatprep.subr.bf16.mxu0 %v1721
          %2009 = vmatpush1.bf16.msra.mxu0 %v1720
          %2010 = vmatprep.subr.bf16.mxu0 %v1751
          %2011 = vmatpush2.bf16.msra.mxu0 %v1750
          %2012 = vmatprep.subr.bf16.mxu0 %v1749
          %2013 = vmatpush2.bf16.msra.mxu0 %v1748
          %2014 = vmatprep.subr.bf16.mxu0 %v1747
          %2015 = vmatpush2.bf16.msra.mxu0 %v1746
          %2016 = vmatprep.subr.bf16.mxu0 %v1745
          %2017 = vmatpush2.bf16.msra.mxu0 %v1744
          %2018 = vmatprep.subr.bf16.mxu0 %v1743
          %2019 = vmatpush2.bf16.msra.mxu0 %v1742
          %2020 = vmatprep.subr.bf16.mxu0 %v1741
          %2021 = vmatpush2.bf16.msra.mxu0 %v1740
          %2022 = vmatprep.subr.bf16.mxu0 %v1739
          %2023 = vmatpush2.bf16.msra.mxu0 %v1738
          %2024 = vmatprep.subr.bf16.mxu0 %v1737
          %2025 = vmatpush2.bf16.msra.mxu0 %v1736
          %2026 = vmatprep.mubr.bf16.mxu0 %v1129
          %2027 = vmatmul.mubr.bf16.gmra.mxu0 %v1128
          %v2028 = vpop.f32.mrf.mxu0
          %v2029 = vadd.f32 %v1988, %v2028
          %v2030 = vpop.f32.mrf.mxu0
          %v2031 = vadd.f32 %v1990, %v2030
          %v2032 = vpop.f32.mrf.mxu0
          %v2033 = vpop.f32.mrf.mxu0
          %2034 = vdwg.mxu0
          %2035 = vmatprep.subr.bf16.mxu0 %v1767
          %2036 = vmatpush1.bf16.msra.mxu0 %v1766
          %2037 = vmatprep.subr.bf16.mxu0 %v1765
          %2038 = vmatpush1.bf16.msra.mxu0 %v1764
          %2039 = vmatprep.subr.bf16.mxu0 %v1763
          %2040 = vmatpush1.bf16.msra.mxu0 %v1762
          %2041 = vmatprep.subr.bf16.mxu0 %v1761
          %2042 = vmatpush1.bf16.msra.mxu0 %v1760
          %2043 = vmatprep.subr.bf16.mxu0 %v1759
          %2044 = vmatpush1.bf16.msra.mxu0 %v1758
          %2045 = vmatprep.subr.bf16.mxu0 %v1757
          %2046 = vmatpush1.bf16.msra.mxu0 %v1756
          %2047 = vmatprep.subr.bf16.mxu0 %v1755
          %2048 = vmatpush1.bf16.msra.mxu0 %v1754
          %2049 = vmatprep.subr.bf16.mxu0 %v1753
          %2050 = vmatpush1.bf16.msra.mxu0 %v1752
          %2051 = vmatprep.subr.bf16.mxu0 %v1783
          %2052 = vmatpush2.bf16.msra.mxu0 %v1782
          %2053 = vmatprep.subr.bf16.mxu0 %v1781
          %2054 = vmatpush2.bf16.msra.mxu0 %v1780
          %2055 = vmatprep.subr.bf16.mxu0 %v1779
          %2056 = vmatpush2.bf16.msra.mxu0 %v1778
          %2057 = vmatprep.subr.bf16.mxu0 %v1777
          %2058 = vmatpush2.bf16.msra.mxu0 %v1776
          %2059 = vmatprep.subr.bf16.mxu0 %v1775
          %2060 = vmatpush2.bf16.msra.mxu0 %v1774
          %2061 = vmatprep.subr.bf16.mxu0 %v1773
          %2062 = vmatpush2.bf16.msra.mxu0 %v1772
          %2063 = vmatprep.subr.bf16.mxu0 %v1771
          %2064 = vmatpush2.bf16.msra.mxu0 %v1770
          %2065 = vmatprep.subr.bf16.mxu0 %v1769
          %2066 = vmatpush2.bf16.msra.mxu0 %v1768
          %2067 = vmatprep.mubr.bf16.mxu0 %v1131
          %2068 = vmatmul.mubr.bf16.gmra.mxu0 %v1130
          %v2069 = vpop.f32.mrf.mxu0
          %v2070 = vadd.f32 %v2029, %v2069
          %v2071 = vpop.f32.mrf.mxu0
          %v2072 = vadd.f32 %v2031, %v2071
          %v2073 = vpop.f32.mrf.mxu0
          %v2074 = vpop.f32.mrf.mxu0
          %2075 = vdwg.mxu0
          %2076 = vst [vmem:[#allocation2] sm:$0xff] %v2070
          %2077 = vst [vmem:[#allocation2 + $0x8] sm:$0xff] %v2072
          %v2078 = vld [vmem:[%s0] sm:$0xff]
          %vm2079 = vcmp.ge.f32.partialorder %v2078, 0.0
          %v2080 = vmul.f32 %v2078, 100.0
          %v2081 = vsel %vm2079, %v2078, %v2080
          %vm2082 = vcmask 15360
          %2083 = vst.msk [vmem:[#allocation3] sm:$0xff] %vm2082, %v2081
          %vm2084 = vcmp.ge.f32.partialorder %v2081, 0.0
          %v2085 = vsel %vm2084, 0.0, -4.6051702
          %v2086 = vsel %vm2082, %v2085, 0.0
          %2087 = vadd.xlane.f32.xlu0 %v2086
          %v2088 = vpop.xlane.xlu0 %2087
          %vm2089 = vcmask 7168
          %2090 = vst.msk [vmem:[#allocation4] sm:$0xff] %vm2089, %v2088
        $region164: #{forward.1} parent=91 // pred_fallthru
          _
        %v2091 = vld [vmem:[#allocation2] sm:$0xff]
        %v2092 = vld [vmem:[#allocation2 + $0x8] sm:$0xff]
        %v2093 = vld [vmem:[#allocation13] sm:$0xff]
        %v2094 = vld [vmem:[#allocation13 + $0x8] sm:$0xff]
        %v2095 = vld [vmem:[#allocation13 + $0x10] sm:$0xff]
        %v2096 = vld [vmem:[#allocation13 + $0x18] sm:$0xff]
        %v2097 = vld [vmem:[#allocation13 + $0x20] sm:$0xff]
        %v2098 = vld [vmem:[#allocation13 + $0x28] sm:$0xff]
        %v2099 = vld [vmem:[#allocation13 + $0x30] sm:$0xff]
        %v2100 = vld [vmem:[#allocation13 + $0x38] sm:$0xff]
        %v2101 = vld [vmem:[#allocation13 + $0x40] sm:$0xff]
        %v2102 = vld [vmem:[#allocation13 + $0x48] sm:$0xff]
        %v2103 = vld [vmem:[#allocation13 + $0x50] sm:$0xff]
        %v2104 = vld [vmem:[#allocation13 + $0x58] sm:$0xff]
        %v2105 = vld [vmem:[#allocation13 + $0x60] sm:$0xff]
        %v2106 = vld [vmem:[#allocation13 + $0x68] sm:$0xff]
        %v2107 = vld [vmem:[#allocation13 + $0x70] sm:$0xff]
        %v2108 = vld [vmem:[#allocation13 + $0x78] sm:$0xff]
        %v2109 = vld [vmem:[#allocation13 + $0x80] sm:$0xff]
        %v2110 = vld [vmem:[#allocation13 + $0x88] sm:$0xff]
        %v2111 = vld [vmem:[#allocation13 + $0x90] sm:$0xff]
        %v2112 = vld [vmem:[#allocation13 + $0x98] sm:$0xff]
        %v2113 = vld [vmem:[#allocation13 + $0xa0] sm:$0xff]
        %v2114 = vld [vmem:[#allocation13 + $0xa8] sm:$0xff]
        %v2115 = vld [vmem:[#allocation13 + $0xb0] sm:$0xff]
        %v2116 = vld [vmem:[#allocation13 + $0xb8] sm:$0xff]
        %v2117 = vld [vmem:[#allocation13 + $0xc0] sm:$0xff]
        %v2118 = vld [vmem:[#allocation13 + $0xc8] sm:$0xff]
        %v2119 = vld [vmem:[#allocation13 + $0xd0] sm:$0xff]
        %v2120 = vld [vmem:[#allocation13 + $0xd8] sm:$0xff]
        %v2121 = vld [vmem:[#allocation13 + $0xe0] sm:$0xff]
        %v2122 = vld [vmem:[#allocation13 + $0xe8] sm:$0xff]
        %v2123 = vld [vmem:[#allocation13 + $0xf0] sm:$0xff]
        %v2124 = vld [vmem:[#allocation13 + $0xf8] sm:$0xff]
        %v2125 = vld [vmem:[#allocation13 + $0x100] sm:$0xff]
        %v2126 = vld [vmem:[#allocation13 + $0x108] sm:$0xff]
        %v2127 = vld [vmem:[#allocation13 + $0x110] sm:$0xff]
        %v2128 = vld [vmem:[#allocation13 + $0x118] sm:$0xff]
        %v2129 = vld [vmem:[#allocation13 + $0x120] sm:$0xff]
        %v2130 = vld [vmem:[#allocation13 + $0x128] sm:$0xff]
        %v2131 = vld [vmem:[#allocation13 + $0x130] sm:$0xff]
        %v2132 = vld [vmem:[#allocation13 + $0x138] sm:$0xff]
        %v2133 = vld [vmem:[#allocation13 + $0x140] sm:$0xff]
        %v2134 = vld [vmem:[#allocation13 + $0x148] sm:$0xff]
        %v2135 = vld [vmem:[#allocation13 + $0x150] sm:$0xff]
        %v2136 = vld [vmem:[#allocation13 + $0x158] sm:$0xff]
        %v2137 = vld [vmem:[#allocation13 + $0x160] sm:$0xff]
        %v2138 = vld [vmem:[#allocation13 + $0x168] sm:$0xff]
        %v2139 = vld [vmem:[#allocation13 + $0x170] sm:$0xff]
        %v2140 = vld [vmem:[#allocation13 + $0x178] sm:$0xff]
        %v2141 = vld [vmem:[#allocation13 + $0x180] sm:$0xff]
        %v2142 = vld [vmem:[#allocation13 + $0x188] sm:$0xff]
        %v2143 = vld [vmem:[#allocation13 + $0x190] sm:$0xff]
        %v2144 = vld [vmem:[#allocation13 + $0x198] sm:$0xff]
        %v2145 = vld [vmem:[#allocation13 + $0x1a0] sm:$0xff]
        %v2146 = vld [vmem:[#allocation13 + $0x1a8] sm:$0xff]
        %v2147 = vld [vmem:[#allocation13 + $0x1b0] sm:$0xff]
        %v2148 = vld [vmem:[#allocation13 + $0x1b8] sm:$0xff]
        %v2149 = vld [vmem:[#allocation13 + $0x1c0] sm:$0xff]
        %v2150 = vld [vmem:[#allocation13 + $0x1c8] sm:$0xff]
        %v2151 = vld [vmem:[#allocation13 + $0x1d0] sm:$0xff]
        %v2152 = vld [vmem:[#allocation13 + $0x1d8] sm:$0xff]
        %v2153 = vld [vmem:[#allocation13 + $0x1e0] sm:$0xff]
        %v2154 = vld [vmem:[#allocation13 + $0x1e8] sm:$0xff]
        %v2155 = vld [vmem:[#allocation13 + $0x1f0] sm:$0xff]
        %v2156 = vld [vmem:[#allocation13 + $0x1f8] sm:$0xff]
        %v2157 = vld [vmem:[#allocation13 + $0x200] sm:$0xff]
        %v2158 = vld [vmem:[#allocation13 + $0x208] sm:$0xff]
        %v2159 = vld [vmem:[#allocation13 + $0x210] sm:$0xff]
        %v2160 = vld [vmem:[#allocation13 + $0x218] sm:$0xff]
        %v2161 = vld [vmem:[#allocation13 + $0x220] sm:$0xff]
        %v2162 = vld [vmem:[#allocation13 + $0x228] sm:$0xff]
        %v2163 = vld [vmem:[#allocation13 + $0x230] sm:$0xff]
        %v2164 = vld [vmem:[#allocation13 + $0x238] sm:$0xff]
        %v2165 = vld [vmem:[#allocation13 + $0x240] sm:$0xff]
        %v2166 = vld [vmem:[#allocation13 + $0x248] sm:$0xff]
        %v2167 = vld [vmem:[#allocation13 + $0x250] sm:$0xff]
        %v2168 = vld [vmem:[#allocation13 + $0x258] sm:$0xff]
        %v2169 = vld [vmem:[#allocation13 + $0x260] sm:$0xff]
        %v2170 = vld [vmem:[#allocation13 + $0x268] sm:$0xff]
        %v2171 = vld [vmem:[#allocation13 + $0x270] sm:$0xff]
        %v2172 = vld [vmem:[#allocation13 + $0x278] sm:$0xff]
        %v2173 = vld [vmem:[#allocation13 + $0x280] sm:$0xff]
        %v2174 = vld [vmem:[#allocation13 + $0x288] sm:$0xff]
        %v2175 = vld [vmem:[#allocation13 + $0x290] sm:$0xff]
        %v2176 = vld [vmem:[#allocation13 + $0x298] sm:$0xff]
        %v2177 = vld [vmem:[#allocation13 + $0x2a0] sm:$0xff]
        %v2178 = vld [vmem:[#allocation13 + $0x2a8] sm:$0xff]
        %v2179 = vld [vmem:[#allocation13 + $0x2b0] sm:$0xff]
        %v2180 = vld [vmem:[#allocation13 + $0x2b8] sm:$0xff]
        %v2181 = vld [vmem:[#allocation13 + $0x2c0] sm:$0xff]
        %v2182 = vld [vmem:[#allocation13 + $0x2c8] sm:$0xff]
        %v2183 = vld [vmem:[#allocation13 + $0x2d0] sm:$0xff]
        %v2184 = vld [vmem:[#allocation13 + $0x2d8] sm:$0xff]
        %v2185 = vld [vmem:[#allocation13 + $0x2e0] sm:$0xff]
        %v2186 = vld [vmem:[#allocation13 + $0x2e8] sm:$0xff]
        %v2187 = vld [vmem:[#allocation13 + $0x2f0] sm:$0xff]
        %v2188 = vld [vmem:[#allocation13 + $0x2f8] sm:$0xff]
        %v2189 = vld [vmem:[#allocation13 + $0x300] sm:$0xff]
        %v2190 = vld [vmem:[#allocation13 + $0x308] sm:$0xff]
        %v2191 = vld [vmem:[#allocation13 + $0x310] sm:$0xff]
        %v2192 = vld [vmem:[#allocation13 + $0x318] sm:$0xff]
        %v2193 = vld [vmem:[#allocation13 + $0x320] sm:$0xff]
        %v2194 = vld [vmem:[#allocation13 + $0x328] sm:$0xff]
        %v2195 = vld [vmem:[#allocation13 + $0x330] sm:$0xff]
        %v2196 = vld [vmem:[#allocation13 + $0x338] sm:$0xff]
        %v2197 = vld [vmem:[#allocation13 + $0x340] sm:$0xff]
        %v2198 = vld [vmem:[#allocation13 + $0x348] sm:$0xff]
        %v2199 = vld [vmem:[#allocation13 + $0x350] sm:$0xff]
        %v2200 = vld [vmem:[#allocation13 + $0x358] sm:$0xff]
        %v2201 = vld [vmem:[#allocation13 + $0x360] sm:$0xff]
        %v2202 = vld [vmem:[#allocation13 + $0x368] sm:$0xff]
        %v2203 = vld [vmem:[#allocation13 + $0x370] sm:$0xff]
        %v2204 = vld [vmem:[#allocation13 + $0x378] sm:$0xff]
        %v2205 = vld [vmem:[#allocation13 + $0x380] sm:$0xff]
        %v2206 = vld [vmem:[#allocation13 + $0x388] sm:$0xff]
        %v2207 = vld [vmem:[#allocation13 + $0x390] sm:$0xff]
        %v2208 = vld [vmem:[#allocation13 + $0x398] sm:$0xff]
        %v2209 = vld [vmem:[#allocation13 + $0x3a0] sm:$0xff]
        %v2210 = vld [vmem:[#allocation13 + $0x3a8] sm:$0xff]
        %v2211 = vld [vmem:[#allocation13 + $0x3b0] sm:$0xff]
        %v2212 = vld [vmem:[#allocation13 + $0x3b8] sm:$0xff]
        %v2213 = vld [vmem:[#allocation13 + $0x3c0] sm:$0xff]
        %v2214 = vld [vmem:[#allocation13 + $0x3c8] sm:$0xff]
        %v2215 = vld [vmem:[#allocation13 + $0x3d0] sm:$0xff]
        %v2216 = vld [vmem:[#allocation13 + $0x3d8] sm:$0xff]
        %v2217 = vld [vmem:[#allocation13 + $0x3e0] sm:$0xff]
        %v2218 = vld [vmem:[#allocation13 + $0x3e8] sm:$0xff]
        %v2219 = vld [vmem:[#allocation13 + $0x3f0] sm:$0xff]
        %v2220 = vld [vmem:[#allocation13 + $0x3f8] sm:$0xff]
        %v2221 = vlaneseq
        %v2222 = vand.u32 %v2221, 127
        %v2223 = vadd.s32 %v2222, 128
        %v2224 = vadd.s32 %v2222, 256
        %v2225 = vadd.s32 %v2222, 384
        %v2226 = vpack.c.bf16 %v2091, %v2091
        %v2227 = vpack.c.bf16 %v2092, %v2092
        %v2228 = vld [vmem:[%s918] sm:$0xff]
        %v2229 = vld [vmem:[%s918 + $0x8] sm:$0xff]
        %v2230 = vld [vmem:[%s918 + $0x10] sm:$0xff]
        %v2231 = vld [vmem:[%s918 + $0x18] sm:$0xff]
        %v2232 = vld [vmem:[%s918 + $0x20] sm:$0xff]
        %v2233 = vld [vmem:[%s918 + $0x28] sm:$0xff]
        %v2234 = vld [vmem:[%s918 + $0x30] sm:$0xff]
        %v2235 = vld [vmem:[%s918 + $0x38] sm:$0xff]
        %v2236 = vld [vmem:[%s918 + $0x40] sm:$0xff]
        %v2237 = vld [vmem:[%s918 + $0x48] sm:$0xff]
        %v2238 = vld [vmem:[%s918 + $0x50] sm:$0xff]
        %v2239 = vld [vmem:[%s918 + $0x58] sm:$0xff]
        %v2240 = vld [vmem:[%s918 + $0x60] sm:$0xff]
        %v2241 = vld [vmem:[%s918 + $0x68] sm:$0xff]
        %v2242 = vld [vmem:[%s918 + $0x70] sm:$0xff]
        %v2243 = vld [vmem:[%s918 + $0x78] sm:$0xff]
        %v2244 = vld [vmem:[%s918 + $0x80] sm:$0xff]
        %v2245 = vld [vmem:[%s918 + $0x88] sm:$0xff]
        %v2246 = vld [vmem:[%s918 + $0x90] sm:$0xff]
        %v2247 = vld [vmem:[%s918 + $0x98] sm:$0xff]
        %v2248 = vld [vmem:[%s918 + $0xa0] sm:$0xff]
        %v2249 = vld [vmem:[%s918 + $0xa8] sm:$0xff]
        %v2250 = vld [vmem:[%s918 + $0xb0] sm:$0xff]
        %v2251 = vld [vmem:[%s918 + $0xb8] sm:$0xff]
        %v2252 = vld [vmem:[%s918 + $0xc0] sm:$0xff]
        %v2253 = vld [vmem:[%s918 + $0xc8] sm:$0xff]
        %v2254 = vld [vmem:[%s918 + $0xd0] sm:$0xff]
        %v2255 = vld [vmem:[%s918 + $0xd8] sm:$0xff]
        %v2256 = vld [vmem:[%s918 + $0xe0] sm:$0xff]
        %v2257 = vld [vmem:[%s918 + $0xe8] sm:$0xff]
        %v2258 = vld [vmem:[%s918 + $0xf0] sm:$0xff]
        %v2259 = vld [vmem:[%s918 + $0xf8] sm:$0xff]
        %v2260 = vld [vmem:[%s927] sm:$0x3]
        %v2262 = vlaneseq
        %v2263 = vshrl.u32 %v2262, 7
        %v2264 = vsub.s32 0, %v2263
        %v2265 = vrot.slane %v2260, %v2264
        %v2266 = vlaneseq
        %v2267 = vshrl.u32 %v2266, 7
        %v2268 = vsub.s32 1, %v2267
        %v2269 = vrot.slane %v2260, %v2268
        %v2304 = vunpack.c.l.b16 %v2228
        %v2305 = vunpack.c.h.b16 %v2228
        %v2306 = vunpack.c.l.b16 %v2229
        %v2307 = vunpack.c.h.b16 %v2229
        %v2308 = vunpack.c.l.b16 %v2230
        %v2309 = vunpack.c.h.b16 %v2230
        %v2310 = vunpack.c.l.b16 %v2231
        %v2311 = vunpack.c.h.b16 %v2231
        %v2312 = vunpack.c.l.b16 %v2232
        %v2313 = vunpack.c.h.b16 %v2232
        %v2314 = vunpack.c.l.b16 %v2233
        %v2315 = vunpack.c.h.b16 %v2233
        %v2316 = vunpack.c.l.b16 %v2234
        %v2317 = vunpack.c.h.b16 %v2234
        %v2318 = vunpack.c.l.b16 %v2235
        %v2319 = vunpack.c.h.b16 %v2235
        %v2320 = vunpack.c.l.b16 %v2236
        %v2321 = vunpack.c.h.b16 %v2236
        %v2322 = vunpack.c.l.b16 %v2237
        %v2323 = vunpack.c.h.b16 %v2237
        %v2324 = vunpack.c.l.b16 %v2238
        %v2325 = vunpack.c.h.b16 %v2238
        %v2326 = vunpack.c.l.b16 %v2239
        %v2327 = vunpack.c.h.b16 %v2239
        %v2328 = vunpack.c.l.b16 %v2240
        %v2329 = vunpack.c.h.b16 %v2240
        %v2330 = vunpack.c.l.b16 %v2241
        %v2331 = vunpack.c.h.b16 %v2241
        %v2332 = vunpack.c.l.b16 %v2242
        %v2333 = vunpack.c.h.b16 %v2242
        %v2334 = vunpack.c.l.b16 %v2243
        %v2335 = vunpack.c.h.b16 %v2243
        %v2336 = vunpack.c.l.b16 %v2244
        %v2337 = vunpack.c.h.b16 %v2244
        %v2338 = vunpack.c.l.b16 %v2245
        %v2339 = vunpack.c.h.b16 %v2245
        %v2340 = vunpack.c.l.b16 %v2246
        %v2341 = vunpack.c.h.b16 %v2246
        %v2342 = vunpack.c.l.b16 %v2247
        %v2343 = vunpack.c.h.b16 %v2247
        %v2344 = vunpack.c.l.b16 %v2248
        %v2345 = vunpack.c.h.b16 %v2248
        %v2346 = vunpack.c.l.b16 %v2249
        %v2347 = vunpack.c.h.b16 %v2249
        %v2348 = vunpack.c.l.b16 %v2250
        %v2349 = vunpack.c.h.b16 %v2250
        %v2350 = vunpack.c.l.b16 %v2251
        %v2351 = vunpack.c.h.b16 %v2251
        %v2352 = vunpack.c.l.b16 %v2252
        %v2353 = vunpack.c.h.b16 %v2252
        %v2354 = vunpack.c.l.b16 %v2253
        %v2355 = vunpack.c.h.b16 %v2253
        %v2356 = vunpack.c.l.b16 %v2254
        %v2357 = vunpack.c.h.b16 %v2254
        %v2358 = vunpack.c.l.b16 %v2255
        %v2359 = vunpack.c.h.b16 %v2255
        %v2360 = vunpack.c.l.b16 %v2256
        %v2361 = vunpack.c.h.b16 %v2256
        %v2362 = vunpack.c.l.b16 %v2257
        %v2363 = vunpack.c.h.b16 %v2257
        %v2364 = vunpack.c.l.b16 %v2258
        %v2365 = vunpack.c.h.b16 %v2258
        %v2366 = vunpack.c.l.b16 %v2259
        %v2367 = vunpack.c.h.b16 %v2259
        %v2368 = vpack.c.b16 %v2306, %v2304
        %v2369 = vpack.c.b16 %v2307, %v2305
        %v2370 = vpack.c.b16 %v2310, %v2308
        %v2371 = vpack.c.b16 %v2311, %v2309
        %v2372 = vpack.c.b16 %v2314, %v2312
        %v2373 = vpack.c.b16 %v2315, %v2313
        %v2374 = vpack.c.b16 %v2318, %v2316
        %v2375 = vpack.c.b16 %v2319, %v2317
        %v2376 = vpack.c.b16 %v2322, %v2320
        %v2377 = vpack.c.b16 %v2323, %v2321
        %v2378 = vpack.c.b16 %v2326, %v2324
        %v2379 = vpack.c.b16 %v2327, %v2325
        %v2380 = vpack.c.b16 %v2330, %v2328
        %v2381 = vpack.c.b16 %v2331, %v2329
        %v2382 = vpack.c.b16 %v2334, %v2332
        %v2383 = vpack.c.b16 %v2335, %v2333
        %v2384 = vpack.c.b16 %v2338, %v2336
        %v2385 = vpack.c.b16 %v2339, %v2337
        %v2386 = vpack.c.b16 %v2342, %v2340
        %v2387 = vpack.c.b16 %v2343, %v2341
        %v2388 = vpack.c.b16 %v2346, %v2344
        %v2389 = vpack.c.b16 %v2347, %v2345
        %v2390 = vpack.c.b16 %v2350, %v2348
        %v2391 = vpack.c.b16 %v2351, %v2349
        %v2392 = vpack.c.b16 %v2354, %v2352
        %v2393 = vpack.c.b16 %v2355, %v2353
        %v2394 = vpack.c.b16 %v2358, %v2356
        %v2395 = vpack.c.b16 %v2359, %v2357
        %v2396 = vpack.c.b16 %v2362, %v2360
        %v2397 = vpack.c.b16 %v2363, %v2361
        %v2398 = vpack.c.b16 %v2366, %v2364
        %v2399 = vpack.c.b16 %v2367, %v2365
        %2432 = vmatprep.subr.bf16.mxu0 %v2383
        %2433 = vmatpush1.bf16.msra.mxu0 %v2382
        %2434 = vmatprep.subr.bf16.mxu0 %v2381
        %2435 = vmatpush1.bf16.msra.mxu0 %v2380
        %2436 = vmatprep.subr.bf16.mxu0 %v2379
        %2437 = vmatpush1.bf16.msra.mxu0 %v2378
        %2438 = vmatprep.subr.bf16.mxu0 %v2377
        %2439 = vmatpush1.bf16.msra.mxu0 %v2376
        %2440 = vmatprep.subr.bf16.mxu0 %v2375
        %2441 = vmatpush1.bf16.msra.mxu0 %v2374
        %2442 = vmatprep.subr.bf16.mxu0 %v2373
        %2443 = vmatpush1.bf16.msra.mxu0 %v2372
        %2444 = vmatprep.subr.bf16.mxu0 %v2371
        %2445 = vmatpush1.bf16.msra.mxu0 %v2370
        %2446 = vmatprep.subr.bf16.mxu0 %v2369
        %2447 = vmatpush1.bf16.msra.mxu0 %v2368
        %2448 = vmatprep.subr.bf16.mxu0 %v2399
        %2449 = vmatpush2.bf16.msra.mxu0 %v2398
        %2450 = vmatprep.subr.bf16.mxu0 %v2397
        %2451 = vmatpush2.bf16.msra.mxu0 %v2396
        %2452 = vmatprep.subr.bf16.mxu0 %v2395
        %2453 = vmatpush2.bf16.msra.mxu0 %v2394
        %2454 = vmatprep.subr.bf16.mxu0 %v2393
        %2455 = vmatpush2.bf16.msra.mxu0 %v2392
        %2456 = vmatprep.subr.bf16.mxu0 %v2391
        %2457 = vmatpush2.bf16.msra.mxu0 %v2390
        %2458 = vmatprep.subr.bf16.mxu0 %v2389
        %2459 = vmatpush2.bf16.msra.mxu0 %v2388
        %2460 = vmatprep.subr.bf16.mxu0 %v2387
        %2461 = vmatpush2.bf16.msra.mxu0 %v2386
        %2462 = vmatprep.subr.bf16.mxu0 %v2385
        %2463 = vmatpush2.bf16.msra.mxu0 %v2384
        %2464 = vmatprep.mubr.bf16.mxu0 %v2227
        %2465 = vmatmul.mubr.bf16.gmra.mxu0 %v2226
        %v2466 = vpop.f32.mrf.mxu0
        %v2467 = vadd.f32 %v2265, %v2466
        %v2468 = vpop.f32.mrf.mxu0
        %v2469 = vadd.f32 %v2269, %v2468
        %v2470 = vpop.f32.mrf.mxu0
        %v2471 = vpop.f32.mrf.mxu0
        %2472 = vdwg.mxu0
        %v2473 = vld [vmem:[#allocation3] sm:$0xff]
        %v2474 = vld [vmem:[#allocation4] sm:$0xff]
        %v2475 = vmax.f32 %v2467, 0.0
        %v2476 = vpack.c.bf16 %v2475, %v2475
        %v2477 = vld [vmem:[%s936] sm:$0xf]
        %v2478 = vld [vmem:[%s936 + $0x4] sm:$0xf]
        %v2479 = vld [vmem:[%s936 + $0x8] sm:$0xf]
        %v2480 = vld [vmem:[%s936 + $0xc] sm:$0xf]
        %v2481 = vld [vmem:[%s936 + $0x10] sm:$0xf]
        %v2482 = vld [vmem:[%s936 + $0x14] sm:$0xf]
        %v2483 = vld [vmem:[%s936 + $0x18] sm:$0xf]
        %v2484 = vld [vmem:[%s936 + $0x1c] sm:$0xf]
        %v2485 = vld [vmem:[%s936 + $0x20] sm:$0xf]
        %v2486 = vld [vmem:[%s936 + $0x24] sm:$0xf]
        %v2487 = vld [vmem:[%s936 + $0x28] sm:$0xf]
        %v2488 = vld [vmem:[%s936 + $0x2c] sm:$0xf]
        %v2489 = vld [vmem:[%s936 + $0x30] sm:$0xf]
        %v2490 = vld [vmem:[%s936 + $0x34] sm:$0xf]
        %v2491 = vld [vmem:[%s936 + $0x38] sm:$0xf]
        %v2492 = vld [vmem:[%s936 + $0x3c] sm:$0xf]
        %v2493 = vld [vmem:[%s963] sm:$0x1]
        %v2495 = vlaneseq
        %v2496 = vshrl.u32 %v2495, 7
        %v2497 = vsub.s32 0, %v2496
        %v2498 = vrot.slane %v2493, %v2497
        %v2516 = vunpack.c.l.b16 %v2477
        %v2517 = vunpack.c.l.b16 %v2478
        %v2518 = vunpack.c.l.b16 %v2479
        %v2519 = vunpack.c.l.b16 %v2480
        %v2520 = vunpack.c.l.b16 %v2481
        %v2521 = vunpack.c.l.b16 %v2482
        %v2522 = vunpack.c.l.b16 %v2483
        %v2523 = vunpack.c.l.b16 %v2484
        %v2524 = vunpack.c.l.b16 %v2485
        %v2525 = vunpack.c.l.b16 %v2486
        %v2526 = vunpack.c.l.b16 %v2487
        %v2527 = vunpack.c.l.b16 %v2488
        %v2528 = vunpack.c.l.b16 %v2489
        %v2529 = vunpack.c.l.b16 %v2490
        %v2530 = vunpack.c.l.b16 %v2491
        %v2531 = vunpack.c.l.b16 %v2492
        %v2532 = vpack.c.b16 %v2517, %v2516
        %v2533 = vpack.c.b16 %v2519, %v2518
        %v2534 = vpack.c.b16 %v2521, %v2520
        %v2535 = vpack.c.b16 %v2523, %v2522
        %v2536 = vpack.c.b16 %v2525, %v2524
        %v2537 = vpack.c.b16 %v2527, %v2526
        %v2538 = vpack.c.b16 %v2529, %v2528
        %v2539 = vpack.c.b16 %v2531, %v2530
        %2548 = vmatprep.subr.bf16.mxu0 0
        %2549 = vmatpush1.bf16.msra.mxu0 %v2539
        %2550 = vmatprep.subr.bf16.mxu0 0
        %2551 = vmatpush1.bf16.msra.mxu0 %v2538
        %2552 = vmatprep.subr.bf16.mxu0 0
        %2553 = vmatpush1.bf16.msra.mxu0 %v2537
        %2554 = vmatprep.subr.bf16.mxu0 0
        %2555 = vmatpush1.bf16.msra.mxu0 %v2536
        %2556 = vmatprep.subr.bf16.mxu0 0
        %2557 = vmatpush1.bf16.msra.mxu0 %v2535
        %2558 = vmatprep.subr.bf16.mxu0 0
        %2559 = vmatpush1.bf16.msra.mxu0 %v2534
        %2560 = vmatprep.subr.bf16.mxu0 0
        %2561 = vmatpush1.bf16.msra.mxu0 %v2533
        %2562 = vmatprep.subr.bf16.mxu0 0
        %2563 = vmatpush1.bf16.msra.mxu0 %v2532
        %2564 = vmatprep.subr.bf16.mxu0 0
        %2565 = vmatpush2.bf16.msra.mxu0 0
        %2566 = vmatprep.subr.bf16.mxu0 0
        %2567 = vmatpush2.bf16.msra.mxu0 0
        %2568 = vmatprep.subr.bf16.mxu0 0
        %2569 = vmatpush2.bf16.msra.mxu0 0
        %2570 = vmatprep.subr.bf16.mxu0 0
        %2571 = vmatpush2.bf16.msra.mxu0 0
        %2572 = vmatprep.subr.bf16.mxu0 0
        %2573 = vmatpush2.bf16.msra.mxu0 0
        %2574 = vmatprep.subr.bf16.mxu0 0
        %2575 = vmatpush2.bf16.msra.mxu0 0
        %2576 = vmatprep.subr.bf16.mxu0 0
        %2577 = vmatpush2.bf16.msra.mxu0 0
        %2578 = vmatprep.subr.bf16.mxu0 0
        %2579 = vmatpush2.bf16.msra.mxu0 0
        %2580 = vmatprep.mubr.bf16.mxu0 0
        %2581 = vmatmul.mubr.bf16.gmra.mxu0 %v2476
        %v2582 = vpop.f32.mrf.mxu0
        %v2583 = vadd.f32 %v2498, %v2582
        %v2584 = vpop.f32.mrf.mxu0
        %v2585 = vpop.f32.mrf.mxu0
        %v2586 = vpop.f32.mrf.mxu0
        %2587 = vdwg.mxu0
        %v2588 = vmax.f32 %v2583, 0.0
        %v2589 = vpack.c.bf16 %v2588, %v2588
        %v2590 = vld [vmem:[%s972] sm:$0xff]
        %v2591 = vld [vmem:[%s972 + $0x8] sm:$0xff]
        %v2592 = vld [vmem:[%s972 + $0x10] sm:$0xff]
        %v2593 = vld [vmem:[%s972 + $0x18] sm:$0xff]
        %v2594 = vld [vmem:[%s972 + $0x20] sm:$0xff]
        %v2595 = vld [vmem:[%s972 + $0x28] sm:$0xff]
        %v2596 = vld [vmem:[%s972 + $0x30] sm:$0xff]
        %v2597 = vld [vmem:[%s972 + $0x38] sm:$0xff]
        %v2598 = vld [vmem:[%s972 + $0x40] sm:$0xff]
        %v2599 = vld [vmem:[%s972 + $0x48] sm:$0xff]
        %v2600 = vld [vmem:[%s972 + $0x50] sm:$0xff]
        %v2601 = vld [vmem:[%s972 + $0x58] sm:$0xff]
        %v2602 = vld [vmem:[%s972 + $0x60] sm:$0xff]
        %v2603 = vld [vmem:[%s972 + $0x68] sm:$0xff]
        %v2604 = vld [vmem:[%s972 + $0x70] sm:$0xff]
        %v2605 = vld [vmem:[%s972 + $0x78] sm:$0xff]
        %v2606 = vld [vmem:[%s972 + $0x80] sm:$0xff]
        %v2607 = vld [vmem:[%s972 + $0x88] sm:$0xff]
        %v2608 = vld [vmem:[%s972 + $0x90] sm:$0xff]
        %v2609 = vld [vmem:[%s972 + $0x98] sm:$0xff]
        %v2610 = vld [vmem:[%s972 + $0xa0] sm:$0xff]
        %v2611 = vld [vmem:[%s972 + $0xa8] sm:$0xff]
        %v2612 = vld [vmem:[%s972 + $0xb0] sm:$0xff]
        %v2613 = vld [vmem:[%s972 + $0xb8] sm:$0xff]
        %v2614 = vld [vmem:[%s972 + $0xc0] sm:$0xff]
        %v2615 = vld [vmem:[%s972 + $0xc8] sm:$0xff]
        %v2616 = vld [vmem:[%s972 + $0xd0] sm:$0xff]
        %v2617 = vld [vmem:[%s972 + $0xd8] sm:$0xff]
        %v2618 = vld [vmem:[%s972 + $0xe0] sm:$0xff]
        %v2619 = vld [vmem:[%s972 + $0xe8] sm:$0xff]
        %v2620 = vld [vmem:[%s972 + $0xf0] sm:$0xff]
        %v2621 = vld [vmem:[%s972 + $0xf8] sm:$0xff]
        %v2622 = vld [vmem:[%s972 + $0x100] sm:$0xff]
        %v2623 = vld [vmem:[%s972 + $0x108] sm:$0xff]
        %v2624 = vld [vmem:[%s972 + $0x110] sm:$0xff]
        %v2625 = vld [vmem:[%s972 + $0x118] sm:$0xff]
        %v2626 = vld [vmem:[%s972 + $0x120] sm:$0xff]
        %v2627 = vld [vmem:[%s972 + $0x128] sm:$0xff]
        %v2628 = vld [vmem:[%s972 + $0x130] sm:$0xff]
        %v2629 = vld [vmem:[%s972 + $0x138] sm:$0xff]
        %v2630 = vld [vmem:[%s972 + $0x140] sm:$0xff]
        %v2631 = vld [vmem:[%s972 + $0x148] sm:$0xff]
        %v2632 = vld [vmem:[%s972 + $0x150] sm:$0xff]
        %v2633 = vld [vmem:[%s972 + $0x158] sm:$0xff]
        %v2634 = vld [vmem:[%s972 + $0x160] sm:$0xff]
        %v2635 = vld [vmem:[%s972 + $0x168] sm:$0xff]
        %v2636 = vld [vmem:[%s972 + $0x170] sm:$0xff]
        %v2637 = vld [vmem:[%s972 + $0x178] sm:$0xff]
        %v2638 = vld [vmem:[%s972 + $0x180] sm:$0xff]
        %v2639 = vld [vmem:[%s972 + $0x188] sm:$0xff]
        %v2640 = vld [vmem:[%s972 + $0x190] sm:$0xff]
        %v2641 = vld [vmem:[%s972 + $0x198] sm:$0xff]
        %v2642 = vld [vmem:[%s972 + $0x1a0] sm:$0xff]
        %v2643 = vld [vmem:[%s972 + $0x1a8] sm:$0xff]
        %v2644 = vld [vmem:[%s972 + $0x1b0] sm:$0xff]
        %v2645 = vld [vmem:[%s972 + $0x1b8] sm:$0xff]
        %v2646 = vld [vmem:[%s972 + $0x1c0] sm:$0xff]
        %v2647 = vld [vmem:[%s972 + $0x1c8] sm:$0xff]
        %v2648 = vld [vmem:[%s972 + $0x1d0] sm:$0xff]
        %v2649 = vld [vmem:[%s972 + $0x1d8] sm:$0xff]
        %v2650 = vld [vmem:[%s972 + $0x1e0] sm:$0xff]
        %v2651 = vld [vmem:[%s972 + $0x1e8] sm:$0xff]
        %v2652 = vld [vmem:[%s972 + $0x1f0] sm:$0xff]
        %v2653 = vld [vmem:[%s972 + $0x1f8] sm:$0xff]
        %v2654 = vld [vmem:[%s972 + $0x200] sm:$0xff]
        %v2655 = vld [vmem:[%s972 + $0x208] sm:$0xff]
        %v2656 = vld [vmem:[%s972 + $0x210] sm:$0xff]
        %v2657 = vld [vmem:[%s972 + $0x218] sm:$0xff]
        %v2658 = vld [vmem:[%s972 + $0x220] sm:$0xff]
        %v2659 = vld [vmem:[%s972 + $0x228] sm:$0xff]
        %v2660 = vld [vmem:[%s972 + $0x230] sm:$0xff]
        %v2661 = vld [vmem:[%s972 + $0x238] sm:$0xff]
        %v2662 = vld [vmem:[%s972 + $0x240] sm:$0xff]
        %v2663 = vld [vmem:[%s972 + $0x248] sm:$0xff]
        %v2664 = vld [vmem:[%s972 + $0x250] sm:$0xff]
        %v2665 = vld [vmem:[%s972 + $0x258] sm:$0xff]
        %v2666 = vld [vmem:[%s972 + $0x260] sm:$0xff]
        %v2667 = vld [vmem:[%s972 + $0x268] sm:$0xff]
        %v2668 = vld [vmem:[%s972 + $0x270] sm:$0xff]
        %v2669 = vld [vmem:[%s972 + $0x278] sm:$0xff]
        %v2670 = vld [vmem:[%s972 + $0x280] sm:$0xff]
        %v2671 = vld [vmem:[%s972 + $0x288] sm:$0xff]
        %v2672 = vld [vmem:[%s972 + $0x290] sm:$0xff]
        %v2673 = vld [vmem:[%s972 + $0x298] sm:$0xff]
        %v2674 = vld [vmem:[%s972 + $0x2a0] sm:$0xff]
        %v2675 = vld [vmem:[%s972 + $0x2a8] sm:$0xff]
        %v2676 = vld [vmem:[%s972 + $0x2b0] sm:$0xff]
        %v2677 = vld [vmem:[%s972 + $0x2b8] sm:$0xff]
        %v2678 = vld [vmem:[%s972 + $0x2c0] sm:$0xff]
        %v2679 = vld [vmem:[%s972 + $0x2c8] sm:$0xff]
        %v2680 = vld [vmem:[%s972 + $0x2d0] sm:$0xff]
        %v2681 = vld [vmem:[%s972 + $0x2d8] sm:$0xff]
        %v2682 = vld [vmem:[%s972 + $0x2e0] sm:$0xff]
        %v2683 = vld [vmem:[%s972 + $0x2e8] sm:$0xff]
        %v2684 = vld [vmem:[%s972 + $0x2f0] sm:$0xff]
        %v2685 = vld [vmem:[%s972 + $0x2f8] sm:$0xff]
        %v2686 = vld [vmem:[%s999] sm:$0xff]
        %v2687 = vld [vmem:[%s999 + $0x8] sm:$0xf]
        %v2690 = vlaneseq
        %v2691 = vshrl.u32 %v2690, 7
        %v2692 = vsub.s32 0, %v2691
        %v2693 = vrot.slane %v2686, %v2692
        %v2694 = vlaneseq
        %v2695 = vshrl.u32 %v2694, 7
        %v2696 = vsub.s32 1, %v2695
        %v2697 = vrot.slane %v2686, %v2696
        %v2698 = vlaneseq
        %v2699 = vshrl.u32 %v2698, 7
        %v2700 = vsub.s32 2, %v2699
        %v2701 = vrot.slane %v2686, %v2700
        %v2702 = vlaneseq
        %v2703 = vshrl.u32 %v2702, 7
        %v2704 = vsub.s32 3, %v2703
        %v2705 = vrot.slane %v2686, %v2704
        %v2706 = vlaneseq
        %v2707 = vshrl.u32 %v2706, 7
        %v2708 = vsub.s32 4, %v2707
        %v2709 = vrot.slane %v2686, %v2708
        %v2710 = vlaneseq
        %v2711 = vshrl.u32 %v2710, 7
        %v2712 = vsub.s32 5, %v2711
        %v2713 = vrot.slane %v2686, %v2712
        %v2714 = vlaneseq
        %v2715 = vshrl.u32 %v2714, 7
        %v2716 = vsub.s32 6, %v2715
        %v2717 = vrot.slane %v2686, %v2716
        %v2718 = vlaneseq
        %v2719 = vshrl.u32 %v2718, 7
        %v2720 = vsub.s32 7, %v2719
        %v2721 = vrot.slane %v2686, %v2720
        %v2722 = vlaneseq
        %v2723 = vshrl.u32 %v2722, 7
        %v2724 = vsub.s32 0, %v2723
        %v2725 = vrot.slane %v2687, %v2724
        %v2726 = vlaneseq
        %v2727 = vshrl.u32 %v2726, 7
        %v2728 = vsub.s32 1, %v2727
        %v2729 = vrot.slane %v2687, %v2728
        %v2730 = vlaneseq
        %v2731 = vshrl.u32 %v2730, 7
        %v2732 = vsub.s32 2, %v2731
        %v2733 = vrot.slane %v2687, %v2732
        %v2734 = vlaneseq
        %v2735 = vshrl.u32 %v2734, 7
        %v2736 = vsub.s32 3, %v2735
        %v2737 = vrot.slane %v2687, %v2736
        %v2846 = vunpack.c.l.b16 %v2590
        %v2847 = vunpack.c.h.b16 %v2590
        %v2848 = vunpack.c.l.b16 %v2591
        %v2849 = vunpack.c.h.b16 %v2591
        %v2850 = vunpack.c.l.b16 %v2592
        %v2851 = vunpack.c.h.b16 %v2592
        %v2852 = vunpack.c.l.b16 %v2593
        %v2853 = vunpack.c.h.b16 %v2593
        %v2854 = vunpack.c.l.b16 %v2594
        %v2855 = vunpack.c.h.b16 %v2594
        %v2856 = vunpack.c.l.b16 %v2595
        %v2857 = vunpack.c.h.b16 %v2595
        %v2858 = vunpack.c.l.b16 %v2596
        %v2859 = vunpack.c.h.b16 %v2596
        %v2860 = vunpack.c.l.b16 %v2597
        %v2861 = vunpack.c.h.b16 %v2597
        %v2862 = vunpack.c.l.b16 %v2598
        %v2863 = vunpack.c.h.b16 %v2598
        %v2864 = vunpack.c.l.b16 %v2599
        %v2865 = vunpack.c.h.b16 %v2599
        %v2866 = vunpack.c.l.b16 %v2600
        %v2867 = vunpack.c.h.b16 %v2600
        %v2868 = vunpack.c.l.b16 %v2601
        %v2869 = vunpack.c.h.b16 %v2601
        %v2870 = vunpack.c.l.b16 %v2602
        %v2871 = vunpack.c.h.b16 %v2602
        %v2872 = vunpack.c.l.b16 %v2603
        %v2873 = vunpack.c.h.b16 %v2603
        %v2874 = vunpack.c.l.b16 %v2604
        %v2875 = vunpack.c.h.b16 %v2604
        %v2876 = vunpack.c.l.b16 %v2605
        %v2877 = vunpack.c.h.b16 %v2605
        %v2878 = vunpack.c.l.b16 %v2606
        %v2879 = vunpack.c.h.b16 %v2606
        %v2880 = vunpack.c.l.b16 %v2607
        %v2881 = vunpack.c.h.b16 %v2607
        %v2882 = vunpack.c.l.b16 %v2608
        %v2883 = vunpack.c.h.b16 %v2608
        %v2884 = vunpack.c.l.b16 %v2609
        %v2885 = vunpack.c.h.b16 %v2609
        %v2886 = vunpack.c.l.b16 %v2610
        %v2887 = vunpack.c.h.b16 %v2610
        %v2888 = vunpack.c.l.b16 %v2611
        %v2889 = vunpack.c.h.b16 %v2611
        %v2890 = vunpack.c.l.b16 %v2612
        %v2891 = vunpack.c.h.b16 %v2612
        %v2892 = vunpack.c.l.b16 %v2613
        %v2893 = vunpack.c.h.b16 %v2613
        %v2894 = vunpack.c.l.b16 %v2614
        %v2895 = vunpack.c.h.b16 %v2614
        %v2896 = vunpack.c.l.b16 %v2615
        %v2897 = vunpack.c.h.b16 %v2615
        %v2898 = vunpack.c.l.b16 %v2616
        %v2899 = vunpack.c.h.b16 %v2616
        %v2900 = vunpack.c.l.b16 %v2617
        %v2901 = vunpack.c.h.b16 %v2617
        %v2902 = vunpack.c.l.b16 %v2618
        %v2903 = vunpack.c.h.b16 %v2618
        %v2904 = vunpack.c.l.b16 %v2619
        %v2905 = vunpack.c.h.b16 %v2619
        %v2906 = vunpack.c.l.b16 %v2620
        %v2907 = vunpack.c.h.b16 %v2620
        %v2908 = vunpack.c.l.b16 %v2621
        %v2909 = vunpack.c.h.b16 %v2621
        %v2910 = vunpack.c.l.b16 %v2622
        %v2911 = vunpack.c.h.b16 %v2622
        %v2912 = vunpack.c.l.b16 %v2623
        %v2913 = vunpack.c.h.b16 %v2623
        %v2914 = vunpack.c.l.b16 %v2624
        %v2915 = vunpack.c.h.b16 %v2624
        %v2916 = vunpack.c.l.b16 %v2625
        %v2917 = vunpack.c.h.b16 %v2625
        %v2918 = vunpack.c.l.b16 %v2626
        %v2919 = vunpack.c.h.b16 %v2626
        %v2920 = vunpack.c.l.b16 %v2627
        %v2921 = vunpack.c.h.b16 %v2627
        %v2922 = vunpack.c.l.b16 %v2628
        %v2923 = vunpack.c.h.b16 %v2628
        %v2924 = vunpack.c.l.b16 %v2629
        %v2925 = vunpack.c.h.b16 %v2629
        %v2926 = vunpack.c.l.b16 %v2630
        %v2927 = vunpack.c.h.b16 %v2630
        %v2928 = vunpack.c.l.b16 %v2631
        %v2929 = vunpack.c.h.b16 %v2631
        %v2930 = vunpack.c.l.b16 %v2632
        %v2931 = vunpack.c.h.b16 %v2632
        %v2932 = vunpack.c.l.b16 %v2633
        %v2933 = vunpack.c.h.b16 %v2633
        %v2934 = vunpack.c.l.b16 %v2634
        %v2935 = vunpack.c.h.b16 %v2634
        %v2936 = vunpack.c.l.b16 %v2635
        %v2937 = vunpack.c.h.b16 %v2635
        %v2938 = vunpack.c.l.b16 %v2636
        %v2939 = vunpack.c.h.b16 %v2636
        %v2940 = vunpack.c.l.b16 %v2637
        %v2941 = vunpack.c.h.b16 %v2637
        %v2942 = vunpack.c.l.b16 %v2638
        %v2943 = vunpack.c.h.b16 %v2638
        %v2944 = vunpack.c.l.b16 %v2639
        %v2945 = vunpack.c.h.b16 %v2639
        %v2946 = vunpack.c.l.b16 %v2640
        %v2947 = vunpack.c.h.b16 %v2640
        %v2948 = vunpack.c.l.b16 %v2641
        %v2949 = vunpack.c.h.b16 %v2641
        %v2950 = vunpack.c.l.b16 %v2642
        %v2951 = vunpack.c.h.b16 %v2642
        %v2952 = vunpack.c.l.b16 %v2643
        %v2953 = vunpack.c.h.b16 %v2643
        %v2954 = vunpack.c.l.b16 %v2644
        %v2955 = vunpack.c.h.b16 %v2644
        %v2956 = vunpack.c.l.b16 %v2645
        %v2957 = vunpack.c.h.b16 %v2645
        %v2958 = vunpack.c.l.b16 %v2646
        %v2959 = vunpack.c.h.b16 %v2646
        %v2960 = vunpack.c.l.b16 %v2647
        %v2961 = vunpack.c.h.b16 %v2647
        %v2962 = vunpack.c.l.b16 %v2648
        %v2963 = vunpack.c.h.b16 %v2648
        %v2964 = vunpack.c.l.b16 %v2649
        %v2965 = vunpack.c.h.b16 %v2649
        %v2966 = vunpack.c.l.b16 %v2650
        %v2967 = vunpack.c.h.b16 %v2650
        %v2968 = vunpack.c.l.b16 %v2651
        %v2969 = vunpack.c.h.b16 %v2651
        %v2970 = vunpack.c.l.b16 %v2652
        %v2971 = vunpack.c.h.b16 %v2652
        %v2972 = vunpack.c.l.b16 %v2653
        %v2973 = vunpack.c.h.b16 %v2653
        %v2974 = vunpack.c.l.b16 %v2654
        %v2975 = vunpack.c.h.b16 %v2654
        %v2976 = vunpack.c.l.b16 %v2655
        %v2977 = vunpack.c.h.b16 %v2655
        %v2978 = vunpack.c.l.b16 %v2656
        %v2979 = vunpack.c.h.b16 %v2656
        %v2980 = vunpack.c.l.b16 %v2657
        %v2981 = vunpack.c.h.b16 %v2657
        %v2982 = vunpack.c.l.b16 %v2658
        %v2983 = vunpack.c.h.b16 %v2658
        %v2984 = vunpack.c.l.b16 %v2659
        %v2985 = vunpack.c.h.b16 %v2659
        %v2986 = vunpack.c.l.b16 %v2660
        %v2987 = vunpack.c.h.b16 %v2660
        %v2988 = vunpack.c.l.b16 %v2661
        %v2989 = vunpack.c.h.b16 %v2661
        %v2990 = vunpack.c.l.b16 %v2662
        %v2991 = vunpack.c.h.b16 %v2662
        %v2992 = vunpack.c.l.b16 %v2663
        %v2993 = vunpack.c.h.b16 %v2663
        %v2994 = vunpack.c.l.b16 %v2664
        %v2995 = vunpack.c.h.b16 %v2664
        %v2996 = vunpack.c.l.b16 %v2665
        %v2997 = vunpack.c.h.b16 %v2665
        %v2998 = vunpack.c.l.b16 %v2666
        %v2999 = vunpack.c.h.b16 %v2666
        %v3000 = vunpack.c.l.b16 %v2667
        %v3001 = vunpack.c.h.b16 %v2667
        %v3002 = vunpack.c.l.b16 %v2668
        %v3003 = vunpack.c.h.b16 %v2668
        %v3004 = vunpack.c.l.b16 %v2669
        %v3005 = vunpack.c.h.b16 %v2669
        %v3006 = vunpack.c.l.b16 %v2670
        %v3007 = vunpack.c.h.b16 %v2670
        %v3008 = vunpack.c.l.b16 %v2671
        %v3009 = vunpack.c.h.b16 %v2671
        %v3010 = vunpack.c.l.b16 %v2672
        %v3011 = vunpack.c.h.b16 %v2672
        %v3012 = vunpack.c.l.b16 %v2673
        %v3013 = vunpack.c.h.b16 %v2673
        %v3014 = vunpack.c.l.b16 %v2674
        %v3015 = vunpack.c.h.b16 %v2674
        %v3016 = vunpack.c.l.b16 %v2675
        %v3017 = vunpack.c.h.b16 %v2675
        %v3018 = vunpack.c.l.b16 %v2676
        %v3019 = vunpack.c.h.b16 %v2676
        %v3020 = vunpack.c.l.b16 %v2677
        %v3021 = vunpack.c.h.b16 %v2677
        %v3022 = vunpack.c.l.b16 %v2678
        %v3023 = vunpack.c.h.b16 %v2678
        %v3024 = vunpack.c.l.b16 %v2679
        %v3025 = vunpack.c.h.b16 %v2679
        %v3026 = vunpack.c.l.b16 %v2680
        %v3027 = vunpack.c.h.b16 %v2680
        %v3028 = vunpack.c.l.b16 %v2681
        %v3029 = vunpack.c.h.b16 %v2681
        %v3030 = vunpack.c.l.b16 %v2682
        %v3031 = vunpack.c.h.b16 %v2682
        %v3032 = vunpack.c.l.b16 %v2683
        %v3033 = vunpack.c.h.b16 %v2683
        %v3034 = vunpack.c.l.b16 %v2684
        %v3035 = vunpack.c.h.b16 %v2684
        %v3036 = vunpack.c.l.b16 %v2685
        %v3037 = vunpack.c.h.b16 %v2685
        %v3038 = vpack.c.b16 %v2858, %v2846
        %v3039 = vpack.c.b16 %v2859, %v2847
        %v3040 = vpack.c.b16 %v2860, %v2848
        %v3041 = vpack.c.b16 %v2861, %v2849
        %v3042 = vpack.c.b16 %v2862, %v2850
        %v3043 = vpack.c.b16 %v2863, %v2851
        %v3044 = vpack.c.b16 %v2864, %v2852
        %v3045 = vpack.c.b16 %v2865, %v2853
        %v3046 = vpack.c.b16 %v2866, %v2854
        %v3047 = vpack.c.b16 %v2867, %v2855
        %v3048 = vpack.c.b16 %v2868, %v2856
        %v3049 = vpack.c.b16 %v2869, %v2857
        %v3050 = vpack.c.b16 %v2882, %v2870
        %v3051 = vpack.c.b16 %v2883, %v2871
        %v3052 = vpack.c.b16 %v2884, %v2872
        %v3053 = vpack.c.b16 %v2885, %v2873
        %v3054 = vpack.c.b16 %v2886, %v2874
        %v3055 = vpack.c.b16 %v2887, %v2875
        %v3056 = vpack.c.b16 %v2888, %v2876
        %v3057 = vpack.c.b16 %v2889, %v2877
        %v3058 = vpack.c.b16 %v2890, %v2878
        %v3059 = vpack.c.b16 %v2891, %v2879
        %v3060 = vpack.c.b16 %v2892, %v2880
        %v3061 = vpack.c.b16 %v2893, %v2881
        %v3062 = vpack.c.b16 %v2906, %v2894
        %v3063 = vpack.c.b16 %v2907, %v2895
        %v3064 = vpack.c.b16 %v2908, %v2896
        %v3065 = vpack.c.b16 %v2909, %v2897
        %v3066 = vpack.c.b16 %v2910, %v2898
        %v3067 = vpack.c.b16 %v2911, %v2899
        %v3068 = vpack.c.b16 %v2912, %v2900
        %v3069 = vpack.c.b16 %v2913, %v2901
        %v3070 = vpack.c.b16 %v2914, %v2902
        %v3071 = vpack.c.b16 %v2915, %v2903
        %v3072 = vpack.c.b16 %v2916, %v2904
        %v3073 = vpack.c.b16 %v2917, %v2905
        %v3074 = vpack.c.b16 %v2930, %v2918
        %v3075 = vpack.c.b16 %v2931, %v2919
        %v3076 = vpack.c.b16 %v2932, %v2920
        %v3077 = vpack.c.b16 %v2933, %v2921
        %v3078 = vpack.c.b16 %v2934, %v2922
        %v3079 = vpack.c.b16 %v2935, %v2923
        %v3080 = vpack.c.b16 %v2936, %v2924
        %v3081 = vpack.c.b16 %v2937, %v2925
        %v3082 = vpack.c.b16 %v2938, %v2926
        %v3083 = vpack.c.b16 %v2939, %v2927
        %v3084 = vpack.c.b16 %v2940, %v2928
        %v3085 = vpack.c.b16 %v2941, %v2929
        %v3086 = vpack.c.b16 %v2954, %v2942
        %v3087 = vpack.c.b16 %v2955, %v2943
        %v3088 = vpack.c.b16 %v2956, %v2944
        %v3089 = vpack.c.b16 %v2957, %v2945
        %v3090 = vpack.c.b16 %v2958, %v2946
        %v3091 = vpack.c.b16 %v2959, %v2947
        %v3092 = vpack.c.b16 %v2960, %v2948
        %v3093 = vpack.c.b16 %v2961, %v2949
        %v3094 = vpack.c.b16 %v2962, %v2950
        %v3095 = vpack.c.b16 %v2963, %v2951
        %v3096 = vpack.c.b16 %v2964, %v2952
        %v3097 = vpack.c.b16 %v2965, %v2953
        %v3098 = vpack.c.b16 %v2978, %v2966
        %v3099 = vpack.c.b16 %v2979, %v2967
        %v3100 = vpack.c.b16 %v2980, %v2968
        %v3101 = vpack.c.b16 %v2981, %v2969
        %v3102 = vpack.c.b16 %v2982, %v2970
        %v3103 = vpack.c.b16 %v2983, %v2971
        %v3104 = vpack.c.b16 %v2984, %v2972
        %v3105 = vpack.c.b16 %v2985, %v2973
        %v3106 = vpack.c.b16 %v2986, %v2974
        %v3107 = vpack.c.b16 %v2987, %v2975
        %v3108 = vpack.c.b16 %v2988, %v2976
        %v3109 = vpack.c.b16 %v2989, %v2977
        %v3110 = vpack.c.b16 %v3002, %v2990
        %v3111 = vpack.c.b16 %v3003, %v2991
        %v3112 = vpack.c.b16 %v3004, %v2992
        %v3113 = vpack.c.b16 %v3005, %v2993
        %v3114 = vpack.c.b16 %v3006, %v2994
        %v3115 = vpack.c.b16 %v3007, %v2995
        %v3116 = vpack.c.b16 %v3008, %v2996
        %v3117 = vpack.c.b16 %v3009, %v2997
        %v3118 = vpack.c.b16 %v3010, %v2998
        %v3119 = vpack.c.b16 %v3011, %v2999
        %v3120 = vpack.c.b16 %v3012, %v3000
        %v3121 = vpack.c.b16 %v3013, %v3001
        %v3122 = vpack.c.b16 %v3026, %v3014
        %v3123 = vpack.c.b16 %v3027, %v3015
        %v3124 = vpack.c.b16 %v3028, %v3016
        %v3125 = vpack.c.b16 %v3029, %v3017
        %v3126 = vpack.c.b16 %v3030, %v3018
        %v3127 = vpack.c.b16 %v3031, %v3019
        %v3128 = vpack.c.b16 %v3032, %v3020
        %v3129 = vpack.c.b16 %v3033, %v3021
        %v3130 = vpack.c.b16 %v3034, %v3022
        %v3131 = vpack.c.b16 %v3035, %v3023
        %v3132 = vpack.c.b16 %v3036, %v3024
        %v3133 = vpack.c.b16 %v3037, %v3025
        %3230 = vmatprep.subr.bf16.mxu0 %v3123
        %3231 = vmatpush1.bf16.msra.mxu0 %v3122
        %3232 = vmatprep.subr.bf16.mxu0 %v3111
        %3233 = vmatpush1.bf16.msra.mxu0 %v3110
        %3234 = vmatprep.subr.bf16.mxu0 %v3099
        %3235 = vmatpush1.bf16.msra.mxu0 %v3098
        %3236 = vmatprep.subr.bf16.mxu0 %v3087
        %3237 = vmatpush1.bf16.msra.mxu0 %v3086
        %3238 = vmatprep.subr.bf16.mxu0 %v3075
        %3239 = vmatpush1.bf16.msra.mxu0 %v3074
        %3240 = vmatprep.subr.bf16.mxu0 %v3063
        %3241 = vmatpush1.bf16.msra.mxu0 %v3062
        %3242 = vmatprep.subr.bf16.mxu0 %v3051
        %3243 = vmatpush1.bf16.msra.mxu0 %v3050
        %3244 = vmatprep.subr.bf16.mxu0 %v3039
        %3245 = vmatpush1.bf16.msra.mxu0 %v3038
        %3246 = vmatprep.subr.bf16.mxu0 0
        %3247 = vmatpush2.bf16.msra.mxu0 0
        %3248 = vmatprep.subr.bf16.mxu0 0
        %3249 = vmatpush2.bf16.msra.mxu0 0
        %3250 = vmatprep.subr.bf16.mxu0 0
        %3251 = vmatpush2.bf16.msra.mxu0 0
        %3252 = vmatprep.subr.bf16.mxu0 0
        %3253 = vmatpush2.bf16.msra.mxu0 0
        %3254 = vmatprep.subr.bf16.mxu0 0
        %3255 = vmatpush2.bf16.msra.mxu0 0
        %3256 = vmatprep.subr.bf16.mxu0 0
        %3257 = vmatpush2.bf16.msra.mxu0 0
        %3258 = vmatprep.subr.bf16.mxu0 0
        %3259 = vmatpush2.bf16.msra.mxu0 0
        %3260 = vmatprep.subr.bf16.mxu0 0
        %3261 = vmatpush2.bf16.msra.mxu0 0
        %3262 = vmatprep.mubr.bf16.mxu0 0
        %3263 = vmatmul.mubr.bf16.gmra.mxu0 %v2589
        %v3264 = vpop.f32.mrf.mxu0
        %v3265 = vadd.f32 %v2693, %v3264
        %v3266 = vpop.f32.mrf.mxu0
        %v3267 = vadd.f32 %v2697, %v3266
        %v3268 = vpop.f32.mrf.mxu0
        %v3269 = vpop.f32.mrf.mxu0
        %3270 = vdwg.mxu0
        %3271 = vmatprep.subr.bf16.mxu0 %v3125
        %3272 = vmatpush1.bf16.msra.mxu0 %v3124
        %3273 = vmatprep.subr.bf16.mxu0 %v3113
        %3274 = vmatpush1.bf16.msra.mxu0 %v3112
        %3275 = vmatprep.subr.bf16.mxu0 %v3101
        %3276 = vmatpush1.bf16.msra.mxu0 %v3100
        %3277 = vmatprep.subr.bf16.mxu0 %v3089
        %3278 = vmatpush1.bf16.msra.mxu0 %v3088
        %3279 = vmatprep.subr.bf16.mxu0 %v3077
        %3280 = vmatpush1.bf16.msra.mxu0 %v3076
        %3281 = vmatprep.subr.bf16.mxu0 %v3065
        %3282 = vmatpush1.bf16.msra.mxu0 %v3064
        %3283 = vmatprep.subr.bf16.mxu0 %v3053
        %3284 = vmatpush1.bf16.msra.mxu0 %v3052
        %3285 = vmatprep.subr.bf16.mxu0 %v3041
        %3286 = vmatpush1.bf16.msra.mxu0 %v3040
        %3287 = vmatprep.subr.bf16.mxu0 0
        %3288 = vmatpush2.bf16.msra.mxu0 0
        %3289 = vmatprep.subr.bf16.mxu0 0
        %3290 = vmatpush2.bf16.msra.mxu0 0
        %3291 = vmatprep.subr.bf16.mxu0 0
        %3292 = vmatpush2.bf16.msra.mxu0 0
        %3293 = vmatprep.subr.bf16.mxu0 0
        %3294 = vmatpush2.bf16.msra.mxu0 0
        %3295 = vmatprep.subr.bf16.mxu0 0
        %3296 = vmatpush2.bf16.msra.mxu0 0
        %3297 = vmatprep.subr.bf16.mxu0 0
        %3298 = vmatpush2.bf16.msra.mxu0 0
        %3299 = vmatprep.subr.bf16.mxu0 0
        %3300 = vmatpush2.bf16.msra.mxu0 0
        %3301 = vmatprep.subr.bf16.mxu0 0
        %3302 = vmatpush2.bf16.msra.mxu0 0
        %3303 = vmatprep.mubr.bf16.mxu0 0
        %3304 = vmatmul.mubr.bf16.gmra.mxu0 %v2589
        %v3305 = vpop.f32.mrf.mxu0
        %v3306 = vadd.f32 %v2701, %v3305
        %v3307 = vpop.f32.mrf.mxu0
        %v3308 = vadd.f32 %v2705, %v3307
        %v3309 = vpop.f32.mrf.mxu0
        %v3310 = vpop.f32.mrf.mxu0
        %3311 = vdwg.mxu0
        %3312 = vmatprep.subr.bf16.mxu0 %v3127
        %3313 = vmatpush1.bf16.msra.mxu0 %v3126
        %3314 = vmatprep.subr.bf16.mxu0 %v3115
        %3315 = vmatpush1.bf16.msra.mxu0 %v3114
        %3316 = vmatprep.subr.bf16.mxu0 %v3103
        %3317 = vmatpush1.bf16.msra.mxu0 %v3102
        %3318 = vmatprep.subr.bf16.mxu0 %v3091
        %3319 = vmatpush1.bf16.msra.mxu0 %v3090
        %3320 = vmatprep.subr.bf16.mxu0 %v3079
        %3321 = vmatpush1.bf16.msra.mxu0 %v3078
        %3322 = vmatprep.subr.bf16.mxu0 %v3067
        %3323 = vmatpush1.bf16.msra.mxu0 %v3066
        %3324 = vmatprep.subr.bf16.mxu0 %v3055
        %3325 = vmatpush1.bf16.msra.mxu0 %v3054
        %3326 = vmatprep.subr.bf16.mxu0 %v3043
        %3327 = vmatpush1.bf16.msra.mxu0 %v3042
        %3328 = vmatprep.subr.bf16.mxu0 0
        %3329 = vmatpush2.bf16.msra.mxu0 0
        %3330 = vmatprep.subr.bf16.mxu0 0
        %3331 = vmatpush2.bf16.msra.mxu0 0
        %3332 = vmatprep.subr.bf16.mxu0 0
        %3333 = vmatpush2.bf16.msra.mxu0 0
        %3334 = vmatprep.subr.bf16.mxu0 0
        %3335 = vmatpush2.bf16.msra.mxu0 0
        %3336 = vmatprep.subr.bf16.mxu0 0
        %3337 = vmatpush2.bf16.msra.mxu0 0
        %3338 = vmatprep.subr.bf16.mxu0 0
        %3339 = vmatpush2.bf16.msra.mxu0 0
        %3340 = vmatprep.subr.bf16.mxu0 0
        %3341 = vmatpush2.bf16.msra.mxu0 0
        %3342 = vmatprep.subr.bf16.mxu0 0
        %3343 = vmatpush2.bf16.msra.mxu0 0
        %3344 = vmatprep.mubr.bf16.mxu0 0
        %3345 = vmatmul.mubr.bf16.gmra.mxu0 %v2589
        %v3346 = vpop.f32.mrf.mxu0
        %v3347 = vadd.f32 %v2709, %v3346
        %v3348 = vpop.f32.mrf.mxu0
        %v3349 = vadd.f32 %v2713, %v3348
        %v3350 = vpop.f32.mrf.mxu0
        %v3351 = vpop.f32.mrf.mxu0
        %3352 = vdwg.mxu0
        %3353 = vmatprep.subr.bf16.mxu0 %v3129
        %3354 = vmatpush1.bf16.msra.mxu0 %v3128
        %3355 = vmatprep.subr.bf16.mxu0 %v3117
        %3356 = vmatpush1.bf16.msra.mxu0 %v3116
        %3357 = vmatprep.subr.bf16.mxu0 %v3105
        %3358 = vmatpush1.bf16.msra.mxu0 %v3104
        %3359 = vmatprep.subr.bf16.mxu0 %v3093
        %3360 = vmatpush1.bf16.msra.mxu0 %v3092
        %3361 = vmatprep.subr.bf16.mxu0 %v3081
        %3362 = vmatpush1.bf16.msra.mxu0 %v3080
        %3363 = vmatprep.subr.bf16.mxu0 %v3069
        %3364 = vmatpush1.bf16.msra.mxu0 %v3068
        %3365 = vmatprep.subr.bf16.mxu0 %v3057
        %3366 = vmatpush1.bf16.msra.mxu0 %v3056
        %3367 = vmatprep.subr.bf16.mxu0 %v3045
        %3368 = vmatpush1.bf16.msra.mxu0 %v3044
        %3369 = vmatprep.subr.bf16.mxu0 0
        %3370 = vmatpush2.bf16.msra.mxu0 0
        %3371 = vmatprep.subr.bf16.mxu0 0
        %3372 = vmatpush2.bf16.msra.mxu0 0
        %3373 = vmatprep.subr.bf16.mxu0 0
        %3374 = vmatpush2.bf16.msra.mxu0 0
        %3375 = vmatprep.subr.bf16.mxu0 0
        %3376 = vmatpush2.bf16.msra.mxu0 0
        %3377 = vmatprep.subr.bf16.mxu0 0
        %3378 = vmatpush2.bf16.msra.mxu0 0
        %3379 = vmatprep.subr.bf16.mxu0 0
        %3380 = vmatpush2.bf16.msra.mxu0 0
        %3381 = vmatprep.subr.bf16.mxu0 0
        %3382 = vmatpush2.bf16.msra.mxu0 0
        %3383 = vmatprep.subr.bf16.mxu0 0
        %3384 = vmatpush2.bf16.msra.mxu0 0
        %3385 = vmatprep.mubr.bf16.mxu0 0
        %3386 = vmatmul.mubr.bf16.gmra.mxu0 %v2589
        %v3387 = vpop.f32.mrf.mxu0
        %v3388 = vadd.f32 %v2717, %v3387
        %v3389 = vpop.f32.mrf.mxu0
        %v3390 = vadd.f32 %v2721, %v3389
        %v3391 = vpop.f32.mrf.mxu0
        %v3392 = vpop.f32.mrf.mxu0
        %3393 = vdwg.mxu0
        %3394 = vmatprep.subr.bf16.mxu0 %v3131
        %3395 = vmatpush1.bf16.msra.mxu0 %v3130
        %3396 = vmatprep.subr.bf16.mxu0 %v3119
        %3397 = vmatpush1.bf16.msra.mxu0 %v3118
        %3398 = vmatprep.subr.bf16.mxu0 %v3107
        %3399 = vmatpush1.bf16.msra.mxu0 %v3106
        %3400 = vmatprep.subr.bf16.mxu0 %v3095
        %3401 = vmatpush1.bf16.msra.mxu0 %v3094
        %3402 = vmatprep.subr.bf16.mxu0 %v3083
        %3403 = vmatpush1.bf16.msra.mxu0 %v3082
        %3404 = vmatprep.subr.bf16.mxu0 %v3071
        %3405 = vmatpush1.bf16.msra.mxu0 %v3070
        %3406 = vmatprep.subr.bf16.mxu0 %v3059
        %3407 = vmatpush1.bf16.msra.mxu0 %v3058
        %3408 = vmatprep.subr.bf16.mxu0 %v3047
        %3409 = vmatpush1.bf16.msra.mxu0 %v3046
        %3410 = vmatprep.subr.bf16.mxu0 0
        %3411 = vmatpush2.bf16.msra.mxu0 0
        %3412 = vmatprep.subr.bf16.mxu0 0
        %3413 = vmatpush2.bf16.msra.mxu0 0
        %3414 = vmatprep.subr.bf16.mxu0 0
        %3415 = vmatpush2.bf16.msra.mxu0 0
        %3416 = vmatprep.subr.bf16.mxu0 0
        %3417 = vmatpush2.bf16.msra.mxu0 0
        %3418 = vmatprep.subr.bf16.mxu0 0
        %3419 = vmatpush2.bf16.msra.mxu0 0
        %3420 = vmatprep.subr.bf16.mxu0 0
        %3421 = vmatpush2.bf16.msra.mxu0 0
        %3422 = vmatprep.subr.bf16.mxu0 0
        %3423 = vmatpush2.bf16.msra.mxu0 0
        %3424 = vmatprep.subr.bf16.mxu0 0
        %3425 = vmatpush2.bf16.msra.mxu0 0
        %3426 = vmatprep.mubr.bf16.mxu0 0
        %3427 = vmatmul.mubr.bf16.gmra.mxu0 %v2589
        %v3428 = vpop.f32.mrf.mxu0
        %v3429 = vadd.f32 %v2725, %v3428
        %v3430 = vpop.f32.mrf.mxu0
        %v3431 = vadd.f32 %v2729, %v3430
        %v3432 = vpop.f32.mrf.mxu0
        %v3433 = vpop.f32.mrf.mxu0
        %3434 = vdwg.mxu0
        %3435 = vmatprep.subr.bf16.mxu0 %v3133
        %3436 = vmatpush1.bf16.msra.mxu0 %v3132
        %3437 = vmatprep.subr.bf16.mxu0 %v3121
        %3438 = vmatpush1.bf16.msra.mxu0 %v3120
        %3439 = vmatprep.subr.bf16.mxu0 %v3109
        %3440 = vmatpush1.bf16.msra.mxu0 %v3108
        %3441 = vmatprep.subr.bf16.mxu0 %v3097
        %3442 = vmatpush1.bf16.msra.mxu0 %v3096
        %3443 = vmatprep.subr.bf16.mxu0 %v3085
        %3444 = vmatpush1.bf16.msra.mxu0 %v3084
        %3445 = vmatprep.subr.bf16.mxu0 %v3073
        %3446 = vmatpush1.bf16.msra.mxu0 %v3072
        %3447 = vmatprep.subr.bf16.mxu0 %v3061
        %3448 = vmatpush1.bf16.msra.mxu0 %v3060
        %3449 = vmatprep.subr.bf16.mxu0 %v3049
        %3450 = vmatpush1.bf16.msra.mxu0 %v3048
        %3451 = vmatprep.subr.bf16.mxu0 0
        %3452 = vmatpush2.bf16.msra.mxu0 0
        %3453 = vmatprep.subr.bf16.mxu0 0
        %3454 = vmatpush2.bf16.msra.mxu0 0
        %3455 = vmatprep.subr.bf16.mxu0 0
        %3456 = vmatpush2.bf16.msra.mxu0 0
        %3457 = vmatprep.subr.bf16.mxu0 0
        %3458 = vmatpush2.bf16.msra.mxu0 0
        %3459 = vmatprep.subr.bf16.mxu0 0
        %3460 = vmatpush2.bf16.msra.mxu0 0
        %3461 = vmatprep.subr.bf16.mxu0 0
        %3462 = vmatpush2.bf16.msra.mxu0 0
        %3463 = vmatprep.subr.bf16.mxu0 0
        %3464 = vmatpush2.bf16.msra.mxu0 0
        %3465 = vmatprep.subr.bf16.mxu0 0
        %3466 = vmatpush2.bf16.msra.mxu0 0
        %3467 = vmatprep.mubr.bf16.mxu0 0
        %3468 = vmatmul.mubr.bf16.gmra.mxu0 %v2589
        %v3469 = vpop.f32.mrf.mxu0
        %v3470 = vadd.f32 %v2733, %v3469
        %v3471 = vpop.f32.mrf.mxu0
        %v3472 = vadd.f32 %v2737, %v3471
        %v3473 = vpop.f32.mrf.mxu0
        %v3474 = vpop.f32.mrf.mxu0
        %3475 = vdwg.mxu0
        %vm3476 = vcmp.lt.s32.totalorder %v2222, 500
        %vm3477 = vcmp.lt.s32.totalorder %v2223, 500
        %vm3478 = vcmp.lt.s32.totalorder %v2224, 500
        %vm3479 = vcmp.lt.s32.totalorder %v2225, 500
        %v3480 = vsel %vm3476, %v3265, -1e+09
        %v3481 = vsel %vm3477, %v3267, -1e+09
        %v3482 = vsel %vm3478, %v3306, -1e+09
        %v3483 = vsel %vm3479, %v3308, -1e+09
        %v3484 = vsel %vm3476, %v3347, -1e+09
        %v3485 = vsel %vm3477, %v3349, -1e+09
        %v3486 = vsel %vm3478, %v3388, -1e+09
        %v3487 = vsel %vm3479, %v3390, -1e+09
        %v3488 = vmax.f32 %v3480, %v3481
        %v3489 = vmax.f32 %v3482, %v3483
        %v3490 = vmax.f32 %v3488, %v3489
        %3491 = vmax.xlane.f32.xlu0 %v3490
        %v3492 = vpop.xlane.xlu0 %3491
        %v3493 = vsub.f32 %v3480, %v3492
        %v3494 = vsub.f32 %v3481, %v3492
        %v3495 = vsub.f32 %v3482, %v3492
        %v3496 = vsub.f32 %v3483, %v3492
        %v3497 = vmul.f32 %v3493, 1.442695
        %v3498 = vpow.pop %v3497
        %v3499 = vmul.f32 %v3494, 1.442695
        %v3500 = vpow.pop %v3499
        %v3501 = vmul.f32 %v3495, 1.442695
        %v3502 = vpow.pop %v3501
        %v3503 = vmul.f32 %v3496, 1.442695
        %v3504 = vpow.pop %v3503
        %v3505 = vadd.f32 %v3498, %v3500
        %v3506 = vadd.f32 %v3505, %v3502
        %v3507 = vadd.f32 %v3506, %v3504
        %3508 = vadd.xlane.f32.xlu0 %v3507
        %v3509 = vpop.xlane.xlu0 %3508
        %v3510 = vrcp.pop %v3509
        %v3511 = vmul.f32 %v3498, %v3510
        %v3512 = vmul.f32 %v3500, %v3510
        %v3513 = vmul.f32 %v3502, %v3510
        %v3514 = vmul.f32 %v3504, %v3510
        %v3515 = vmul.f32 %v3511, 0.5
        %v3516 = vmul.f32 %v3512, 0.5
        %v3517 = vmul.f32 %v3513, 0.5
        %v3518 = vmul.f32 %v3514, 0.5
        %v3519 = vadd.f32 %v3515, 0.001
        %v3520 = vadd.f32 %v3516, 0.001
        %v3521 = vadd.f32 %v3517, 0.001
        %v3522 = vadd.f32 %v3518, 0.001
        %v3523 = vmul.f32 %v3519, 200.0
        %v3524 = vmul.f32 %v3520, 200.0
        %v3525 = vmul.f32 %v3521, 200.0
        %v3526 = vmul.f32 %v3522, 200.0
        %v3527 = vmax.f32 %v3484, %v3485
        %v3528 = vmax.f32 %v3486, %v3487
        %v3529 = vmax.f32 %v3527, %v3528
        %3530 = vmax.xlane.f32.xlu0 %v3529
        %v3531 = vpop.xlane.xlu0 %3530
        %v3532 = vsub.f32 %v3484, %v3531
        %v3533 = vsub.f32 %v3485, %v3531
        %v3534 = vsub.f32 %v3486, %v3531
        %v3535 = vsub.f32 %v3487, %v3531
        %v3536 = vmul.f32 %v3532, 1.442695
        %v3537 = vpow.pop %v3536
        %v3538 = vmul.f32 %v3533, 1.442695
        %v3539 = vpow.pop %v3538
        %v3540 = vmul.f32 %v3534, 1.442695
        %v3541 = vpow.pop %v3540
        %v3542 = vmul.f32 %v3535, 1.442695
        %v3543 = vpow.pop %v3542
        %v3544 = vadd.f32 %v3537, %v3539
        %v3545 = vadd.f32 %v3544, %v3541
        %v3546 = vadd.f32 %v3545, %v3543
        %3547 = vadd.xlane.f32.xlu0 %v3546
        %v3548 = vpop.xlane.xlu0 %3547
        %v3549 = vrcp.pop %v3548
        %v3550 = vmul.f32 %v3537, %v3549
        %v3551 = vmul.f32 %v3539, %v3549
        %v3552 = vmul.f32 %v3541, %v3549
        %v3553 = vmul.f32 %v3543, %v3549
        %v3554 = vmul.f32 %v3550, 0.5
        %v3555 = vmul.f32 %v3551, 0.5
        %v3556 = vmul.f32 %v3552, 0.5
        %v3557 = vmul.f32 %v3553, 0.5
        %v3558 = vadd.f32 %v3554, 0.001
        %v3559 = vadd.f32 %v3555, 0.001
        %v3560 = vadd.f32 %v3556, 0.001
        %v3561 = vadd.f32 %v3557, 0.001
        %v3562 = vmul.f32 %v3558, 200.0
        %v3563 = vmul.f32 %v3559, 200.0
        %v3564 = vmul.f32 %v3560, 200.0
        %v3565 = vmul.f32 %v3561, 200.0
        %v3566 = vsel %vm3476, %v3523, 0.0
        %v3567 = vsel %vm3477, %v3524, 0.0
        %v3568 = vsel %vm3478, %v3525, 0.0
        %v3569 = vsel %vm3479, %v3526, 0.0
        %v3570 = vsel %vm3476, %v3562, 0.0
        %v3571 = vsel %vm3477, %v3563, 0.0
        %v3572 = vsel %vm3478, %v3564, 0.0
        %v3573 = vsel %vm3479, %v3565, 0.0
        %v3574 = vmax.f32 %v3429, 0.0
        %v3575 = vmax.f32 %v3431, 0.0
        %v3576 = vmax.f32 %v3470, 0.0
        %v3577 = vmax.f32 %v3472, 0.0
        %v3578 = vadd.f32 %v3574, 0.001
        %v3579 = vadd.f32 %v3575, 0.001
        %v3580 = vadd.f32 %v3576, 0.001
        %v3581 = vadd.f32 %v3577, 0.001
        %v3582 = vand.u32 2147483647, %v3429
        %v3583 = vand.u32 2147483647, %v3431
        %v3584 = vand.u32 2147483647, %v3470
        %v3585 = vand.u32 2147483647, %v3472
        %v3586 = vsub.f32 0.0, %v3582
        %v3587 = vsub.f32 0.0, %v3583
        %v3588 = vsub.f32 0.0, %v3584
        %v3589 = vsub.f32 0.0, %v3585
        %v3590 = vmul.f32 %v3586, 1.442695
        %v3591 = vpow.pop %v3590
        %v3592 = vmul.f32 %v3587, 1.442695
        %v3593 = vpow.pop %v3592
        %v3594 = vmul.f32 %v3588, 1.442695
        %v3595 = vpow.pop %v3594
        %v3596 = vmul.f32 %v3589, 1.442695
        %v3597 = vpow.pop %v3596
        %v3598 = vadd.f32 %v3591, 1.0
        %v3599 = vadd.f32 %v3593, 1.0
        %v3600 = vadd.f32 %v3595, 1.0
        %v3601 = vadd.f32 %v3597, 1.0
        %v3602 = vlog2.pop %v3598
        %v3603 = vmul.f32 %v3602, 0.6931472
        %v3604 = vlog2.pop %v3599
        %v3605 = vmul.f32 %v3604, 0.6931472
        %v3606 = vlog2.pop %v3600
        %v3607 = vmul.f32 %v3606, 0.6931472
        %v3608 = vlog2.pop %v3601
        %v3609 = vmul.f32 %v3608, 0.6931472
        %v3610 = vadd.f32 %v3578, %v3603
        %v3611 = vadd.f32 %v3579, %v3605
        %v3612 = vadd.f32 %v3580, %v3607
        %v3613 = vadd.f32 %v3581, %v3609
        %v3614 = vpack.c.bf16 %v3570, %v3570
        %v3615 = vpack.c.bf16 %v3571, %v3571
        %v3616 = vpack.c.bf16 %v3572, %v3572
        %v3617 = vpack.c.bf16 %v3573, %v3573
        %v3746 = vunpack.c.l.b16 %v2093
        %v3747 = vunpack.c.h.b16 %v2093
        %v3748 = vunpack.c.l.b16 %v2094
        %v3749 = vunpack.c.h.b16 %v2094
        %v3750 = vunpack.c.l.b16 %v2095
        %v3751 = vunpack.c.h.b16 %v2095
        %v3752 = vunpack.c.l.b16 %v2096
        %v3753 = vunpack.c.h.b16 %v2096
        %v3754 = vunpack.c.l.b16 %v2097
        %v3755 = vunpack.c.h.b16 %v2097
        %v3756 = vunpack.c.l.b16 %v2098
        %v3757 = vunpack.c.h.b16 %v2098
        %v3758 = vunpack.c.l.b16 %v2099
        %v3759 = vunpack.c.h.b16 %v2099
        %v3760 = vunpack.c.l.b16 %v2100
        %v3761 = vunpack.c.h.b16 %v2100
        %v3762 = vunpack.c.l.b16 %v2101
        %v3763 = vunpack.c.h.b16 %v2101
        %v3764 = vunpack.c.l.b16 %v2102
        %v3765 = vunpack.c.h.b16 %v2102
        %v3766 = vunpack.c.l.b16 %v2103
        %v3767 = vunpack.c.h.b16 %v2103
        %v3768 = vunpack.c.l.b16 %v2104
        %v3769 = vunpack.c.h.b16 %v2104
        %v3770 = vunpack.c.l.b16 %v2105
        %v3771 = vunpack.c.h.b16 %v2105
        %v3772 = vunpack.c.l.b16 %v2106
        %v3773 = vunpack.c.h.b16 %v2106
        %v3774 = vunpack.c.l.b16 %v2107
        %v3775 = vunpack.c.h.b16 %v2107
        %v3776 = vunpack.c.l.b16 %v2108
        %v3777 = vunpack.c.h.b16 %v2108
        %v3778 = vunpack.c.l.b16 %v2109
        %v3779 = vunpack.c.h.b16 %v2109
        %v3780 = vunpack.c.l.b16 %v2110
        %v3781 = vunpack.c.h.b16 %v2110
        %v3782 = vunpack.c.l.b16 %v2111
        %v3783 = vunpack.c.h.b16 %v2111
        %v3784 = vunpack.c.l.b16 %v2112
        %v3785 = vunpack.c.h.b16 %v2112
        %v3786 = vunpack.c.l.b16 %v2113
        %v3787 = vunpack.c.h.b16 %v2113
        %v3788 = vunpack.c.l.b16 %v2114
        %v3789 = vunpack.c.h.b16 %v2114
        %v3790 = vunpack.c.l.b16 %v2115
        %v3791 = vunpack.c.h.b16 %v2115
        %v3792 = vunpack.c.l.b16 %v2116
        %v3793 = vunpack.c.h.b16 %v2116
        %v3794 = vunpack.c.l.b16 %v2117
        %v3795 = vunpack.c.h.b16 %v2117
        %v3796 = vunpack.c.l.b16 %v2118
        %v3797 = vunpack.c.h.b16 %v2118
        %v3798 = vunpack.c.l.b16 %v2119
        %v3799 = vunpack.c.h.b16 %v2119
        %v3800 = vunpack.c.l.b16 %v2120
        %v3801 = vunpack.c.h.b16 %v2120
        %v3802 = vunpack.c.l.b16 %v2121
        %v3803 = vunpack.c.h.b16 %v2121
        %v3804 = vunpack.c.l.b16 %v2122
        %v3805 = vunpack.c.h.b16 %v2122
        %v3806 = vunpack.c.l.b16 %v2123
        %v3807 = vunpack.c.h.b16 %v2123
        %v3808 = vunpack.c.l.b16 %v2124
        %v3809 = vunpack.c.h.b16 %v2124
        %v3810 = vunpack.c.l.b16 %v2125
        %v3811 = vunpack.c.h.b16 %v2125
        %v3812 = vunpack.c.l.b16 %v2126
        %v3813 = vunpack.c.h.b16 %v2126
        %v3814 = vunpack.c.l.b16 %v2127
        %v3815 = vunpack.c.h.b16 %v2127
        %v3816 = vunpack.c.l.b16 %v2128
        %v3817 = vunpack.c.h.b16 %v2128
        %v3818 = vunpack.c.l.b16 %v2129
        %v3819 = vunpack.c.h.b16 %v2129
        %v3820 = vunpack.c.l.b16 %v2130
        %v3821 = vunpack.c.h.b16 %v2130
        %v3822 = vunpack.c.l.b16 %v2131
        %v3823 = vunpack.c.h.b16 %v2131
        %v3824 = vunpack.c.l.b16 %v2132
        %v3825 = vunpack.c.h.b16 %v2132
        %v3826 = vunpack.c.l.b16 %v2133
        %v3827 = vunpack.c.h.b16 %v2133
        %v3828 = vunpack.c.l.b16 %v2134
        %v3829 = vunpack.c.h.b16 %v2134
        %v3830 = vunpack.c.l.b16 %v2135
        %v3831 = vunpack.c.h.b16 %v2135
        %v3832 = vunpack.c.l.b16 %v2136
        %v3833 = vunpack.c.h.b16 %v2136
        %v3834 = vunpack.c.l.b16 %v2137
        %v3835 = vunpack.c.h.b16 %v2137
        %v3836 = vunpack.c.l.b16 %v2138
        %v3837 = vunpack.c.h.b16 %v2138
        %v3838 = vunpack.c.l.b16 %v2139
        %v3839 = vunpack.c.h.b16 %v2139
        %v3840 = vunpack.c.l.b16 %v2140
        %v3841 = vunpack.c.h.b16 %v2140
        %v3842 = vunpack.c.l.b16 %v2141
        %v3843 = vunpack.c.h.b16 %v2141
        %v3844 = vunpack.c.l.b16 %v2142
        %v3845 = vunpack.c.h.b16 %v2142
        %v3846 = vunpack.c.l.b16 %v2143
        %v3847 = vunpack.c.h.b16 %v2143
        %v3848 = vunpack.c.l.b16 %v2144
        %v3849 = vunpack.c.h.b16 %v2144
        %v3850 = vunpack.c.l.b16 %v2145
        %v3851 = vunpack.c.h.b16 %v2145
        %v3852 = vunpack.c.l.b16 %v2146
        %v3853 = vunpack.c.h.b16 %v2146
        %v3854 = vunpack.c.l.b16 %v2147
        %v3855 = vunpack.c.h.b16 %v2147
        %v3856 = vunpack.c.l.b16 %v2148
        %v3857 = vunpack.c.h.b16 %v2148
        %v3858 = vunpack.c.l.b16 %v2149
        %v3859 = vunpack.c.h.b16 %v2149
        %v3860 = vunpack.c.l.b16 %v2150
        %v3861 = vunpack.c.h.b16 %v2150
        %v3862 = vunpack.c.l.b16 %v2151
        %v3863 = vunpack.c.h.b16 %v2151
        %v3864 = vunpack.c.l.b16 %v2152
        %v3865 = vunpack.c.h.b16 %v2152
        %v3866 = vunpack.c.l.b16 %v2153
        %v3867 = vunpack.c.h.b16 %v2153
        %v3868 = vunpack.c.l.b16 %v2154
        %v3869 = vunpack.c.h.b16 %v2154
        %v3870 = vunpack.c.l.b16 %v2155
        %v3871 = vunpack.c.h.b16 %v2155
        %v3872 = vunpack.c.l.b16 %v2156
        %v3873 = vunpack.c.h.b16 %v2156
        %v3874 = vunpack.c.l.b16 %v2157
        %v3875 = vunpack.c.h.b16 %v2157
        %v3876 = vunpack.c.l.b16 %v2158
        %v3877 = vunpack.c.h.b16 %v2158
        %v3878 = vunpack.c.l.b16 %v2159
        %v3879 = vunpack.c.h.b16 %v2159
        %v3880 = vunpack.c.l.b16 %v2160
        %v3881 = vunpack.c.h.b16 %v2160
        %v3882 = vunpack.c.l.b16 %v2161
        %v3883 = vunpack.c.h.b16 %v2161
        %v3884 = vunpack.c.l.b16 %v2162
        %v3885 = vunpack.c.h.b16 %v2162
        %v3886 = vunpack.c.l.b16 %v2163
        %v3887 = vunpack.c.h.b16 %v2163
        %v3888 = vunpack.c.l.b16 %v2164
        %v3889 = vunpack.c.h.b16 %v2164
        %v3890 = vunpack.c.l.b16 %v2165
        %v3891 = vunpack.c.h.b16 %v2165
        %v3892 = vunpack.c.l.b16 %v2166
        %v3893 = vunpack.c.h.b16 %v2166
        %v3894 = vunpack.c.l.b16 %v2167
        %v3895 = vunpack.c.h.b16 %v2167
        %v3896 = vunpack.c.l.b16 %v2168
        %v3897 = vunpack.c.h.b16 %v2168
        %v3898 = vunpack.c.l.b16 %v2169
        %v3899 = vunpack.c.h.b16 %v2169
        %v3900 = vunpack.c.l.b16 %v2170
        %v3901 = vunpack.c.h.b16 %v2170
        %v3902 = vunpack.c.l.b16 %v2171
        %v3903 = vunpack.c.h.b16 %v2171
        %v3904 = vunpack.c.l.b16 %v2172
        %v3905 = vunpack.c.h.b16 %v2172
        %v3906 = vunpack.c.l.b16 %v2173
        %v3907 = vunpack.c.h.b16 %v2173
        %v3908 = vunpack.c.l.b16 %v2174
        %v3909 = vunpack.c.h.b16 %v2174
        %v3910 = vunpack.c.l.b16 %v2175
        %v3911 = vunpack.c.h.b16 %v2175
        %v3912 = vunpack.c.l.b16 %v2176
        %v3913 = vunpack.c.h.b16 %v2176
        %v3914 = vunpack.c.l.b16 %v2177
        %v3915 = vunpack.c.h.b16 %v2177
        %v3916 = vunpack.c.l.b16 %v2178
        %v3917 = vunpack.c.h.b16 %v2178
        %v3918 = vunpack.c.l.b16 %v2179
        %v3919 = vunpack.c.h.b16 %v2179
        %v3920 = vunpack.c.l.b16 %v2180
        %v3921 = vunpack.c.h.b16 %v2180
        %v3922 = vunpack.c.l.b16 %v2181
        %v3923 = vunpack.c.h.b16 %v2181
        %v3924 = vunpack.c.l.b16 %v2182
        %v3925 = vunpack.c.h.b16 %v2182
        %v3926 = vunpack.c.l.b16 %v2183
        %v3927 = vunpack.c.h.b16 %v2183
        %v3928 = vunpack.c.l.b16 %v2184
        %v3929 = vunpack.c.h.b16 %v2184
        %v3930 = vunpack.c.l.b16 %v2185
        %v3931 = vunpack.c.h.b16 %v2185
        %v3932 = vunpack.c.l.b16 %v2186
        %v3933 = vunpack.c.h.b16 %v2186
        %v3934 = vunpack.c.l.b16 %v2187
        %v3935 = vunpack.c.h.b16 %v2187
        %v3936 = vunpack.c.l.b16 %v2188
        %v3937 = vunpack.c.h.b16 %v2188
        %v3938 = vunpack.c.l.b16 %v2189
        %v3939 = vunpack.c.h.b16 %v2189
        %v3940 = vunpack.c.l.b16 %v2190
        %v3941 = vunpack.c.h.b16 %v2190
        %v3942 = vunpack.c.l.b16 %v2191
        %v3943 = vunpack.c.h.b16 %v2191
        %v3944 = vunpack.c.l.b16 %v2192
        %v3945 = vunpack.c.h.b16 %v2192
        %v3946 = vunpack.c.l.b16 %v2193
        %v3947 = vunpack.c.h.b16 %v2193
        %v3948 = vunpack.c.l.b16 %v2194
        %v3949 = vunpack.c.h.b16 %v2194
        %v3950 = vunpack.c.l.b16 %v2195
        %v3951 = vunpack.c.h.b16 %v2195
        %v3952 = vunpack.c.l.b16 %v2196
        %v3953 = vunpack.c.h.b16 %v2196
        %v3954 = vunpack.c.l.b16 %v2197
        %v3955 = vunpack.c.h.b16 %v2197
        %v3956 = vunpack.c.l.b16 %v2198
        %v3957 = vunpack.c.h.b16 %v2198
        %v3958 = vunpack.c.l.b16 %v2199
        %v3959 = vunpack.c.h.b16 %v2199
        %v3960 = vunpack.c.l.b16 %v2200
        %v3961 = vunpack.c.h.b16 %v2200
        %v3962 = vunpack.c.l.b16 %v2201
        %v3963 = vunpack.c.h.b16 %v2201
        %v3964 = vunpack.c.l.b16 %v2202
        %v3965 = vunpack.c.h.b16 %v2202
        %v3966 = vunpack.c.l.b16 %v2203
        %v3967 = vunpack.c.h.b16 %v2203
        %v3968 = vunpack.c.l.b16 %v2204
        %v3969 = vunpack.c.h.b16 %v2204
        %v3970 = vunpack.c.l.b16 %v2205
        %v3971 = vunpack.c.h.b16 %v2205
        %v3972 = vunpack.c.l.b16 %v2206
        %v3973 = vunpack.c.h.b16 %v2206
        %v3974 = vunpack.c.l.b16 %v2207
        %v3975 = vunpack.c.h.b16 %v2207
        %v3976 = vunpack.c.l.b16 %v2208
        %v3977 = vunpack.c.h.b16 %v2208
        %v3978 = vunpack.c.l.b16 %v2209
        %v3979 = vunpack.c.h.b16 %v2209
        %v3980 = vunpack.c.l.b16 %v2210
        %v3981 = vunpack.c.h.b16 %v2210
        %v3982 = vunpack.c.l.b16 %v2211
        %v3983 = vunpack.c.h.b16 %v2211
        %v3984 = vunpack.c.l.b16 %v2212
        %v3985 = vunpack.c.h.b16 %v2212
        %v3986 = vunpack.c.l.b16 %v2213
        %v3987 = vunpack.c.h.b16 %v2213
        %v3988 = vunpack.c.l.b16 %v2214
        %v3989 = vunpack.c.h.b16 %v2214
        %v3990 = vunpack.c.l.b16 %v2215
        %v3991 = vunpack.c.h.b16 %v2215
        %v3992 = vunpack.c.l.b16 %v2216
        %v3993 = vunpack.c.h.b16 %v2216
        %v3994 = vunpack.c.l.b16 %v2217
        %v3995 = vunpack.c.h.b16 %v2217
        %v3996 = vunpack.c.l.b16 %v2218
        %v3997 = vunpack.c.h.b16 %v2218
        %v3998 = vunpack.c.l.b16 %v2219
        %v3999 = vunpack.c.h.b16 %v2219
        %v4000 = vunpack.c.l.b16 %v2220
        %v4001 = vunpack.c.h.b16 %v2220
        %v4002 = vpack.c.b16 %v3750, %v3746
        %v4003 = vpack.c.b16 %v3751, %v3747
        %v4004 = vpack.c.b16 %v3752, %v3748
        %v4005 = vpack.c.b16 %v3753, %v3749
        %v4006 = vpack.c.b16 %v3758, %v3754
        %v4007 = vpack.c.b16 %v3759, %v3755
        %v4008 = vpack.c.b16 %v3760, %v3756
        %v4009 = vpack.c.b16 %v3761, %v3757
        %v4010 = vpack.c.b16 %v3766, %v3762
        %v4011 = vpack.c.b16 %v3767, %v3763
        %v4012 = vpack.c.b16 %v3768, %v3764
        %v4013 = vpack.c.b16 %v3769, %v3765
        %v4014 = vpack.c.b16 %v3774, %v3770
        %v4015 = vpack.c.b16 %v3775, %v3771
        %v4016 = vpack.c.b16 %v3776, %v3772
        %v4017 = vpack.c.b16 %v3777, %v3773
        %v4018 = vpack.c.b16 %v3782, %v3778
        %v4019 = vpack.c.b16 %v3783, %v3779
        %v4020 = vpack.c.b16 %v3784, %v3780
        %v4021 = vpack.c.b16 %v3785, %v3781
        %v4022 = vpack.c.b16 %v3790, %v3786
        %v4023 = vpack.c.b16 %v3791, %v3787
        %v4024 = vpack.c.b16 %v3792, %v3788
        %v4025 = vpack.c.b16 %v3793, %v3789
        %v4026 = vpack.c.b16 %v3798, %v3794
        %v4027 = vpack.c.b16 %v3799, %v3795
        %v4028 = vpack.c.b16 %v3800, %v3796
        %v4029 = vpack.c.b16 %v3801, %v3797
        %v4030 = vpack.c.b16 %v3806, %v3802
        %v4031 = vpack.c.b16 %v3807, %v3803
        %v4032 = vpack.c.b16 %v3808, %v3804
        %v4033 = vpack.c.b16 %v3809, %v3805
        %v4034 = vpack.c.b16 %v3814, %v3810
        %v4035 = vpack.c.b16 %v3815, %v3811
        %v4036 = vpack.c.b16 %v3816, %v3812
        %v4037 = vpack.c.b16 %v3817, %v3813
        %v4038 = vpack.c.b16 %v3822, %v3818
        %v4039 = vpack.c.b16 %v3823, %v3819
        %v4040 = vpack.c.b16 %v3824, %v3820
        %v4041 = vpack.c.b16 %v3825, %v3821
        %v4042 = vpack.c.b16 %v3830, %v3826
        %v4043 = vpack.c.b16 %v3831, %v3827
        %v4044 = vpack.c.b16 %v3832, %v3828
        %v4045 = vpack.c.b16 %v3833, %v3829
        %v4046 = vpack.c.b16 %v3838, %v3834
        %v4047 = vpack.c.b16 %v3839, %v3835
        %v4048 = vpack.c.b16 %v3840, %v3836
        %v4049 = vpack.c.b16 %v3841, %v3837
        %v4050 = vpack.c.b16 %v3846, %v3842
        %v4051 = vpack.c.b16 %v3847, %v3843
        %v4052 = vpack.c.b16 %v3848, %v3844
        %v4053 = vpack.c.b16 %v3849, %v3845
        %v4054 = vpack.c.b16 %v3854, %v3850
        %v4055 = vpack.c.b16 %v3855, %v3851
        %v4056 = vpack.c.b16 %v3856, %v3852
        %v4057 = vpack.c.b16 %v3857, %v3853
        %v4058 = vpack.c.b16 %v3862, %v3858
        %v4059 = vpack.c.b16 %v3863, %v3859
        %v4060 = vpack.c.b16 %v3864, %v3860
        %v4061 = vpack.c.b16 %v3865, %v3861
        %v4062 = vpack.c.b16 %v3870, %v3866
        %v4063 = vpack.c.b16 %v3871, %v3867
        %v4064 = vpack.c.b16 %v3872, %v3868
        %v4065 = vpack.c.b16 %v3873, %v3869
        %v4066 = vpack.c.b16 %v3878, %v3874
        %v4067 = vpack.c.b16 %v3879, %v3875
        %v4068 = vpack.c.b16 %v3880, %v3876
        %v4069 = vpack.c.b16 %v3881, %v3877
        %v4070 = vpack.c.b16 %v3886, %v3882
        %v4071 = vpack.c.b16 %v3887, %v3883
        %v4072 = vpack.c.b16 %v3888, %v3884
        %v4073 = vpack.c.b16 %v3889, %v3885
        %v4074 = vpack.c.b16 %v3894, %v3890
        %v4075 = vpack.c.b16 %v3895, %v3891
        %v4076 = vpack.c.b16 %v3896, %v3892
        %v4077 = vpack.c.b16 %v3897, %v3893
        %v4078 = vpack.c.b16 %v3902, %v3898
        %v4079 = vpack.c.b16 %v3903, %v3899
        %v4080 = vpack.c.b16 %v3904, %v3900
        %v4081 = vpack.c.b16 %v3905, %v3901
        %v4082 = vpack.c.b16 %v3910, %v3906
        %v4083 = vpack.c.b16 %v3911, %v3907
        %v4084 = vpack.c.b16 %v3912, %v3908
        %v4085 = vpack.c.b16 %v3913, %v3909
        %v4086 = vpack.c.b16 %v3918, %v3914
        %v4087 = vpack.c.b16 %v3919, %v3915
        %v4088 = vpack.c.b16 %v3920, %v3916
        %v4089 = vpack.c.b16 %v3921, %v3917
        %v4090 = vpack.c.b16 %v3926, %v3922
        %v4091 = vpack.c.b16 %v3927, %v3923
        %v4092 = vpack.c.b16 %v3928, %v3924
        %v4093 = vpack.c.b16 %v3929, %v3925
        %v4094 = vpack.c.b16 %v3934, %v3930
        %v4095 = vpack.c.b16 %v3935, %v3931
        %v4096 = vpack.c.b16 %v3936, %v3932
        %v4097 = vpack.c.b16 %v3937, %v3933
        %v4098 = vpack.c.b16 %v3942, %v3938
        %v4099 = vpack.c.b16 %v3943, %v3939
        %v4100 = vpack.c.b16 %v3944, %v3940
        %v4101 = vpack.c.b16 %v3945, %v3941
        %v4102 = vpack.c.b16 %v3950, %v3946
        %v4103 = vpack.c.b16 %v3951, %v3947
        %v4104 = vpack.c.b16 %v3952, %v3948
        %v4105 = vpack.c.b16 %v3953, %v3949
        %v4106 = vpack.c.b16 %v3958, %v3954
        %v4107 = vpack.c.b16 %v3959, %v3955
        %v4108 = vpack.c.b16 %v3960, %v3956
        %v4109 = vpack.c.b16 %v3961, %v3957
        %v4110 = vpack.c.b16 %v3966, %v3962
        %v4111 = vpack.c.b16 %v3967, %v3963
        %v4112 = vpack.c.b16 %v3968, %v3964
        %v4113 = vpack.c.b16 %v3969, %v3965
        %v4114 = vpack.c.b16 %v3974, %v3970
        %v4115 = vpack.c.b16 %v3975, %v3971
        %v4116 = vpack.c.b16 %v3976, %v3972
        %v4117 = vpack.c.b16 %v3977, %v3973
        %v4118 = vpack.c.b16 %v3982, %v3978
        %v4119 = vpack.c.b16 %v3983, %v3979
        %v4120 = vpack.c.b16 %v3984, %v3980
        %v4121 = vpack.c.b16 %v3985, %v3981
        %v4122 = vpack.c.b16 %v3990, %v3986
        %v4123 = vpack.c.b16 %v3991, %v3987
        %v4124 = vpack.c.b16 %v3992, %v3988
        %v4125 = vpack.c.b16 %v3993, %v3989
        %v4126 = vpack.c.b16 %v3998, %v3994
        %v4127 = vpack.c.b16 %v3999, %v3995
        %v4128 = vpack.c.b16 %v4000, %v3996
        %v4129 = vpack.c.b16 %v4001, %v3997
        %4258 = vmatprep.subr.bf16.mxu0 %v4031
        %4259 = vmatpush1.bf16.msra.mxu0 %v4030
        %4260 = vmatprep.subr.bf16.mxu0 %v4027
        %4261 = vmatpush1.bf16.msra.mxu0 %v4026
        %4262 = vmatprep.subr.bf16.mxu0 %v4023
        %4263 = vmatpush1.bf16.msra.mxu0 %v4022
        %4264 = vmatprep.subr.bf16.mxu0 %v4019
        %4265 = vmatpush1.bf16.msra.mxu0 %v4018
        %4266 = vmatprep.subr.bf16.mxu0 %v4015
        %4267 = vmatpush1.bf16.msra.mxu0 %v4014
        %4268 = vmatprep.subr.bf16.mxu0 %v4011
        %4269 = vmatpush1.bf16.msra.mxu0 %v4010
        %4270 = vmatprep.subr.bf16.mxu0 %v4007
        %4271 = vmatpush1.bf16.msra.mxu0 %v4006
        %4272 = vmatprep.subr.bf16.mxu0 %v4003
        %4273 = vmatpush1.bf16.msra.mxu0 %v4002
        %4274 = vmatprep.subr.bf16.mxu0 %v4063
        %4275 = vmatpush2.bf16.msra.mxu0 %v4062
        %4276 = vmatprep.subr.bf16.mxu0 %v4059
        %4277 = vmatpush2.bf16.msra.mxu0 %v4058
        %4278 = vmatprep.subr.bf16.mxu0 %v4055
        %4279 = vmatpush2.bf16.msra.mxu0 %v4054
        %4280 = vmatprep.subr.bf16.mxu0 %v4051
        %4281 = vmatpush2.bf16.msra.mxu0 %v4050
        %4282 = vmatprep.subr.bf16.mxu0 %v4047
        %4283 = vmatpush2.bf16.msra.mxu0 %v4046
        %4284 = vmatprep.subr.bf16.mxu0 %v4043
        %4285 = vmatpush2.bf16.msra.mxu0 %v4042
        %4286 = vmatprep.subr.bf16.mxu0 %v4039
        %4287 = vmatpush2.bf16.msra.mxu0 %v4038
        %4288 = vmatprep.subr.bf16.mxu0 %v4035
        %4289 = vmatpush2.bf16.msra.mxu0 %v4034
        %4290 = vmatprep.mubr.bf16.mxu0 %v3615
        %4291 = vmatmul.mubr.bf16.gmra.mxu0 %v3614
        %v4292 = vpop.f32.mrf.mxu0
        %v4293 = vadd.f32 0.0, %v4292
        %v4294 = vpop.f32.mrf.mxu0
        %v4295 = vadd.f32 0.0, %v4294
        %v4296 = vpop.f32.mrf.mxu0
        %v4297 = vpop.f32.mrf.mxu0
        %4298 = vdwg.mxu0
        %4299 = vmatprep.subr.bf16.mxu0 %v4095
        %4300 = vmatpush1.bf16.msra.mxu0 %v4094
        %4301 = vmatprep.subr.bf16.mxu0 %v4091
        %4302 = vmatpush1.bf16.msra.mxu0 %v4090
        %4303 = vmatprep.subr.bf16.mxu0 %v4087
        %4304 = vmatpush1.bf16.msra.mxu0 %v4086
        %4305 = vmatprep.subr.bf16.mxu0 %v4083
        %4306 = vmatpush1.bf16.msra.mxu0 %v4082
        %4307 = vmatprep.subr.bf16.mxu0 %v4079
        %4308 = vmatpush1.bf16.msra.mxu0 %v4078
        %4309 = vmatprep.subr.bf16.mxu0 %v4075
        %4310 = vmatpush1.bf16.msra.mxu0 %v4074
        %4311 = vmatprep.subr.bf16.mxu0 %v4071
        %4312 = vmatpush1.bf16.msra.mxu0 %v4070
        %4313 = vmatprep.subr.bf16.mxu0 %v4067
        %4314 = vmatpush1.bf16.msra.mxu0 %v4066
        %4315 = vmatprep.subr.bf16.mxu0 %v4127
        %4316 = vmatpush2.bf16.msra.mxu0 %v4126
        %4317 = vmatprep.subr.bf16.mxu0 %v4123
        %4318 = vmatpush2.bf16.msra.mxu0 %v4122
        %4319 = vmatprep.subr.bf16.mxu0 %v4119
        %4320 = vmatpush2.bf16.msra.mxu0 %v4118
        %4321 = vmatprep.subr.bf16.mxu0 %v4115
        %4322 = vmatpush2.bf16.msra.mxu0 %v4114
        %4323 = vmatprep.subr.bf16.mxu0 %v4111
        %4324 = vmatpush2.bf16.msra.mxu0 %v4110
        %4325 = vmatprep.subr.bf16.mxu0 %v4107
        %4326 = vmatpush2.bf16.msra.mxu0 %v4106
        %4327 = vmatprep.subr.bf16.mxu0 %v4103
        %4328 = vmatpush2.bf16.msra.mxu0 %v4102
        %4329 = vmatprep.subr.bf16.mxu0 %v4099
        %4330 = vmatpush2.bf16.msra.mxu0 %v4098
        %4331 = vmatprep.mubr.bf16.mxu0 %v3617
        %4332 = vmatmul.mubr.bf16.gmra.mxu0 %v3616
        %v4333 = vpop.f32.mrf.mxu0
        %v4334 = vadd.f32 %v4293, %v4333
        %v4335 = vpop.f32.mrf.mxu0
        %v4336 = vadd.f32 %v4295, %v4335
        %v4337 = vpop.f32.mrf.mxu0
        %v4338 = vpop.f32.mrf.mxu0
        %4339 = vdwg.mxu0
        %4340 = vmatprep.subr.bf16.mxu0 %v4033
        %4341 = vmatpush1.bf16.msra.mxu0 %v4032
        %4342 = vmatprep.subr.bf16.mxu0 %v4029
        %4343 = vmatpush1.bf16.msra.mxu0 %v4028
        %4344 = vmatprep.subr.bf16.mxu0 %v4025
        %4345 = vmatpush1.bf16.msra.mxu0 %v4024
        %4346 = vmatprep.subr.bf16.mxu0 %v4021
        %4347 = vmatpush1.bf16.msra.mxu0 %v4020
        %4348 = vmatprep.subr.bf16.mxu0 %v4017
        %4349 = vmatpush1.bf16.msra.mxu0 %v4016
        %4350 = vmatprep.subr.bf16.mxu0 %v4013
        %4351 = vmatpush1.bf16.msra.mxu0 %v4012
        %4352 = vmatprep.subr.bf16.mxu0 %v4009
        %4353 = vmatpush1.bf16.msra.mxu0 %v4008
        %4354 = vmatprep.subr.bf16.mxu0 %v4005
        %4355 = vmatpush1.bf16.msra.mxu0 %v4004
        %4356 = vmatprep.subr.bf16.mxu0 %v4065
        %4357 = vmatpush2.bf16.msra.mxu0 %v4064
        %4358 = vmatprep.subr.bf16.mxu0 %v4061
        %4359 = vmatpush2.bf16.msra.mxu0 %v4060
        %4360 = vmatprep.subr.bf16.mxu0 %v4057
        %4361 = vmatpush2.bf16.msra.mxu0 %v4056
        %4362 = vmatprep.subr.bf16.mxu0 %v4053
        %4363 = vmatpush2.bf16.msra.mxu0 %v4052
        %4364 = vmatprep.subr.bf16.mxu0 %v4049
        %4365 = vmatpush2.bf16.msra.mxu0 %v4048
        %4366 = vmatprep.subr.bf16.mxu0 %v4045
        %4367 = vmatpush2.bf16.msra.mxu0 %v4044
        %4368 = vmatprep.subr.bf16.mxu0 %v4041
        %4369 = vmatpush2.bf16.msra.mxu0 %v4040
        %4370 = vmatprep.subr.bf16.mxu0 %v4037
        %4371 = vmatpush2.bf16.msra.mxu0 %v4036
        %4372 = vmatprep.mubr.bf16.mxu0 %v3615
        %4373 = vmatmul.mubr.bf16.gmra.mxu0 %v3614
        %v4374 = vpop.f32.mrf.mxu0
        %v4375 = vadd.f32 0.0, %v4374
        %v4376 = vpop.f32.mrf.mxu0
        %v4377 = vadd.f32 0.0, %v4376
        %v4378 = vpop.f32.mrf.mxu0
        %v4379 = vpop.f32.mrf.mxu0
        %4380 = vdwg.mxu0
        %4381 = vmatprep.subr.bf16.mxu0 %v4097
        %4382 = vmatpush1.bf16.msra.mxu0 %v4096
        %4383 = vmatprep.subr.bf16.mxu0 %v4093
        %4384 = vmatpush1.bf16.msra.mxu0 %v4092
        %4385 = vmatprep.subr.bf16.mxu0 %v4089
        %4386 = vmatpush1.bf16.msra.mxu0 %v4088
        %4387 = vmatprep.subr.bf16.mxu0 %v4085
        %4388 = vmatpush1.bf16.msra.mxu0 %v4084
        %4389 = vmatprep.subr.bf16.mxu0 %v4081
        %4390 = vmatpush1.bf16.msra.mxu0 %v4080
        %4391 = vmatprep.subr.bf16.mxu0 %v4077
        %4392 = vmatpush1.bf16.msra.mxu0 %v4076
        %4393 = vmatprep.subr.bf16.mxu0 %v4073
        %4394 = vmatpush1.bf16.msra.mxu0 %v4072
        %4395 = vmatprep.subr.bf16.mxu0 %v4069
        %4396 = vmatpush1.bf16.msra.mxu0 %v4068
        %4397 = vmatprep.subr.bf16.mxu0 %v4129
        %4398 = vmatpush2.bf16.msra.mxu0 %v4128
        %4399 = vmatprep.subr.bf16.mxu0 %v4125
        %4400 = vmatpush2.bf16.msra.mxu0 %v4124
        %4401 = vmatprep.subr.bf16.mxu0 %v4121
        %4402 = vmatpush2.bf16.msra.mxu0 %v4120
        %4403 = vmatprep.subr.bf16.mxu0 %v4117
        %4404 = vmatpush2.bf16.msra.mxu0 %v4116
        %4405 = vmatprep.subr.bf16.mxu0 %v4113
        %4406 = vmatpush2.bf16.msra.mxu0 %v4112
        %4407 = vmatprep.subr.bf16.mxu0 %v4109
        %4408 = vmatpush2.bf16.msra.mxu0 %v4108
        %4409 = vmatprep.subr.bf16.mxu0 %v4105
        %4410 = vmatpush2.bf16.msra.mxu0 %v4104
        %4411 = vmatprep.subr.bf16.mxu0 %v4101
        %4412 = vmatpush2.bf16.msra.mxu0 %v4100
        %4413 = vmatprep.mubr.bf16.mxu0 %v3617
        %4414 = vmatmul.mubr.bf16.gmra.mxu0 %v3616
        %v4415 = vpop.f32.mrf.mxu0
        %v4416 = vadd.f32 %v4375, %v4415
        %v4417 = vpop.f32.mrf.mxu0
        %v4418 = vadd.f32 %v4377, %v4417
        %v4419 = vpop.f32.mrf.mxu0
        %v4420 = vpop.f32.mrf.mxu0
        %4421 = vdwg.mxu0
        %vm4422 = vcmp.gt.f32.partialorder %v2473, -100.0
        %vm4423 = vcmp.lt.f32.partialorder %v2473, 100.0
        %vm4424 = vmand %vm4422, %vm4423
        %v4425 = vmax.f32 %v2473, -100.0
        %v4426 = vmin.f32 %v4425, 100.0
        %vm4427 = vcmp.le.s32.totalorder %v2222, 498
        %vm4428 = vcmp.le.s32.totalorder %v2223, 498
        %vm4429 = vcmp.le.s32.totalorder %v2224, 498
        %vm4430 = vcmp.le.s32.totalorder %v2225, 498
        %v4431 = vsub.f32 %v4334, 100.0
        %v4432 = vsub.f32 %v4336, 100.0
        %v4433 = vsub.f32 %v4416, 100.0
        %v4434 = vsub.f32 %v4418, 100.0
        %4436 = vset.pattern.permute.xlu0 0
        %4437 = vperm.xlu0 %4436, %v4426
        %v4438 = vpop.permute.xlu0 %4437
        %vm4440 = vcmp.le.f32.partialorder %v4431, %v4438
        %vm4441 = vcmp.le.f32.partialorder %v4432, %v4438
        %vm4442 = vcmp.le.f32.partialorder %v4433, %v4438
        %vm4443 = vcmp.le.f32.partialorder %v4434, %v4438
        %vm4444 = vmand %vm4427, %vm4440
        %vm4445 = vmand %vm4428, %vm4441
        %vm4446 = vmand %vm4429, %vm4442
        %vm4447 = vmand %vm4430, %vm4443
        %v4448 = vsel %vm4444, 1, 0
        %v4449 = vsel %vm4445, 1, 0
        %v4450 = vsel %vm4446, 1, 0
        %v4451 = vsel %vm4447, 1, 0
        %v4452 = vadd.s32 %v4448, %v4449
        %v4453 = vadd.s32 %v4450, %v4451
        %v4454 = vadd.s32 %v4452, %v4453
        %v4455 = vand.u32 %v4454, 65535
        %v4456 = vshrl.u32 %v4454, 16
        %v4457 = vcvt.s32.f32 %v4455
        %v4458 = vcvt.s32.f32 %v4456
        %4459 = vadd.xlane.f32.xlu0 %v4457
        %v4460 = vpop.xlane.xlu0 %4459
        %4461 = vadd.xlane.f32.xlu0 %v4458
        %v4462 = vpop.xlane.xlu0 %4461
        %v4463 = vcvt.f32.s32 %v4460
        %v4464 = vcvt.f32.s32 %v4462
        %v4465 = vshll.u32 %v4464, 16
        %v4466 = vadd.s32 %v4465, %v4463
        %vm4467 = vcmp.eq.s32.totalorder %v2222, %v4466
        %vm4468 = vcmp.eq.s32.totalorder %v2223, %v4466
        %vm4469 = vcmp.eq.s32.totalorder %v2224, %v4466
        %vm4470 = vcmp.eq.s32.totalorder %v2225, %v4466
        %vm4471 = vcmp.lt.s32.totalorder %v2222, %v4466
        %vm4472 = vcmp.lt.s32.totalorder %v2223, %v4466
        %vm4473 = vcmp.lt.s32.totalorder %v2224, %v4466
        %vm4474 = vcmp.lt.s32.totalorder %v2225, %v4466
        %v4475 = vsel %vm4467, %v3566, 0.0
        %v4476 = vsel %vm4468, %v3567, 0.0
        %v4477 = vsel %vm4469, %v3568, 0.0
        %v4478 = vsel %vm4470, %v3569, 0.0
        %v4479 = vadd.f32 %v4475, %v4476
        %v4480 = vadd.f32 %v4479, %v4477
        %v4481 = vadd.f32 %v4480, %v4478
        %4482 = vadd.xlane.f32.xlu0 %v4481
        %v4483 = vpop.xlane.xlu0 %4482
        %v4484 = vsel %vm4467, %v3570, 0.0
        %v4485 = vsel %vm4468, %v3571, 0.0
        %v4486 = vsel %vm4469, %v3572, 0.0
        %v4487 = vsel %vm4470, %v3573, 0.0
        %v4488 = vadd.f32 %v4484, %v4485
        %v4489 = vadd.f32 %v4488, %v4486
        %v4490 = vadd.f32 %v4489, %v4487
        %4491 = vadd.xlane.f32.xlu0 %v4490
        %v4492 = vpop.xlane.xlu0 %4491
        %v4493 = vsel %vm4471, %v3566, 0.0
        %v4494 = vsel %vm4472, %v3567, 0.0
        %v4495 = vsel %vm4473, %v3568, 0.0
        %v4496 = vsel %vm4474, %v3569, 0.0
        %v4497 = vadd.f32 %v4493, %v4494
        %v4498 = vadd.f32 %v4497, %v4495
        %v4499 = vadd.f32 %v4498, %v4496
        %4500 = vadd.xlane.f32.xlu0 %v4499
        %v4501 = vpop.xlane.xlu0 %4500
        %v4502 = vadd.f32 %v4501, -100.0
        %v4503 = vsel %vm4471, %v3570, 0.0
        %v4504 = vsel %vm4472, %v3571, 0.0
        %v4505 = vsel %vm4473, %v3572, 0.0
        %v4506 = vsel %vm4474, %v3573, 0.0
        %v4507 = vadd.f32 %v4503, %v4504
        %v4508 = vadd.f32 %v4507, %v4505
        %v4509 = vadd.f32 %v4508, %v4506
        %4510 = vadd.xlane.f32.xlu0 %v4509
        %v4511 = vpop.xlane.xlu0 %4510
        %v4512 = vadd.f32 %v4511, -100.0
        %vm4513 = vcmp.eq.s32.totalorder %v4466, 499
        %v4514 = vsel %vm4467, %v3610, 0.0
        %v4515 = vsel %vm4468, %v3611, 0.0
        %v4516 = vsel %vm4469, %v3612, 0.0
        %v4517 = vsel %vm4470, %v3613, 0.0
        %v4518 = vadd.f32 %v4514, %v4515
        %v4519 = vadd.f32 %v4518, %v4516
        %v4520 = vadd.f32 %v4519, %v4517
        %4521 = vadd.xlane.f32.xlu0 %v4520
        %v4522 = vpop.xlane.xlu0 %4521
        %v4523 = vsel %vm4513, 1.0, %v4522
        %vm4524 = vcmp.eq.s32.totalorder %v4466, 0
        %v4525 = vsub.s32 %v4466, 1
        %vm4526 = vcmp.eq.s32.totalorder %v2222, %v4525
        %vm4527 = vcmp.eq.s32.totalorder %v2223, %v4525
        %vm4528 = vcmp.eq.s32.totalorder %v2224, %v4525
        %vm4529 = vcmp.eq.s32.totalorder %v2225, %v4525
        %v4530 = vsel %vm4526, %v3610, 0.0
        %v4531 = vsel %vm4527, %v3611, 0.0
        %v4532 = vsel %vm4528, %v3612, 0.0
        %v4533 = vsel %vm4529, %v3613, 0.0
        %v4534 = vadd.f32 %v4530, %v4531
        %v4535 = vadd.f32 %v4534, %v4532
        %v4536 = vadd.f32 %v4535, %v4533
        %4537 = vadd.xlane.f32.xlu0 %v4536
        %v4538 = vpop.xlane.xlu0 %4537
        %v4539 = vsel %vm4524, 1.0, %v4538
        %v4540 = vrcp.pop %v4483
        %v4541 = vmul.f32 %v4492, %v4540
        %v4542 = vsub.f32 %v4426, %v4512
        %v4543 = vadd.f32 %v4523, %v4539
        %v4544 = vmul.f32 %v4541, 2.0
        %v4545 = vsub.f32 %v4543, %v4544
        %v4546 = vsub.f32 %v4541, %v4539
        %v4547 = vmul.f32 %v4492, %v4546
        %v4548 = vmul.f32 %v4542, %v4545
        %v4549 = vadd.f32 %v4547, %v4548
        %v4550 = vmul.f32 %v4492, %v4539
        %v4551 = vsub.f32 %v4550, %v4548
        %v4552 = vsub.f32 0.0, %v4541
        %v4553 = vmul.f32 %v4552, %v4542
        %v4554 = vmul.f32 %v4551, %v4551
        %v4555 = vmul.f32 %v4549, 4.0
        %v4556 = vmul.f32 %v4555, %v4553
        %v4557 = vsub.f32 %v4554, %v4556
        %v4558 = vmax.f32 %v4557, 0.0
        %v4559 = vmul.f32 %v4553, 2.0
        %v4560 = vsub.f32 0.0, %v4551
        %v4561 = vrsqrt.pop %v4558
        %v4562 = vmul.f32 %v4558, %v4561
        %vm4563 = vcmp.eq.f32.partialorder %v4558, inf
        %v4564 = vsel %vm4563, %v4558, %v4562
        %vm4565 = vcmp.eq.f32.partialorder %v4558, 0.0
        %v4566 = vand.u32 %v4558, 2147483648
        %v4567 = vsel %vm4565, %v4566, %v4564
        %v4568 = vsub.f32 %v4560, %v4567
        %v4569 = vrcp.pop %v4568
        %v4570 = vmul.f32 %v4559, %v4569
        %v4571 = vmul.f32 %v4570, %v4483
        %v4572 = vadd.f32 %v4502, %v4571
        %v4573 = vmul.f32 %v4545, %v4570
        %v4574 = vsub.f32 1.0, %v4570
        %v4575 = vmul.f32 %v4573, %v4574
        %v4576 = vadd.f32 %v4541, %v4575
        %v4577 = vmul.f32 %v4541, %v4541
        %v4578 = vmul.f32 %v4523, %v4570
        %v4579 = vmul.f32 %v4578, %v4570
        %v4580 = vmul.f32 %v4544, %v4570
        %v4581 = vmul.f32 %v4580, %v4574
        %v4582 = vadd.f32 %v4579, %v4581
        %v4583 = vmul.f32 %v4539, %v4574
        %v4584 = vmul.f32 %v4583, %v4574
        %v4585 = vadd.f32 %v4582, %v4584
        %v4586 = vmul.f32 %v4577, %v4585
        %v4587 = vmul.f32 %v4576, %v4576
        %v4588 = vrcp.pop %v4587
        %v4589 = vmul.f32 %v4586, %v4588
        %v4590 = vsel %vm4424, %v4572, %v2473
        %v4591 = vlog2.pop %v4589
        %v4592 = vmul.f32 %v4591, 0.6931472
        %v4593 = vsel %vm4424, %v4592, 0.0
        %v4594 = vld [vmem:[%s909] sm:$0x1]
        %4596 = vset.pattern.permute.xlu0 0
        %4597 = vperm.xlu0 %4596, %v4590
        %v4598 = vpop.permute.xlu0 %4597
        %v4601 = vlaneseq
        %v4602 = vshrl.u32 %v4601, 7
        %v4603 = vsub.s32 0, %v4602
        %v4604 = vrot.slane %v4594, %v4603
        %v4606 = vmul.f32 %v4598, %v4604
        %v4607 = vadd.f32 %v2469, %v4606
        %v4608 = vmax.f32 %v4607, 0.0
        %v4609 = vld [vmem:[%s945] sm:$0xf]
        %v4610 = vld [vmem:[%s945 + $0x4] sm:$0xf]
        %v4611 = vld [vmem:[%s945 + $0x8] sm:$0xf]
        %v4612 = vld [vmem:[%s945 + $0xc] sm:$0xf]
        %v4613 = vld [vmem:[%s945 + $0x10] sm:$0xf]
        %v4614 = vld [vmem:[%s945 + $0x14] sm:$0xf]
        %v4615 = vld [vmem:[%s945 + $0x18] sm:$0xf]
        %v4616 = vld [vmem:[%s945 + $0x1c] sm:$0xf]
        %v4617 = vld [vmem:[%s945 + $0x20] sm:$0xf]
        %v4618 = vld [vmem:[%s945 + $0x24] sm:$0xf]
        %v4619 = vld [vmem:[%s945 + $0x28] sm:$0xf]
        %v4620 = vld [vmem:[%s945 + $0x2c] sm:$0xf]
        %v4621 = vld [vmem:[%s945 + $0x30] sm:$0xf]
        %v4622 = vld [vmem:[%s945 + $0x34] sm:$0xf]
        %v4623 = vld [vmem:[%s945 + $0x38] sm:$0xf]
        %v4624 = vld [vmem:[%s945 + $0x3c] sm:$0xf]
        %v4625 = vpack.c.bf16 %v4608, %v4608
        %v4626 = vld [vmem:[%s954] sm:$0xf]
        %v4627 = vld [vmem:[%s954 + $0x4] sm:$0xf]
        %v4628 = vld [vmem:[%s954 + $0x8] sm:$0xf]
        %v4629 = vld [vmem:[%s954 + $0xc] sm:$0xf]
        %v4630 = vld [vmem:[%s954 + $0x10] sm:$0xf]
        %v4631 = vld [vmem:[%s954 + $0x14] sm:$0xf]
        %v4632 = vld [vmem:[%s954 + $0x18] sm:$0xf]
        %v4633 = vld [vmem:[%s954 + $0x1c] sm:$0xf]
        %v4634 = vld [vmem:[%s954 + $0x20] sm:$0xf]
        %v4635 = vld [vmem:[%s954 + $0x24] sm:$0xf]
        %v4636 = vld [vmem:[%s954 + $0x28] sm:$0xf]
        %v4637 = vld [vmem:[%s954 + $0x2c] sm:$0xf]
        %v4638 = vld [vmem:[%s954 + $0x30] sm:$0xf]
        %v4639 = vld [vmem:[%s954 + $0x34] sm:$0xf]
        %v4640 = vld [vmem:[%s954 + $0x38] sm:$0xf]
        %v4641 = vld [vmem:[%s954 + $0x3c] sm:$0xf]
        %v4658 = vunpack.c.l.b16 %v4626
        %v4659 = vunpack.c.l.b16 %v4627
        %v4660 = vunpack.c.l.b16 %v4628
        %v4661 = vunpack.c.l.b16 %v4629
        %v4662 = vunpack.c.l.b16 %v4630
        %v4663 = vunpack.c.l.b16 %v4631
        %v4664 = vunpack.c.l.b16 %v4632
        %v4665 = vunpack.c.l.b16 %v4633
        %v4666 = vunpack.c.l.b16 %v4634
        %v4667 = vunpack.c.l.b16 %v4635
        %v4668 = vunpack.c.l.b16 %v4636
        %v4669 = vunpack.c.l.b16 %v4637
        %v4670 = vunpack.c.l.b16 %v4638
        %v4671 = vunpack.c.l.b16 %v4639
        %v4672 = vunpack.c.l.b16 %v4640
        %v4673 = vunpack.c.l.b16 %v4641
        %v4674 = vpack.c.b16 %v4659, %v4658
        %v4675 = vpack.c.b16 %v4661, %v4660
        %v4676 = vpack.c.b16 %v4663, %v4662
        %v4677 = vpack.c.b16 %v4665, %v4664
        %v4678 = vpack.c.b16 %v4667, %v4666
        %v4679 = vpack.c.b16 %v4669, %v4668
        %v4680 = vpack.c.b16 %v4671, %v4670
        %v4681 = vpack.c.b16 %v4673, %v4672
        %4690 = vmatprep.subr.bf16.mxu0 0
        %4691 = vmatpush1.bf16.msra.mxu0 %v4681
        %4692 = vmatprep.subr.bf16.mxu0 0
        %4693 = vmatpush1.bf16.msra.mxu0 %v4680
        %4694 = vmatprep.subr.bf16.mxu0 0
        %4695 = vmatpush1.bf16.msra.mxu0 %v4679
        %4696 = vmatprep.subr.bf16.mxu0 0
        %4697 = vmatpush1.bf16.msra.mxu0 %v4678
        %4698 = vmatprep.subr.bf16.mxu0 0
        %4699 = vmatpush1.bf16.msra.mxu0 %v4677
        %4700 = vmatprep.subr.bf16.mxu0 0
        %4701 = vmatpush1.bf16.msra.mxu0 %v4676
        %4702 = vmatprep.subr.bf16.mxu0 0
        %4703 = vmatpush1.bf16.msra.mxu0 %v4675
        %4704 = vmatprep.subr.bf16.mxu0 0
        %4705 = vmatpush1.bf16.msra.mxu0 %v4674
        %4706 = vmatprep.subr.bf16.mxu0 0
        %4707 = vmatpush2.bf16.msra.mxu0 0
        %4708 = vmatprep.subr.bf16.mxu0 0
        %4709 = vmatpush2.bf16.msra.mxu0 0
        %4710 = vmatprep.subr.bf16.mxu0 0
        %4711 = vmatpush2.bf16.msra.mxu0 0
        %4712 = vmatprep.subr.bf16.mxu0 0
        %4713 = vmatpush2.bf16.msra.mxu0 0
        %4714 = vmatprep.subr.bf16.mxu0 0
        %4715 = vmatpush2.bf16.msra.mxu0 0
        %4716 = vmatprep.subr.bf16.mxu0 0
        %4717 = vmatpush2.bf16.msra.mxu0 0
        %4718 = vmatprep.subr.bf16.mxu0 0
        %4719 = vmatpush2.bf16.msra.mxu0 0
        %4720 = vmatprep.subr.bf16.mxu0 0
        %4721 = vmatpush2.bf16.msra.mxu0 0
        %4722 = vmatprep.mubr.bf16.mxu0 0
        %4723 = vmatmul.mubr.bf16.gmra.mxu0 %v4625
        %v4724 = vpop.f32.mrf.mxu0
        %v4725 = vadd.f32 0.0, %v4724
        %v4726 = vpop.f32.mrf.mxu0
        %v4727 = vpop.f32.mrf.mxu0
        %v4728 = vpop.f32.mrf.mxu0
        %4729 = vdwg.mxu0
        %v4746 = vunpack.c.l.b16 %v4609
        %v4747 = vunpack.c.l.b16 %v4610
        %v4748 = vunpack.c.l.b16 %v4611
        %v4749 = vunpack.c.l.b16 %v4612
        %v4750 = vunpack.c.l.b16 %v4613
        %v4751 = vunpack.c.l.b16 %v4614
        %v4752 = vunpack.c.l.b16 %v4615
        %v4753 = vunpack.c.l.b16 %v4616
        %v4754 = vunpack.c.l.b16 %v4617
        %v4755 = vunpack.c.l.b16 %v4618
        %v4756 = vunpack.c.l.b16 %v4619
        %v4757 = vunpack.c.l.b16 %v4620
        %v4758 = vunpack.c.l.b16 %v4621
        %v4759 = vunpack.c.l.b16 %v4622
        %v4760 = vunpack.c.l.b16 %v4623
        %v4761 = vunpack.c.l.b16 %v4624
        %v4762 = vpack.c.b16 %v4747, %v4746
        %v4763 = vpack.c.b16 %v4749, %v4748
        %v4764 = vpack.c.b16 %v4751, %v4750
        %v4765 = vpack.c.b16 %v4753, %v4752
        %v4766 = vpack.c.b16 %v4755, %v4754
        %v4767 = vpack.c.b16 %v4757, %v4756
        %v4768 = vpack.c.b16 %v4759, %v4758
        %v4769 = vpack.c.b16 %v4761, %v4760
        %4778 = vmatprep.subr.bf16.mxu0 0
        %4779 = vmatpush1.bf16.msra.mxu0 %v4769
        %4780 = vmatprep.subr.bf16.mxu0 0
        %4781 = vmatpush1.bf16.msra.mxu0 %v4768
        %4782 = vmatprep.subr.bf16.mxu0 0
        %4783 = vmatpush1.bf16.msra.mxu0 %v4767
        %4784 = vmatprep.subr.bf16.mxu0 0
        %4785 = vmatpush1.bf16.msra.mxu0 %v4766
        %4786 = vmatprep.subr.bf16.mxu0 0
        %4787 = vmatpush1.bf16.msra.mxu0 %v4765
        %4788 = vmatprep.subr.bf16.mxu0 0
        %4789 = vmatpush1.bf16.msra.mxu0 %v4764
        %4790 = vmatprep.subr.bf16.mxu0 0
        %4791 = vmatpush1.bf16.msra.mxu0 %v4763
        %4792 = vmatprep.subr.bf16.mxu0 0
        %4793 = vmatpush1.bf16.msra.mxu0 %v4762
        %4794 = vmatprep.subr.bf16.mxu0 0
        %4795 = vmatpush2.bf16.msra.mxu0 0
        %4796 = vmatprep.subr.bf16.mxu0 0
        %4797 = vmatpush2.bf16.msra.mxu0 0
        %4798 = vmatprep.subr.bf16.mxu0 0
        %4799 = vmatpush2.bf16.msra.mxu0 0
        %4800 = vmatprep.subr.bf16.mxu0 0
        %4801 = vmatpush2.bf16.msra.mxu0 0
        %4802 = vmatprep.subr.bf16.mxu0 0
        %4803 = vmatpush2.bf16.msra.mxu0 0
        %4804 = vmatprep.subr.bf16.mxu0 0
        %4805 = vmatpush2.bf16.msra.mxu0 0
        %4806 = vmatprep.subr.bf16.mxu0 0
        %4807 = vmatpush2.bf16.msra.mxu0 0
        %4808 = vmatprep.subr.bf16.mxu0 0
        %4809 = vmatpush2.bf16.msra.mxu0 0
        %4810 = vmatprep.mubr.bf16.mxu0 0
        %4811 = vmatmul.mubr.bf16.gmra.mxu0 %v2476
        %v4812 = vpop.f32.mrf.mxu0
        %v4813 = vadd.f32 %v4725, %v4812
        %v4814 = vpop.f32.mrf.mxu0
        %v4815 = vpop.f32.mrf.mxu0
        %v4816 = vpop.f32.mrf.mxu0
        %4817 = vdwg.mxu0
        %v4818 = vld [vmem:[%s963 + $0x1] sm:$0x1]
        %v4820 = vlaneseq
        %v4821 = vshrl.u32 %v4820, 7
        %v4822 = vsub.s32 0, %v4821
        %v4823 = vrot.slane %v4818, %v4822
        %v4825 = vadd.f32 %v4813, %v4823
        %v4826 = vmax.f32 %v4825, 0.0
        %v4827 = vld [vmem:[%s981] sm:$0xff]
        %v4828 = vld [vmem:[%s981 + $0x8] sm:$0xff]
        %v4829 = vld [vmem:[%s981 + $0x10] sm:$0xff]
        %v4830 = vld [vmem:[%s981 + $0x18] sm:$0xff]
        %v4831 = vld [vmem:[%s981 + $0x20] sm:$0xff]
        %v4832 = vld [vmem:[%s981 + $0x28] sm:$0xff]
        %v4833 = vld [vmem:[%s981 + $0x30] sm:$0xff]
        %v4834 = vld [vmem:[%s981 + $0x38] sm:$0xff]
        %v4835 = vld [vmem:[%s981 + $0x40] sm:$0xff]
        %v4836 = vld [vmem:[%s981 + $0x48] sm:$0xff]
        %v4837 = vld [vmem:[%s981 + $0x50] sm:$0xff]
        %v4838 = vld [vmem:[%s981 + $0x58] sm:$0xff]
        %v4839 = vld [vmem:[%s981 + $0x60] sm:$0xff]
        %v4840 = vld [vmem:[%s981 + $0x68] sm:$0xff]
        %v4841 = vld [vmem:[%s981 + $0x70] sm:$0xff]
        %v4842 = vld [vmem:[%s981 + $0x78] sm:$0xff]
        %v4843 = vld [vmem:[%s981 + $0x80] sm:$0xff]
        %v4844 = vld [vmem:[%s981 + $0x88] sm:$0xff]
        %v4845 = vld [vmem:[%s981 + $0x90] sm:$0xff]
        %v4846 = vld [vmem:[%s981 + $0x98] sm:$0xff]
        %v4847 = vld [vmem:[%s981 + $0xa0] sm:$0xff]
        %v4848 = vld [vmem:[%s981 + $0xa8] sm:$0xff]
        %v4849 = vld [vmem:[%s981 + $0xb0] sm:$0xff]
        %v4850 = vld [vmem:[%s981 + $0xb8] sm:$0xff]
        %v4851 = vld [vmem:[%s981 + $0xc0] sm:$0xff]
        %v4852 = vld [vmem:[%s981 + $0xc8] sm:$0xff]
        %v4853 = vld [vmem:[%s981 + $0xd0] sm:$0xff]
        %v4854 = vld [vmem:[%s981 + $0xd8] sm:$0xff]
        %v4855 = vld [vmem:[%s981 + $0xe0] sm:$0xff]
        %v4856 = vld [vmem:[%s981 + $0xe8] sm:$0xff]
        %v4857 = vld [vmem:[%s981 + $0xf0] sm:$0xff]
        %v4858 = vld [vmem:[%s981 + $0xf8] sm:$0xff]
        %v4859 = vld [vmem:[%s981 + $0x100] sm:$0xff]
        %v4860 = vld [vmem:[%s981 + $0x108] sm:$0xff]
        %v4861 = vld [vmem:[%s981 + $0x110] sm:$0xff]
        %v4862 = vld [vmem:[%s981 + $0x118] sm:$0xff]
        %v4863 = vld [vmem:[%s981 + $0x120] sm:$0xff]
        %v4864 = vld [vmem:[%s981 + $0x128] sm:$0xff]
        %v4865 = vld [vmem:[%s981 + $0x130] sm:$0xff]
        %v4866 = vld [vmem:[%s981 + $0x138] sm:$0xff]
        %v4867 = vld [vmem:[%s981 + $0x140] sm:$0xff]
        %v4868 = vld [vmem:[%s981 + $0x148] sm:$0xff]
        %v4869 = vld [vmem:[%s981 + $0x150] sm:$0xff]
        %v4870 = vld [vmem:[%s981 + $0x158] sm:$0xff]
        %v4871 = vld [vmem:[%s981 + $0x160] sm:$0xff]
        %v4872 = vld [vmem:[%s981 + $0x168] sm:$0xff]
        %v4873 = vld [vmem:[%s981 + $0x170] sm:$0xff]
        %v4874 = vld [vmem:[%s981 + $0x178] sm:$0xff]
        %v4875 = vld [vmem:[%s981 + $0x180] sm:$0xff]
        %v4876 = vld [vmem:[%s981 + $0x188] sm:$0xff]
        %v4877 = vld [vmem:[%s981 + $0x190] sm:$0xff]
        %v4878 = vld [vmem:[%s981 + $0x198] sm:$0xff]
        %v4879 = vld [vmem:[%s981 + $0x1a0] sm:$0xff]
        %v4880 = vld [vmem:[%s981 + $0x1a8] sm:$0xff]
        %v4881 = vld [vmem:[%s981 + $0x1b0] sm:$0xff]
        %v4882 = vld [vmem:[%s981 + $0x1b8] sm:$0xff]
        %v4883 = vld [vmem:[%s981 + $0x1c0] sm:$0xff]
        %v4884 = vld [vmem:[%s981 + $0x1c8] sm:$0xff]
        %v4885 = vld [vmem:[%s981 + $0x1d0] sm:$0xff]
        %v4886 = vld [vmem:[%s981 + $0x1d8] sm:$0xff]
        %v4887 = vld [vmem:[%s981 + $0x1e0] sm:$0xff]
        %v4888 = vld [vmem:[%s981 + $0x1e8] sm:$0xff]
        %v4889 = vld [vmem:[%s981 + $0x1f0] sm:$0xff]
        %v4890 = vld [vmem:[%s981 + $0x1f8] sm:$0xff]
        %v4891 = vld [vmem:[%s981 + $0x200] sm:$0xff]
        %v4892 = vld [vmem:[%s981 + $0x208] sm:$0xff]
        %v4893 = vld [vmem:[%s981 + $0x210] sm:$0xff]
        %v4894 = vld [vmem:[%s981 + $0x218] sm:$0xff]
        %v4895 = vld [vmem:[%s981 + $0x220] sm:$0xff]
        %v4896 = vld [vmem:[%s981 + $0x228] sm:$0xff]
        %v4897 = vld [vmem:[%s981 + $0x230] sm:$0xff]
        %v4898 = vld [vmem:[%s981 + $0x238] sm:$0xff]
        %v4899 = vld [vmem:[%s981 + $0x240] sm:$0xff]
        %v4900 = vld [vmem:[%s981 + $0x248] sm:$0xff]
        %v4901 = vld [vmem:[%s981 + $0x250] sm:$0xff]
        %v4902 = vld [vmem:[%s981 + $0x258] sm:$0xff]
        %v4903 = vld [vmem:[%s981 + $0x260] sm:$0xff]
        %v4904 = vld [vmem:[%s981 + $0x268] sm:$0xff]
        %v4905 = vld [vmem:[%s981 + $0x270] sm:$0xff]
        %v4906 = vld [vmem:[%s981 + $0x278] sm:$0xff]
        %v4907 = vld [vmem:[%s981 + $0x280] sm:$0xff]
        %v4908 = vld [vmem:[%s981 + $0x288] sm:$0xff]
        %v4909 = vld [vmem:[%s981 + $0x290] sm:$0xff]
        %v4910 = vld [vmem:[%s981 + $0x298] sm:$0xff]
        %v4911 = vld [vmem:[%s981 + $0x2a0] sm:$0xff]
        %v4912 = vld [vmem:[%s981 + $0x2a8] sm:$0xff]
        %v4913 = vld [vmem:[%s981 + $0x2b0] sm:$0xff]
        %v4914 = vld [vmem:[%s981 + $0x2b8] sm:$0xff]
        %v4915 = vld [vmem:[%s981 + $0x2c0] sm:$0xff]
        %v4916 = vld [vmem:[%s981 + $0x2c8] sm:$0xff]
        %v4917 = vld [vmem:[%s981 + $0x2d0] sm:$0xff]
        %v4918 = vld [vmem:[%s981 + $0x2d8] sm:$0xff]
        %v4919 = vld [vmem:[%s981 + $0x2e0] sm:$0xff]
        %v4920 = vld [vmem:[%s981 + $0x2e8] sm:$0xff]
        %v4921 = vld [vmem:[%s981 + $0x2f0] sm:$0xff]
        %v4922 = vld [vmem:[%s981 + $0x2f8] sm:$0xff]
        %v4923 = vpack.c.bf16 %v4826, %v4826
        %v4924 = vld [vmem:[%s990] sm:$0xff]
        %v4925 = vld [vmem:[%s990 + $0x8] sm:$0xff]
        %v4926 = vld [vmem:[%s990 + $0x10] sm:$0xff]
        %v4927 = vld [vmem:[%s990 + $0x18] sm:$0xff]
        %v4928 = vld [vmem:[%s990 + $0x20] sm:$0xff]
        %v4929 = vld [vmem:[%s990 + $0x28] sm:$0xff]
        %v4930 = vld [vmem:[%s990 + $0x30] sm:$0xff]
        %v4931 = vld [vmem:[%s990 + $0x38] sm:$0xff]
        %v4932 = vld [vmem:[%s990 + $0x40] sm:$0xff]
        %v4933 = vld [vmem:[%s990 + $0x48] sm:$0xff]
        %v4934 = vld [vmem:[%s990 + $0x50] sm:$0xff]
        %v4935 = vld [vmem:[%s990 + $0x58] sm:$0xff]
        %v4936 = vld [vmem:[%s990 + $0x60] sm:$0xff]
        %v4937 = vld [vmem:[%s990 + $0x68] sm:$0xff]
        %v4938 = vld [vmem:[%s990 + $0x70] sm:$0xff]
        %v4939 = vld [vmem:[%s990 + $0x78] sm:$0xff]
        %v4940 = vld [vmem:[%s990 + $0x80] sm:$0xff]
        %v4941 = vld [vmem:[%s990 + $0x88] sm:$0xff]
        %v4942 = vld [vmem:[%s990 + $0x90] sm:$0xff]
        %v4943 = vld [vmem:[%s990 + $0x98] sm:$0xff]
        %v4944 = vld [vmem:[%s990 + $0xa0] sm:$0xff]
        %v4945 = vld [vmem:[%s990 + $0xa8] sm:$0xff]
        %v4946 = vld [vmem:[%s990 + $0xb0] sm:$0xff]
        %v4947 = vld [vmem:[%s990 + $0xb8] sm:$0xff]
        %v4948 = vld [vmem:[%s990 + $0xc0] sm:$0xff]
        %v4949 = vld [vmem:[%s990 + $0xc8] sm:$0xff]
        %v4950 = vld [vmem:[%s990 + $0xd0] sm:$0xff]
        %v4951 = vld [vmem:[%s990 + $0xd8] sm:$0xff]
        %v4952 = vld [vmem:[%s990 + $0xe0] sm:$0xff]
        %v4953 = vld [vmem:[%s990 + $0xe8] sm:$0xff]
        %v4954 = vld [vmem:[%s990 + $0xf0] sm:$0xff]
        %v4955 = vld [vmem:[%s990 + $0xf8] sm:$0xff]
        %v4956 = vld [vmem:[%s990 + $0x100] sm:$0xff]
        %v4957 = vld [vmem:[%s990 + $0x108] sm:$0xff]
        %v4958 = vld [vmem:[%s990 + $0x110] sm:$0xff]
        %v4959 = vld [vmem:[%s990 + $0x118] sm:$0xff]
        %v4960 = vld [vmem:[%s990 + $0x120] sm:$0xff]
        %v4961 = vld [vmem:[%s990 + $0x128] sm:$0xff]
        %v4962 = vld [vmem:[%s990 + $0x130] sm:$0xff]
        %v4963 = vld [vmem:[%s990 + $0x138] sm:$0xff]
        %v4964 = vld [vmem:[%s990 + $0x140] sm:$0xff]
        %v4965 = vld [vmem:[%s990 + $0x148] sm:$0xff]
        %v4966 = vld [vmem:[%s990 + $0x150] sm:$0xff]
        %v4967 = vld [vmem:[%s990 + $0x158] sm:$0xff]
        %v4968 = vld [vmem:[%s990 + $0x160] sm:$0xff]
        %v4969 = vld [vmem:[%s990 + $0x168] sm:$0xff]
        %v4970 = vld [vmem:[%s990 + $0x170] sm:$0xff]
        %v4971 = vld [vmem:[%s990 + $0x178] sm:$0xff]
        %v4972 = vld [vmem:[%s990 + $0x180] sm:$0xff]
        %v4973 = vld [vmem:[%s990 + $0x188] sm:$0xff]
        %v4974 = vld [vmem:[%s990 + $0x190] sm:$0xff]
        %v4975 = vld [vmem:[%s990 + $0x198] sm:$0xff]
        %v4976 = vld [vmem:[%s990 + $0x1a0] sm:$0xff]
        %v4977 = vld [vmem:[%s990 + $0x1a8] sm:$0xff]
        %v4978 = vld [vmem:[%s990 + $0x1b0] sm:$0xff]
        %v4979 = vld [vmem:[%s990 + $0x1b8] sm:$0xff]
        %v4980 = vld [vmem:[%s990 + $0x1c0] sm:$0xff]
        %v4981 = vld [vmem:[%s990 + $0x1c8] sm:$0xff]
        %v4982 = vld [vmem:[%s990 + $0x1d0] sm:$0xff]
        %v4983 = vld [vmem:[%s990 + $0x1d8] sm:$0xff]
        %v4984 = vld [vmem:[%s990 + $0x1e0] sm:$0xff]
        %v4985 = vld [vmem:[%s990 + $0x1e8] sm:$0xff]
        %v4986 = vld [vmem:[%s990 + $0x1f0] sm:$0xff]
        %v4987 = vld [vmem:[%s990 + $0x1f8] sm:$0xff]
        %v4988 = vld [vmem:[%s990 + $0x200] sm:$0xff]
        %v4989 = vld [vmem:[%s990 + $0x208] sm:$0xff]
        %v4990 = vld [vmem:[%s990 + $0x210] sm:$0xff]
        %v4991 = vld [vmem:[%s990 + $0x218] sm:$0xff]
        %v4992 = vld [vmem:[%s990 + $0x220] sm:$0xff]
        %v4993 = vld [vmem:[%s990 + $0x228] sm:$0xff]
        %v4994 = vld [vmem:[%s990 + $0x230] sm:$0xff]
        %v4995 = vld [vmem:[%s990 + $0x238] sm:$0xff]
        %v4996 = vld [vmem:[%s990 + $0x240] sm:$0xff]
        %v4997 = vld [vmem:[%s990 + $0x248] sm:$0xff]
        %v4998 = vld [vmem:[%s990 + $0x250] sm:$0xff]
        %v4999 = vld [vmem:[%s990 + $0x258] sm:$0xff]
        %v5000 = vld [vmem:[%s990 + $0x260] sm:$0xff]
        %v5001 = vld [vmem:[%s990 + $0x268] sm:$0xff]
        %v5002 = vld [vmem:[%s990 + $0x270] sm:$0xff]
        %v5003 = vld [vmem:[%s990 + $0x278] sm:$0xff]
        %v5004 = vld [vmem:[%s990 + $0x280] sm:$0xff]
        %v5005 = vld [vmem:[%s990 + $0x288] sm:$0xff]
        %v5006 = vld [vmem:[%s990 + $0x290] sm:$0xff]
        %v5007 = vld [vmem:[%s990 + $0x298] sm:$0xff]
        %v5008 = vld [vmem:[%s990 + $0x2a0] sm:$0xff]
        %v5009 = vld [vmem:[%s990 + $0x2a8] sm:$0xff]
        %v5010 = vld [vmem:[%s990 + $0x2b0] sm:$0xff]
        %v5011 = vld [vmem:[%s990 + $0x2b8] sm:$0xff]
        %v5012 = vld [vmem:[%s990 + $0x2c0] sm:$0xff]
        %v5013 = vld [vmem:[%s990 + $0x2c8] sm:$0xff]
        %v5014 = vld [vmem:[%s990 + $0x2d0] sm:$0xff]
        %v5015 = vld [vmem:[%s990 + $0x2d8] sm:$0xff]
        %v5016 = vld [vmem:[%s990 + $0x2e0] sm:$0xff]
        %v5017 = vld [vmem:[%s990 + $0x2e8] sm:$0xff]
        %v5018 = vld [vmem:[%s990 + $0x2f0] sm:$0xff]
        %v5019 = vld [vmem:[%s990 + $0x2f8] sm:$0xff]
        %v5116 = vunpack.c.l.b16 %v4924
        %v5117 = vunpack.c.h.b16 %v4924
        %v5118 = vunpack.c.l.b16 %v4925
        %v5119 = vunpack.c.h.b16 %v4925
        %v5120 = vunpack.c.l.b16 %v4926
        %v5121 = vunpack.c.h.b16 %v4926
        %v5122 = vunpack.c.l.b16 %v4927
        %v5123 = vunpack.c.h.b16 %v4927
        %v5124 = vunpack.c.l.b16 %v4928
        %v5125 = vunpack.c.h.b16 %v4928
        %v5126 = vunpack.c.l.b16 %v4929
        %v5127 = vunpack.c.h.b16 %v4929
        %v5128 = vunpack.c.l.b16 %v4930
        %v5129 = vunpack.c.h.b16 %v4930
        %v5130 = vunpack.c.l.b16 %v4931
        %v5131 = vunpack.c.h.b16 %v4931
        %v5132 = vunpack.c.l.b16 %v4932
        %v5133 = vunpack.c.h.b16 %v4932
        %v5134 = vunpack.c.l.b16 %v4933
        %v5135 = vunpack.c.h.b16 %v4933
        %v5136 = vunpack.c.l.b16 %v4934
        %v5137 = vunpack.c.h.b16 %v4934
        %v5138 = vunpack.c.l.b16 %v4935
        %v5139 = vunpack.c.h.b16 %v4935
        %v5140 = vunpack.c.l.b16 %v4936
        %v5141 = vunpack.c.h.b16 %v4936
        %v5142 = vunpack.c.l.b16 %v4937
        %v5143 = vunpack.c.h.b16 %v4937
        %v5144 = vunpack.c.l.b16 %v4938
        %v5145 = vunpack.c.h.b16 %v4938
        %v5146 = vunpack.c.l.b16 %v4939
        %v5147 = vunpack.c.h.b16 %v4939
        %v5148 = vunpack.c.l.b16 %v4940
        %v5149 = vunpack.c.h.b16 %v4940
        %v5150 = vunpack.c.l.b16 %v4941
        %v5151 = vunpack.c.h.b16 %v4941
        %v5152 = vunpack.c.l.b16 %v4942
        %v5153 = vunpack.c.h.b16 %v4942
        %v5154 = vunpack.c.l.b16 %v4943
        %v5155 = vunpack.c.h.b16 %v4943
        %v5156 = vunpack.c.l.b16 %v4944
        %v5157 = vunpack.c.h.b16 %v4944
        %v5158 = vunpack.c.l.b16 %v4945
        %v5159 = vunpack.c.h.b16 %v4945
        %v5160 = vunpack.c.l.b16 %v4946
        %v5161 = vunpack.c.h.b16 %v4946
        %v5162 = vunpack.c.l.b16 %v4947
        %v5163 = vunpack.c.h.b16 %v4947
        %v5164 = vunpack.c.l.b16 %v4948
        %v5165 = vunpack.c.h.b16 %v4948
        %v5166 = vunpack.c.l.b16 %v4949
        %v5167 = vunpack.c.h.b16 %v4949
        %v5168 = vunpack.c.l.b16 %v4950
        %v5169 = vunpack.c.h.b16 %v4950
        %v5170 = vunpack.c.l.b16 %v4951
        %v5171 = vunpack.c.h.b16 %v4951
        %v5172 = vunpack.c.l.b16 %v4952
        %v5173 = vunpack.c.h.b16 %v4952
        %v5174 = vunpack.c.l.b16 %v4953
        %v5175 = vunpack.c.h.b16 %v4953
        %v5176 = vunpack.c.l.b16 %v4954
        %v5177 = vunpack.c.h.b16 %v4954
        %v5178 = vunpack.c.l.b16 %v4955
        %v5179 = vunpack.c.h.b16 %v4955
        %v5180 = vunpack.c.l.b16 %v4956
        %v5181 = vunpack.c.h.b16 %v4956
        %v5182 = vunpack.c.l.b16 %v4957
        %v5183 = vunpack.c.h.b16 %v4957
        %v5184 = vunpack.c.l.b16 %v4958
        %v5185 = vunpack.c.h.b16 %v4958
        %v5186 = vunpack.c.l.b16 %v4959
        %v5187 = vunpack.c.h.b16 %v4959
        %v5188 = vunpack.c.l.b16 %v4960
        %v5189 = vunpack.c.h.b16 %v4960
        %v5190 = vunpack.c.l.b16 %v4961
        %v5191 = vunpack.c.h.b16 %v4961
        %v5192 = vunpack.c.l.b16 %v4962
        %v5193 = vunpack.c.h.b16 %v4962
        %v5194 = vunpack.c.l.b16 %v4963
        %v5195 = vunpack.c.h.b16 %v4963
        %v5196 = vunpack.c.l.b16 %v4964
        %v5197 = vunpack.c.h.b16 %v4964
        %v5198 = vunpack.c.l.b16 %v4965
        %v5199 = vunpack.c.h.b16 %v4965
        %v5200 = vunpack.c.l.b16 %v4966
        %v5201 = vunpack.c.h.b16 %v4966
        %v5202 = vunpack.c.l.b16 %v4967
        %v5203 = vunpack.c.h.b16 %v4967
        %v5204 = vunpack.c.l.b16 %v4968
        %v5205 = vunpack.c.h.b16 %v4968
        %v5206 = vunpack.c.l.b16 %v4969
        %v5207 = vunpack.c.h.b16 %v4969
        %v5208 = vunpack.c.l.b16 %v4970
        %v5209 = vunpack.c.h.b16 %v4970
        %v5210 = vunpack.c.l.b16 %v4971
        %v5211 = vunpack.c.h.b16 %v4971
        %v5212 = vunpack.c.l.b16 %v4972
        %v5213 = vunpack.c.h.b16 %v4972
        %v5214 = vunpack.c.l.b16 %v4973
        %v5215 = vunpack.c.h.b16 %v4973
        %v5216 = vunpack.c.l.b16 %v4974
        %v5217 = vunpack.c.h.b16 %v4974
        %v5218 = vunpack.c.l.b16 %v4975
        %v5219 = vunpack.c.h.b16 %v4975
        %v5220 = vunpack.c.l.b16 %v4976
        %v5221 = vunpack.c.h.b16 %v4976
        %v5222 = vunpack.c.l.b16 %v4977
        %v5223 = vunpack.c.h.b16 %v4977
        %v5224 = vunpack.c.l.b16 %v4978
        %v5225 = vunpack.c.h.b16 %v4978
        %v5226 = vunpack.c.l.b16 %v4979
        %v5227 = vunpack.c.h.b16 %v4979
        %v5228 = vunpack.c.l.b16 %v4980
        %v5229 = vunpack.c.h.b16 %v4980
        %v5230 = vunpack.c.l.b16 %v4981
        %v5231 = vunpack.c.h.b16 %v4981
        %v5232 = vunpack.c.l.b16 %v4982
        %v5233 = vunpack.c.h.b16 %v4982
        %v5234 = vunpack.c.l.b16 %v4983
        %v5235 = vunpack.c.h.b16 %v4983
        %v5236 = vunpack.c.l.b16 %v4984
        %v5237 = vunpack.c.h.b16 %v4984
        %v5238 = vunpack.c.l.b16 %v4985
        %v5239 = vunpack.c.h.b16 %v4985
        %v5240 = vunpack.c.l.b16 %v4986
        %v5241 = vunpack.c.h.b16 %v4986
        %v5242 = vunpack.c.l.b16 %v4987
        %v5243 = vunpack.c.h.b16 %v4987
        %v5244 = vunpack.c.l.b16 %v4988
        %v5245 = vunpack.c.h.b16 %v4988
        %v5246 = vunpack.c.l.b16 %v4989
        %v5247 = vunpack.c.h.b16 %v4989
        %v5248 = vunpack.c.l.b16 %v4990
        %v5249 = vunpack.c.h.b16 %v4990
        %v5250 = vunpack.c.l.b16 %v4991
        %v5251 = vunpack.c.h.b16 %v4991
        %v5252 = vunpack.c.l.b16 %v4992
        %v5253 = vunpack.c.h.b16 %v4992
        %v5254 = vunpack.c.l.b16 %v4993
        %v5255 = vunpack.c.h.b16 %v4993
        %v5256 = vunpack.c.l.b16 %v4994
        %v5257 = vunpack.c.h.b16 %v4994
        %v5258 = vunpack.c.l.b16 %v4995
        %v5259 = vunpack.c.h.b16 %v4995
        %v5260 = vunpack.c.l.b16 %v4996
        %v5261 = vunpack.c.h.b16 %v4996
        %v5262 = vunpack.c.l.b16 %v4997
        %v5263 = vunpack.c.h.b16 %v4997
        %v5264 = vunpack.c.l.b16 %v4998
        %v5265 = vunpack.c.h.b16 %v4998
        %v5266 = vunpack.c.l.b16 %v4999
        %v5267 = vunpack.c.h.b16 %v4999
        %v5268 = vunpack.c.l.b16 %v5000
        %v5269 = vunpack.c.h.b16 %v5000
        %v5270 = vunpack.c.l.b16 %v5001
        %v5271 = vunpack.c.h.b16 %v5001
        %v5272 = vunpack.c.l.b16 %v5002
        %v5273 = vunpack.c.h.b16 %v5002
        %v5274 = vunpack.c.l.b16 %v5003
        %v5275 = vunpack.c.h.b16 %v5003
        %v5276 = vunpack.c.l.b16 %v5004
        %v5277 = vunpack.c.h.b16 %v5004
        %v5278 = vunpack.c.l.b16 %v5005
        %v5279 = vunpack.c.h.b16 %v5005
        %v5280 = vunpack.c.l.b16 %v5006
        %v5281 = vunpack.c.h.b16 %v5006
        %v5282 = vunpack.c.l.b16 %v5007
        %v5283 = vunpack.c.h.b16 %v5007
        %v5284 = vunpack.c.l.b16 %v5008
        %v5285 = vunpack.c.h.b16 %v5008
        %v5286 = vunpack.c.l.b16 %v5009
        %v5287 = vunpack.c.h.b16 %v5009
        %v5288 = vunpack.c.l.b16 %v5010
        %v5289 = vunpack.c.h.b16 %v5010
        %v5290 = vunpack.c.l.b16 %v5011
        %v5291 = vunpack.c.h.b16 %v5011
        %v5292 = vunpack.c.l.b16 %v5012
        %v5293 = vunpack.c.h.b16 %v5012
        %v5294 = vunpack.c.l.b16 %v5013
        %v5295 = vunpack.c.h.b16 %v5013
        %v5296 = vunpack.c.l.b16 %v5014
        %v5297 = vunpack.c.h.b16 %v5014
        %v5298 = vunpack.c.l.b16 %v5015
        %v5299 = vunpack.c.h.b16 %v5015
        %v5300 = vunpack.c.l.b16 %v5016
        %v5301 = vunpack.c.h.b16 %v5016
        %v5302 = vunpack.c.l.b16 %v5017
        %v5303 = vunpack.c.h.b16 %v5017
        %v5304 = vunpack.c.l.b16 %v5018
        %v5305 = vunpack.c.h.b16 %v5018
        %v5306 = vunpack.c.l.b16 %v5019
        %v5307 = vunpack.c.h.b16 %v5019
        %v5308 = vpack.c.b16 %v5128, %v5116
        %v5309 = vpack.c.b16 %v5129, %v5117
        %v5310 = vpack.c.b16 %v5130, %v5118
        %v5311 = vpack.c.b16 %v5131, %v5119
        %v5312 = vpack.c.b16 %v5132, %v5120
        %v5313 = vpack.c.b16 %v5133, %v5121
        %v5314 = vpack.c.b16 %v5134, %v5122
        %v5315 = vpack.c.b16 %v5135, %v5123
        %v5316 = vpack.c.b16 %v5136, %v5124
        %v5317 = vpack.c.b16 %v5137, %v5125
        %v5318 = vpack.c.b16 %v5138, %v5126
        %v5319 = vpack.c.b16 %v5139, %v5127
        %v5320 = vpack.c.b16 %v5152, %v5140
        %v5321 = vpack.c.b16 %v5153, %v5141
        %v5322 = vpack.c.b16 %v5154, %v5142
        %v5323 = vpack.c.b16 %v5155, %v5143
        %v5324 = vpack.c.b16 %v5156, %v5144
        %v5325 = vpack.c.b16 %v5157, %v5145
        %v5326 = vpack.c.b16 %v5158, %v5146
        %v5327 = vpack.c.b16 %v5159, %v5147
        %v5328 = vpack.c.b16 %v5160, %v5148
        %v5329 = vpack.c.b16 %v5161, %v5149
        %v5330 = vpack.c.b16 %v5162, %v5150
        %v5331 = vpack.c.b16 %v5163, %v5151
        %v5332 = vpack.c.b16 %v5176, %v5164
        %v5333 = vpack.c.b16 %v5177, %v5165
        %v5334 = vpack.c.b16 %v5178, %v5166
        %v5335 = vpack.c.b16 %v5179, %v5167
        %v5336 = vpack.c.b16 %v5180, %v5168
        %v5337 = vpack.c.b16 %v5181, %v5169
        %v5338 = vpack.c.b16 %v5182, %v5170
        %v5339 = vpack.c.b16 %v5183, %v5171
        %v5340 = vpack.c.b16 %v5184, %v5172
        %v5341 = vpack.c.b16 %v5185, %v5173
        %v5342 = vpack.c.b16 %v5186, %v5174
        %v5343 = vpack.c.b16 %v5187, %v5175
        %v5344 = vpack.c.b16 %v5200, %v5188
        %v5345 = vpack.c.b16 %v5201, %v5189
        %v5346 = vpack.c.b16 %v5202, %v5190
        %v5347 = vpack.c.b16 %v5203, %v5191
        %v5348 = vpack.c.b16 %v5204, %v5192
        %v5349 = vpack.c.b16 %v5205, %v5193
        %v5350 = vpack.c.b16 %v5206, %v5194
        %v5351 = vpack.c.b16 %v5207, %v5195
        %v5352 = vpack.c.b16 %v5208, %v5196
        %v5353 = vpack.c.b16 %v5209, %v5197
        %v5354 = vpack.c.b16 %v5210, %v5198
        %v5355 = vpack.c.b16 %v5211, %v5199
        %v5356 = vpack.c.b16 %v5224, %v5212
        %v5357 = vpack.c.b16 %v5225, %v5213
        %v5358 = vpack.c.b16 %v5226, %v5214
        %v5359 = vpack.c.b16 %v5227, %v5215
        %v5360 = vpack.c.b16 %v5228, %v5216
        %v5361 = vpack.c.b16 %v5229, %v5217
        %v5362 = vpack.c.b16 %v5230, %v5218
        %v5363 = vpack.c.b16 %v5231, %v5219
        %v5364 = vpack.c.b16 %v5232, %v5220
        %v5365 = vpack.c.b16 %v5233, %v5221
        %v5366 = vpack.c.b16 %v5234, %v5222
        %v5367 = vpack.c.b16 %v5235, %v5223
        %v5368 = vpack.c.b16 %v5248, %v5236
        %v5369 = vpack.c.b16 %v5249, %v5237
        %v5370 = vpack.c.b16 %v5250, %v5238
        %v5371 = vpack.c.b16 %v5251, %v5239
        %v5372 = vpack.c.b16 %v5252, %v5240
        %v5373 = vpack.c.b16 %v5253, %v5241
        %v5374 = vpack.c.b16 %v5254, %v5242
        %v5375 = vpack.c.b16 %v5255, %v5243
        %v5376 = vpack.c.b16 %v5256, %v5244
        %v5377 = vpack.c.b16 %v5257, %v5245
        %v5378 = vpack.c.b16 %v5258, %v5246
        %v5379 = vpack.c.b16 %v5259, %v5247
        %v5380 = vpack.c.b16 %v5272, %v5260
        %v5381 = vpack.c.b16 %v5273, %v5261
        %v5382 = vpack.c.b16 %v5274, %v5262
        %v5383 = vpack.c.b16 %v5275, %v5263
        %v5384 = vpack.c.b16 %v5276, %v5264
        %v5385 = vpack.c.b16 %v5277, %v5265
        %v5386 = vpack.c.b16 %v5278, %v5266
        %v5387 = vpack.c.b16 %v5279, %v5267
        %v5388 = vpack.c.b16 %v5280, %v5268
        %v5389 = vpack.c.b16 %v5281, %v5269
        %v5390 = vpack.c.b16 %v5282, %v5270
        %v5391 = vpack.c.b16 %v5283, %v5271
        %v5392 = vpack.c.b16 %v5296, %v5284
        %v5393 = vpack.c.b16 %v5297, %v5285
        %v5394 = vpack.c.b16 %v5298, %v5286
        %v5395 = vpack.c.b16 %v5299, %v5287
        %v5396 = vpack.c.b16 %v5300, %v5288
        %v5397 = vpack.c.b16 %v5301, %v5289
        %v5398 = vpack.c.b16 %v5302, %v5290
        %v5399 = vpack.c.b16 %v5303, %v5291
        %v5400 = vpack.c.b16 %v5304, %v5292
        %v5401 = vpack.c.b16 %v5305, %v5293
        %v5402 = vpack.c.b16 %v5306, %v5294
        %v5403 = vpack.c.b16 %v5307, %v5295
        %5500 = vmatprep.subr.bf16.mxu0 %v5393
        %5501 = vmatpush1.bf16.msra.mxu0 %v5392
        %5502 = vmatprep.subr.bf16.mxu0 %v5381
        %5503 = vmatpush1.bf16.msra.mxu0 %v5380
        %5504 = vmatprep.subr.bf16.mxu0 %v5369
        %5505 = vmatpush1.bf16.msra.mxu0 %v5368
        %5506 = vmatprep.subr.bf16.mxu0 %v5357
        %5507 = vmatpush1.bf16.msra.mxu0 %v5356
        %5508 = vmatprep.subr.bf16.mxu0 %v5345
        %5509 = vmatpush1.bf16.msra.mxu0 %v5344
        %5510 = vmatprep.subr.bf16.mxu0 %v5333
        %5511 = vmatpush1.bf16.msra.mxu0 %v5332
        %5512 = vmatprep.subr.bf16.mxu0 %v5321
        %5513 = vmatpush1.bf16.msra.mxu0 %v5320
        %5514 = vmatprep.subr.bf16.mxu0 %v5309
        %5515 = vmatpush1.bf16.msra.mxu0 %v5308
        %5516 = vmatprep.subr.bf16.mxu0 0
        %5517 = vmatpush2.bf16.msra.mxu0 0
        %5518 = vmatprep.subr.bf16.mxu0 0
        %5519 = vmatpush2.bf16.msra.mxu0 0
        %5520 = vmatprep.subr.bf16.mxu0 0
        %5521 = vmatpush2.bf16.msra.mxu0 0
        %5522 = vmatprep.subr.bf16.mxu0 0
        %5523 = vmatpush2.bf16.msra.mxu0 0
        %5524 = vmatprep.subr.bf16.mxu0 0
        %5525 = vmatpush2.bf16.msra.mxu0 0
        %5526 = vmatprep.subr.bf16.mxu0 0
        %5527 = vmatpush2.bf16.msra.mxu0 0
        %5528 = vmatprep.subr.bf16.mxu0 0
        %5529 = vmatpush2.bf16.msra.mxu0 0
        %5530 = vmatprep.subr.bf16.mxu0 0
        %5531 = vmatpush2.bf16.msra.mxu0 0
        %5532 = vmatprep.mubr.bf16.mxu0 0
        %5533 = vmatmul.mubr.bf16.gmra.mxu0 %v4923
        %v5534 = vpop.f32.mrf.mxu0
        %v5535 = vadd.f32 0.0, %v5534
        %v5536 = vpop.f32.mrf.mxu0
        %v5537 = vadd.f32 0.0, %v5536
        %v5538 = vpop.f32.mrf.mxu0
        %v5539 = vpop.f32.mrf.mxu0
        %5540 = vdwg.mxu0
        %5541 = vmatprep.subr.bf16.mxu0 %v5395
        %5542 = vmatpush1.bf16.msra.mxu0 %v5394
        %5543 = vmatprep.subr.bf16.mxu0 %v5383
        %5544 = vmatpush1.bf16.msra.mxu0 %v5382
        %5545 = vmatprep.subr.bf16.mxu0 %v5371
        %5546 = vmatpush1.bf16.msra.mxu0 %v5370
        %5547 = vmatprep.subr.bf16.mxu0 %v5359
        %5548 = vmatpush1.bf16.msra.mxu0 %v5358
        %5549 = vmatprep.subr.bf16.mxu0 %v5347
        %5550 = vmatpush1.bf16.msra.mxu0 %v5346
        %5551 = vmatprep.subr.bf16.mxu0 %v5335
        %5552 = vmatpush1.bf16.msra.mxu0 %v5334
        %5553 = vmatprep.subr.bf16.mxu0 %v5323
        %5554 = vmatpush1.bf16.msra.mxu0 %v5322
        %5555 = vmatprep.subr.bf16.mxu0 %v5311
        %5556 = vmatpush1.bf16.msra.mxu0 %v5310
        %5557 = vmatprep.subr.bf16.mxu0 0
        %5558 = vmatpush2.bf16.msra.mxu0 0
        %5559 = vmatprep.subr.bf16.mxu0 0
        %5560 = vmatpush2.bf16.msra.mxu0 0
        %5561 = vmatprep.subr.bf16.mxu0 0
        %5562 = vmatpush2.bf16.msra.mxu0 0
        %5563 = vmatprep.subr.bf16.mxu0 0
        %5564 = vmatpush2.bf16.msra.mxu0 0
        %5565 = vmatprep.subr.bf16.mxu0 0
        %5566 = vmatpush2.bf16.msra.mxu0 0
        %5567 = vmatprep.subr.bf16.mxu0 0
        %5568 = vmatpush2.bf16.msra.mxu0 0
        %5569 = vmatprep.subr.bf16.mxu0 0
        %5570 = vmatpush2.bf16.msra.mxu0 0
        %5571 = vmatprep.subr.bf16.mxu0 0
        %5572 = vmatpush2.bf16.msra.mxu0 0
        %5573 = vmatprep.mubr.bf16.mxu0 0
        %5574 = vmatmul.mubr.bf16.gmra.mxu0 %v4923
        %v5575 = vpop.f32.mrf.mxu0
        %v5576 = vadd.f32 0.0, %v5575
        %v5577 = vpop.f32.mrf.mxu0
        %v5578 = vadd.f32 0.0, %v5577
        %v5579 = vpop.f32.mrf.mxu0
        %v5580 = vpop.f32.mrf.mxu0
        %5581 = vdwg.mxu0
        %5582 = vmatprep.subr.bf16.mxu0 %v5397
        %5583 = vmatpush1.bf16.msra.mxu0 %v5396
        %5584 = vmatprep.subr.bf16.mxu0 %v5385
        %5585 = vmatpush1.bf16.msra.mxu0 %v5384
        %5586 = vmatprep.subr.bf16.mxu0 %v5373
        %5587 = vmatpush1.bf16.msra.mxu0 %v5372
        %5588 = vmatprep.subr.bf16.mxu0 %v5361
        %5589 = vmatpush1.bf16.msra.mxu0 %v5360
        %5590 = vmatprep.subr.bf16.mxu0 %v5349
        %5591 = vmatpush1.bf16.msra.mxu0 %v5348
        %5592 = vmatprep.subr.bf16.mxu0 %v5337
        %5593 = vmatpush1.bf16.msra.mxu0 %v5336
        %5594 = vmatprep.subr.bf16.mxu0 %v5325
        %5595 = vmatpush1.bf16.msra.mxu0 %v5324
        %5596 = vmatprep.subr.bf16.mxu0 %v5313
        %5597 = vmatpush1.bf16.msra.mxu0 %v5312
        %5598 = vmatprep.subr.bf16.mxu0 0
        %5599 = vmatpush2.bf16.msra.mxu0 0
        %5600 = vmatprep.subr.bf16.mxu0 0
        %5601 = vmatpush2.bf16.msra.mxu0 0
        %5602 = vmatprep.subr.bf16.mxu0 0
        %5603 = vmatpush2.bf16.msra.mxu0 0
        %5604 = vmatprep.subr.bf16.mxu0 0
        %5605 = vmatpush2.bf16.msra.mxu0 0
        %5606 = vmatprep.subr.bf16.mxu0 0
        %5607 = vmatpush2.bf16.msra.mxu0 0
        %5608 = vmatprep.subr.bf16.mxu0 0
        %5609 = vmatpush2.bf16.msra.mxu0 0
        %5610 = vmatprep.subr.bf16.mxu0 0
        %5611 = vmatpush2.bf16.msra.mxu0 0
        %5612 = vmatprep.subr.bf16.mxu0 0
        %5613 = vmatpush2.bf16.msra.mxu0 0
        %5614 = vmatprep.mubr.bf16.mxu0 0
        %5615 = vmatmul.mubr.bf16.gmra.mxu0 %v4923
        %v5616 = vpop.f32.mrf.mxu0
        %v5617 = vadd.f32 0.0, %v5616
        %v5618 = vpop.f32.mrf.mxu0
        %v5619 = vadd.f32 0.0, %v5618
        %v5620 = vpop.f32.mrf.mxu0
        %v5621 = vpop.f32.mrf.mxu0
        %5622 = vdwg.mxu0
        %5623 = vmatprep.subr.bf16.mxu0 %v5399
        %5624 = vmatpush1.bf16.msra.mxu0 %v5398
        %5625 = vmatprep.subr.bf16.mxu0 %v5387
        %5626 = vmatpush1.bf16.msra.mxu0 %v5386
        %5627 = vmatprep.subr.bf16.mxu0 %v5375
        %5628 = vmatpush1.bf16.msra.mxu0 %v5374
        %5629 = vmatprep.subr.bf16.mxu0 %v5363
        %5630 = vmatpush1.bf16.msra.mxu0 %v5362
        %5631 = vmatprep.subr.bf16.mxu0 %v5351
        %5632 = vmatpush1.bf16.msra.mxu0 %v5350
        %5633 = vmatprep.subr.bf16.mxu0 %v5339
        %5634 = vmatpush1.bf16.msra.mxu0 %v5338
        %5635 = vmatprep.subr.bf16.mxu0 %v5327
        %5636 = vmatpush1.bf16.msra.mxu0 %v5326
        %5637 = vmatprep.subr.bf16.mxu0 %v5315
        %5638 = vmatpush1.bf16.msra.mxu0 %v5314
        %5639 = vmatprep.subr.bf16.mxu0 0
        %5640 = vmatpush2.bf16.msra.mxu0 0
        %5641 = vmatprep.subr.bf16.mxu0 0
        %5642 = vmatpush2.bf16.msra.mxu0 0
        %5643 = vmatprep.subr.bf16.mxu0 0
        %5644 = vmatpush2.bf16.msra.mxu0 0
        %5645 = vmatprep.subr.bf16.mxu0 0
        %5646 = vmatpush2.bf16.msra.mxu0 0
        %5647 = vmatprep.subr.bf16.mxu0 0
        %5648 = vmatpush2.bf16.msra.mxu0 0
        %5649 = vmatprep.subr.bf16.mxu0 0
        %5650 = vmatpush2.bf16.msra.mxu0 0
        %5651 = vmatprep.subr.bf16.mxu0 0
        %5652 = vmatpush2.bf16.msra.mxu0 0
        %5653 = vmatprep.subr.bf16.mxu0 0
        %5654 = vmatpush2.bf16.msra.mxu0 0
        %5655 = vmatprep.mubr.bf16.mxu0 0
        %5656 = vmatmul.mubr.bf16.gmra.mxu0 %v4923
        %v5657 = vpop.f32.mrf.mxu0
        %v5658 = vadd.f32 0.0, %v5657
        %v5659 = vpop.f32.mrf.mxu0
        %v5660 = vadd.f32 0.0, %v5659
        %v5661 = vpop.f32.mrf.mxu0
        %v5662 = vpop.f32.mrf.mxu0
        %5663 = vdwg.mxu0
        %5664 = vmatprep.subr.bf16.mxu0 %v5401
        %5665 = vmatpush1.bf16.msra.mxu0 %v5400
        %5666 = vmatprep.subr.bf16.mxu0 %v5389
        %5667 = vmatpush1.bf16.msra.mxu0 %v5388
        %5668 = vmatprep.subr.bf16.mxu0 %v5377
        %5669 = vmatpush1.bf16.msra.mxu0 %v5376
        %5670 = vmatprep.subr.bf16.mxu0 %v5365
        %5671 = vmatpush1.bf16.msra.mxu0 %v5364
        %5672 = vmatprep.subr.bf16.mxu0 %v5353
        %5673 = vmatpush1.bf16.msra.mxu0 %v5352
        %5674 = vmatprep.subr.bf16.mxu0 %v5341
        %5675 = vmatpush1.bf16.msra.mxu0 %v5340
        %5676 = vmatprep.subr.bf16.mxu0 %v5329
        %5677 = vmatpush1.bf16.msra.mxu0 %v5328
        %5678 = vmatprep.subr.bf16.mxu0 %v5317
        %5679 = vmatpush1.bf16.msra.mxu0 %v5316
        %5680 = vmatprep.subr.bf16.mxu0 0
        %5681 = vmatpush2.bf16.msra.mxu0 0
        %5682 = vmatprep.subr.bf16.mxu0 0
        %5683 = vmatpush2.bf16.msra.mxu0 0
        %5684 = vmatprep.subr.bf16.mxu0 0
        %5685 = vmatpush2.bf16.msra.mxu0 0
        %5686 = vmatprep.subr.bf16.mxu0 0
        %5687 = vmatpush2.bf16.msra.mxu0 0
        %5688 = vmatprep.subr.bf16.mxu0 0
        %5689 = vmatpush2.bf16.msra.mxu0 0
        %5690 = vmatprep.subr.bf16.mxu0 0
        %5691 = vmatpush2.bf16.msra.mxu0 0
        %5692 = vmatprep.subr.bf16.mxu0 0
        %5693 = vmatpush2.bf16.msra.mxu0 0
        %5694 = vmatprep.subr.bf16.mxu0 0
        %5695 = vmatpush2.bf16.msra.mxu0 0
        %5696 = vmatprep.mubr.bf16.mxu0 0
        %5697 = vmatmul.mubr.bf16.gmra.mxu0 %v4923
        %v5698 = vpop.f32.mrf.mxu0
        %v5699 = vadd.f32 0.0, %v5698
        %v5700 = vpop.f32.mrf.mxu0
        %v5701 = vadd.f32 0.0, %v5700
        %v5702 = vpop.f32.mrf.mxu0
        %v5703 = vpop.f32.mrf.mxu0
        %5704 = vdwg.mxu0
        %5705 = vmatprep.subr.bf16.mxu0 %v5403
        %5706 = vmatpush1.bf16.msra.mxu0 %v5402
        %5707 = vmatprep.subr.bf16.mxu0 %v5391
        %5708 = vmatpush1.bf16.msra.mxu0 %v5390
        %5709 = vmatprep.subr.bf16.mxu0 %v5379
        %5710 = vmatpush1.bf16.msra.mxu0 %v5378
        %5711 = vmatprep.subr.bf16.mxu0 %v5367
        %5712 = vmatpush1.bf16.msra.mxu0 %v5366
        %5713 = vmatprep.subr.bf16.mxu0 %v5355
        %5714 = vmatpush1.bf16.msra.mxu0 %v5354
        %5715 = vmatprep.subr.bf16.mxu0 %v5343
        %5716 = vmatpush1.bf16.msra.mxu0 %v5342
        %5717 = vmatprep.subr.bf16.mxu0 %v5331
        %5718 = vmatpush1.bf16.msra.mxu0 %v5330
        %5719 = vmatprep.subr.bf16.mxu0 %v5319
        %5720 = vmatpush1.bf16.msra.mxu0 %v5318
        %5721 = vmatprep.subr.bf16.mxu0 0
        %5722 = vmatpush2.bf16.msra.mxu0 0
        %5723 = vmatprep.subr.bf16.mxu0 0
        %5724 = vmatpush2.bf16.msra.mxu0 0
        %5725 = vmatprep.subr.bf16.mxu0 0
        %5726 = vmatpush2.bf16.msra.mxu0 0
        %5727 = vmatprep.subr.bf16.mxu0 0
        %5728 = vmatpush2.bf16.msra.mxu0 0
        %5729 = vmatprep.subr.bf16.mxu0 0
        %5730 = vmatpush2.bf16.msra.mxu0 0
        %5731 = vmatprep.subr.bf16.mxu0 0
        %5732 = vmatpush2.bf16.msra.mxu0 0
        %5733 = vmatprep.subr.bf16.mxu0 0
        %5734 = vmatpush2.bf16.msra.mxu0 0
        %5735 = vmatprep.subr.bf16.mxu0 0
        %5736 = vmatpush2.bf16.msra.mxu0 0
        %5737 = vmatprep.mubr.bf16.mxu0 0
        %5738 = vmatmul.mubr.bf16.gmra.mxu0 %v4923
        %v5739 = vpop.f32.mrf.mxu0
        %v5740 = vadd.f32 0.0, %v5739
        %v5741 = vpop.f32.mrf.mxu0
        %v5742 = vadd.f32 0.0, %v5741
        %v5743 = vpop.f32.mrf.mxu0
        %v5744 = vpop.f32.mrf.mxu0
        %5745 = vdwg.mxu0
        %v5842 = vunpack.c.l.b16 %v4827
        %v5843 = vunpack.c.h.b16 %v4827
        %v5844 = vunpack.c.l.b16 %v4828
        %v5845 = vunpack.c.h.b16 %v4828
        %v5846 = vunpack.c.l.b16 %v4829
        %v5847 = vunpack.c.h.b16 %v4829
        %v5848 = vunpack.c.l.b16 %v4830
        %v5849 = vunpack.c.h.b16 %v4830
        %v5850 = vunpack.c.l.b16 %v4831
        %v5851 = vunpack.c.h.b16 %v4831
        %v5852 = vunpack.c.l.b16 %v4832
        %v5853 = vunpack.c.h.b16 %v4832
        %v5854 = vunpack.c.l.b16 %v4833
        %v5855 = vunpack.c.h.b16 %v4833
        %v5856 = vunpack.c.l.b16 %v4834
        %v5857 = vunpack.c.h.b16 %v4834
        %v5858 = vunpack.c.l.b16 %v4835
        %v5859 = vunpack.c.h.b16 %v4835
        %v5860 = vunpack.c.l.b16 %v4836
        %v5861 = vunpack.c.h.b16 %v4836
        %v5862 = vunpack.c.l.b16 %v4837
        %v5863 = vunpack.c.h.b16 %v4837
        %v5864 = vunpack.c.l.b16 %v4838
        %v5865 = vunpack.c.h.b16 %v4838
        %v5866 = vunpack.c.l.b16 %v4839
        %v5867 = vunpack.c.h.b16 %v4839
        %v5868 = vunpack.c.l.b16 %v4840
        %v5869 = vunpack.c.h.b16 %v4840
        %v5870 = vunpack.c.l.b16 %v4841
        %v5871 = vunpack.c.h.b16 %v4841
        %v5872 = vunpack.c.l.b16 %v4842
        %v5873 = vunpack.c.h.b16 %v4842
        %v5874 = vunpack.c.l.b16 %v4843
        %v5875 = vunpack.c.h.b16 %v4843
        %v5876 = vunpack.c.l.b16 %v4844
        %v5877 = vunpack.c.h.b16 %v4844
        %v5878 = vunpack.c.l.b16 %v4845
        %v5879 = vunpack.c.h.b16 %v4845
        %v5880 = vunpack.c.l.b16 %v4846
        %v5881 = vunpack.c.h.b16 %v4846
        %v5882 = vunpack.c.l.b16 %v4847
        %v5883 = vunpack.c.h.b16 %v4847
        %v5884 = vunpack.c.l.b16 %v4848
        %v5885 = vunpack.c.h.b16 %v4848
        %v5886 = vunpack.c.l.b16 %v4849
        %v5887 = vunpack.c.h.b16 %v4849
        %v5888 = vunpack.c.l.b16 %v4850
        %v5889 = vunpack.c.h.b16 %v4850
        %v5890 = vunpack.c.l.b16 %v4851
        %v5891 = vunpack.c.h.b16 %v4851
        %v5892 = vunpack.c.l.b16 %v4852
        %v5893 = vunpack.c.h.b16 %v4852
        %v5894 = vunpack.c.l.b16 %v4853
        %v5895 = vunpack.c.h.b16 %v4853
        %v5896 = vunpack.c.l.b16 %v4854
        %v5897 = vunpack.c.h.b16 %v4854
        %v5898 = vunpack.c.l.b16 %v4855
        %v5899 = vunpack.c.h.b16 %v4855
        %v5900 = vunpack.c.l.b16 %v4856
        %v5901 = vunpack.c.h.b16 %v4856
        %v5902 = vunpack.c.l.b16 %v4857
        %v5903 = vunpack.c.h.b16 %v4857
        %v5904 = vunpack.c.l.b16 %v4858
        %v5905 = vunpack.c.h.b16 %v4858
        %v5906 = vunpack.c.l.b16 %v4859
        %v5907 = vunpack.c.h.b16 %v4859
        %v5908 = vunpack.c.l.b16 %v4860
        %v5909 = vunpack.c.h.b16 %v4860
        %v5910 = vunpack.c.l.b16 %v4861
        %v5911 = vunpack.c.h.b16 %v4861
        %v5912 = vunpack.c.l.b16 %v4862
        %v5913 = vunpack.c.h.b16 %v4862
        %v5914 = vunpack.c.l.b16 %v4863
        %v5915 = vunpack.c.h.b16 %v4863
        %v5916 = vunpack.c.l.b16 %v4864
        %v5917 = vunpack.c.h.b16 %v4864
        %v5918 = vunpack.c.l.b16 %v4865
        %v5919 = vunpack.c.h.b16 %v4865
        %v5920 = vunpack.c.l.b16 %v4866
        %v5921 = vunpack.c.h.b16 %v4866
        %v5922 = vunpack.c.l.b16 %v4867
        %v5923 = vunpack.c.h.b16 %v4867
        %v5924 = vunpack.c.l.b16 %v4868
        %v5925 = vunpack.c.h.b16 %v4868
        %v5926 = vunpack.c.l.b16 %v4869
        %v5927 = vunpack.c.h.b16 %v4869
        %v5928 = vunpack.c.l.b16 %v4870
        %v5929 = vunpack.c.h.b16 %v4870
        %v5930 = vunpack.c.l.b16 %v4871
        %v5931 = vunpack.c.h.b16 %v4871
        %v5932 = vunpack.c.l.b16 %v4872
        %v5933 = vunpack.c.h.b16 %v4872
        %v5934 = vunpack.c.l.b16 %v4873
        %v5935 = vunpack.c.h.b16 %v4873
        %v5936 = vunpack.c.l.b16 %v4874
        %v5937 = vunpack.c.h.b16 %v4874
        %v5938 = vunpack.c.l.b16 %v4875
        %v5939 = vunpack.c.h.b16 %v4875
        %v5940 = vunpack.c.l.b16 %v4876
        %v5941 = vunpack.c.h.b16 %v4876
        %v5942 = vunpack.c.l.b16 %v4877
        %v5943 = vunpack.c.h.b16 %v4877
        %v5944 = vunpack.c.l.b16 %v4878
        %v5945 = vunpack.c.h.b16 %v4878
        %v5946 = vunpack.c.l.b16 %v4879
        %v5947 = vunpack.c.h.b16 %v4879
        %v5948 = vunpack.c.l.b16 %v4880
        %v5949 = vunpack.c.h.b16 %v4880
        %v5950 = vunpack.c.l.b16 %v4881
        %v5951 = vunpack.c.h.b16 %v4881
        %v5952 = vunpack.c.l.b16 %v4882
        %v5953 = vunpack.c.h.b16 %v4882
        %v5954 = vunpack.c.l.b16 %v4883
        %v5955 = vunpack.c.h.b16 %v4883
        %v5956 = vunpack.c.l.b16 %v4884
        %v5957 = vunpack.c.h.b16 %v4884
        %v5958 = vunpack.c.l.b16 %v4885
        %v5959 = vunpack.c.h.b16 %v4885
        %v5960 = vunpack.c.l.b16 %v4886
        %v5961 = vunpack.c.h.b16 %v4886
        %v5962 = vunpack.c.l.b16 %v4887
        %v5963 = vunpack.c.h.b16 %v4887
        %v5964 = vunpack.c.l.b16 %v4888
        %v5965 = vunpack.c.h.b16 %v4888
        %v5966 = vunpack.c.l.b16 %v4889
        %v5967 = vunpack.c.h.b16 %v4889
        %v5968 = vunpack.c.l.b16 %v4890
        %v5969 = vunpack.c.h.b16 %v4890
        %v5970 = vunpack.c.l.b16 %v4891
        %v5971 = vunpack.c.h.b16 %v4891
        %v5972 = vunpack.c.l.b16 %v4892
        %v5973 = vunpack.c.h.b16 %v4892
        %v5974 = vunpack.c.l.b16 %v4893
        %v5975 = vunpack.c.h.b16 %v4893
        %v5976 = vunpack.c.l.b16 %v4894
        %v5977 = vunpack.c.h.b16 %v4894
        %v5978 = vunpack.c.l.b16 %v4895
        %v5979 = vunpack.c.h.b16 %v4895
        %v5980 = vunpack.c.l.b16 %v4896
        %v5981 = vunpack.c.h.b16 %v4896
        %v5982 = vunpack.c.l.b16 %v4897
        %v5983 = vunpack.c.h.b16 %v4897
        %v5984 = vunpack.c.l.b16 %v4898
        %v5985 = vunpack.c.h.b16 %v4898
        %v5986 = vunpack.c.l.b16 %v4899
        %v5987 = vunpack.c.h.b16 %v4899
        %v5988 = vunpack.c.l.b16 %v4900
        %v5989 = vunpack.c.h.b16 %v4900
        %v5990 = vunpack.c.l.b16 %v4901
        %v5991 = vunpack.c.h.b16 %v4901
        %v5992 = vunpack.c.l.b16 %v4902
        %v5993 = vunpack.c.h.b16 %v4902
        %v5994 = vunpack.c.l.b16 %v4903
        %v5995 = vunpack.c.h.b16 %v4903
        %v5996 = vunpack.c.l.b16 %v4904
        %v5997 = vunpack.c.h.b16 %v4904
        %v5998 = vunpack.c.l.b16 %v4905
        %v5999 = vunpack.c.h.b16 %v4905
        %v6000 = vunpack.c.l.b16 %v4906
        %v6001 = vunpack.c.h.b16 %v4906
        %v6002 = vunpack.c.l.b16 %v4907
        %v6003 = vunpack.c.h.b16 %v4907
        %v6004 = vunpack.c.l.b16 %v4908
        %v6005 = vunpack.c.h.b16 %v4908
        %v6006 = vunpack.c.l.b16 %v4909
        %v6007 = vunpack.c.h.b16 %v4909
        %v6008 = vunpack.c.l.b16 %v4910
        %v6009 = vunpack.c.h.b16 %v4910
        %v6010 = vunpack.c.l.b16 %v4911
        %v6011 = vunpack.c.h.b16 %v4911
        %v6012 = vunpack.c.l.b16 %v4912
        %v6013 = vunpack.c.h.b16 %v4912
        %v6014 = vunpack.c.l.b16 %v4913
        %v6015 = vunpack.c.h.b16 %v4913
        %v6016 = vunpack.c.l.b16 %v4914
        %v6017 = vunpack.c.h.b16 %v4914
        %v6018 = vunpack.c.l.b16 %v4915
        %v6019 = vunpack.c.h.b16 %v4915
        %v6020 = vunpack.c.l.b16 %v4916
        %v6021 = vunpack.c.h.b16 %v4916
        %v6022 = vunpack.c.l.b16 %v4917
        %v6023 = vunpack.c.h.b16 %v4917
        %v6024 = vunpack.c.l.b16 %v4918
        %v6025 = vunpack.c.h.b16 %v4918
        %v6026 = vunpack.c.l.b16 %v4919
        %v6027 = vunpack.c.h.b16 %v4919
        %v6028 = vunpack.c.l.b16 %v4920
        %v6029 = vunpack.c.h.b16 %v4920
        %v6030 = vunpack.c.l.b16 %v4921
        %v6031 = vunpack.c.h.b16 %v4921
        %v6032 = vunpack.c.l.b16 %v4922
        %v6033 = vunpack.c.h.b16 %v4922
        %v6034 = vpack.c.b16 %v5854, %v5842
        %v6035 = vpack.c.b16 %v5855, %v5843
        %v6036 = vpack.c.b16 %v5856, %v5844
        %v6037 = vpack.c.b16 %v5857, %v5845
        %v6038 = vpack.c.b16 %v5858, %v5846
        %v6039 = vpack.c.b16 %v5859, %v5847
        %v6040 = vpack.c.b16 %v5860, %v5848
        %v6041 = vpack.c.b16 %v5861, %v5849
        %v6042 = vpack.c.b16 %v5862, %v5850
        %v6043 = vpack.c.b16 %v5863, %v5851
        %v6044 = vpack.c.b16 %v5864, %v5852
        %v6045 = vpack.c.b16 %v5865, %v5853
        %v6046 = vpack.c.b16 %v5878, %v5866
        %v6047 = vpack.c.b16 %v5879, %v5867
        %v6048 = vpack.c.b16 %v5880, %v5868
        %v6049 = vpack.c.b16 %v5881, %v5869
        %v6050 = vpack.c.b16 %v5882, %v5870
        %v6051 = vpack.c.b16 %v5883, %v5871
        %v6052 = vpack.c.b16 %v5884, %v5872
        %v6053 = vpack.c.b16 %v5885, %v5873
        %v6054 = vpack.c.b16 %v5886, %v5874
        %v6055 = vpack.c.b16 %v5887, %v5875
        %v6056 = vpack.c.b16 %v5888, %v5876
        %v6057 = vpack.c.b16 %v5889, %v5877
        %v6058 = vpack.c.b16 %v5902, %v5890
        %v6059 = vpack.c.b16 %v5903, %v5891
        %v6060 = vpack.c.b16 %v5904, %v5892
        %v6061 = vpack.c.b16 %v5905, %v5893
        %v6062 = vpack.c.b16 %v5906, %v5894
        %v6063 = vpack.c.b16 %v5907, %v5895
        %v6064 = vpack.c.b16 %v5908, %v5896
        %v6065 = vpack.c.b16 %v5909, %v5897
        %v6066 = vpack.c.b16 %v5910, %v5898
        %v6067 = vpack.c.b16 %v5911, %v5899
        %v6068 = vpack.c.b16 %v5912, %v5900
        %v6069 = vpack.c.b16 %v5913, %v5901
        %v6070 = vpack.c.b16 %v5926, %v5914
        %v6071 = vpack.c.b16 %v5927, %v5915
        %v6072 = vpack.c.b16 %v5928, %v5916
        %v6073 = vpack.c.b16 %v5929, %v5917
        %v6074 = vpack.c.b16 %v5930, %v5918
        %v6075 = vpack.c.b16 %v5931, %v5919
        %v6076 = vpack.c.b16 %v5932, %v5920
        %v6077 = vpack.c.b16 %v5933, %v5921
        %v6078 = vpack.c.b16 %v5934, %v5922
        %v6079 = vpack.c.b16 %v5935, %v5923
        %v6080 = vpack.c.b16 %v5936, %v5924
        %v6081 = vpack.c.b16 %v5937, %v5925
        %v6082 = vpack.c.b16 %v5950, %v5938
        %v6083 = vpack.c.b16 %v5951, %v5939
        %v6084 = vpack.c.b16 %v5952, %v5940
        %v6085 = vpack.c.b16 %v5953, %v5941
        %v6086 = vpack.c.b16 %v5954, %v5942
        %v6087 = vpack.c.b16 %v5955, %v5943
        %v6088 = vpack.c.b16 %v5956, %v5944
        %v6089 = vpack.c.b16 %v5957, %v5945
        %v6090 = vpack.c.b16 %v5958, %v5946
        %v6091 = vpack.c.b16 %v5959, %v5947
        %v6092 = vpack.c.b16 %v5960, %v5948
        %v6093 = vpack.c.b16 %v5961, %v5949
        %v6094 = vpack.c.b16 %v5974, %v5962
        %v6095 = vpack.c.b16 %v5975, %v5963
        %v6096 = vpack.c.b16 %v5976, %v5964
        %v6097 = vpack.c.b16 %v5977, %v5965
        %v6098 = vpack.c.b16 %v5978, %v5966
        %v6099 = vpack.c.b16 %v5979, %v5967
        %v6100 = vpack.c.b16 %v5980, %v5968
        %v6101 = vpack.c.b16 %v5981, %v5969
        %v6102 = vpack.c.b16 %v5982, %v5970
        %v6103 = vpack.c.b16 %v5983, %v5971
        %v6104 = vpack.c.b16 %v5984, %v5972
        %v6105 = vpack.c.b16 %v5985, %v5973
        %v6106 = vpack.c.b16 %v5998, %v5986
        %v6107 = vpack.c.b16 %v5999, %v5987
        %v6108 = vpack.c.b16 %v6000, %v5988
        %v6109 = vpack.c.b16 %v6001, %v5989
        %v6110 = vpack.c.b16 %v6002, %v5990
        %v6111 = vpack.c.b16 %v6003, %v5991
        %v6112 = vpack.c.b16 %v6004, %v5992
        %v6113 = vpack.c.b16 %v6005, %v5993
        %v6114 = vpack.c.b16 %v6006, %v5994
        %v6115 = vpack.c.b16 %v6007, %v5995
        %v6116 = vpack.c.b16 %v6008, %v5996
        %v6117 = vpack.c.b16 %v6009, %v5997
        %v6118 = vpack.c.b16 %v6022, %v6010
        %v6119 = vpack.c.b16 %v6023, %v6011
        %v6120 = vpack.c.b16 %v6024, %v6012
        %v6121 = vpack.c.b16 %v6025, %v6013
        %v6122 = vpack.c.b16 %v6026, %v6014
        %v6123 = vpack.c.b16 %v6027, %v6015
        %v6124 = vpack.c.b16 %v6028, %v6016
        %v6125 = vpack.c.b16 %v6029, %v6017
        %v6126 = vpack.c.b16 %v6030, %v6018
        %v6127 = vpack.c.b16 %v6031, %v6019
        %v6128 = vpack.c.b16 %v6032, %v6020
        %v6129 = vpack.c.b16 %v6033, %v6021
        %6226 = vmatprep.subr.bf16.mxu0 %v6119
        %6227 = vmatpush1.bf16.msra.mxu0 %v6118
        %6228 = vmatprep.subr.bf16.mxu0 %v6107
        %6229 = vmatpush1.bf16.msra.mxu0 %v6106
        %6230 = vmatprep.subr.bf16.mxu0 %v6095
        %6231 = vmatpush1.bf16.msra.mxu0 %v6094
        %6232 = vmatprep.subr.bf16.mxu0 %v6083
        %6233 = vmatpush1.bf16.msra.mxu0 %v6082
        %6234 = vmatprep.subr.bf16.mxu0 %v6071
        %6235 = vmatpush1.bf16.msra.mxu0 %v6070
        %6236 = vmatprep.subr.bf16.mxu0 %v6059
        %6237 = vmatpush1.bf16.msra.mxu0 %v6058
        %6238 = vmatprep.subr.bf16.mxu0 %v6047
        %6239 = vmatpush1.bf16.msra.mxu0 %v6046
        %6240 = vmatprep.subr.bf16.mxu0 %v6035
        %6241 = vmatpush1.bf16.msra.mxu0 %v6034
        %6242 = vmatprep.subr.bf16.mxu0 0
        %6243 = vmatpush2.bf16.msra.mxu0 0
        %6244 = vmatprep.subr.bf16.mxu0 0
        %6245 = vmatpush2.bf16.msra.mxu0 0
        %6246 = vmatprep.subr.bf16.mxu0 0
        %6247 = vmatpush2.bf16.msra.mxu0 0
        %6248 = vmatprep.subr.bf16.mxu0 0
        %6249 = vmatpush2.bf16.msra.mxu0 0
        %6250 = vmatprep.subr.bf16.mxu0 0
        %6251 = vmatpush2.bf16.msra.mxu0 0
        %6252 = vmatprep.subr.bf16.mxu0 0
        %6253 = vmatpush2.bf16.msra.mxu0 0
        %6254 = vmatprep.subr.bf16.mxu0 0
        %6255 = vmatpush2.bf16.msra.mxu0 0
        %6256 = vmatprep.subr.bf16.mxu0 0
        %6257 = vmatpush2.bf16.msra.mxu0 0
        %6258 = vmatprep.mubr.bf16.mxu0 0
        %6259 = vmatmul.mubr.bf16.gmra.mxu0 %v2589
        %v6260 = vpop.f32.mrf.mxu0
        %v6261 = vadd.f32 %v5535, %v6260
        %v6262 = vpop.f32.mrf.mxu0
        %v6263 = vadd.f32 %v5537, %v6262
        %v6264 = vpop.f32.mrf.mxu0
        %v6265 = vpop.f32.mrf.mxu0
        %6266 = vdwg.mxu0
        %6267 = vmatprep.subr.bf16.mxu0 %v6121
        %6268 = vmatpush1.bf16.msra.mxu0 %v6120
        %6269 = vmatprep.subr.bf16.mxu0 %v6109
        %6270 = vmatpush1.bf16.msra.mxu0 %v6108
        %6271 = vmatprep.subr.bf16.mxu0 %v6097
        %6272 = vmatpush1.bf16.msra.mxu0 %v6096
        %6273 = vmatprep.subr.bf16.mxu0 %v6085
        %6274 = vmatpush1.bf16.msra.mxu0 %v6084
        %6275 = vmatprep.subr.bf16.mxu0 %v6073
        %6276 = vmatpush1.bf16.msra.mxu0 %v6072
        %6277 = vmatprep.subr.bf16.mxu0 %v6061
        %6278 = vmatpush1.bf16.msra.mxu0 %v6060
        %6279 = vmatprep.subr.bf16.mxu0 %v6049
        %6280 = vmatpush1.bf16.msra.mxu0 %v6048
        %6281 = vmatprep.subr.bf16.mxu0 %v6037
        %6282 = vmatpush1.bf16.msra.mxu0 %v6036
        %6283 = vmatprep.subr.bf16.mxu0 0
        %6284 = vmatpush2.bf16.msra.mxu0 0
        %6285 = vmatprep.subr.bf16.mxu0 0
        %6286 = vmatpush2.bf16.msra.mxu0 0
        %6287 = vmatprep.subr.bf16.mxu0 0
        %6288 = vmatpush2.bf16.msra.mxu0 0
        %6289 = vmatprep.subr.bf16.mxu0 0
        %6290 = vmatpush2.bf16.msra.mxu0 0
        %6291 = vmatprep.subr.bf16.mxu0 0
        %6292 = vmatpush2.bf16.msra.mxu0 0
        %6293 = vmatprep.subr.bf16.mxu0 0
        %6294 = vmatpush2.bf16.msra.mxu0 0
        %6295 = vmatprep.subr.bf16.mxu0 0
        %6296 = vmatpush2.bf16.msra.mxu0 0
        %6297 = vmatprep.subr.bf16.mxu0 0
        %6298 = vmatpush2.bf16.msra.mxu0 0
        %6299 = vmatprep.mubr.bf16.mxu0 0
        %6300 = vmatmul.mubr.bf16.gmra.mxu0 %v2589
        %v6301 = vpop.f32.mrf.mxu0
        %v6302 = vadd.f32 %v5576, %v6301
        %v6303 = vpop.f32.mrf.mxu0
        %v6304 = vadd.f32 %v5578, %v6303
        %v6305 = vpop.f32.mrf.mxu0
        %v6306 = vpop.f32.mrf.mxu0
        %6307 = vdwg.mxu0
        %6308 = vmatprep.subr.bf16.mxu0 %v6123
        %6309 = vmatpush1.bf16.msra.mxu0 %v6122
        %6310 = vmatprep.subr.bf16.mxu0 %v6111
        %6311 = vmatpush1.bf16.msra.mxu0 %v6110
        %6312 = vmatprep.subr.bf16.mxu0 %v6099
        %6313 = vmatpush1.bf16.msra.mxu0 %v6098
        %6314 = vmatprep.subr.bf16.mxu0 %v6087
        %6315 = vmatpush1.bf16.msra.mxu0 %v6086
        %6316 = vmatprep.subr.bf16.mxu0 %v6075
        %6317 = vmatpush1.bf16.msra.mxu0 %v6074
        %6318 = vmatprep.subr.bf16.mxu0 %v6063
        %6319 = vmatpush1.bf16.msra.mxu0 %v6062
        %6320 = vmatprep.subr.bf16.mxu0 %v6051
        %6321 = vmatpush1.bf16.msra.mxu0 %v6050
        %6322 = vmatprep.subr.bf16.mxu0 %v6039
        %6323 = vmatpush1.bf16.msra.mxu0 %v6038
        %6324 = vmatprep.subr.bf16.mxu0 0
        %6325 = vmatpush2.bf16.msra.mxu0 0
        %6326 = vmatprep.subr.bf16.mxu0 0
        %6327 = vmatpush2.bf16.msra.mxu0 0
        %6328 = vmatprep.subr.bf16.mxu0 0
        %6329 = vmatpush2.bf16.msra.mxu0 0
        %6330 = vmatprep.subr.bf16.mxu0 0
        %6331 = vmatpush2.bf16.msra.mxu0 0
        %6332 = vmatprep.subr.bf16.mxu0 0
        %6333 = vmatpush2.bf16.msra.mxu0 0
        %6334 = vmatprep.subr.bf16.mxu0 0
        %6335 = vmatpush2.bf16.msra.mxu0 0
        %6336 = vmatprep.subr.bf16.mxu0 0
        %6337 = vmatpush2.bf16.msra.mxu0 0
        %6338 = vmatprep.subr.bf16.mxu0 0
        %6339 = vmatpush2.bf16.msra.mxu0 0
        %6340 = vmatprep.mubr.bf16.mxu0 0
        %6341 = vmatmul.mubr.bf16.gmra.mxu0 %v2589
        %v6342 = vpop.f32.mrf.mxu0
        %v6343 = vadd.f32 %v5617, %v6342
        %v6344 = vpop.f32.mrf.mxu0
        %v6345 = vadd.f32 %v5619, %v6344
        %v6346 = vpop.f32.mrf.mxu0
        %v6347 = vpop.f32.mrf.mxu0
        %6348 = vdwg.mxu0
        %6349 = vmatprep.subr.bf16.mxu0 %v6125
        %6350 = vmatpush1.bf16.msra.mxu0 %v6124
        %6351 = vmatprep.subr.bf16.mxu0 %v6113
        %6352 = vmatpush1.bf16.msra.mxu0 %v6112
        %6353 = vmatprep.subr.bf16.mxu0 %v6101
        %6354 = vmatpush1.bf16.msra.mxu0 %v6100
        %6355 = vmatprep.subr.bf16.mxu0 %v6089
        %6356 = vmatpush1.bf16.msra.mxu0 %v6088
        %6357 = vmatprep.subr.bf16.mxu0 %v6077
        %6358 = vmatpush1.bf16.msra.mxu0 %v6076
        %6359 = vmatprep.subr.bf16.mxu0 %v6065
        %6360 = vmatpush1.bf16.msra.mxu0 %v6064
        %6361 = vmatprep.subr.bf16.mxu0 %v6053
        %6362 = vmatpush1.bf16.msra.mxu0 %v6052
        %6363 = vmatprep.subr.bf16.mxu0 %v6041
        %6364 = vmatpush1.bf16.msra.mxu0 %v6040
        %6365 = vmatprep.subr.bf16.mxu0 0
        %6366 = vmatpush2.bf16.msra.mxu0 0
        %6367 = vmatprep.subr.bf16.mxu0 0
        %6368 = vmatpush2.bf16.msra.mxu0 0
        %6369 = vmatprep.subr.bf16.mxu0 0
        %6370 = vmatpush2.bf16.msra.mxu0 0
        %6371 = vmatprep.subr.bf16.mxu0 0
        %6372 = vmatpush2.bf16.msra.mxu0 0
        %6373 = vmatprep.subr.bf16.mxu0 0
        %6374 = vmatpush2.bf16.msra.mxu0 0
        %6375 = vmatprep.subr.bf16.mxu0 0
        %6376 = vmatpush2.bf16.msra.mxu0 0
        %6377 = vmatprep.subr.bf16.mxu0 0
        %6378 = vmatpush2.bf16.msra.mxu0 0
        %6379 = vmatprep.subr.bf16.mxu0 0
        %6380 = vmatpush2.bf16.msra.mxu0 0
        %6381 = vmatprep.mubr.bf16.mxu0 0
        %6382 = vmatmul.mubr.bf16.gmra.mxu0 %v2589
        %v6383 = vpop.f32.mrf.mxu0
        %v6384 = vadd.f32 %v5658, %v6383
        %v6385 = vpop.f32.mrf.mxu0
        %v6386 = vadd.f32 %v5660, %v6385
        %v6387 = vpop.f32.mrf.mxu0
        %v6388 = vpop.f32.mrf.mxu0
        %6389 = vdwg.mxu0
        %6390 = vmatprep.subr.bf16.mxu0 %v6127
        %6391 = vmatpush1.bf16.msra.mxu0 %v6126
        %6392 = vmatprep.subr.bf16.mxu0 %v6115
        %6393 = vmatpush1.bf16.msra.mxu0 %v6114
        %6394 = vmatprep.subr.bf16.mxu0 %v6103
        %6395 = vmatpush1.bf16.msra.mxu0 %v6102
        %6396 = vmatprep.subr.bf16.mxu0 %v6091
        %6397 = vmatpush1.bf16.msra.mxu0 %v6090
        %6398 = vmatprep.subr.bf16.mxu0 %v6079
        %6399 = vmatpush1.bf16.msra.mxu0 %v6078
        %6400 = vmatprep.subr.bf16.mxu0 %v6067
        %6401 = vmatpush1.bf16.msra.mxu0 %v6066
        %6402 = vmatprep.subr.bf16.mxu0 %v6055
        %6403 = vmatpush1.bf16.msra.mxu0 %v6054
        %6404 = vmatprep.subr.bf16.mxu0 %v6043
        %6405 = vmatpush1.bf16.msra.mxu0 %v6042
        %6406 = vmatprep.subr.bf16.mxu0 0
        %6407 = vmatpush2.bf16.msra.mxu0 0
        %6408 = vmatprep.subr.bf16.mxu0 0
        %6409 = vmatpush2.bf16.msra.mxu0 0
        %6410 = vmatprep.subr.bf16.mxu0 0
        %6411 = vmatpush2.bf16.msra.mxu0 0
        %6412 = vmatprep.subr.bf16.mxu0 0
        %6413 = vmatpush2.bf16.msra.mxu0 0
        %6414 = vmatprep.subr.bf16.mxu0 0
        %6415 = vmatpush2.bf16.msra.mxu0 0
        %6416 = vmatprep.subr.bf16.mxu0 0
        %6417 = vmatpush2.bf16.msra.mxu0 0
        %6418 = vmatprep.subr.bf16.mxu0 0
        %6419 = vmatpush2.bf16.msra.mxu0 0
        %6420 = vmatprep.subr.bf16.mxu0 0
        %6421 = vmatpush2.bf16.msra.mxu0 0
        %6422 = vmatprep.mubr.bf16.mxu0 0
        %6423 = vmatmul.mubr.bf16.gmra.mxu0 %v2589
        %v6424 = vpop.f32.mrf.mxu0
        %v6425 = vadd.f32 %v5699, %v6424
        %v6426 = vpop.f32.mrf.mxu0
        %v6427 = vadd.f32 %v5701, %v6426
        %v6428 = vpop.f32.mrf.mxu0
        %v6429 = vpop.f32.mrf.mxu0
        %6430 = vdwg.mxu0
        %6431 = vmatprep.subr.bf16.mxu0 %v6129
        %6432 = vmatpush1.bf16.msra.mxu0 %v6128
        %6433 = vmatprep.subr.bf16.mxu0 %v6117
        %6434 = vmatpush1.bf16.msra.mxu0 %v6116
        %6435 = vmatprep.subr.bf16.mxu0 %v6105
        %6436 = vmatpush1.bf16.msra.mxu0 %v6104
        %6437 = vmatprep.subr.bf16.mxu0 %v6093
        %6438 = vmatpush1.bf16.msra.mxu0 %v6092
        %6439 = vmatprep.subr.bf16.mxu0 %v6081
        %6440 = vmatpush1.bf16.msra.mxu0 %v6080
        %6441 = vmatprep.subr.bf16.mxu0 %v6069
        %6442 = vmatpush1.bf16.msra.mxu0 %v6068
        %6443 = vmatprep.subr.bf16.mxu0 %v6057
        %6444 = vmatpush1.bf16.msra.mxu0 %v6056
        %6445 = vmatprep.subr.bf16.mxu0 %v6045
        %6446 = vmatpush1.bf16.msra.mxu0 %v6044
        %6447 = vmatprep.subr.bf16.mxu0 0
        %6448 = vmatpush2.bf16.msra.mxu0 0
        %6449 = vmatprep.subr.bf16.mxu0 0
        %6450 = vmatpush2.bf16.msra.mxu0 0
        %6451 = vmatprep.subr.bf16.mxu0 0
        %6452 = vmatpush2.bf16.msra.mxu0 0
        %6453 = vmatprep.subr.bf16.mxu0 0
        %6454 = vmatpush2.bf16.msra.mxu0 0
        %6455 = vmatprep.subr.bf16.mxu0 0
        %6456 = vmatpush2.bf16.msra.mxu0 0
        %6457 = vmatprep.subr.bf16.mxu0 0
        %6458 = vmatpush2.bf16.msra.mxu0 0
        %6459 = vmatprep.subr.bf16.mxu0 0
        %6460 = vmatpush2.bf16.msra.mxu0 0
        %6461 = vmatprep.subr.bf16.mxu0 0
        %6462 = vmatpush2.bf16.msra.mxu0 0
        %6463 = vmatprep.mubr.bf16.mxu0 0
        %6464 = vmatmul.mubr.bf16.gmra.mxu0 %v2589
        %v6465 = vpop.f32.mrf.mxu0
        %v6466 = vadd.f32 %v5740, %v6465
        %v6467 = vpop.f32.mrf.mxu0
        %v6468 = vadd.f32 %v5742, %v6467
        %v6469 = vpop.f32.mrf.mxu0
        %v6470 = vpop.f32.mrf.mxu0
        %6471 = vdwg.mxu0
        %v6472 = vld [vmem:[%s999 + $0xc] sm:$0xff]
        %v6473 = vld [vmem:[%s999 + $0x14] sm:$0xf]
        %v6476 = vlaneseq
        %v6477 = vshrl.u32 %v6476, 7
        %v6478 = vsub.s32 0, %v6477
        %v6479 = vrot.slane %v6472, %v6478
        %v6480 = vlaneseq
        %v6481 = vshrl.u32 %v6480, 7
        %v6482 = vsub.s32 1, %v6481
        %v6483 = vrot.slane %v6472, %v6482
        %v6484 = vlaneseq
        %v6485 = vshrl.u32 %v6484, 7
        %v6486 = vsub.s32 2, %v6485
        %v6487 = vrot.slane %v6472, %v6486
        %v6488 = vlaneseq
        %v6489 = vshrl.u32 %v6488, 7
        %v6490 = vsub.s32 3, %v6489
        %v6491 = vrot.slane %v6472, %v6490
        %v6492 = vlaneseq
        %v6493 = vshrl.u32 %v6492, 7
        %v6494 = vsub.s32 4, %v6493
        %v6495 = vrot.slane %v6472, %v6494
        %v6496 = vlaneseq
        %v6497 = vshrl.u32 %v6496, 7
        %v6498 = vsub.s32 5, %v6497
        %v6499 = vrot.slane %v6472, %v6498
        %v6500 = vlaneseq
        %v6501 = vshrl.u32 %v6500, 7
        %v6502 = vsub.s32 6, %v6501
        %v6503 = vrot.slane %v6472, %v6502
        %v6504 = vlaneseq
        %v6505 = vshrl.u32 %v6504, 7
        %v6506 = vsub.s32 7, %v6505
        %v6507 = vrot.slane %v6472, %v6506
        %v6508 = vlaneseq
        %v6509 = vshrl.u32 %v6508, 7
        %v6510 = vsub.s32 0, %v6509
        %v6511 = vrot.slane %v6473, %v6510
        %v6512 = vlaneseq
        %v6513 = vshrl.u32 %v6512, 7
        %v6514 = vsub.s32 1, %v6513
        %v6515 = vrot.slane %v6473, %v6514
        %v6516 = vlaneseq
        %v6517 = vshrl.u32 %v6516, 7
        %v6518 = vsub.s32 2, %v6517
        %v6519 = vrot.slane %v6473, %v6518
        %v6520 = vlaneseq
        %v6521 = vshrl.u32 %v6520, 7
        %v6522 = vsub.s32 3, %v6521
        %v6523 = vrot.slane %v6473, %v6522
        %v6536 = vadd.f32 %v6261, %v6479
        %v6537 = vadd.f32 %v6263, %v6483
        %v6538 = vadd.f32 %v6302, %v6487
        %v6539 = vadd.f32 %v6304, %v6491
        %v6540 = vadd.f32 %v6343, %v6495
        %v6541 = vadd.f32 %v6345, %v6499
        %v6542 = vadd.f32 %v6384, %v6503
        %v6543 = vadd.f32 %v6386, %v6507
        %v6544 = vadd.f32 %v6425, %v6511
        %v6545 = vadd.f32 %v6427, %v6515
        %v6546 = vadd.f32 %v6466, %v6519
        %v6547 = vadd.f32 %v6468, %v6523
        %v6548 = vsel %vm3476, %v6536, -1e+09
        %v6549 = vsel %vm3477, %v6537, -1e+09
        %v6550 = vsel %vm3478, %v6538, -1e+09
        %v6551 = vsel %vm3479, %v6539, -1e+09
        %v6552 = vsel %vm3476, %v6540, -1e+09
        %v6553 = vsel %vm3477, %v6541, -1e+09
        %v6554 = vsel %vm3478, %v6542, -1e+09
        %v6555 = vsel %vm3479, %v6543, -1e+09
        %v6556 = vmax.f32 %v6548, %v6549
        %v6557 = vmax.f32 %v6550, %v6551
        %v6558 = vmax.f32 %v6556, %v6557
        %6559 = vmax.xlane.f32.xlu0 %v6558
        %v6560 = vpop.xlane.xlu0 %6559
        %v6561 = vsub.f32 %v6548, %v6560
        %v6562 = vsub.f32 %v6549, %v6560
        %v6563 = vsub.f32 %v6550, %v6560
        %v6564 = vsub.f32 %v6551, %v6560
        %v6565 = vmul.f32 %v6561, 1.442695
        %v6566 = vpow.pop %v6565
        %v6567 = vmul.f32 %v6562, 1.442695
        %v6568 = vpow.pop %v6567
        %v6569 = vmul.f32 %v6563, 1.442695
        %v6570 = vpow.pop %v6569
        %v6571 = vmul.f32 %v6564, 1.442695
        %v6572 = vpow.pop %v6571
        %v6573 = vadd.f32 %v6566, %v6568
        %v6574 = vadd.f32 %v6573, %v6570
        %v6575 = vadd.f32 %v6574, %v6572
        %6576 = vadd.xlane.f32.xlu0 %v6575
        %v6577 = vpop.xlane.xlu0 %6576
        %v6578 = vrcp.pop %v6577
        %v6579 = vmul.f32 %v6566, %v6578
        %v6580 = vmul.f32 %v6568, %v6578
        %v6581 = vmul.f32 %v6570, %v6578
        %v6582 = vmul.f32 %v6572, %v6578
        %v6583 = vmul.f32 %v6579, 0.5
        %v6584 = vmul.f32 %v6580, 0.5
        %v6585 = vmul.f32 %v6581, 0.5
        %v6586 = vmul.f32 %v6582, 0.5
        %v6587 = vadd.f32 %v6583, 0.001
        %v6588 = vadd.f32 %v6584, 0.001
        %v6589 = vadd.f32 %v6585, 0.001
        %v6590 = vadd.f32 %v6586, 0.001
        %v6591 = vmul.f32 %v6587, 200.0
        %v6592 = vmul.f32 %v6588, 200.0
        %v6593 = vmul.f32 %v6589, 200.0
        %v6594 = vmul.f32 %v6590, 200.0
        %v6595 = vmax.f32 %v6552, %v6553
        %v6596 = vmax.f32 %v6554, %v6555
        %v6597 = vmax.f32 %v6595, %v6596
        %6598 = vmax.xlane.f32.xlu0 %v6597
        %v6599 = vpop.xlane.xlu0 %6598
        %v6600 = vsub.f32 %v6552, %v6599
        %v6601 = vsub.f32 %v6553, %v6599
        %v6602 = vsub.f32 %v6554, %v6599
        %v6603 = vsub.f32 %v6555, %v6599
        %v6604 = vmul.f32 %v6600, 1.442695
        %v6605 = vpow.pop %v6604
        %v6606 = vmul.f32 %v6601, 1.442695
        %v6607 = vpow.pop %v6606
        %v6608 = vmul.f32 %v6602, 1.442695
        %v6609 = vpow.pop %v6608
        %v6610 = vmul.f32 %v6603, 1.442695
        %v6611 = vpow.pop %v6610
        %v6612 = vadd.f32 %v6605, %v6607
        %v6613 = vadd.f32 %v6612, %v6609
        %v6614 = vadd.f32 %v6613, %v6611
        %6615 = vadd.xlane.f32.xlu0 %v6614
        %v6616 = vpop.xlane.xlu0 %6615
        %v6617 = vrcp.pop %v6616
        %v6618 = vmul.f32 %v6605, %v6617
        %v6619 = vmul.f32 %v6607, %v6617
        %v6620 = vmul.f32 %v6609, %v6617
        %v6621 = vmul.f32 %v6611, %v6617
        %v6622 = vmul.f32 %v6618, 0.5
        %v6623 = vmul.f32 %v6619, 0.5
        %v6624 = vmul.f32 %v6620, 0.5
        %v6625 = vmul.f32 %v6621, 0.5
        %v6626 = vadd.f32 %v6622, 0.001
        %v6627 = vadd.f32 %v6623, 0.001
        %v6628 = vadd.f32 %v6624, 0.001
        %v6629 = vadd.f32 %v6625, 0.001
        %v6630 = vmul.f32 %v6626, 200.0
        %v6631 = vmul.f32 %v6627, 200.0
        %v6632 = vmul.f32 %v6628, 200.0
        %v6633 = vmul.f32 %v6629, 200.0
        %v6634 = vsel %vm3476, %v6591, 0.0
        %v6635 = vsel %vm3477, %v6592, 0.0
        %v6636 = vsel %vm3478, %v6593, 0.0
        %v6637 = vsel %vm3479, %v6594, 0.0
        %v6638 = vsel %vm3476, %v6630, 0.0
        %v6639 = vsel %vm3477, %v6631, 0.0
        %v6640 = vsel %vm3478, %v6632, 0.0
        %v6641 = vsel %vm3479, %v6633, 0.0
        %v6642 = vmax.f32 %v6544, 0.0
        %v6643 = vmax.f32 %v6545, 0.0
        %v6644 = vmax.f32 %v6546, 0.0
        %v6645 = vmax.f32 %v6547, 0.0
        %v6646 = vadd.f32 %v6642, 0.001
        %v6647 = vadd.f32 %v6643, 0.001
        %v6648 = vadd.f32 %v6644, 0.001
        %v6649 = vadd.f32 %v6645, 0.001
        %v6650 = vand.u32 2147483647, %v6544
        %v6651 = vand.u32 2147483647, %v6545
        %v6652 = vand.u32 2147483647, %v6546
        %v6653 = vand.u32 2147483647, %v6547
        %v6654 = vsub.f32 0.0, %v6650
        %v6655 = vsub.f32 0.0, %v6651
        %v6656 = vsub.f32 0.0, %v6652
        %v6657 = vsub.f32 0.0, %v6653
        %v6658 = vmul.f32 %v6654, 1.442695
        %v6659 = vpow.pop %v6658
        %v6660 = vmul.f32 %v6655, 1.442695
        %v6661 = vpow.pop %v6660
        %v6662 = vmul.f32 %v6656, 1.442695
        %v6663 = vpow.pop %v6662
        %v6664 = vmul.f32 %v6657, 1.442695
        %v6665 = vpow.pop %v6664
        %v6666 = vadd.f32 %v6659, 1.0
        %v6667 = vadd.f32 %v6661, 1.0
        %v6668 = vadd.f32 %v6663, 1.0
        %v6669 = vadd.f32 %v6665, 1.0
        %v6670 = vlog2.pop %v6666
        %v6671 = vmul.f32 %v6670, 0.6931472
        %v6672 = vlog2.pop %v6667
        %v6673 = vmul.f32 %v6672, 0.6931472
        %v6674 = vlog2.pop %v6668
        %v6675 = vmul.f32 %v6674, 0.6931472
        %v6676 = vlog2.pop %v6669
        %v6677 = vmul.f32 %v6676, 0.6931472
        %v6678 = vadd.f32 %v6646, %v6671
        %v6679 = vadd.f32 %v6647, %v6673
        %v6680 = vadd.f32 %v6648, %v6675
        %v6681 = vadd.f32 %v6649, %v6677
        %v6682 = vpack.c.bf16 %v6638, %v6638
        %v6683 = vpack.c.bf16 %v6639, %v6639
        %v6684 = vpack.c.bf16 %v6640, %v6640
        %v6685 = vpack.c.bf16 %v6641, %v6641
        %6686 = vmatprep.subr.bf16.mxu0 %v4031
        %6687 = vmatpush1.bf16.msra.mxu0 %v4030
        %6688 = vmatprep.subr.bf16.mxu0 %v4027
        %6689 = vmatpush1.bf16.msra.mxu0 %v4026
        %6690 = vmatprep.subr.bf16.mxu0 %v4023
        %6691 = vmatpush1.bf16.msra.mxu0 %v4022
        %6692 = vmatprep.subr.bf16.mxu0 %v4019
        %6693 = vmatpush1.bf16.msra.mxu0 %v4018
        %6694 = vmatprep.subr.bf16.mxu0 %v4015
        %6695 = vmatpush1.bf16.msra.mxu0 %v4014
        %6696 = vmatprep.subr.bf16.mxu0 %v4011
        %6697 = vmatpush1.bf16.msra.mxu0 %v4010
        %6698 = vmatprep.subr.bf16.mxu0 %v4007
        %6699 = vmatpush1.bf16.msra.mxu0 %v4006
        %6700 = vmatprep.subr.bf16.mxu0 %v4003
        %6701 = vmatpush1.bf16.msra.mxu0 %v4002
        %6702 = vmatprep.subr.bf16.mxu0 %v4063
        %6703 = vmatpush2.bf16.msra.mxu0 %v4062
        %6704 = vmatprep.subr.bf16.mxu0 %v4059
        %6705 = vmatpush2.bf16.msra.mxu0 %v4058
        %6706 = vmatprep.subr.bf16.mxu0 %v4055
        %6707 = vmatpush2.bf16.msra.mxu0 %v4054
        %6708 = vmatprep.subr.bf16.mxu0 %v4051
        %6709 = vmatpush2.bf16.msra.mxu0 %v4050
        %6710 = vmatprep.subr.bf16.mxu0 %v4047
        %6711 = vmatpush2.bf16.msra.mxu0 %v4046
        %6712 = vmatprep.subr.bf16.mxu0 %v4043
        %6713 = vmatpush2.bf16.msra.mxu0 %v4042
        %6714 = vmatprep.subr.bf16.mxu0 %v4039
        %6715 = vmatpush2.bf16.msra.mxu0 %v4038
        %6716 = vmatprep.subr.bf16.mxu0 %v4035
        %6717 = vmatpush2.bf16.msra.mxu0 %v4034
        %6718 = vmatprep.mubr.bf16.mxu0 %v6683
        %6719 = vmatmul.mubr.bf16.gmra.mxu0 %v6682
        %v6720 = vpop.f32.mrf.mxu0
        %v6721 = vadd.f32 0.0, %v6720
        %v6722 = vpop.f32.mrf.mxu0
        %v6723 = vadd.f32 0.0, %v6722
        %v6724 = vpop.f32.mrf.mxu0
        %v6725 = vpop.f32.mrf.mxu0
        %6726 = vdwg.mxu0
        %6727 = vmatprep.subr.bf16.mxu0 %v4095
        %6728 = vmatpush1.bf16.msra.mxu0 %v4094
        %6729 = vmatprep.subr.bf16.mxu0 %v4091
        %6730 = vmatpush1.bf16.msra.mxu0 %v4090
        %6731 = vmatprep.subr.bf16.mxu0 %v4087
        %6732 = vmatpush1.bf16.msra.mxu0 %v4086
        %6733 = vmatprep.subr.bf16.mxu0 %v4083
        %6734 = vmatpush1.bf16.msra.mxu0 %v4082
        %6735 = vmatprep.subr.bf16.mxu0 %v4079
        %6736 = vmatpush1.bf16.msra.mxu0 %v4078
        %6737 = vmatprep.subr.bf16.mxu0 %v4075
        %6738 = vmatpush1.bf16.msra.mxu0 %v4074
        %6739 = vmatprep.subr.bf16.mxu0 %v4071
        %6740 = vmatpush1.bf16.msra.mxu0 %v4070
        %6741 = vmatprep.subr.bf16.mxu0 %v4067
        %6742 = vmatpush1.bf16.msra.mxu0 %v4066
        %6743 = vmatprep.subr.bf16.mxu0 %v4127
        %6744 = vmatpush2.bf16.msra.mxu0 %v4126
        %6745 = vmatprep.subr.bf16.mxu0 %v4123
        %6746 = vmatpush2.bf16.msra.mxu0 %v4122
        %6747 = vmatprep.subr.bf16.mxu0 %v4119
        %6748 = vmatpush2.bf16.msra.mxu0 %v4118
        %6749 = vmatprep.subr.bf16.mxu0 %v4115
        %6750 = vmatpush2.bf16.msra.mxu0 %v4114
        %6751 = vmatprep.subr.bf16.mxu0 %v4111
        %6752 = vmatpush2.bf16.msra.mxu0 %v4110
        %6753 = vmatprep.subr.bf16.mxu0 %v4107
        %6754 = vmatpush2.bf16.msra.mxu0 %v4106
        %6755 = vmatprep.subr.bf16.mxu0 %v4103
        %6756 = vmatpush2.bf16.msra.mxu0 %v4102
        %6757 = vmatprep.subr.bf16.mxu0 %v4099
        %6758 = vmatpush2.bf16.msra.mxu0 %v4098
        %6759 = vmatprep.mubr.bf16.mxu0 %v6685
        %6760 = vmatmul.mubr.bf16.gmra.mxu0 %v6684
        %v6761 = vpop.f32.mrf.mxu0
        %v6762 = vadd.f32 %v6721, %v6761
        %v6763 = vpop.f32.mrf.mxu0
        %v6764 = vadd.f32 %v6723, %v6763
        %v6765 = vpop.f32.mrf.mxu0
        %v6766 = vpop.f32.mrf.mxu0
        %6767 = vdwg.mxu0
        %6768 = vmatprep.subr.bf16.mxu0 %v4033
        %6769 = vmatpush1.bf16.msra.mxu0 %v4032
        %6770 = vmatprep.subr.bf16.mxu0 %v4029
        %6771 = vmatpush1.bf16.msra.mxu0 %v4028
        %6772 = vmatprep.subr.bf16.mxu0 %v4025
        %6773 = vmatpush1.bf16.msra.mxu0 %v4024
        %6774 = vmatprep.subr.bf16.mxu0 %v4021
        %6775 = vmatpush1.bf16.msra.mxu0 %v4020
        %6776 = vmatprep.subr.bf16.mxu0 %v4017
        %6777 = vmatpush1.bf16.msra.mxu0 %v4016
        %6778 = vmatprep.subr.bf16.mxu0 %v4013
        %6779 = vmatpush1.bf16.msra.mxu0 %v4012
        %6780 = vmatprep.subr.bf16.mxu0 %v4009
        %6781 = vmatpush1.bf16.msra.mxu0 %v4008
        %6782 = vmatprep.subr.bf16.mxu0 %v4005
        %6783 = vmatpush1.bf16.msra.mxu0 %v4004
        %6784 = vmatprep.subr.bf16.mxu0 %v4065
        %6785 = vmatpush2.bf16.msra.mxu0 %v4064
        %6786 = vmatprep.subr.bf16.mxu0 %v4061
        %6787 = vmatpush2.bf16.msra.mxu0 %v4060
        %6788 = vmatprep.subr.bf16.mxu0 %v4057
        %6789 = vmatpush2.bf16.msra.mxu0 %v4056
        %6790 = vmatprep.subr.bf16.mxu0 %v4053
        %6791 = vmatpush2.bf16.msra.mxu0 %v4052
        %6792 = vmatprep.subr.bf16.mxu0 %v4049
        %6793 = vmatpush2.bf16.msra.mxu0 %v4048
        %6794 = vmatprep.subr.bf16.mxu0 %v4045
        %6795 = vmatpush2.bf16.msra.mxu0 %v4044
        %6796 = vmatprep.subr.bf16.mxu0 %v4041
        %6797 = vmatpush2.bf16.msra.mxu0 %v4040
        %6798 = vmatprep.subr.bf16.mxu0 %v4037
        %6799 = vmatpush2.bf16.msra.mxu0 %v4036
        %6800 = vmatprep.mubr.bf16.mxu0 %v6683
        %6801 = vmatmul.mubr.bf16.gmra.mxu0 %v6682
        %v6802 = vpop.f32.mrf.mxu0
        %v6803 = vadd.f32 0.0, %v6802
        %v6804 = vpop.f32.mrf.mxu0
        %v6805 = vadd.f32 0.0, %v6804
        %v6806 = vpop.f32.mrf.mxu0
        %v6807 = vpop.f32.mrf.mxu0
        %6808 = vdwg.mxu0
        %6809 = vmatprep.subr.bf16.mxu0 %v4097
        %6810 = vmatpush1.bf16.msra.mxu0 %v4096
        %6811 = vmatprep.subr.bf16.mxu0 %v4093
        %6812 = vmatpush1.bf16.msra.mxu0 %v4092
        %6813 = vmatprep.subr.bf16.mxu0 %v4089
        %6814 = vmatpush1.bf16.msra.mxu0 %v4088
        %6815 = vmatprep.subr.bf16.mxu0 %v4085
        %6816 = vmatpush1.bf16.msra.mxu0 %v4084
        %6817 = vmatprep.subr.bf16.mxu0 %v4081
        %6818 = vmatpush1.bf16.msra.mxu0 %v4080
        %6819 = vmatprep.subr.bf16.mxu0 %v4077
        %6820 = vmatpush1.bf16.msra.mxu0 %v4076
        %6821 = vmatprep.subr.bf16.mxu0 %v4073
        %6822 = vmatpush1.bf16.msra.mxu0 %v4072
        %6823 = vmatprep.subr.bf16.mxu0 %v4069
        %6824 = vmatpush1.bf16.msra.mxu0 %v4068
        %6825 = vmatprep.subr.bf16.mxu0 %v4129
        %6826 = vmatpush2.bf16.msra.mxu0 %v4128
        %6827 = vmatprep.subr.bf16.mxu0 %v4125
        %6828 = vmatpush2.bf16.msra.mxu0 %v4124
        %6829 = vmatprep.subr.bf16.mxu0 %v4121
        %6830 = vmatpush2.bf16.msra.mxu0 %v4120
        %6831 = vmatprep.subr.bf16.mxu0 %v4117
        %6832 = vmatpush2.bf16.msra.mxu0 %v4116
        %6833 = vmatprep.subr.bf16.mxu0 %v4113
        %6834 = vmatpush2.bf16.msra.mxu0 %v4112
        %6835 = vmatprep.subr.bf16.mxu0 %v4109
        %6836 = vmatpush2.bf16.msra.mxu0 %v4108
        %6837 = vmatprep.subr.bf16.mxu0 %v4105
        %6838 = vmatpush2.bf16.msra.mxu0 %v4104
        %6839 = vmatprep.subr.bf16.mxu0 %v4101
        %6840 = vmatpush2.bf16.msra.mxu0 %v4100
        %6841 = vmatprep.mubr.bf16.mxu0 %v6685
        %6842 = vmatmul.mubr.bf16.gmra.mxu0 %v6684
        %v6843 = vpop.f32.mrf.mxu0
        %v6844 = vadd.f32 %v6803, %v6843
        %v6845 = vpop.f32.mrf.mxu0
        %v6846 = vadd.f32 %v6805, %v6845
        %v6847 = vpop.f32.mrf.mxu0
        %v6848 = vpop.f32.mrf.mxu0
        %6849 = vdwg.mxu0
        %v6850 = vsub.f32 %v6762, 100.0
        %v6851 = vsub.f32 %v6764, 100.0
        %v6852 = vsub.f32 %v6844, 100.0
        %v6853 = vsub.f32 %v6846, 100.0
        %6854 = vset.pattern.permute.xlu0 1
        %6855 = vperm.xlu0 %6854, %v4426
        %v6856 = vpop.permute.xlu0 %6855
        %vm6858 = vcmp.le.f32.partialorder %v6850, %v6856
        %vm6859 = vcmp.le.f32.partialorder %v6851, %v6856
        %vm6860 = vcmp.le.f32.partialorder %v6852, %v6856
        %vm6861 = vcmp.le.f32.partialorder %v6853, %v6856
        %vm6862 = vmand %vm4427, %vm6858
        %vm6863 = vmand %vm4428, %vm6859
        %vm6864 = vmand %vm4429, %vm6860
        %vm6865 = vmand %vm4430, %vm6861
        %v6866 = vsel %vm6862, 1, 0
        %v6867 = vsel %vm6863, 1, 0
        %v6868 = vsel %vm6864, 1, 0
        %v6869 = vsel %vm6865, 1, 0
        %v6870 = vadd.s32 %v6866, %v6867
        %v6871 = vadd.s32 %v6868, %v6869
        %v6872 = vadd.s32 %v6870, %v6871
        %v6873 = vand.u32 %v6872, 65535
        %v6874 = vshrl.u32 %v6872, 16
        %v6875 = vcvt.s32.f32 %v6873
        %v6876 = vcvt.s32.f32 %v6874
        %6877 = vadd.xlane.f32.xlu0 %v6875
        %v6878 = vpop.xlane.xlu0 %6877
        %6879 = vadd.xlane.f32.xlu0 %v6876
        %v6880 = vpop.xlane.xlu0 %6879
        %v6881 = vcvt.f32.s32 %v6878
        %v6882 = vcvt.f32.s32 %v6880
        %v6883 = vshll.u32 %v6882, 16
        %v6884 = vadd.s32 %v6883, %v6881
        %vm6885 = vcmp.eq.s32.totalorder %v2222, %v6884
        %vm6886 = vcmp.eq.s32.totalorder %v2223, %v6884
        %vm6887 = vcmp.eq.s32.totalorder %v2224, %v6884
        %vm6888 = vcmp.eq.s32.totalorder %v2225, %v6884
        %vm6889 = vcmp.lt.s32.totalorder %v2222, %v6884
        %vm6890 = vcmp.lt.s32.totalorder %v2223, %v6884
        %vm6891 = vcmp.lt.s32.totalorder %v2224, %v6884
        %vm6892 = vcmp.lt.s32.totalorder %v2225, %v6884
        %v6893 = vsel %vm6885, %v6634, 0.0
        %v6894 = vsel %vm6886, %v6635, 0.0
        %v6895 = vsel %vm6887, %v6636, 0.0
        %v6896 = vsel %vm6888, %v6637, 0.0
        %v6897 = vadd.f32 %v6893, %v6894
        %v6898 = vadd.f32 %v6897, %v6895
        %v6899 = vadd.f32 %v6898, %v6896
        %6900 = vadd.xlane.f32.xlu0 %v6899
        %v6901 = vpop.xlane.xlu0 %6900
        %v6902 = vsel %vm6885, %v6638, 0.0
        %v6903 = vsel %vm6886, %v6639, 0.0
        %v6904 = vsel %vm6887, %v6640, 0.0
        %v6905 = vsel %vm6888, %v6641, 0.0
        %v6906 = vadd.f32 %v6902, %v6903
        %v6907 = vadd.f32 %v6906, %v6904
        %v6908 = vadd.f32 %v6907, %v6905
        %6909 = vadd.xlane.f32.xlu0 %v6908
        %v6910 = vpop.xlane.xlu0 %6909
        %v6911 = vsel %vm6889, %v6634, 0.0
        %v6912 = vsel %vm6890, %v6635, 0.0
        %v6913 = vsel %vm6891, %v6636, 0.0
        %v6914 = vsel %vm6892, %v6637, 0.0
        %v6915 = vadd.f32 %v6911, %v6912
        %v6916 = vadd.f32 %v6915, %v6913
        %v6917 = vadd.f32 %v6916, %v6914
        %6918 = vadd.xlane.f32.xlu0 %v6917
        %v6919 = vpop.xlane.xlu0 %6918
        %v6920 = vadd.f32 %v6919, -100.0
        %v6921 = vsel %vm6889, %v6638, 0.0
        %v6922 = vsel %vm6890, %v6639, 0.0
        %v6923 = vsel %vm6891, %v6640, 0.0
        %v6924 = vsel %vm6892, %v6641, 0.0
        %v6925 = vadd.f32 %v6921, %v6922
        %v6926 = vadd.f32 %v6925, %v6923
        %v6927 = vadd.f32 %v6926, %v6924
        %6928 = vadd.xlane.f32.xlu0 %v6927
        %v6929 = vpop.xlane.xlu0 %6928
        %v6930 = vadd.f32 %v6929, -100.0
        %vm6931 = vcmp.eq.s32.totalorder %v6884, 499
        %v6932 = vsel %vm6885, %v6678, 0.0
        %v6933 = vsel %vm6886, %v6679, 0.0
        %v6934 = vsel %vm6887, %v6680, 0.0
        %v6935 = vsel %vm6888, %v6681, 0.0
        %v6936 = vadd.f32 %v6932, %v6933
        %v6937 = vadd.f32 %v6936, %v6934
        %v6938 = vadd.f32 %v6937, %v6935
        %6939 = vadd.xlane.f32.xlu0 %v6938
        %v6940 = vpop.xlane.xlu0 %6939
        %v6941 = vsel %vm6931, 1.0, %v6940
        %vm6942 = vcmp.eq.s32.totalorder %v6884, 0
        %v6943 = vsub.s32 %v6884, 1
        %vm6944 = vcmp.eq.s32.totalorder %v2222, %v6943
        %vm6945 = vcmp.eq.s32.totalorder %v2223, %v6943
        %vm6946 = vcmp.eq.s32.totalorder %v2224, %v6943
        %vm6947 = vcmp.eq.s32.totalorder %v2225, %v6943
        %v6948 = vsel %vm6944, %v6678, 0.0
        %v6949 = vsel %vm6945, %v6679, 0.0
        %v6950 = vsel %vm6946, %v6680, 0.0
        %v6951 = vsel %vm6947, %v6681, 0.0
        %v6952 = vadd.f32 %v6948, %v6949
        %v6953 = vadd.f32 %v6952, %v6950
        %v6954 = vadd.f32 %v6953, %v6951
        %6955 = vadd.xlane.f32.xlu0 %v6954
        %v6956 = vpop.xlane.xlu0 %6955
        %v6957 = vsel %vm6942, 1.0, %v6956
        %v6958 = vrcp.pop %v6901
        %v6959 = vmul.f32 %v6910, %v6958
        %v6960 = vsub.f32 %v4426, %v6930
        %v6961 = vadd.f32 %v6941, %v6957
        %v6962 = vmul.f32 %v6959, 2.0
        %v6963 = vsub.f32 %v6961, %v6962
        %v6964 = vsub.f32 %v6959, %v6957
        %v6965 = vmul.f32 %v6910, %v6964
        %v6966 = vmul.f32 %v6960, %v6963
        %v6967 = vadd.f32 %v6965, %v6966
        %v6968 = vmul.f32 %v6910, %v6957
        %v6969 = vsub.f32 %v6968, %v6966
        %v6970 = vsub.f32 0.0, %v6959
        %v6971 = vmul.f32 %v6970, %v6960
        %v6972 = vmul.f32 %v6969, %v6969
        %v6973 = vmul.f32 %v6967, 4.0
        %v6974 = vmul.f32 %v6973, %v6971
        %v6975 = vsub.f32 %v6972, %v6974
        %v6976 = vmax.f32 %v6975, 0.0
        %v6977 = vmul.f32 %v6971, 2.0
        %v6978 = vsub.f32 0.0, %v6969
        %v6979 = vrsqrt.pop %v6976
        %v6980 = vmul.f32 %v6976, %v6979
        %vm6981 = vcmp.eq.f32.partialorder %v6976, inf
        %v6982 = vsel %vm6981, %v6976, %v6980
        %vm6983 = vcmp.eq.f32.partialorder %v6976, 0.0
        %v6984 = vand.u32 %v6976, 2147483648
        %v6985 = vsel %vm6983, %v6984, %v6982
        %v6986 = vsub.f32 %v6978, %v6985
        %v6987 = vrcp.pop %v6986
        %v6988 = vmul.f32 %v6977, %v6987
        %v6989 = vmul.f32 %v6988, %v6901
        %v6990 = vadd.f32 %v6920, %v6989
        %v6991 = vmul.f32 %v6963, %v6988
        %v6992 = vsub.f32 1.0, %v6988
        %v6993 = vmul.f32 %v6991, %v6992
        %v6994 = vadd.f32 %v6959, %v6993
        %v6995 = vmul.f32 %v6959, %v6959
        %v6996 = vmul.f32 %v6941, %v6988
        %v6997 = vmul.f32 %v6996, %v6988
        %v6998 = vmul.f32 %v6962, %v6988
        %v6999 = vmul.f32 %v6998, %v6992
        %v7000 = vadd.f32 %v6997, %v6999
        %v7001 = vmul.f32 %v6957, %v6992
        %v7002 = vmul.f32 %v7001, %v6992
        %v7003 = vadd.f32 %v7000, %v7002
        %v7004 = vmul.f32 %v6995, %v7003
        %v7005 = vmul.f32 %v6994, %v6994
        %v7006 = vrcp.pop %v7005
        %v7007 = vmul.f32 %v7004, %v7006
        %v7008 = vsel %vm4424, %v6990, %v2473
        %v7009 = vlog2.pop %v7007
        %v7010 = vmul.f32 %v7009, 0.6931472
        %v7011 = vsel %vm4424, %v7010, 0.0
        %vm7012 = vcmp.eq.s32.totalorder %v2222, 0
        %7014 = vset.pattern.permute.xlu0 1
        %7015 = vperm.xlu0 %7014, %v7008
        %v7016 = vpop.permute.xlu0 %7015
        %v7018 = vsel %vm7012, %v4598, %v7016
        %v7019 = vadd.f32 %v2474, %v4593
        %7021 = vrot.lane.b32.xlu0 %v7011, 127
        %v7022 = vpop.permute.xlu0 %7021
        %v7024 = vadd.f32 %v7019, %v7022
        %vm7025 = vcmask 15360
        %7026 = vst.msk [vmem:[#allocation3] sm:$0xff] %vm7025, %v7018
        %vm7027 = vcmask 7168
        %7028 = vst.msk [vmem:[#allocation4] sm:$0xff] %vm7027, %v7024
        %p7029 = scmp.eq.s32.totalorder %s38, 4
        // Predicated region
        $region165: #{forward.1} parent=91 // pred_check
          %p7030 = pneg %p7029
        $region166: #{forward.1} parent=91 // pred_check_branch
          %7032 = sbr.rel (%p7030) target = $region168
        $region167: #{forward.1} parent=91 // pred_region
          %v7033 = vld [vmem:[#allocation14] sm:$0x1]
          %v7034 = vld [vmem:[#allocation14 + $0x1] sm:$0x1]
          %v7035 = vlaneseq
          %v7036 = vshrl.u32 %v7035, 7
          %v7037 = vsub.s32 0, %v7036
          %v7038 = vrot.slane %v7033, %v7037
          %v7039 = vsub.f32 %v7018, %v7038
          %v7040 = vlaneseq
          %v7041 = vshrl.u32 %v7040, 7
          %v7042 = vsub.s32 0, %v7041
          %v7043 = vrot.slane %v7034, %v7042
          %v7044 = vrcp.pop %v7043
          %v7045 = vmul.f32 %v7039, %v7044
          %v7046 = vmul.f32 %v7045, -0.5
          %v7047 = vmul.f32 %v7046, %v7045
          %v7048 = vlog2.pop %v7034
          %v7049 = vmul.f32 %v7048, 0.6931472
          %v7050 = vlaneseq
          %v7051 = vshrl.u32 %v7050, 7
          %v7052 = vsub.s32 0, %v7051
          %v7053 = vrot.slane %v7049, %v7052
          %v7054 = vsub.f32 %v7047, %v7053
          %v7055 = vsub.f32 %v7054, 0.9189385
          %v7056 = vsel %vm7025, %v7055, 0.0
          %7057 = vadd.xlane.f32.xlu0 %v7056
          %v7058 = vpop.xlane.xlu0 %7057
          %v7059 = vsub.f32 %v7058, %v7024
          %v7060 = vsel %vm7027, %v7059, 0.0
          %7061 = vadd.xlane.f32.xlu0 %v7060
          %v7062 = vpop.xlane.xlu0 %7061
          %v7063 = vrot.slane %v7062, 4
          %v7064 = vadd.f32 %v7062, %v7063
          %v7065 = vrot.slane %v7064, 2
          %v7066 = vadd.f32 %v7064, %v7065
          %v7067 = vrot.slane %v7066, 1
          %v7068 = vadd.f32 %v7066, %v7067
          %s7069 = vtos %v7068
          %v7070 = vrcp.pop 8.0
          %s7071 = vtos %v7070
          %s7072 = smul.f32 %s7069, %s7071
          %s7073 = ssub.f32 0.0, %s7072
          %v7074 = vstv %s7073
          %vm7075 = vcmask 0
          %7076 = vst.msk [vmem:[#allocation27] sm:$0x1] %vm7075, %v7074
          %v7077 = vld [vmem:[#allocation2] sm:$0xff]
          %v7078 = vld [vmem:[#allocation2 + $0x8] sm:$0xff]
          %7079 = vst [vmem:[#allocation28] sm:$0xff] %v7077
          %7080 = vst [vmem:[#allocation28 + $0x8] sm:$0xff] %v7078
          %v7081 = vld [vmem:[#allocation11] ss:$4 sm:$0x3]
          %v7083 = vlaneseq
          %v7084 = vshrl.u32 %v7083, 7
          %v7085 = vsub.s32 0, %v7084
          %v7086 = vrot.slane %v7081, %v7085
          %v7087 = vlaneseq
          %v7088 = vshrl.u32 %v7087, 7
          %v7089 = vsub.s32 1, %v7088
          %v7090 = vrot.slane %v7081, %v7089
          %v7093 = vmul.f32 %v7077, %v7086
          %v7094 = vmul.f32 %v7078, %v7090
          %s7095 = scalar_lea.vmem [#allocation11], 1
          %v7096 = vld [vmem:[%s7095] ss:$4 sm:$0x3]
          %v7098 = vlaneseq
          %v7099 = vshrl.u32 %v7098, 7
          %v7100 = vsub.s32 0, %v7099
          %v7101 = vrot.slane %v7096, %v7100
          %v7102 = vlaneseq
          %v7103 = vshrl.u32 %v7102, 7
          %v7104 = vsub.s32 1, %v7103
          %v7105 = vrot.slane %v7096, %v7104
          %v7108 = vadd.f32 %v7093, %v7101
          %v7109 = vadd.f32 %v7094, %v7105
          %v7110 = vmax.f32 %v7108, 0.0
          %v7111 = vmax.f32 %v7109, 0.0
          %s7112 = scalar_lea.vmem [#allocation11], 2
          %v7113 = vld [vmem:[%s7112] ss:$4 sm:$0x3]
          %v7115 = vlaneseq
          %v7116 = vshrl.u32 %v7115, 7
          %v7117 = vsub.s32 0, %v7116
          %v7118 = vrot.slane %v7113, %v7117
          %v7119 = vlaneseq
          %v7120 = vshrl.u32 %v7119, 7
          %v7121 = vsub.s32 1, %v7120
          %v7122 = vrot.slane %v7113, %v7121
          %v7125 = vmul.f32 %v7110, %v7118
          %v7126 = vmul.f32 %v7111, %v7122
          %s7127 = scalar_lea.vmem [#allocation11], 3
          %v7128 = vld [vmem:[%s7127] ss:$4 sm:$0x3]
          %v7130 = vlaneseq
          %v7131 = vshrl.u32 %v7130, 7
          %v7132 = vsub.s32 0, %v7131
          %v7133 = vrot.slane %v7128, %v7132
          %v7134 = vlaneseq
          %v7135 = vshrl.u32 %v7134, 7
          %v7136 = vsub.s32 1, %v7135
          %v7137 = vrot.slane %v7128, %v7136
          %v7140 = vadd.f32 %v7125, %v7133
          %v7141 = vadd.f32 %v7126, %v7137
          %7142 = vst [vmem:[#allocation30] sm:$0xff] %v7140
          %7143 = vst [vmem:[#allocation30 + $0x8] sm:$0xff] %v7141
        $region168: #{forward.1} parent=91 // pred_fallthru
          _
        // Predicated region
        $region169: #{forward.1} parent=91 // pred_check
          %p7144 = pneg %p506
        $region170: #{forward.1} parent=91 // pred_check_branch
          %7146 = sbr.rel (%p7144) target = $region172
        $region171: #{forward.1} parent=91 // pred_region
          %s7148 = ssub.s32 16, 16
          %7149 = vsyncadd [#allocation7], %s7148
          %s7151 = sshll.u32 [#allocation27], 4
          %s7152 = int_to_ptr.vmem [resolvable:$true] %s7151
          %7154 = dma.vmem_to_hbm [thread:$0]  %s7152, 16, %s18, [#allocation7]
        $region172: #{forward.1} parent=91 // pred_fallthru
          _
        // Predicated region
        $region173: #{forward.1} parent=91 // pred_check
          %p7155 = pneg %p527
        $region174: #{forward.1} parent=91 // pred_check_branch
          %7157 = sbr.rel (%p7155) target = $region176
        $region175: #{forward.1} parent=91 // pred_region
          %s7159 = ssub.s32 256, 256
          %7160 = vsyncadd [#allocation29], %s7159
          %s7162 = sshll.u32 [#allocation28], 4
          %s7163 = int_to_ptr.vmem [resolvable:$true] %s7162
          %7165 = dma.vmem_to_hbm [thread:$0]  %s7163, 256, %s19, [#allocation29]
        $region176: #{forward.1} parent=91 // pred_fallthru
          _
        // Predicated region
        $region177: #{forward.1} parent=91 // pred_check
          %p7166 = pneg %p548
        $region178: #{forward.1} parent=91 // pred_check_branch
          %7168 = sbr.rel (%p7166) target = $region180
        $region179: #{forward.1} parent=91 // pred_region
          %s7170 = ssub.s32 256, 256
          %7171 = vsyncadd [#allocation29], %s7170
          %s7173 = sshll.u32 [#allocation30], 4
          %s7174 = int_to_ptr.vmem [resolvable:$true] %s7173
          %7176 = dma.vmem_to_hbm [thread:$0]  %s7174, 256, %s20, [#allocation29]
        $region180: #{forward.1} parent=91 // pred_fallthru
          _
        // Predicated region
        $region181: #{forward.1} parent=91 // pred_check
          %p7177 = pneg %p506
        $region182: #{forward.1} parent=91 // pred_check_branch
          %7179 = sbr.rel (%p7177) target = $region184
        $region183: #{forward.1} parent=91 // pred_region
          %7180 = dma.done [#allocation7], 16
        $region184: #{forward.1} parent=91 // pred_fallthru
          _
        // Predicated region
        $region185: #{forward.1} parent=91 // pred_check
          %p7181 = pneg %p527
        $region186: #{forward.1} parent=91 // pred_check_branch
          %7183 = sbr.rel (%p7181) target = $region188
        $region187: #{forward.1} parent=91 // pred_region
          %7184 = dma.done [#allocation29], 256
        $region188: #{forward.1} parent=91 // pred_fallthru
          _
        // Predicated region
        $region189: #{forward.1} parent=91 // pred_check
          %p7185 = pneg %p548
        $region190: #{forward.1} parent=91 // pred_check_branch
          %7187 = sbr.rel (%p7185) target = $region192
        $region191: #{forward.1} parent=91 // pred_region
          %7188 = dma.done [#allocation29], 256
        $region192: #{forward.1} parent=91 // pred_fallthru
          _
      $region92: #{forward.1} parent=5 // pred_fallthru
        _
      %p7189 = scmp.le.s32.totalorder 2, %s33
      // Predicated region
      $region193: #{forward.1} parent=5 // pred_check
        %p7190 = pneg %p7189
      $region194: #{forward.1} parent=5 // pred_check_branch
        %7192 = sbr.rel (%p7190) target = $region196
      $region195: #{forward.1} parent=5 // pred_region
        %s7193 = ssub.s32 %s33, 2
      $region196: #{forward.1} parent=5 // pred_fallthru
        _
    $region6: #{forward.1} parent=1 // loop_footer
      %s37 = sadd.s32 1, %s33
    $region7: #{forward.1} parent=1 // loop_footer_branch
      %32 = sbr.rel target = $region3
    $region8: #{forward.1} parent=1 // loop_exit
      _
    %7194 = vsyncpa [#allocation6], 1
    %s7195 = scalar_lea.sflag [#allocation6], 1
    %7196 = vsyncpa %s7195, 1
    %7197 = vsyncpa [#allocation9], 1
    %7198 = vsyncpa [#allocation12], 1
    %7199 = vsyncpa [#allocation15], 1
    %7200 = vsyncpa [#allocation7], 1
    %s7201 = scalar_lea.sflag [#allocation7], 1
    %7202 = vsyncpa %s7201, 1
    %7203 = vsyncpa [#allocation29], 1

</llo_original>
